<compile_context>
chip_gen: v5e
topology: v5e:2x2
jax: 0.10.0
libtpu: 0.0.40
codegen_flags: <defaults>
</compile_context>

<pallas_src>
import numpy as np
import jax
import jax.numpy as jnp
from jax.experimental import pallas as pl
from jax.experimental.pallas import tpu as pltpu

# ----------------------------- model hyper-params -----------------------------
NUM_CLASS = 3
NUM_ANCHORS = NUM_CLASS * 2          # self.num_ancohors = num_class * 2
PFN_IN = 9                           # augmented point feature dim
C0 = 32                              # PFN output / canvas channels
C1 = 64                              # backbone stage 1 channels
C2 = 128                             # backbone stage 2 channels
NECK_C = 64                          # per-scale neck channels
H = W = 16                           # BEV canvas size
HW = H * W                           # 256
H2, W2 = H // 2, W // 2
HW2 = H2 * W2                        # 64
C_CLS = NUM_ANCHORS * NUM_CLASS      # 18
C_DIR = NUM_ANCHORS * 2              # 12
C_REG = NUM_ANCHORS * 7              # 42
C_HEAD = C_CLS + C_DIR + C_REG       # 72

# --------------------- constant 0/1 gather matrices (numpy) --------------------

def _conv3x3_gather(h, w, stride):
    """(9, h*w, ho*wo): G[t, p, o] = 1 iff input pixel p feeds output pixel o
    through tap t of a 3x3, pad=1 conv with the given stride (zero padding is
    folded in: out-of-bounds taps simply select nothing)."""
    ho = (h + 2 - 3) // stride + 1
    wo = (w + 2 - 3) // stride + 1
    g = np.zeros((9, h * w, ho * wo), np.float32)
    for dy in range(3):
        for dx in range(3):
            t = dy * 3 + dx
            for i in range(ho):
                for j in range(wo):
                    ih, iw = i * stride + dy - 1, j * stride + dx - 1
                    if 0 <= ih < h and 0 <= iw < w:
                        g[t, ih * w + iw, i * wo + j] = 1.0
    return g


def _upsample2x_gather(h2, w2):
    """(h2*w2, 4*h2*w2): U[p, q] = 1 iff coarse pixel p is the nearest-neighbor
    source of fine pixel q."""
    h, w = 2 * h2, 2 * w2
    u = np.zeros((h2 * w2, h * w), np.float32)
    for qh in range(h):
        for qw in range(w):
            u[(qh // 2) * w2 + (qw // 2), qh * w + qw] = 1.0
    return u

# --------------------------------- the kernel ----------------------------------

def _combined_kernel(raw_ref, scat_ref,
                     pfn_w_ref, pfn_b_ref,
                     w1_ref, b1_ref, g1_ref,
                     w2_ref, b2_ref, g2_ref,
                     n1w_ref, n1b_ref, n2w_ref, n2b_ref, up_ref,
                     wh1_ref, wh2_ref, hb_ref,
                     o_ref):
    f32 = jnp.float32
    v_cnt = scat_ref.shape[0]                 # number of pillars
    p_cnt = raw_ref.shape[0] // v_cnt         # points per pillar

    # ---- PFN: per-point Linear (+folded BN) + ReLU, then max over points ----
    # raw_ref rows are ordered point-major: row = p * V + v  (set up in wrapper),
    # so the max over points is 16 static value slices — no reshapes, no strides.
    feat = jnp.dot(raw_ref[...], pfn_w_ref[...], preferred_element_type=f32) + pfn_b_ref[...]
    m = feat[0:v_cnt, :]
    for p_idx in range(1, p_cnt):
        m = jnp.maximum(m, feat[p_idx * v_cnt:(p_idx + 1) * v_cnt, :])
    pillar_t = jnp.maximum(m, 0.0).T                                    # (C0, V)

    # ---- PointPillarsScatter as a one-hot matmul -> canvas (C0, H*W) ----
    # (duplicate pillar coords would sum instead of overwrite; coords are unique)
    canvas_t = jnp.dot(pillar_t, scat_ref[...], preferred_element_type=f32)   # (C0, 256)

    def conv3x3(x_t, g_ref, w_ref):
        # x_t: (Cin, S_in); 9 taps of gather-by-constant + tap-weight matmul.
        g = jnp.dot(x_t, g_ref[0].astype(f32), preferred_element_type=f32)
        acc = jnp.dot(w_ref[0], g, preferred_element_type=f32)
        for t in range(1, 9):
            g = jnp.dot(x_t, g_ref[t].astype(f32), preferred_element_type=f32)
            acc = acc + jnp.dot(w_ref[t], g, preferred_element_type=f32)
        return acc                                                       # (Cout, S_out)

    # ---- SECOND backbone: 3x3 s1 C0->C1, 3x3 s2 C1->C2 (BN folded, ReLU) ----
    f1_t = jnp.maximum(conv3x3(canvas_t, g1_ref, w1_ref) + b1_ref[...], 0.0)   # (C1, 256)
    f2_t = jnp.maximum(conv3x3(f1_t, g2_ref, w2_ref) + b2_ref[...], 0.0)       # (C2, 64)

    # ---- SECONDFPN neck: 1x1 convs + 2x nearest-neighbor upsample ----
    # TODO(synk): ConvTranspose2d deblock approximated by 1x1 conv + NN 2x upsample.
    n1_t = jnp.maximum(jnp.dot(n1w_ref[...], f1_t, preferred_element_type=f32)
                       + n1b_ref[...], 0.0)                                    # (NECK_C, 256)
    n2_t = jnp.maximum(jnp.dot(n2w_ref[...], f2_t, preferred_element_type=f32)
                       + n2b_ref[...], 0.0)                                    # (NECK_C, 64)
    n2u_t = jnp.dot(n2_t, up_ref[...].astype(f32), preferred_element_type=f32)  # (NECK_C, 256)

    # ---- fused cls | dir | reg heads: one lane-dense (72, 256) result ----
    y = (jnp.dot(wh1_ref[...], n1_t, preferred_element_type=f32)
         + jnp.dot(wh2_ref[...], n2u_t, preferred_element_type=f32)
         + hb_ref[...])
    o_ref[...] = y.astype(o_ref.dtype)

# ------------------------------- parameter setup -------------------------------

def init_params(key):
    ks = jax.random.split(key, 12)

    def bn_fold(kb, cout, eps=1e-5):
        kg, kbe, km, kv = jax.random.split(kb, 4)
        gamma = 1.0 + 0.05 * jax.random.normal(kg, (cout,), jnp.float32)
        beta = 0.05 * jax.random.normal(kbe, (cout,), jnp.float32)
        mean = 0.05 * jax.random.normal(km, (cout,), jnp.float32)
        var = 1.0 + 0.1 * jnp.abs(jax.random.normal(kv, (cout,), jnp.float32))
        scale = gamma / jnp.sqrt(var + eps)
        return scale, beta - mean * scale

    p = {}
    # PFN Linear(9 -> C0) + folded BN1d (output channels are columns).
    scale, shift = bn_fold(ks[1], C0)
    p['pfn_w'] = 0.05 * jax.random.normal(ks[0], (PFN_IN, C0), jnp.float32) * scale[None, :]
    p['pfn_b'] = shift.reshape(1, C0)

    # backbone conv1: 3x3 s1 C0->C1 (BN folded).  w1[t] == W[:, :, dy, dx].
    scale, shift = bn_fold(ks[3], C1)
    p['w1'] = 0.05 * jax.random.normal(ks[2], (9, C1, C0), jnp.float32) * scale[None, :, None]
    p['b1'] = shift.reshape(C1, 1)

    # backbone conv2: 3x3 s2 C1->C2 (BN folded).
    scale, shift = bn_fold(ks[5], C2)
    p['w2'] = 0.05 * jax.random.normal(ks[4], (9, C2, C1), jnp.float32) * scale[None, :, None]
    p['b2'] = shift.reshape(C2, 1)

    # neck 1x1 convs (BN folded): C1->NECK_C and C2->NECK_C.
    scale, shift = bn_fold(ks[7], NECK_C)
    p['n1w'] = 0.05 * jax.random.normal(ks[6], (NECK_C, C1), jnp.float32) * scale[:, None]
    p['n1b'] = shift.reshape(NECK_C, 1)
    scale, shift = bn_fold(ks[9], NECK_C)
    p['n2w'] = 0.05 * jax.random.normal(ks[8], (NECK_C, C2), jnp.float32) * scale[:, None]
    p['n2b'] = shift.reshape(NECK_C, 1)

    # heads: plain 1x1 convs with bias, fused along output channels (cls|dir|reg).
    wh = 0.05 * jax.random.normal(ks[10], (C_HEAD, 2 * NECK_C), jnp.float32)
    p['wh1'] = wh[:, :NECK_C]            # acts on neck scale-1 features
    p['wh2'] = wh[:, NECK_C:]            # acts on upsampled neck scale-2 features
    p['hb'] = (0.05 * jax.random.normal(ks[11], (C_HEAD,), jnp.float32)).reshape(C_HEAD, 1)

    # constant 0/1 gather matrices (exact in bf16; halves their DMA bytes).
    p['g1'] = jnp.asarray(_conv3x3_gather(H, W, 1), jnp.bfloat16)    # (9, 256, 256)
    p['g2'] = jnp.asarray(_conv3x3_gather(H, W, 2), jnp.bfloat16)    # (9, 256, 64)
    p['up'] = jnp.asarray(_upsample2x_gather(H2, W2), jnp.bfloat16)  # (64, 256)
    return p

# --------------------------------- forward pass --------------------------------

@jax.jit
def combined_model_forward(params, raw_voxel_feat, coors, data):
    del data  # TODO(synk): runtime metadata for the edgeai middle encoder; unused here.
    v_cnt, p_cnt, _ = raw_voxel_feat.shape

    # point-major layout so the in-kernel max-over-points is static slicing only
    raw_pv = jnp.transpose(raw_voxel_feat, (1, 0, 2)).reshape(p_cnt * v_cnt, PFN_IN)

    # scatter one-hot: pillar v -> BEV cell y*W + x (batch_size = 1).
    idx = coors[:, 2].astype(jnp.int32) * W + coors[:, 3].astype(jnp.int32)
    in_batch = coors[:, 0] == 0
    scat = ((idx[:, None] == jnp.arange(HW, dtype=jnp.int32)[None, :])
            & in_batch[:, None]).astype(jnp.float32)                  # (V, HW)

    y = pl.pallas_call(
        _combined_kernel,
        out_shape=jax.ShapeDtypeStruct((C_HEAD, HW), jnp.float32),
        compiler_params=pltpu.CompilerParams(vmem_limit_bytes=32 * 1024 * 1024),
    )(raw_pv, scat,
      params['pfn_w'], params['pfn_b'],
      params['w1'], params['b1'], params['g1'],
      params['w2'], params['b2'], params['g2'],
      params['n1w'], params['n1b'], params['n2w'], params['n2b'], params['up'],
      params['wh1'], params['wh2'], params['hb'])

    # torch.cat((y0, y1, y2), dim=1) then reshape(-1, 72 / num_anchors):
    # y is already channels-major (NCHW-flat for batch 1) -> plain reshape.
    return y.reshape(-1, C_HEAD // NUM_ANCHORS)

# ------------------------------------- main ------------------------------------

if __name__ == "__main__":
    key = jax.random.PRNGKey(0)
    kp, kx = jax.random.split(key)
    params = init_params(kp)

    V, P = 20, 16
    raw_voxel_feat = jax.random.normal(kx, (V, P, PFN_IN), dtype=jnp.float32)
    # unique (y, x) pillar coordinates, batch index 0, z = 0
    lin = (jnp.arange(V, dtype=jnp.int32) * 7) % HW
    coors = jnp.stack([jnp.zeros(V, jnp.int32), jnp.zeros(V, jnp.int32),
                       lin // W, lin % W], axis=1)
    data = jnp.zeros((1,), jnp.float32)

    y = combined_model_forward(params, raw_voxel_feat, coors, data)
    y = jax.block_until_ready(y)

    expected_rows = (1 * C_HEAD * H * W) // (C_HEAD // NUM_ANCHORS)   # 1536
    assert y.shape == (expected_rows, C_HEAD // NUM_ANCHORS), y.shape
    assert bool(jnp.all(jnp.isfinite(y)))
    print("KERNEL_OK")
</pallas_src>

<mosaic_0001>
module attributes {stable_mosaic.version = 11 : i64} {
  func.func @_combined_kernel(%arg0: memref<320x9xf32, #tpu.memory_space<vmem>>, %arg1: memref<20x256xf32, #tpu.memory_space<vmem>>, %arg2: memref<9x32xf32, #tpu.memory_space<vmem>>, %arg3: memref<1x32xf32, #tpu.memory_space<vmem>>, %arg4: memref<9x64x32xf32, #tpu.memory_space<vmem>>, %arg5: memref<64x1xf32, #tpu.memory_space<vmem>>, %arg6: memref<9x256x256xbf16, #tpu.memory_space<vmem>>, %arg7: memref<9x128x64xf32, #tpu.memory_space<vmem>>, %arg8: memref<128x1xf32, #tpu.memory_space<vmem>>, %arg9: memref<9x256x64xbf16, #tpu.memory_space<vmem>>, %arg10: memref<64x64xf32, #tpu.memory_space<vmem>>, %arg11: memref<64x1xf32, #tpu.memory_space<vmem>>, %arg12: memref<64x128xf32, #tpu.memory_space<vmem>>, %arg13: memref<64x1xf32, #tpu.memory_space<vmem>>, %arg14: memref<64x256xbf16, #tpu.memory_space<vmem>>, %arg15: memref<72x64xf32, #tpu.memory_space<vmem>>, %arg16: memref<72x64xf32, #tpu.memory_space<vmem>>, %arg17: memref<72x1xf32, #tpu.memory_space<vmem>>, %arg18: memref<72x256xf32, #tpu.memory_space<vmem>>) attributes {dimension_semantics = [], scalar_prefetch = 0 : i64, scratch_operands = 0 : i64, tpu.core_type = #tpu.core_type<tc>} {
    %c0 = arith.constant 0 : index
    %c0_0 = arith.constant 0 : index
    %0 = vector.load %arg0[%c0, %c0_0] : memref<320x9xf32, #tpu.memory_space<vmem>>, vector<320x9xf32>
    %c0_1 = arith.constant 0 : index
    %c0_2 = arith.constant 0 : index
    %1 = vector.load %arg2[%c0_1, %c0_2] : memref<9x32xf32, #tpu.memory_space<vmem>>, vector<9x32xf32>
    %cst = arith.constant dense<0.000000e+00> : vector<320x32xf32>
    %2 = tpu.matmul %0, %1, %cst {dimension_numbers = #tpu.dot_dimension_numbers<[1], [0], [0], [1], [0, 0, 1, 1], [], []>} : vector<320x9xf32>, vector<9x32xf32>, vector<320x32xf32> -> vector<320x32xf32>
    %c0_3 = arith.constant 0 : index
    %c0_4 = arith.constant 0 : index
    %3 = vector.load %arg3[%c0_3, %c0_4] : memref<1x32xf32, #tpu.memory_space<vmem>>, vector<1x32xf32>
    %4 = vector.broadcast %3 : vector<1x32xf32> to vector<320x32xf32>
    %5 = arith.addf %2, %4 : vector<320x32xf32>
    %6 = vector.extract_strided_slice %5 {offsets = [0, 0], sizes = [20, 32], strides = [1, 1]} : vector<320x32xf32> to vector<20x32xf32>
    %7 = vector.extract_strided_slice %5 {offsets = [20, 0], sizes = [20, 32], strides = [1, 1]} : vector<320x32xf32> to vector<20x32xf32>
    %8 = arith.maximumf %6, %7 : vector<20x32xf32>
    %9 = vector.extract_strided_slice %5 {offsets = [40, 0], sizes = [20, 32], strides = [1, 1]} : vector<320x32xf32> to vector<20x32xf32>
    %10 = arith.maximumf %8, %9 : vector<20x32xf32>
    %11 = vector.extract_strided_slice %5 {offsets = [60, 0], sizes = [20, 32], strides = [1, 1]} : vector<320x32xf32> to vector<20x32xf32>
    %12 = arith.maximumf %10, %11 : vector<20x32xf32>
    %13 = vector.extract_strided_slice %5 {offsets = [80, 0], sizes = [20, 32], strides = [1, 1]} : vector<320x32xf32> to vector<20x32xf32>
    %14 = arith.maximumf %12, %13 : vector<20x32xf32>
    %15 = vector.extract_strided_slice %5 {offsets = [100, 0], sizes = [20, 32], strides = [1, 1]} : vector<320x32xf32> to vector<20x32xf32>
    %16 = arith.maximumf %14, %15 : vector<20x32xf32>
    %17 = vector.extract_strided_slice %5 {offsets = [120, 0], sizes = [20, 32], strides = [1, 1]} : vector<320x32xf32> to vector<20x32xf32>
    %18 = arith.maximumf %16, %17 : vector<20x32xf32>
    %19 = vector.extract_strided_slice %5 {offsets = [140, 0], sizes = [20, 32], strides = [1, 1]} : vector<320x32xf32> to vector<20x32xf32>
    %20 = arith.maximumf %18, %19 : vector<20x32xf32>
    %21 = vector.extract_strided_slice %5 {offsets = [160, 0], sizes = [20, 32], strides = [1, 1]} : vector<320x32xf32> to vector<20x32xf32>
    %22 = arith.maximumf %20, %21 : vector<20x32xf32>
    %23 = vector.extract_strided_slice %5 {offsets = [180, 0], sizes = [20, 32], strides = [1, 1]} : vector<320x32xf32> to vector<20x32xf32>
    %24 = arith.maximumf %22, %23 : vector<20x32xf32>
    %25 = vector.extract_strided_slice %5 {offsets = [200, 0], sizes = [20, 32], strides = [1, 1]} : vector<320x32xf32> to vector<20x32xf32>
    %26 = arith.maximumf %24, %25 : vector<20x32xf32>
    %27 = vector.extract_strided_slice %5 {offsets = [220, 0], sizes = [20, 32], strides = [1, 1]} : vector<320x32xf32> to vector<20x32xf32>
    %28 = arith.maximumf %26, %27 : vector<20x32xf32>
    %29 = vector.extract_strided_slice %5 {offsets = [240, 0], sizes = [20, 32], strides = [1, 1]} : vector<320x32xf32> to vector<20x32xf32>
    %30 = arith.maximumf %28, %29 : vector<20x32xf32>
    %31 = vector.extract_strided_slice %5 {offsets = [260, 0], sizes = [20, 32], strides = [1, 1]} : vector<320x32xf32> to vector<20x32xf32>
    %32 = arith.maximumf %30, %31 : vector<20x32xf32>
    %33 = vector.extract_strided_slice %5 {offsets = [280, 0], sizes = [20, 32], strides = [1, 1]} : vector<320x32xf32> to vector<20x32xf32>
    %34 = arith.maximumf %32, %33 : vector<20x32xf32>
    %35 = vector.extract_strided_slice %5 {offsets = [300, 0], sizes = [20, 32], strides = [1, 1]} : vector<320x32xf32> to vector<20x32xf32>
    %36 = arith.maximumf %34, %35 : vector<20x32xf32>
    %cst_5 = arith.constant 0.000000e+00 : f32
    %37 = vector.broadcast %cst_5 : f32 to vector<20x32xf32>
    %38 = arith.maximumf %36, %37 : vector<20x32xf32>
    %39 = tpu.transpose %38, [1, 0] : vector<20x32xf32> -> vector<32x20xf32>
    %c0_6 = arith.constant 0 : index
    %c0_7 = arith.constant 0 : index
    %40 = vector.load %arg1[%c0_6, %c0_7] : memref<20x256xf32, #tpu.memory_space<vmem>>, vector<20x256xf32>
    %cst_8 = arith.constant dense<0.000000e+00> : vector<32x256xf32>
    %41 = tpu.matmul %39, %40, %cst_8 {dimension_numbers = #tpu.dot_dimension_numbers<[1], [0], [0], [1], [0, 0, 1, 1], [], []>} : vector<32x20xf32>, vector<20x256xf32>, vector<32x256xf32> -> vector<32x256xf32>
    %c0_9 = arith.constant 0 : index
    %c0_10 = arith.constant 0 : index
    %c0_11 = arith.constant 0 : index
    %42 = vector.load %arg6[%c0_9, %c0_10, %c0_11] : memref<9x256x256xbf16, #tpu.memory_space<vmem>>, vector<1x256x256xbf16>
    %43 = vector.shape_cast %42 : vector<1x256x256xbf16> to vector<256x256xbf16>
    %44 = arith.extf %43 : vector<256x256xbf16> to vector<256x256xf32>
    %cst_12 = arith.constant dense<0.000000e+00> : vector<32x256xf32>
    %45 = tpu.matmul %41, %44, %cst_12 {dimension_numbers = #tpu.dot_dimension_numbers<[1], [0], [0], [1], [0, 0, 1, 1], [], []>} : vector<32x256xf32>, vector<256x256xf32>, vector<32x256xf32> -> vector<32x256xf32>
    %c0_13 = arith.constant 0 : index
    %c0_14 = arith.constant 0 : index
    %c0_15 = arith.constant 0 : index
    %46 = vector.load %arg4[%c0_13, %c0_14, %c0_15] : memref<9x64x32xf32, #tpu.memory_space<vmem>>, vector<1x64x32xf32>
    %47 = vector.shape_cast %46 : vector<1x64x32xf32> to vector<64x32xf32>
    %cst_16 = arith.constant dense<0.000000e+00> : vector<64x256xf32>
    %48 = tpu.matmul %47, %45, %cst_16 {dimension_numbers = #tpu.dot_dimension_numbers<[1], [0], [0], [1], [0, 0, 1, 1], [], []>} : vector<64x32xf32>, vector<32x256xf32>, vector<64x256xf32> -> vector<64x256xf32>
    %c1 = arith.constant 1 : index
    %c0_17 = arith.constant 0 : index
    %c0_18 = arith.constant 0 : index
    %49 = vector.load %arg6[%c1, %c0_17, %c0_18] : memref<9x256x256xbf16, #tpu.memory_space<vmem>>, vector<1x256x256xbf16>
    %50 = vector.shape_cast %49 : vector<1x256x256xbf16> to vector<256x256xbf16>
    %51 = arith.extf %50 : vector<256x256xbf16> to vector<256x256xf32>
    %cst_19 = arith.constant dense<0.000000e+00> : vector<32x256xf32>
    %52 = tpu.matmul %41, %51, %cst_19 {dimension_numbers = #tpu.dot_dimension_numbers<[1], [0], [0], [1], [0, 0, 1, 1], [], []>} : vector<32x256xf32>, vector<256x256xf32>, vector<32x256xf32> -> vector<32x256xf32>
    %c1_20 = arith.constant 1 : index
    %c0_21 = arith.constant 0 : index
    %c0_22 = arith.constant 0 : index
    %53 = vector.load %arg4[%c1_20, %c0_21, %c0_22] : memref<9x64x32xf32, #tpu.memory_space<vmem>>, vector<1x64x32xf32>
    %54 = vector.shape_cast %53 : vector<1x64x32xf32> to vector<64x32xf32>
    %cst_23 = arith.constant dense<0.000000e+00> : vector<64x256xf32>
    %55 = tpu.matmul %54, %52, %cst_23 {dimension_numbers = #tpu.dot_dimension_numbers<[1], [0], [0], [1], [0, 0, 1, 1], [], []>} : vector<64x32xf32>, vector<32x256xf32>, vector<64x256xf32> -> vector<64x256xf32>
    %56 = arith.addf %48, %55 : vector<64x256xf32>
    %c2 = arith.constant 2 : index
    %c0_24 = arith.constant 0 : index
    %c0_25 = arith.constant 0 : index
    %57 = vector.load %arg6[%c2, %c0_24, %c0_25] : memref<9x256x256xbf16, #tpu.memory_space<vmem>>, vector<1x256x256xbf16>
    %58 = vector.shape_cast %57 : vector<1x256x256xbf16> to vector<256x256xbf16>
    %59 = arith.extf %58 : vector<256x256xbf16> to vector<256x256xf32>
    %cst_26 = arith.constant dense<0.000000e+00> : vector<32x256xf32>
    %60 = tpu.matmul %41, %59, %cst_26 {dimension_numbers = #tpu.dot_dimension_numbers<[1], [0], [0], [1], [0, 0, 1, 1], [], []>} : vector<32x256xf32>, vector<256x256xf32>, vector<32x256xf32> -> vector<32x256xf32>
    %c2_27 = arith.constant 2 : index
    %c0_28 = arith.constant 0 : index
    %c0_29 = arith.constant 0 : index
    %61 = vector.load %arg4[%c2_27, %c0_28, %c0_29] : memref<9x64x32xf32, #tpu.memory_space<vmem>>, vector<1x64x32xf32>
    %62 = vector.shape_cast %61 : vector<1x64x32xf32> to vector<64x32xf32>
    %cst_30 = arith.constant dense<0.000000e+00> : vector<64x256xf32>
    %63 = tpu.matmul %62, %60, %cst_30 {dimension_numbers = #tpu.dot_dimension_numbers<[1], [0], [0], [1], [0, 0, 1, 1], [], []>} : vector<64x32xf32>, vector<32x256xf32>, vector<64x256xf32> -> vector<64x256xf32>
    %64 = arith.addf %56, %63 : vector<64x256xf32>
    %c3 = arith.constant 3 : index
    %c0_31 = arith.constant 0 : index
    %c0_32 = arith.constant 0 : index
    %65 = vector.load %arg6[%c3, %c0_31, %c0_32] : memref<9x256x256xbf16, #tpu.memory_space<vmem>>, vector<1x256x256xbf16>
    %66 = vector.shape_cast %65 : vector<1x256x256xbf16> to vector<256x256xbf16>
    %67 = arith.extf %66 : vector<256x256xbf16> to vector<256x256xf32>
    %cst_33 = arith.constant dense<0.000000e+00> : vector<32x256xf32>
    %68 = tpu.matmul %41, %67, %cst_33 {dimension_numbers = #tpu.dot_dimension_numbers<[1], [0], [0], [1], [0, 0, 1, 1], [], []>} : vector<32x256xf32>, vector<256x256xf32>, vector<32x256xf32> -> vector<32x256xf32>
    %c3_34 = arith.constant 3 : index
    %c0_35 = arith.constant 0 : index
    %c0_36 = arith.constant 0 : index
    %69 = vector.load %arg4[%c3_34, %c0_35, %c0_36] : memref<9x64x32xf32, #tpu.memory_space<vmem>>, vector<1x64x32xf32>
    %70 = vector.shape_cast %69 : vector<1x64x32xf32> to vector<64x32xf32>
    %cst_37 = arith.constant dense<0.000000e+00> : vector<64x256xf32>
    %71 = tpu.matmul %70, %68, %cst_37 {dimension_numbers = #tpu.dot_dimension_numbers<[1], [0], [0], [1], [0, 0, 1, 1], [], []>} : vector<64x32xf32>, vector<32x256xf32>, vector<64x256xf32> -> vector<64x256xf32>
    %72 = arith.addf %64, %71 : vector<64x256xf32>
    %c4 = arith.constant 4 : index
    %c0_38 = arith.constant 0 : index
    %c0_39 = arith.constant 0 : index
    %73 = vector.load %arg6[%c4, %c0_38, %c0_39] : memref<9x256x256xbf16, #tpu.memory_space<vmem>>, vector<1x256x256xbf16>
    %74 = vector.shape_cast %73 : vector<1x256x256xbf16> to vector<256x256xbf16>
    %75 = arith.extf %74 : vector<256x256xbf16> to vector<256x256xf32>
    %cst_40 = arith.constant dense<0.000000e+00> : vector<32x256xf32>
    %76 = tpu.matmul %41, %75, %cst_40 {dimension_numbers = #tpu.dot_dimension_numbers<[1], [0], [0], [1], [0, 0, 1, 1], [], []>} : vector<32x256xf32>, vector<256x256xf32>, vector<32x256xf32> -> vector<32x256xf32>
    %c4_41 = arith.constant 4 : index
    %c0_42 = arith.constant 0 : index
    %c0_43 = arith.constant 0 : index
    %77 = vector.load %arg4[%c4_41, %c0_42, %c0_43] : memref<9x64x32xf32, #tpu.memory_space<vmem>>, vector<1x64x32xf32>
    %78 = vector.shape_cast %77 : vector<1x64x32xf32> to vector<64x32xf32>
    %cst_44 = arith.constant dense<0.000000e+00> : vector<64x256xf32>
    %79 = tpu.matmul %78, %76, %cst_44 {dimension_numbers = #tpu.dot_dimension_numbers<[1], [0], [0], [1], [0, 0, 1, 1], [], []>} : vector<64x32xf32>, vector<32x256xf32>, vector<64x256xf32> -> vector<64x256xf32>
    %80 = arith.addf %72, %79 : vector<64x256xf32>
    %c5 = arith.constant 5 : index
    %c0_45 = arith.constant 0 : index
    %c0_46 = arith.constant 0 : index
    %81 = vector.load %arg6[%c5, %c0_45, %c0_46] : memref<9x256x256xbf16, #tpu.memory_space<vmem>>, vector<1x256x256xbf16>
    %82 = vector.shape_cast %81 : vector<1x256x256xbf16> to vector<256x256xbf16>
    %83 = arith.extf %82 : vector<256x256xbf16> to vector<256x256xf32>
    %cst_47 = arith.constant dense<0.000000e+00> : vector<32x256xf32>
    %84 = tpu.matmul %41, %83, %cst_47 {dimension_numbers = #tpu.dot_dimension_numbers<[1], [0], [0], [1], [0, 0, 1, 1], [], []>} : vector<32x256xf32>, vector<256x256xf32>, vector<32x256xf32> -> vector<32x256xf32>
    %c5_48 = arith.constant 5 : index
    %c0_49 = arith.constant 0 : index
    %c0_50 = arith.constant 0 : index
    %85 = vector.load %arg4[%c5_48, %c0_49, %c0_50] : memref<9x64x32xf32, #tpu.memory_space<vmem>>, vector<1x64x32xf32>
    %86 = vector.shape_cast %85 : vector<1x64x32xf32> to vector<64x32xf32>
    %cst_51 = arith.constant dense<0.000000e+00> : vector<64x256xf32>
    %87 = tpu.matmul %86, %84, %cst_51 {dimension_numbers = #tpu.dot_dimension_numbers<[1], [0], [0], [1], [0, 0, 1, 1], [], []>} : vector<64x32xf32>, vector<32x256xf32>, vector<64x256xf32> -> vector<64x256xf32>
    %88 = arith.addf %80, %87 : vector<64x256xf32>
    %c6 = arith.constant 6 : index
    %c0_52 = arith.constant 0 : index
    %c0_53 = arith.constant 0 : index
    %89 = vector.load %arg6[%c6, %c0_52, %c0_53] : memref<9x256x256xbf16, #tpu.memory_space<vmem>>, vector<1x256x256xbf16>
    %90 = vector.shape_cast %89 : vector<1x256x256xbf16> to vector<256x256xbf16>
    %91 = arith.extf %90 : vector<256x256xbf16> to vector<256x256xf32>
    %cst_54 = arith.constant dense<0.000000e+00> : vector<32x256xf32>
    %92 = tpu.matmul %41, %91, %cst_54 {dimension_numbers = #tpu.dot_dimension_numbers<[1], [0], [0], [1], [0, 0, 1, 1], [], []>} : vector<32x256xf32>, vector<256x256xf32>, vector<32x256xf32> -> vector<32x256xf32>
    %c6_55 = arith.constant 6 : index
    %c0_56 = arith.constant 0 : index
    %c0_57 = arith.constant 0 : index
    %93 = vector.load %arg4[%c6_55, %c0_56, %c0_57] : memref<9x64x32xf32, #tpu.memory_space<vmem>>, vector<1x64x32xf32>
    %94 = vector.shape_cast %93 : vector<1x64x32xf32> to vector<64x32xf32>
    %cst_58 = arith.constant dense<0.000000e+00> : vector<64x256xf32>
    %95 = tpu.matmul %94, %92, %cst_58 {dimension_numbers = #tpu.dot_dimension_numbers<[1], [0], [0], [1], [0, 0, 1, 1], [], []>} : vector<64x32xf32>, vector<32x256xf32>, vector<64x256xf32> -> vector<64x256xf32>
    %96 = arith.addf %88, %95 : vector<64x256xf32>
    %c7 = arith.constant 7 : index
    %c0_59 = arith.constant 0 : index
    %c0_60 = arith.constant 0 : index
    %97 = vector.load %arg6[%c7, %c0_59, %c0_60] : memref<9x256x256xbf16, #tpu.memory_space<vmem>>, vector<1x256x256xbf16>
    %98 = vector.shape_cast %97 : vector<1x256x256xbf16> to vector<256x256xbf16>
    %99 = arith.extf %98 : vector<256x256xbf16> to vector<256x256xf32>
    %cst_61 = arith.constant dense<0.000000e+00> : vector<32x256xf32>
    %100 = tpu.matmul %41, %99, %cst_61 {dimension_numbers = #tpu.dot_dimension_numbers<[1], [0], [0], [1], [0, 0, 1, 1], [], []>} : vector<32x256xf32>, vector<256x256xf32>, vector<32x256xf32> -> vector<32x256xf32>
    %c7_62 = arith.constant 7 : index
    %c0_63 = arith.constant 0 : index
    %c0_64 = arith.constant 0 : index
    %101 = vector.load %arg4[%c7_62, %c0_63, %c0_64] : memref<9x64x32xf32, #tpu.memory_space<vmem>>, vector<1x64x32xf32>
    %102 = vector.shape_cast %101 : vector<1x64x32xf32> to vector<64x32xf32>
    %cst_65 = arith.constant dense<0.000000e+00> : vector<64x256xf32>
    %103 = tpu.matmul %102, %100, %cst_65 {dimension_numbers = #tpu.dot_dimension_numbers<[1], [0], [0], [1], [0, 0, 1, 1], [], []>} : vector<64x32xf32>, vector<32x256xf32>, vector<64x256xf32> -> vector<64x256xf32>
    %104 = arith.addf %96, %103 : vector<64x256xf32>
    %c8 = arith.constant 8 : index
    %c0_66 = arith.constant 0 : index
    %c0_67 = arith.constant 0 : index
    %105 = vector.load %arg6[%c8, %c0_66, %c0_67] : memref<9x256x256xbf16, #tpu.memory_space<vmem>>, vector<1x256x256xbf16>
    %106 = vector.shape_cast %105 : vector<1x256x256xbf16> to vector<256x256xbf16>
    %107 = arith.extf %106 : vector<256x256xbf16> to vector<256x256xf32>
    %cst_68 = arith.constant dense<0.000000e+00> : vector<32x256xf32>
    %108 = tpu.matmul %41, %107, %cst_68 {dimension_numbers = #tpu.dot_dimension_numbers<[1], [0], [0], [1], [0, 0, 1, 1], [], []>} : vector<32x256xf32>, vector<256x256xf32>, vector<32x256xf32> -> vector<32x256xf32>
    %c8_69 = arith.constant 8 : index
    %c0_70 = arith.constant 0 : index
    %c0_71 = arith.constant 0 : index
    %109 = vector.load %arg4[%c8_69, %c0_70, %c0_71] : memref<9x64x32xf32, #tpu.memory_space<vmem>>, vector<1x64x32xf32>
    %110 = vector.shape_cast %109 : vector<1x64x32xf32> to vector<64x32xf32>
    %cst_72 = arith.constant dense<0.000000e+00> : vector<64x256xf32>
    %111 = tpu.matmul %110, %108, %cst_72 {dimension_numbers = #tpu.dot_dimension_numbers<[1], [0], [0], [1], [0, 0, 1, 1], [], []>} : vector<64x32xf32>, vector<32x256xf32>, vector<64x256xf32> -> vector<64x256xf32>
    %112 = arith.addf %104, %111 : vector<64x256xf32>
    %c0_73 = arith.constant 0 : index
    %c0_74 = arith.constant 0 : index
    %113 = vector.load %arg5[%c0_73, %c0_74] : memref<64x1xf32, #tpu.memory_space<vmem>>, vector<64x1xf32>
    %114 = vector.broadcast %113 : vector<64x1xf32> to vector<64x256xf32>
    %115 = arith.addf %112, %114 : vector<64x256xf32>
    %cst_75 = arith.constant 0.000000e+00 : f32
    %116 = vector.broadcast %cst_75 : f32 to vector<64x256xf32>
    %117 = arith.maximumf %115, %116 : vector<64x256xf32>
    %c0_76 = arith.constant 0 : index
    %c0_77 = arith.constant 0 : index
    %c0_78 = arith.constant 0 : index
    %118 = vector.load %arg9[%c0_76, %c0_77, %c0_78] : memref<9x256x64xbf16, #tpu.memory_space<vmem>>, vector<1x256x64xbf16>
    %119 = vector.shape_cast %118 : vector<1x256x64xbf16> to vector<256x64xbf16>
    %120 = arith.extf %119 : vector<256x64xbf16> to vector<256x64xf32>
    %cst_79 = arith.constant dense<0.000000e+00> : vector<64x64xf32>
    %121 = tpu.matmul %117, %120, %cst_79 {dimension_numbers = #tpu.dot_dimension_numbers<[1], [0], [0], [1], [0, 0, 1, 1], [], []>} : vector<64x256xf32>, vector<256x64xf32>, vector<64x64xf32> -> vector<64x64xf32>
    %c0_80 = arith.constant 0 : index
    %c0_81 = arith.constant 0 : index
    %c0_82 = arith.constant 0 : index
    %122 = vector.load %arg7[%c0_80, %c0_81, %c0_82] : memref<9x128x64xf32, #tpu.memory_space<vmem>>, vector<1x128x64xf32>
    %123 = vector.shape_cast %122 : vector<1x128x64xf32> to vector<128x64xf32>
    %cst_83 = arith.constant dense<0.000000e+00> : vector<128x64xf32>
    %124 = tpu.matmul %123, %121, %cst_83 {dimension_numbers = #tpu.dot_dimension_numbers<[1], [0], [0], [1], [0, 0, 1, 1], [], []>} : vector<128x64xf32>, vector<64x64xf32>, vector<128x64xf32> -> vector<128x64xf32>
    %c1_84 = arith.constant 1 : index
    %c0_85 = arith.constant 0 : index
    %c0_86 = arith.constant 0 : index
    %125 = vector.load %arg9[%c1_84, %c0_85, %c0_86] : memref<9x256x64xbf16, #tpu.memory_space<vmem>>, vector<1x256x64xbf16>
    %126 = vector.shape_cast %125 : vector<1x256x64xbf16> to vector<256x64xbf16>
    %127 = arith.extf %126 : vector<256x64xbf16> to vector<256x64xf32>
    %cst_87 = arith.constant dense<0.000000e+00> : vector<64x64xf32>
    %128 = tpu.matmul %117, %127, %cst_87 {dimension_numbers = #tpu.dot_dimension_numbers<[1], [0], [0], [1], [0, 0, 1, 1], [], []>} : vector<64x256xf32>, vector<256x64xf32>, vector<64x64xf32> -> vector<64x64xf32>
    %c1_88 = arith.constant 1 : index
    %c0_89 = arith.constant 0 : index
    %c0_90 = arith.constant 0 : index
    %129 = vector.load %arg7[%c1_88, %c0_89, %c0_90] : memref<9x128x64xf32, #tpu.memory_space<vmem>>, vector<1x128x64xf32>
    %130 = vector.shape_cast %129 : vector<1x128x64xf32> to vector<128x64xf32>
    %cst_91 = arith.constant dense<0.000000e+00> : vector<128x64xf32>
    %131 = tpu.matmul %130, %128, %cst_91 {dimension_numbers = #tpu.dot_dimension_numbers<[1], [0], [0], [1], [0, 0, 1, 1], [], []>} : vector<128x64xf32>, vector<64x64xf32>, vector<128x64xf32> -> vector<128x64xf32>
    %132 = arith.addf %124, %131 : vector<128x64xf32>
    %c2_92 = arith.constant 2 : index
    %c0_93 = arith.constant 0 : index
    %c0_94 = arith.constant 0 : index
    %133 = vector.load %arg9[%c2_92, %c0_93, %c0_94] : memref<9x256x64xbf16, #tpu.memory_space<vmem>>, vector<1x256x64xbf16>
    %134 = vector.shape_cast %133 : vector<1x256x64xbf16> to vector<256x64xbf16>
    %135 = arith.extf %134 : vector<256x64xbf16> to vector<256x64xf32>
    %cst_95 = arith.constant dense<0.000000e+00> : vector<64x64xf32>
    %136 = tpu.matmul %117, %135, %cst_95 {dimension_numbers = #tpu.dot_dimension_numbers<[1], [0], [0], [1], [0, 0, 1, 1], [], []>} : vector<64x256xf32>, vector<256x64xf32>, vector<64x64xf32> -> vector<64x64xf32>
    %c2_96 = arith.constant 2 : index
    %c0_97 = arith.constant 0 : index
    %c0_98 = arith.constant 0 : index
    %137 = vector.load %arg7[%c2_96, %c0_97, %c0_98] : memref<9x128x64xf32, #tpu.memory_space<vmem>>, vector<1x128x64xf32>
    %138 = vector.shape_cast %137 : vector<1x128x64xf32> to vector<128x64xf32>
    %cst_99 = arith.constant dense<0.000000e+00> : vector<128x64xf32>
    %139 = tpu.matmul %138, %136, %cst_99 {dimension_numbers = #tpu.dot_dimension_numbers<[1], [0], [0], [1], [0, 0, 1, 1], [], []>} : vector<128x64xf32>, vector<64x64xf32>, vector<128x64xf32> -> vector<128x64xf32>
    %140 = arith.addf %132, %139 : vector<128x64xf32>
    %c3_100 = arith.constant 3 : index
    %c0_101 = arith.constant 0 : index
    %c0_102 = arith.constant 0 : index
    %141 = vector.load %arg9[%c3_100, %c0_101, %c0_102] : memref<9x256x64xbf16, #tpu.memory_space<vmem>>, vector<1x256x64xbf16>
    %142 = vector.shape_cast %141 : vector<1x256x64xbf16> to vector<256x64xbf16>
    %143 = arith.extf %142 : vector<256x64xbf16> to vector<256x64xf32>
    %cst_103 = arith.constant dense<0.000000e+00> : vector<64x64xf32>
    %144 = tpu.matmul %117, %143, %cst_103 {dimension_numbers = #tpu.dot_dimension_numbers<[1], [0], [0], [1], [0, 0, 1, 1], [], []>} : vector<64x256xf32>, vector<256x64xf32>, vector<64x64xf32> -> vector<64x64xf32>
    %c3_104 = arith.constant 3 : index
    %c0_105 = arith.constant 0 : index
    %c0_106 = arith.constant 0 : index
    %145 = vector.load %arg7[%c3_104, %c0_105, %c0_106] : memref<9x128x64xf32, #tpu.memory_space<vmem>>, vector<1x128x64xf32>
    %146 = vector.shape_cast %145 : vector<1x128x64xf32> to vector<128x64xf32>
    %cst_107 = arith.constant dense<0.000000e+00> : vector<128x64xf32>
    %147 = tpu.matmul %146, %144, %cst_107 {dimension_numbers = #tpu.dot_dimension_numbers<[1], [0], [0], [1], [0, 0, 1, 1], [], []>} : vector<128x64xf32>, vector<64x64xf32>, vector<128x64xf32> -> vector<128x64xf32>
    %148 = arith.addf %140, %147 : vector<128x64xf32>
    %c4_108 = arith.constant 4 : index
    %c0_109 = arith.constant 0 : index
    %c0_110 = arith.constant 0 : index
    %149 = vector.load %arg9[%c4_108, %c0_109, %c0_110] : memref<9x256x64xbf16, #tpu.memory_space<vmem>>, vector<1x256x64xbf16>
    %150 = vector.shape_cast %149 : vector<1x256x64xbf16> to vector<256x64xbf16>
    %151 = arith.extf %150 : vector<256x64xbf16> to vector<256x64xf32>
    %cst_111 = arith.constant dense<0.000000e+00> : vector<64x64xf32>
    %152 = tpu.matmul %117, %151, %cst_111 {dimension_numbers = #tpu.dot_dimension_numbers<[1], [0], [0], [1], [0, 0, 1, 1], [], []>} : vector<64x256xf32>, vector<256x64xf32>, vector<64x64xf32> -> vector<64x64xf32>
    %c4_112 = arith.constant 4 : index
    %c0_113 = arith.constant 0 : index
    %c0_114 = arith.constant 0 : index
    %153 = vector.load %arg7[%c4_112, %c0_113, %c0_114] : memref<9x128x64xf32, #tpu.memory_space<vmem>>, vector<1x128x64xf32>
    %154 = vector.shape_cast %153 : vector<1x128x64xf32> to vector<128x64xf32>
    %cst_115 = arith.constant dense<0.000000e+00> : vector<128x64xf32>
    %155 = tpu.matmul %154, %152, %cst_115 {dimension_numbers = #tpu.dot_dimension_numbers<[1], [0], [0], [1], [0, 0, 1, 1], [], []>} : vector<128x64xf32>, vector<64x64xf32>, vector<128x64xf32> -> vector<128x64xf32>
    %156 = arith.addf %148, %155 : vector<128x64xf32>
    %c5_116 = arith.constant 5 : index
    %c0_117 = arith.constant 0 : index
    %c0_118 = arith.constant 0 : index
    %157 = vector.load %arg9[%c5_116, %c0_117, %c0_118] : memref<9x256x64xbf16, #tpu.memory_space<vmem>>, vector<1x256x64xbf16>
    %158 = vector.shape_cast %157 : vector<1x256x64xbf16> to vector<256x64xbf16>
    %159 = arith.extf %158 : vector<256x64xbf16> to vector<256x64xf32>
    %cst_119 = arith.constant dense<0.000000e+00> : vector<64x64xf32>
    %160 = tpu.matmul %117, %159, %cst_119 {dimension_numbers = #tpu.dot_dimension_numbers<[1], [0], [0], [1], [0, 0, 1, 1], [], []>} : vector<64x256xf32>, vector<256x64xf32>, vector<64x64xf32> -> vector<64x64xf32>
    %c5_120 = arith.constant 5 : index
    %c0_121 = arith.constant 0 : index
    %c0_122 = arith.constant 0 : index
    %161 = vector.load %arg7[%c5_120, %c0_121, %c0_122] : memref<9x128x64xf32, #tpu.memory_space<vmem>>, vector<1x128x64xf32>
    %162 = vector.shape_cast %161 : vector<1x128x64xf32> to vector<128x64xf32>
    %cst_123 = arith.constant dense<0.000000e+00> : vector<128x64xf32>
    %163 = tpu.matmul %162, %160, %cst_123 {dimension_numbers = #tpu.dot_dimension_numbers<[1], [0], [0], [1], [0, 0, 1, 1], [], []>} : vector<128x64xf32>, vector<64x64xf32>, vector<128x64xf32> -> vector<128x64xf32>
    %164 = arith.addf %156, %163 : vector<128x64xf32>
    %c6_124 = arith.constant 6 : index
    %c0_125 = arith.constant 0 : index
    %c0_126 = arith.constant 0 : index
    %165 = vector.load %arg9[%c6_124, %c0_125, %c0_126] : memref<9x256x64xbf16, #tpu.memory_space<vmem>>, vector<1x256x64xbf16>
    %166 = vector.shape_cast %165 : vector<1x256x64xbf16> to vector<256x64xbf16>
    %167 = arith.extf %166 : vector<256x64xbf16> to vector<256x64xf32>
    %cst_127 = arith.constant dense<0.000000e+00> : vector<64x64xf32>
    %168 = tpu.matmul %117, %167, %cst_127 {dimension_numbers = #tpu.dot_dimension_numbers<[1], [0], [0], [1], [0, 0, 1, 1], [], []>} : vector<64x256xf32>, vector<256x64xf32>, vector<64x64xf32> -> vector<64x64xf32>
    %c6_128 = arith.constant 6 : index
    %c0_129 = arith.constant 0 : index
    %c0_130 = arith.constant 0 : index
    %169 = vector.load %arg7[%c6_128, %c0_129, %c0_130] : memref<9x128x64xf32, #tpu.memory_space<vmem>>, vector<1x128x64xf32>
    %170 = vector.shape_cast %169 : vector<1x128x64xf32> to vector<128x64xf32>
    %cst_131 = arith.constant dense<0.000000e+00> : vector<128x64xf32>
    %171 = tpu.matmul %170, %168, %cst_131 {dimension_numbers = #tpu.dot_dimension_numbers<[1], [0], [0], [1], [0, 0, 1, 1], [], []>} : vector<128x64xf32>, vector<64x64xf32>, vector<128x64xf32> -> vector<128x64xf32>
    %172 = arith.addf %164, %171 : vector<128x64xf32>
    %c7_132 = arith.constant 7 : index
    %c0_133 = arith.constant 0 : index
    %c0_134 = arith.constant 0 : index
    %173 = vector.load %arg9[%c7_132, %c0_133, %c0_134] : memref<9x256x64xbf16, #tpu.memory_space<vmem>>, vector<1x256x64xbf16>
    %174 = vector.shape_cast %173 : vector<1x256x64xbf16> to vector<256x64xbf16>
    %175 = arith.extf %174 : vector<256x64xbf16> to vector<256x64xf32>
    %cst_135 = arith.constant dense<0.000000e+00> : vector<64x64xf32>
    %176 = tpu.matmul %117, %175, %cst_135 {dimension_numbers = #tpu.dot_dimension_numbers<[1], [0], [0], [1], [0, 0, 1, 1], [], []>} : vector<64x256xf32>, vector<256x64xf32>, vector<64x64xf32> -> vector<64x64xf32>
    %c7_136 = arith.constant 7 : index
    %c0_137 = arith.constant 0 : index
    %c0_138 = arith.constant 0 : index
    %177 = vector.load %arg7[%c7_136, %c0_137, %c0_138] : memref<9x128x64xf32, #tpu.memory_space<vmem>>, vector<1x128x64xf32>
    %178 = vector.shape_cast %177 : vector<1x128x64xf32> to vector<128x64xf32>
    %cst_139 = arith.constant dense<0.000000e+00> : vector<128x64xf32>
    %179 = tpu.matmul %178, %176, %cst_139 {dimension_numbers = #tpu.dot_dimension_numbers<[1], [0], [0], [1], [0, 0, 1, 1], [], []>} : vector<128x64xf32>, vector<64x64xf32>, vector<128x64xf32> -> vector<128x64xf32>
    %180 = arith.addf %172, %179 : vector<128x64xf32>
    %c8_140 = arith.constant 8 : index
    %c0_141 = arith.constant 0 : index
    %c0_142 = arith.constant 0 : index
    %181 = vector.load %arg9[%c8_140, %c0_141, %c0_142] : memref<9x256x64xbf16, #tpu.memory_space<vmem>>, vector<1x256x64xbf16>
    %182 = vector.shape_cast %181 : vector<1x256x64xbf16> to vector<256x64xbf16>
    %183 = arith.extf %182 : vector<256x64xbf16> to vector<256x64xf32>
    %cst_143 = arith.constant dense<0.000000e+00> : vector<64x64xf32>
    %184 = tpu.matmul %117, %183, %cst_143 {dimension_numbers = #tpu.dot_dimension_numbers<[1], [0], [0], [1], [0, 0, 1, 1], [], []>} : vector<64x256xf32>, vector<256x64xf32>, vector<64x64xf32> -> vector<64x64xf32>
    %c8_144 = arith.constant 8 : index
    %c0_145 = arith.constant 0 : index
    %c0_146 = arith.constant 0 : index
    %185 = vector.load %arg7[%c8_144, %c0_145, %c0_146] : memref<9x128x64xf32, #tpu.memory_space<vmem>>, vector<1x128x64xf32>
    %186 = vector.shape_cast %185 : vector<1x128x64xf32> to vector<128x64xf32>
    %cst_147 = arith.constant dense<0.000000e+00> : vector<128x64xf32>
    %187 = tpu.matmul %186, %184, %cst_147 {dimension_numbers = #tpu.dot_dimension_numbers<[1], [0], [0], [1], [0, 0, 1, 1], [], []>} : vector<128x64xf32>, vector<64x64xf32>, vector<128x64xf32> -> vector<128x64xf32>
    %188 = arith.addf %180, %187 : vector<128x64xf32>
    %c0_148 = arith.constant 0 : index
    %c0_149 = arith.constant 0 : index
    %189 = vector.load %arg8[%c0_148, %c0_149] : memref<128x1xf32, #tpu.memory_space<vmem>>, vector<128x1xf32>
    %190 = vector.broadcast %189 : vector<128x1xf32> to vector<128x64xf32>
    %191 = arith.addf %188, %190 : vector<128x64xf32>
    %cst_150 = arith.constant 0.000000e+00 : f32
    %192 = vector.broadcast %cst_150 : f32 to vector<128x64xf32>
    %193 = arith.maximumf %191, %192 : vector<128x64xf32>
    %c0_151 = arith.constant 0 : index
    %c0_152 = arith.constant 0 : index
    %194 = vector.load %arg10[%c0_151, %c0_152] : memref<64x64xf32, #tpu.memory_space<vmem>>, vector<64x64xf32>
    %cst_153 = arith.constant dense<0.000000e+00> : vector<64x256xf32>
    %195 = tpu.matmul %194, %117, %cst_153 {dimension_numbers = #tpu.dot_dimension_numbers<[1], [0], [0], [1], [0, 0, 1, 1], [], []>} : vector<64x64xf32>, vector<64x256xf32>, vector<64x256xf32> -> vector<64x256xf32>
    %c0_154 = arith.constant 0 : index
    %c0_155 = arith.constant 0 : index
    %196 = vector.load %arg11[%c0_154, %c0_155] : memref<64x1xf32, #tpu.memory_space<vmem>>, vector<64x1xf32>
    %197 = vector.broadcast %196 : vector<64x1xf32> to vector<64x256xf32>
    %198 = arith.addf %195, %197 : vector<64x256xf32>
    %cst_156 = arith.constant 0.000000e+00 : f32
    %199 = vector.broadcast %cst_156 : f32 to vector<64x256xf32>
    %200 = arith.maximumf %198, %199 : vector<64x256xf32>
    %c0_157 = arith.constant 0 : index
    %c0_158 = arith.constant 0 : index
    %201 = vector.load %arg12[%c0_157, %c0_158] : memref<64x128xf32, #tpu.memory_space<vmem>>, vector<64x128xf32>
    %cst_159 = arith.constant dense<0.000000e+00> : vector<64x64xf32>
    %202 = tpu.matmul %201, %193, %cst_159 {dimension_numbers = #tpu.dot_dimension_numbers<[1], [0], [0], [1], [0, 0, 1, 1], [], []>} : vector<64x128xf32>, vector<128x64xf32>, vector<64x64xf32> -> vector<64x64xf32>
    %c0_160 = arith.constant 0 : index
    %c0_161 = arith.constant 0 : index
    %203 = vector.load %arg13[%c0_160, %c0_161] : memref<64x1xf32, #tpu.memory_space<vmem>>, vector<64x1xf32>
    %204 = vector.broadcast %203 : vector<64x1xf32> to vector<64x64xf32>
    %205 = arith.addf %202, %204 : vector<64x64xf32>
    %cst_162 = arith.constant 0.000000e+00 : f32
    %206 = vector.broadcast %cst_162 : f32 to vector<64x64xf32>
    %207 = arith.maximumf %205, %206 : vector<64x64xf32>
    %c0_163 = arith.constant 0 : index
    %c0_164 = arith.constant 0 : index
    %208 = vector.load %arg14[%c0_163, %c0_164] : memref<64x256xbf16, #tpu.memory_space<vmem>>, vector<64x256xbf16>
    %209 = arith.extf %208 : vector<64x256xbf16> to vector<64x256xf32>
    %cst_165 = arith.constant dense<0.000000e+00> : vector<64x256xf32>
    %210 = tpu.matmul %207, %209, %cst_165 {dimension_numbers = #tpu.dot_dimension_numbers<[1], [0], [0], [1], [0, 0, 1, 1], [], []>} : vector<64x64xf32>, vector<64x256xf32>, vector<64x256xf32> -> vector<64x256xf32>
    %c0_166 = arith.constant 0 : index
    %c0_167 = arith.constant 0 : index
    %211 = vector.load %arg15[%c0_166, %c0_167] : memref<72x64xf32, #tpu.memory_space<vmem>>, vector<72x64xf32>
    %cst_168 = arith.constant dense<0.000000e+00> : vector<72x256xf32>
    %212 = tpu.matmul %211, %200, %cst_168 {dimension_numbers = #tpu.dot_dimension_numbers<[1], [0], [0], [1], [0, 0, 1, 1], [], []>} : vector<72x64xf32>, vector<64x256xf32>, vector<72x256xf32> -> vector<72x256xf32>
    %c0_169 = arith.constant 0 : index
    %c0_170 = arith.constant 0 : index
    %213 = vector.load %arg16[%c0_169, %c0_170] : memref<72x64xf32, #tpu.memory_space<vmem>>, vector<72x64xf32>
    %cst_171 = arith.constant dense<0.000000e+00> : vector<72x256xf32>
    %214 = tpu.matmul %213, %210, %cst_171 {dimension_numbers = #tpu.dot_dimension_numbers<[1], [0], [0], [1], [0, 0, 1, 1], [], []>} : vector<72x64xf32>, vector<64x256xf32>, vector<72x256xf32> -> vector<72x256xf32>
    %215 = arith.addf %212, %214 : vector<72x256xf32>
    %c0_172 = arith.constant 0 : index
    %c0_173 = arith.constant 0 : index
    %216 = vector.load %arg17[%c0_172, %c0_173] : memref<72x1xf32, #tpu.memory_space<vmem>>, vector<72x1xf32>
    %217 = vector.broadcast %216 : vector<72x1xf32> to vector<72x256xf32>
    %218 = arith.addf %215, %217 : vector<72x256xf32>
    %c0_174 = arith.constant 0 : index
    %c0_175 = arith.constant 0 : index
    %219 = vector.load %arg18[%c0_174, %c0_175] : memref<72x256xf32, #tpu.memory_space<vmem>>, vector<72x256xf32>
    tpu.vector_store %arg18[%c0_174, %c0_175], %218 {strides = array<i32>} : memref<72x256xf32, #tpu.memory_space<vmem>>, vector<72x256xf32>,
    return
  }
}

</mosaic_0001>

<llo_original>
// kernel: combined_model_forward.1
$region0: #{combined_model_forward.1}
  #allocation0 [shape = 'u32[]', space=smem, size = 0x4, offset = 0x4, fixed_abs, tag = 'smem constant byte address 0x4 - core index']
  #allocation1 [shape = 'u32[72,128]{1,0:T(1,128)}', space=vmem, size = 0x9000, scoped, tag = 'internal scratch']
  %s0 = inlined_call_operand.vmem [shape: f32[320,9], index: 0, kind: input, shape index: {}]
  %s1 = inlined_call_operand.vmem [shape: f32[20,256], index: 1, kind: input, shape index: {}]
  %s2 = inlined_call_operand.vmem [shape: f32[9,32], index: 2, kind: input, shape index: {}]
  %s3 = inlined_call_operand.vmem [shape: f32[1,32], index: 3, kind: input, shape index: {}]
  %s4 = inlined_call_operand.vmem [shape: f32[9,64,32], index: 4, kind: input, shape index: {}]
  %s5 = inlined_call_operand.vmem [shape: f32[64,1], index: 5, kind: input, shape index: {}]
  %s6 = inlined_call_operand.vmem [shape: bf16[9,256,256], index: 6, kind: input, shape index: {}]
  %s7 = inlined_call_operand.vmem [shape: f32[9,128,64], index: 7, kind: input, shape index: {}]
  %s8 = inlined_call_operand.vmem [shape: f32[128,1], index: 8, kind: input, shape index: {}]
  %s9 = inlined_call_operand.vmem [shape: bf16[9,256,64], index: 9, kind: input, shape index: {}]
  %s10 = inlined_call_operand.vmem [shape: f32[64,64], index: 10, kind: input, shape index: {}]
  %s11 = inlined_call_operand.vmem [shape: f32[64,1], index: 11, kind: input, shape index: {}]
  %s12 = inlined_call_operand.vmem [shape: f32[64,128], index: 12, kind: input, shape index: {}]
  %s13 = inlined_call_operand.vmem [shape: f32[64,1], index: 13, kind: input, shape index: {}]
  %s14 = inlined_call_operand.vmem [shape: bf16[64,256], index: 14, kind: input, shape index: {}]
  %s15 = inlined_call_operand.vmem [shape: f32[72,64], index: 15, kind: input, shape index: {}]
  %s16 = inlined_call_operand.vmem [shape: f32[72,64], index: 16, kind: input, shape index: {}]
  %s17 = inlined_call_operand.vmem [shape: f32[72,1], index: 17, kind: input, shape index: {}]
  %s18 = inlined_call_operand.vmem [shape: f32[72,256], index: 18, kind: output, shape index: {}]
  %s19 = sld [smem:[#allocation0]]
  $region82: #{combined_model_forward.1} parent=0
    _
  %s21 = ssub.s32 1, %s19
  %s22 = scalar_select 0, %s21, %s19
  // Predicated region
  $region2: #{combined_model_forward.1} parent=0 // pred_check
    _
  $region3: #{combined_model_forward.1} parent=0 // pred_check_branch
    %24 = sbr.rel (0) target = $region5
  $region4: #{combined_model_forward.1} parent=0 // pred_region
    _
  $region5: #{combined_model_forward.1} parent=0 // pred_fallthru
    _
  // Predicated region
  $region6: #{combined_model_forward.1} parent=0 // pred_check
    _
  $region7: #{combined_model_forward.1} parent=0 // pred_check_branch
    %26 = sbr.rel (0) target = $region9
  $region8: #{combined_model_forward.1} parent=0 // pred_region
    _
  $region9: #{combined_model_forward.1} parent=0 // pred_fallthru
    _
  // Predicated region
  $region10: #{combined_model_forward.1} parent=0 // pred_check
    _
  $region11: #{combined_model_forward.1} parent=0 // pred_check_branch
    %28 = sbr.rel (0) target = $region13
  $region12: #{combined_model_forward.1} parent=0 // pred_region
    _
  $region13: #{combined_model_forward.1} parent=0 // pred_fallthru
    _
  // Predicated region
  $region14: #{combined_model_forward.1} parent=0 // pred_check
    _
  $region15: #{combined_model_forward.1} parent=0 // pred_check_branch
    %30 = sbr.rel (0) target = $region17
  $region16: #{combined_model_forward.1} parent=0 // pred_region
    _
  $region17: #{combined_model_forward.1} parent=0 // pred_fallthru
    _
  // Predicated region
  $region18: #{combined_model_forward.1} parent=0 // pred_check
    _
  $region19: #{combined_model_forward.1} parent=0 // pred_check_branch
    %32 = sbr.rel (0) target = $region21
  $region20: #{combined_model_forward.1} parent=0 // pred_region
    _
  $region21: #{combined_model_forward.1} parent=0 // pred_fallthru
    _
  // Predicated region
  $region22: #{combined_model_forward.1} parent=0 // pred_check
    _
  $region23: #{combined_model_forward.1} parent=0 // pred_check_branch
    %34 = sbr.rel (0) target = $region25
  $region24: #{combined_model_forward.1} parent=0 // pred_region
    _
  $region25: #{combined_model_forward.1} parent=0 // pred_fallthru
    _
  // Predicated region
  $region26: #{combined_model_forward.1} parent=0 // pred_check
    _
  $region27: #{combined_model_forward.1} parent=0 // pred_check_branch
    %36 = sbr.rel (0) target = $region29
  $region28: #{combined_model_forward.1} parent=0 // pred_region
    _
  $region29: #{combined_model_forward.1} parent=0 // pred_fallthru
    _
  // Predicated region
  $region30: #{combined_model_forward.1} parent=0 // pred_check
    _
  $region31: #{combined_model_forward.1} parent=0 // pred_check_branch
    %38 = sbr.rel (0) target = $region33
  $region32: #{combined_model_forward.1} parent=0 // pred_region
    _
  $region33: #{combined_model_forward.1} parent=0 // pred_fallthru
    _
  // Predicated region
  $region34: #{combined_model_forward.1} parent=0 // pred_check
    _
  $region35: #{combined_model_forward.1} parent=0 // pred_check_branch
    %40 = sbr.rel (0) target = $region37
  $region36: #{combined_model_forward.1} parent=0 // pred_region
    _
  $region37: #{combined_model_forward.1} parent=0 // pred_fallthru
    _
  // Predicated region
  $region38: #{combined_model_forward.1} parent=0 // pred_check
    _
  $region39: #{combined_model_forward.1} parent=0 // pred_check_branch
    %42 = sbr.rel (0) target = $region41
  $region40: #{combined_model_forward.1} parent=0 // pred_region
    _
  $region41: #{combined_model_forward.1} parent=0 // pred_fallthru
    _
  // Predicated region
  $region42: #{combined_model_forward.1} parent=0 // pred_check
    _
  $region43: #{combined_model_forward.1} parent=0 // pred_check_branch
    %44 = sbr.rel (0) target = $region45
  $region44: #{combined_model_forward.1} parent=0 // pred_region
    _
  $region45: #{combined_model_forward.1} parent=0 // pred_fallthru
    _
  // Predicated region
  $region46: #{combined_model_forward.1} parent=0 // pred_check
    _
  $region47: #{combined_model_forward.1} parent=0 // pred_check_branch
    %46 = sbr.rel (0) target = $region49
  $region48: #{combined_model_forward.1} parent=0 // pred_region
    _
  $region49: #{combined_model_forward.1} parent=0 // pred_fallthru
    _
  // Predicated region
  $region50: #{combined_model_forward.1} parent=0 // pred_check
    _
  $region51: #{combined_model_forward.1} parent=0 // pred_check_branch
    %48 = sbr.rel (0) target = $region53
  $region52: #{combined_model_forward.1} parent=0 // pred_region
    _
  $region53: #{combined_model_forward.1} parent=0 // pred_fallthru
    _
  // Predicated region
  $region54: #{combined_model_forward.1} parent=0 // pred_check
    _
  $region55: #{combined_model_forward.1} parent=0 // pred_check_branch
    %50 = sbr.rel (0) target = $region57
  $region56: #{combined_model_forward.1} parent=0 // pred_region
    _
  $region57: #{combined_model_forward.1} parent=0 // pred_fallthru
    _
  // Predicated region
  $region58: #{combined_model_forward.1} parent=0 // pred_check
    _
  $region59: #{combined_model_forward.1} parent=0 // pred_check_branch
    %52 = sbr.rel (0) target = $region61
  $region60: #{combined_model_forward.1} parent=0 // pred_region
    _
  $region61: #{combined_model_forward.1} parent=0 // pred_fallthru
    _
  // Predicated region
  $region62: #{combined_model_forward.1} parent=0 // pred_check
    _
  $region63: #{combined_model_forward.1} parent=0 // pred_check_branch
    %54 = sbr.rel (0) target = $region65
  $region64: #{combined_model_forward.1} parent=0 // pred_region
    _
  $region65: #{combined_model_forward.1} parent=0 // pred_fallthru
    _
  // Predicated region
  $region66: #{combined_model_forward.1} parent=0 // pred_check
    _
  $region67: #{combined_model_forward.1} parent=0 // pred_check_branch
    %56 = sbr.rel (0) target = $region69
  $region68: #{combined_model_forward.1} parent=0 // pred_region
    _
  $region69: #{combined_model_forward.1} parent=0 // pred_fallthru
    _
  // Predicated region
  $region70: #{combined_model_forward.1} parent=0 // pred_check
    _
  $region71: #{combined_model_forward.1} parent=0 // pred_check_branch
    %58 = sbr.rel (0) target = $region73
  $region72: #{combined_model_forward.1} parent=0 // pred_region
    _
  $region73: #{combined_model_forward.1} parent=0 // pred_fallthru
    _
  %v59 = vld [vmem:[%s0] sm:$0xff]
  %v60 = vld [vmem:[%s0 + $0x8] sm:$0xff]
  %v61 = vld [vmem:[%s0 + $0x10] sm:$0xff]
  %v62 = vld [vmem:[%s0 + $0x18] sm:$0xff]
  %v63 = vld [vmem:[%s0 + $0x20] sm:$0xff]
  %v64 = vld [vmem:[%s0 + $0x28] sm:$0xff]
  %v65 = vld [vmem:[%s0 + $0x30] sm:$0xff]
  %v66 = vld [vmem:[%s0 + $0x38] sm:$0xff]
  %v67 = vld [vmem:[%s0 + $0x40] sm:$0xff]
  %v68 = vld [vmem:[%s0 + $0x48] sm:$0xff]
  %v69 = vld [vmem:[%s0 + $0x50] sm:$0xff]
  %v70 = vld [vmem:[%s0 + $0x58] sm:$0xff]
  %v71 = vld [vmem:[%s0 + $0x60] sm:$0xff]
  %v72 = vld [vmem:[%s0 + $0x68] sm:$0xff]
  %v73 = vld [vmem:[%s0 + $0x70] sm:$0xff]
  %v74 = vld [vmem:[%s0 + $0x78] sm:$0xff]
  %v75 = vld [vmem:[%s0 + $0x80] sm:$0xff]
  %v76 = vld [vmem:[%s0 + $0x88] sm:$0xff]
  %v77 = vld [vmem:[%s0 + $0x90] sm:$0xff]
  %v78 = vld [vmem:[%s0 + $0x98] sm:$0xff]
  %v79 = vld [vmem:[%s0 + $0xa0] sm:$0xff]
  %v80 = vld [vmem:[%s0 + $0xa8] sm:$0xff]
  %v81 = vld [vmem:[%s0 + $0xb0] sm:$0xff]
  %v82 = vld [vmem:[%s0 + $0xb8] sm:$0xff]
  %v83 = vld [vmem:[%s0 + $0xc0] sm:$0xff]
  %v84 = vld [vmem:[%s0 + $0xc8] sm:$0xff]
  %v85 = vld [vmem:[%s0 + $0xd0] sm:$0xff]
  %v86 = vld [vmem:[%s0 + $0xd8] sm:$0xff]
  %v87 = vld [vmem:[%s0 + $0xe0] sm:$0xff]
  %v88 = vld [vmem:[%s0 + $0xe8] sm:$0xff]
  %v89 = vld [vmem:[%s0 + $0xf0] sm:$0xff]
  %v90 = vld [vmem:[%s0 + $0xf8] sm:$0xff]
  %v91 = vld [vmem:[%s0 + $0x100] sm:$0xff]
  %v92 = vld [vmem:[%s0 + $0x108] sm:$0xff]
  %v93 = vld [vmem:[%s0 + $0x110] sm:$0xff]
  %v94 = vld [vmem:[%s0 + $0x118] sm:$0xff]
  %v95 = vld [vmem:[%s0 + $0x120] sm:$0xff]
  %v96 = vld [vmem:[%s0 + $0x128] sm:$0xff]
  %v97 = vld [vmem:[%s0 + $0x130] sm:$0xff]
  %v98 = vld [vmem:[%s0 + $0x138] sm:$0xff]
  %v99 = vld [vmem:[%s2] sm:$0xff]
  %v100 = vld [vmem:[%s2 + $0x8] sm:$0x1]
  %v101 = vld [vmem:[%s3] sm:$0x1]
  %v103 = vperm.slane %v101, 0
  %vm105 = vcmask 72704
  %v107 = vsel %vm105, %v59, 0
  %v110 = vsel %vm105, %v60, 0
  %v113 = vsel %vm105, %v61, 0
  %v116 = vsel %vm105, %v62, 0
  %v119 = vsel %vm105, %v63, 0
  %v122 = vsel %vm105, %v64, 0
  %v125 = vsel %vm105, %v65, 0
  %v128 = vsel %vm105, %v66, 0
  %v131 = vsel %vm105, %v67, 0
  %v134 = vsel %vm105, %v68, 0
  %v137 = vsel %vm105, %v69, 0
  %v140 = vsel %vm105, %v70, 0
  %v143 = vsel %vm105, %v71, 0
  %v146 = vsel %vm105, %v72, 0
  %v149 = vsel %vm105, %v73, 0
  %v152 = vsel %vm105, %v74, 0
  %v155 = vsel %vm105, %v75, 0
  %v158 = vsel %vm105, %v76, 0
  %v161 = vsel %vm105, %v77, 0
  %v164 = vsel %vm105, %v78, 0
  %v167 = vsel %vm105, %v79, 0
  %v170 = vsel %vm105, %v80, 0
  %v173 = vsel %vm105, %v81, 0
  %v176 = vsel %vm105, %v82, 0
  %v179 = vsel %vm105, %v83, 0
  %v182 = vsel %vm105, %v84, 0
  %v185 = vsel %vm105, %v85, 0
  %v188 = vsel %vm105, %v86, 0
  %v191 = vsel %vm105, %v87, 0
  %v194 = vsel %vm105, %v88, 0
  %v197 = vsel %vm105, %v89, 0
  %v200 = vsel %vm105, %v90, 0
  %v203 = vsel %vm105, %v91, 0
  %v206 = vsel %vm105, %v92, 0
  %v209 = vsel %vm105, %v93, 0
  %v212 = vsel %vm105, %v94, 0
  %v215 = vsel %vm105, %v95, 0
  %v218 = vsel %vm105, %v96, 0
  %v221 = vsel %vm105, %v97, 0
  %v224 = vsel %vm105, %v98, 0
  %vm226 = vcmask 1040384
  %v228 = vsel %vm226, %v100, 0
  %230 = vmatpush.msra.mxu0 0.0
  %231 = vmatpush.msra.mxu0 0.0
  %232 = vmatpush.msra.mxu0 0.0
  %233 = vmatpush.msra.mxu0 0.0
  %234 = vmatpush.msra.mxu0 0.0
  %235 = vmatpush.msra.mxu0 0.0
  %236 = vmatpush.msra.mxu0 0.0
  %237 = vmatpush.msra.mxu0 0.0
  %238 = vmatpush.msra.mxu0 0.0
  %239 = vmatpush.msra.mxu0 0.0
  %240 = vmatpush.msra.mxu0 0.0
  %241 = vmatpush.msra.mxu0 0.0
  %242 = vmatpush.msra.mxu0 0.0
  %243 = vmatpush.msra.mxu0 0.0
  %244 = vmatpush.msra.mxu0 %v228
  %245 = vmatpush.msra.mxu0 %v99
  %246 = vmatmul.f32.gmra.mxu0 %v107
  %v247 = vpop.f32.mrf.mxu0
  %v248 = vadd.f32 %v103, %v247
  %249 = vmatmul.f32.gmra.mxu0 %v110
  %v250 = vpop.f32.mrf.mxu0
  %v251 = vadd.f32 %v103, %v250
  %252 = vmatmul.f32.gmra.mxu0 %v113
  %v253 = vpop.f32.mrf.mxu0
  %v254 = vadd.f32 %v103, %v253
  %255 = vmatmul.f32.gmra.mxu0 %v116
  %v256 = vpop.f32.mrf.mxu0
  %v257 = vadd.f32 %v103, %v256
  %258 = vmatmul.f32.gmra.mxu0 %v119
  %v259 = vpop.f32.mrf.mxu0
  %v260 = vadd.f32 %v103, %v259
  %261 = vmatmul.f32.gmra.mxu0 %v122
  %v262 = vpop.f32.mrf.mxu0
  %v263 = vadd.f32 %v103, %v262
  %264 = vmatmul.f32.gmra.mxu0 %v125
  %v265 = vpop.f32.mrf.mxu0
  %v266 = vadd.f32 %v103, %v265
  %267 = vmatmul.f32.gmra.mxu0 %v128
  %v268 = vpop.f32.mrf.mxu0
  %v269 = vadd.f32 %v103, %v268
  %270 = vmatmul.f32.gmra.mxu0 %v131
  %v271 = vpop.f32.mrf.mxu0
  %v272 = vadd.f32 %v103, %v271
  %273 = vmatmul.f32.gmra.mxu0 %v134
  %v274 = vpop.f32.mrf.mxu0
  %v275 = vadd.f32 %v103, %v274
  %276 = vmatmul.f32.gmra.mxu0 %v137
  %v277 = vpop.f32.mrf.mxu0
  %v278 = vadd.f32 %v103, %v277
  %279 = vmatmul.f32.gmra.mxu0 %v140
  %v280 = vpop.f32.mrf.mxu0
  %v281 = vadd.f32 %v103, %v280
  %282 = vmatmul.f32.gmra.mxu0 %v143
  %v283 = vpop.f32.mrf.mxu0
  %v284 = vadd.f32 %v103, %v283
  %285 = vmatmul.f32.gmra.mxu0 %v146
  %v286 = vpop.f32.mrf.mxu0
  %v287 = vadd.f32 %v103, %v286
  %288 = vmatmul.f32.gmra.mxu0 %v149
  %v289 = vpop.f32.mrf.mxu0
  %v290 = vadd.f32 %v103, %v289
  %291 = vmatmul.f32.gmra.mxu0 %v152
  %v292 = vpop.f32.mrf.mxu0
  %v293 = vadd.f32 %v103, %v292
  %294 = vmatmul.f32.gmra.mxu0 %v155
  %v295 = vpop.f32.mrf.mxu0
  %v296 = vadd.f32 %v103, %v295
  %297 = vmatmul.f32.gmra.mxu0 %v158
  %v298 = vpop.f32.mrf.mxu0
  %v299 = vadd.f32 %v103, %v298
  %300 = vmatmul.f32.gmra.mxu0 %v161
  %v301 = vpop.f32.mrf.mxu0
  %v302 = vadd.f32 %v103, %v301
  %303 = vmatmul.f32.gmra.mxu0 %v164
  %v304 = vpop.f32.mrf.mxu0
  %v305 = vadd.f32 %v103, %v304
  %306 = vmatmul.f32.gmra.mxu0 %v167
  %v307 = vpop.f32.mrf.mxu0
  %v308 = vadd.f32 %v103, %v307
  %309 = vmatmul.f32.gmra.mxu0 %v170
  %v310 = vpop.f32.mrf.mxu0
  %v311 = vadd.f32 %v103, %v310
  %312 = vmatmul.f32.gmra.mxu0 %v173
  %v313 = vpop.f32.mrf.mxu0
  %v314 = vadd.f32 %v103, %v313
  %315 = vmatmul.f32.gmra.mxu0 %v176
  %v316 = vpop.f32.mrf.mxu0
  %v317 = vadd.f32 %v103, %v316
  %318 = vmatmul.f32.gmra.mxu0 %v179
  %v319 = vpop.f32.mrf.mxu0
  %v320 = vadd.f32 %v103, %v319
  %321 = vmatmul.f32.gmra.mxu0 %v182
  %v322 = vpop.f32.mrf.mxu0
  %v323 = vadd.f32 %v103, %v322
  %324 = vmatmul.f32.gmra.mxu0 %v185
  %v325 = vpop.f32.mrf.mxu0
  %v326 = vadd.f32 %v103, %v325
  %327 = vmatmul.f32.gmra.mxu0 %v188
  %v328 = vpop.f32.mrf.mxu0
  %v329 = vadd.f32 %v103, %v328
  %330 = vmatmul.f32.gmra.mxu0 %v191
  %v331 = vpop.f32.mrf.mxu0
  %v332 = vadd.f32 %v103, %v331
  %333 = vmatmul.f32.gmra.mxu0 %v194
  %v334 = vpop.f32.mrf.mxu0
  %v335 = vadd.f32 %v103, %v334
  %336 = vmatmul.f32.gmra.mxu0 %v197
  %v337 = vpop.f32.mrf.mxu0
  %v338 = vadd.f32 %v103, %v337
  %339 = vmatmul.f32.gmra.mxu0 %v200
  %v340 = vpop.f32.mrf.mxu0
  %v341 = vadd.f32 %v103, %v340
  %342 = vmatmul.f32.gmra.mxu0 %v203
  %v343 = vpop.f32.mrf.mxu0
  %v344 = vadd.f32 %v103, %v343
  %345 = vmatmul.f32.gmra.mxu0 %v206
  %v346 = vpop.f32.mrf.mxu0
  %v347 = vadd.f32 %v103, %v346
  %348 = vmatmul.f32.gmra.mxu0 %v209
  %v349 = vpop.f32.mrf.mxu0
  %v350 = vadd.f32 %v103, %v349
  %351 = vmatmul.f32.gmra.mxu0 %v212
  %v352 = vpop.f32.mrf.mxu0
  %v353 = vadd.f32 %v103, %v352
  %354 = vmatmul.f32.gmra.mxu0 %v215
  %v355 = vpop.f32.mrf.mxu0
  %v356 = vadd.f32 %v103, %v355
  %357 = vmatmul.f32.gmra.mxu0 %v218
  %v358 = vpop.f32.mrf.mxu0
  %v359 = vadd.f32 %v103, %v358
  %360 = vmatmul.f32.gmra.mxu0 %v221
  %v361 = vpop.f32.mrf.mxu0
  %v362 = vadd.f32 %v103, %v361
  %363 = vmatmul.f32.gmra.mxu0 %v224
  %v364 = vpop.f32.mrf.mxu0
  %v365 = vadd.f32 %v103, %v364
  %366 = vdwg.mxu0
  %vm370 = vcmask 1043456
  %v371 = vrot.slane %v254, 4
  %v372 = vrot.slane %v257, 4
  %v373 = vsel %vm370, %v371, %v372
  %v374 = vrot.slane %v260, 4
  %v375 = vsel %vm370, %v372, %v374
  %v379 = vmax.f32 %v248, %v373
  %v380 = vmax.f32 %v251, %v375
  %v381 = vmax.f32 %v254, %v374
  %v382 = vmax.f32 %v379, %v263
  %v383 = vmax.f32 %v380, %v266
  %v384 = vmax.f32 %v381, %v269
  %v388 = vrot.slane %v269, 4
  %v389 = vrot.slane %v272, 4
  %v390 = vsel %vm370, %v388, %v389
  %v391 = vrot.slane %v275, 4
  %v392 = vsel %vm370, %v389, %v391
  %v396 = vmax.f32 %v382, %v390
  %v397 = vmax.f32 %v383, %v392
  %v398 = vmax.f32 %v384, %v391
  %v399 = vmax.f32 %v396, %v278
  %v400 = vmax.f32 %v397, %v281
  %v401 = vmax.f32 %v398, %v284
  %v405 = vrot.slane %v284, 4
  %v406 = vrot.slane %v287, 4
  %v407 = vsel %vm370, %v405, %v406
  %v408 = vrot.slane %v290, 4
  %v409 = vsel %vm370, %v406, %v408
  %v413 = vmax.f32 %v399, %v407
  %v414 = vmax.f32 %v400, %v409
  %v415 = vmax.f32 %v401, %v408
  %v416 = vmax.f32 %v413, %v293
  %v417 = vmax.f32 %v414, %v296
  %v418 = vmax.f32 %v415, %v299
  %v422 = vrot.slane %v299, 4
  %v423 = vrot.slane %v302, 4
  %v424 = vsel %vm370, %v422, %v423
  %v425 = vrot.slane %v305, 4
  %v426 = vsel %vm370, %v423, %v425
  %v430 = vmax.f32 %v416, %v424
  %v431 = vmax.f32 %v417, %v426
  %v432 = vmax.f32 %v418, %v425
  %v433 = vmax.f32 %v430, %v308
  %v434 = vmax.f32 %v431, %v311
  %v435 = vmax.f32 %v432, %v314
  %v439 = vrot.slane %v314, 4
  %v440 = vrot.slane %v317, 4
  %v441 = vsel %vm370, %v439, %v440
  %v442 = vrot.slane %v320, 4
  %v443 = vsel %vm370, %v440, %v442
  %v447 = vmax.f32 %v433, %v441
  %v448 = vmax.f32 %v434, %v443
  %v449 = vmax.f32 %v435, %v442
  %v450 = vmax.f32 %v447, %v323
  %v451 = vmax.f32 %v448, %v326
  %v452 = vmax.f32 %v449, %v329
  %v456 = vrot.slane %v329, 4
  %v457 = vrot.slane %v332, 4
  %v458 = vsel %vm370, %v456, %v457
  %v459 = vrot.slane %v335, 4
  %v460 = vsel %vm370, %v457, %v459
  %v464 = vmax.f32 %v450, %v458
  %v465 = vmax.f32 %v451, %v460
  %v466 = vmax.f32 %v452, %v459
  %v467 = vmax.f32 %v464, %v338
  %v468 = vmax.f32 %v465, %v341
  %v469 = vmax.f32 %v466, %v344
  %v473 = vrot.slane %v344, 4
  %v474 = vrot.slane %v347, 4
  %v475 = vsel %vm370, %v473, %v474
  %v476 = vrot.slane %v350, 4
  %v477 = vsel %vm370, %v474, %v476
  %v481 = vmax.f32 %v467, %v475
  %v482 = vmax.f32 %v468, %v477
  %v483 = vmax.f32 %v469, %v476
  %v484 = vmax.f32 %v481, %v353
  %v485 = vmax.f32 %v482, %v356
  %v486 = vmax.f32 %v483, %v359
  %v490 = vrot.slane %v359, 4
  %v491 = vrot.slane %v362, 4
  %v492 = vsel %vm370, %v490, %v491
  %v493 = vrot.slane %v365, 4
  %v494 = vsel %vm370, %v491, %v493
  %v498 = vmax.f32 %v484, %v492
  %v499 = vmax.f32 %v485, %v494
  %v500 = vmax.f32 %v486, %v493
  %v501 = vmax.f32 %v498, 0.0
  %v502 = vmax.f32 %v499, 0.0
  %v503 = vmax.f32 %v500, 0.0
  %504 = vxpose.xlu0.b32.start [1/16] %v501, 128
  %505 = vxpose.xlu0.b32.cont [2/16] %v502, 128
  %506 = vxpose.xlu0.b32.cont [3/16] %v503, 128
  %507 = vxpose.xlu0.b32.cont [4/16] 0.0, 128
  %508 = vxpose.xlu0.b32.cont [5/16] 0.0, 128
  %509 = vxpose.xlu0.b32.cont [6/16] 0.0, 128
  %510 = vxpose.xlu0.b32.cont [7/16] 0.0, 128
  %511 = vxpose.xlu0.b32.cont [8/16] 0.0, 128
  %512 = vxpose.xlu0.b32.cont [9/16] 0.0, 128
  %513 = vxpose.xlu0.b32.cont [10/16] 0.0, 128
  %514 = vxpose.xlu0.b32.cont [11/16] 0.0, 128
  %515 = vxpose.xlu0.b32.cont [12/16] 0.0, 128
  %516 = vxpose.xlu0.b32.cont [13/16] 0.0, 128
  %517 = vxpose.xlu0.b32.cont [14/16] 0.0, 128
  %518 = vxpose.xlu0.b32.cont [15/16] 0.0, 128
  %519 = vxpose.xlu0.b32.end [16/16] 0.0, 128
  %v520 = vpop.trf.xlu0
  %v521 = vpop.trf.xlu0
  %v522 = vpop.trf.xlu0
  %v523 = vpop.trf.xlu0
  %v524 = vpop.trf.xlu0
  %v525 = vpop.trf.xlu0
  %v526 = vpop.trf.xlu0
  %v527 = vpop.trf.xlu0
  %v528 = vpop.trf.xlu0
  %v529 = vpop.trf.xlu0
  %v530 = vpop.trf.xlu0
  %v531 = vpop.trf.xlu0
  %v532 = vpop.trf.xlu0
  %v533 = vpop.trf.xlu0
  %v534 = vpop.trf.xlu0
  %v535 = vpop.trf.xlu0
  %v536 = vld [vmem:[%s1] sm:$0xff]
  %v537 = vld [vmem:[%s1 + $0x8] sm:$0xff]
  %v538 = vld [vmem:[%s1 + $0x10] sm:$0xff]
  %v539 = vld [vmem:[%s1 + $0x18] sm:$0xff]
  %v540 = vld [vmem:[%s1 + $0x20] sm:$0xf]
  %v541 = vld [vmem:[%s1 + $0x28] sm:$0xf]
  %vm542 = vcmask 162816
  %v544 = vsel %vm542, %v520, 0
  %v547 = vsel %vm542, %v521, 0
  %v550 = vsel %vm542, %v522, 0
  %v553 = vsel %vm542, %v523, 0
  %v556 = vsel %vm370, %v540, 0
  %v559 = vsel %vm370, %v541, 0
  %561 = vmatpush.msra.mxu0 0.0
  %562 = vmatpush.msra.mxu0 0.0
  %563 = vmatpush.msra.mxu0 0.0
  %564 = vmatpush.msra.mxu0 0.0
  %565 = vmatpush.msra.mxu0 0.0
  %566 = vmatpush.msra.mxu0 0.0
  %567 = vmatpush.msra.mxu0 0.0
  %568 = vmatpush.msra.mxu0 0.0
  %569 = vmatpush.msra.mxu0 0.0
  %570 = vmatpush.msra.mxu0 0.0
  %571 = vmatpush.msra.mxu0 0.0
  %572 = vmatpush.msra.mxu0 0.0
  %573 = vmatpush.msra.mxu0 0.0
  %574 = vmatpush.msra.mxu0 %v556
  %575 = vmatpush.msra.mxu0 %v538
  %576 = vmatpush.msra.mxu0 %v536
  %577 = vmatmul.f32.gmra.mxu0 %v544
  %v578 = vpop.f32.mrf.mxu0
  %v579 = vadd.f32 0.0, %v578
  %580 = vmatmul.f32.gmra.mxu0 %v547
  %v581 = vpop.f32.mrf.mxu0
  %v582 = vadd.f32 0.0, %v581
  %583 = vmatmul.f32.gmra.mxu0 %v550
  %v584 = vpop.f32.mrf.mxu0
  %v585 = vadd.f32 0.0, %v584
  %586 = vmatmul.f32.gmra.mxu0 %v553
  %v587 = vpop.f32.mrf.mxu0
  %v588 = vadd.f32 0.0, %v587
  %589 = vdwg.mxu0
  %590 = vmatpush.msra.mxu0 0.0
  %591 = vmatpush.msra.mxu0 0.0
  %592 = vmatpush.msra.mxu0 0.0
  %593 = vmatpush.msra.mxu0 0.0
  %594 = vmatpush.msra.mxu0 0.0
  %595 = vmatpush.msra.mxu0 0.0
  %596 = vmatpush.msra.mxu0 0.0
  %597 = vmatpush.msra.mxu0 0.0
  %598 = vmatpush.msra.mxu0 0.0
  %599 = vmatpush.msra.mxu0 0.0
  %600 = vmatpush.msra.mxu0 0.0
  %601 = vmatpush.msra.mxu0 0.0
  %602 = vmatpush.msra.mxu0 0.0
  %603 = vmatpush.msra.mxu0 %v559
  %604 = vmatpush.msra.mxu0 %v539
  %605 = vmatpush.msra.mxu0 %v537
  %606 = vmatmul.f32.gmra.mxu0 %v544
  %v607 = vpop.f32.mrf.mxu0
  %v608 = vadd.f32 0.0, %v607
  %609 = vmatmul.f32.gmra.mxu0 %v547
  %v610 = vpop.f32.mrf.mxu0
  %v611 = vadd.f32 0.0, %v610
  %612 = vmatmul.f32.gmra.mxu0 %v550
  %v613 = vpop.f32.mrf.mxu0
  %v614 = vadd.f32 0.0, %v613
  %615 = vmatmul.f32.gmra.mxu0 %v553
  %v616 = vpop.f32.mrf.mxu0
  %v617 = vadd.f32 0.0, %v616
  %618 = vdwg.mxu0
  %v619 = vld [vmem:[%s6] sm:$0xff]
  %v620 = vld [vmem:[%s6 + $0x8] sm:$0xff]
  %v621 = vld [vmem:[%s6 + $0x10] sm:$0xff]
  %v622 = vld [vmem:[%s6 + $0x18] sm:$0xff]
  %v623 = vld [vmem:[%s6 + $0x20] sm:$0xff]
  %v624 = vld [vmem:[%s6 + $0x28] sm:$0xff]
  %v625 = vld [vmem:[%s6 + $0x30] sm:$0xff]
  %v626 = vld [vmem:[%s6 + $0x38] sm:$0xff]
  %v627 = vld [vmem:[%s6 + $0x40] sm:$0xff]
  %v628 = vld [vmem:[%s6 + $0x48] sm:$0xff]
  %v629 = vld [vmem:[%s6 + $0x50] sm:$0xff]
  %v630 = vld [vmem:[%s6 + $0x58] sm:$0xff]
  %v631 = vld [vmem:[%s6 + $0x60] sm:$0xff]
  %v632 = vld [vmem:[%s6 + $0x68] sm:$0xff]
  %v633 = vld [vmem:[%s6 + $0x70] sm:$0xff]
  %v634 = vld [vmem:[%s6 + $0x78] sm:$0xff]
  %v635 = vld [vmem:[%s6 + $0x80] sm:$0xff]
  %v636 = vld [vmem:[%s6 + $0x88] sm:$0xff]
  %v637 = vld [vmem:[%s6 + $0x90] sm:$0xff]
  %v638 = vld [vmem:[%s6 + $0x98] sm:$0xff]
  %v639 = vld [vmem:[%s6 + $0xa0] sm:$0xff]
  %v640 = vld [vmem:[%s6 + $0xa8] sm:$0xff]
  %v641 = vld [vmem:[%s6 + $0xb0] sm:$0xff]
  %v642 = vld [vmem:[%s6 + $0xb8] sm:$0xff]
  %v643 = vld [vmem:[%s6 + $0xc0] sm:$0xff]
  %v644 = vld [vmem:[%s6 + $0xc8] sm:$0xff]
  %v645 = vld [vmem:[%s6 + $0xd0] sm:$0xff]
  %v646 = vld [vmem:[%s6 + $0xd8] sm:$0xff]
  %v647 = vld [vmem:[%s6 + $0xe0] sm:$0xff]
  %v648 = vld [vmem:[%s6 + $0xe8] sm:$0xff]
  %v649 = vld [vmem:[%s6 + $0xf0] sm:$0xff]
  %v650 = vld [vmem:[%s6 + $0xf8] sm:$0xff]
  %v651 = vunpack.c.l.bf16 %v619
  %v652 = vunpack.c.h.bf16 %v619
  %v653 = vunpack.c.l.bf16 %v620
  %v654 = vunpack.c.h.bf16 %v620
  %v655 = vunpack.c.l.bf16 %v621
  %v656 = vunpack.c.h.bf16 %v621
  %v657 = vunpack.c.l.bf16 %v622
  %v658 = vunpack.c.h.bf16 %v622
  %v659 = vunpack.c.l.bf16 %v623
  %v660 = vunpack.c.h.bf16 %v623
  %v661 = vunpack.c.l.bf16 %v624
  %v662 = vunpack.c.h.bf16 %v624
  %v663 = vunpack.c.l.bf16 %v625
  %v664 = vunpack.c.h.bf16 %v625
  %v665 = vunpack.c.l.bf16 %v626
  %v666 = vunpack.c.h.bf16 %v626
  %v667 = vunpack.c.l.bf16 %v627
  %v668 = vunpack.c.h.bf16 %v627
  %v669 = vunpack.c.l.bf16 %v628
  %v670 = vunpack.c.h.bf16 %v628
  %v671 = vunpack.c.l.bf16 %v629
  %v672 = vunpack.c.h.bf16 %v629
  %v673 = vunpack.c.l.bf16 %v630
  %v674 = vunpack.c.h.bf16 %v630
  %v675 = vunpack.c.l.bf16 %v631
  %v676 = vunpack.c.h.bf16 %v631
  %v677 = vunpack.c.l.bf16 %v632
  %v678 = vunpack.c.h.bf16 %v632
  %v679 = vunpack.c.l.bf16 %v633
  %v680 = vunpack.c.h.bf16 %v633
  %v681 = vunpack.c.l.bf16 %v634
  %v682 = vunpack.c.h.bf16 %v634
  %v683 = vunpack.c.l.bf16 %v635
  %v684 = vunpack.c.h.bf16 %v635
  %v685 = vunpack.c.l.bf16 %v636
  %v686 = vunpack.c.h.bf16 %v636
  %v687 = vunpack.c.l.bf16 %v637
  %v688 = vunpack.c.h.bf16 %v637
  %v689 = vunpack.c.l.bf16 %v638
  %v690 = vunpack.c.h.bf16 %v638
  %v691 = vunpack.c.l.bf16 %v639
  %v692 = vunpack.c.h.bf16 %v639
  %v693 = vunpack.c.l.bf16 %v640
  %v694 = vunpack.c.h.bf16 %v640
  %v695 = vunpack.c.l.bf16 %v641
  %v696 = vunpack.c.h.bf16 %v641
  %v697 = vunpack.c.l.bf16 %v642
  %v698 = vunpack.c.h.bf16 %v642
  %v699 = vunpack.c.l.bf16 %v643
  %v700 = vunpack.c.h.bf16 %v643
  %v701 = vunpack.c.l.bf16 %v644
  %v702 = vunpack.c.h.bf16 %v644
  %v703 = vunpack.c.l.bf16 %v645
  %v704 = vunpack.c.h.bf16 %v645
  %v705 = vunpack.c.l.bf16 %v646
  %v706 = vunpack.c.h.bf16 %v646
  %v707 = vunpack.c.l.bf16 %v647
  %v708 = vunpack.c.h.bf16 %v647
  %v709 = vunpack.c.l.bf16 %v648
  %v710 = vunpack.c.h.bf16 %v648
  %v711 = vunpack.c.l.bf16 %v649
  %v712 = vunpack.c.h.bf16 %v649
  %v713 = vunpack.c.l.bf16 %v650
  %v714 = vunpack.c.h.bf16 %v650
  %715 = vmatpush.msra.mxu0 %v681
  %716 = vmatpush.msra.mxu0 %v679
  %717 = vmatpush.msra.mxu0 %v677
  %718 = vmatpush.msra.mxu0 %v675
  %719 = vmatpush.msra.mxu0 %v673
  %720 = vmatpush.msra.mxu0 %v671
  %721 = vmatpush.msra.mxu0 %v669
  %722 = vmatpush.msra.mxu0 %v667
  %723 = vmatpush.msra.mxu0 %v665
  %724 = vmatpush.msra.mxu0 %v663
  %725 = vmatpush.msra.mxu0 %v661
  %726 = vmatpush.msra.mxu0 %v659
  %727 = vmatpush.msra.mxu0 %v657
  %728 = vmatpush.msra.mxu0 %v655
  %729 = vmatpush.msra.mxu0 %v653
  %730 = vmatpush.msra.mxu0 %v651
  %731 = vmatmul.f32.gmra.mxu0 %v579
  %v732 = vpop.f32.mrf.mxu0
  %v733 = vadd.f32 0.0, %v732
  %734 = vmatmul.f32.gmra.mxu0 %v582
  %v735 = vpop.f32.mrf.mxu0
  %v736 = vadd.f32 0.0, %v735
  %737 = vmatmul.f32.gmra.mxu0 %v585
  %v738 = vpop.f32.mrf.mxu0
  %v739 = vadd.f32 0.0, %v738
  %740 = vmatmul.f32.gmra.mxu0 %v588
  %v741 = vpop.f32.mrf.mxu0
  %v742 = vadd.f32 0.0, %v741
  %743 = vdwg.mxu0
  %744 = vmatpush.msra.mxu0 %v713
  %745 = vmatpush.msra.mxu0 %v711
  %746 = vmatpush.msra.mxu0 %v709
  %747 = vmatpush.msra.mxu0 %v707
  %748 = vmatpush.msra.mxu0 %v705
  %749 = vmatpush.msra.mxu0 %v703
  %750 = vmatpush.msra.mxu0 %v701
  %751 = vmatpush.msra.mxu0 %v699
  %752 = vmatpush.msra.mxu0 %v697
  %753 = vmatpush.msra.mxu0 %v695
  %754 = vmatpush.msra.mxu0 %v693
  %755 = vmatpush.msra.mxu0 %v691
  %756 = vmatpush.msra.mxu0 %v689
  %757 = vmatpush.msra.mxu0 %v687
  %758 = vmatpush.msra.mxu0 %v685
  %759 = vmatpush.msra.mxu0 %v683
  %760 = vmatmul.f32.gmra.mxu0 %v608
  %v761 = vpop.f32.mrf.mxu0
  %v762 = vadd.f32 %v733, %v761
  %763 = vmatmul.f32.gmra.mxu0 %v611
  %v764 = vpop.f32.mrf.mxu0
  %v765 = vadd.f32 %v736, %v764
  %766 = vmatmul.f32.gmra.mxu0 %v614
  %v767 = vpop.f32.mrf.mxu0
  %v768 = vadd.f32 %v739, %v767
  %769 = vmatmul.f32.gmra.mxu0 %v617
  %v770 = vpop.f32.mrf.mxu0
  %v771 = vadd.f32 %v742, %v770
  %772 = vdwg.mxu0
  %773 = vmatpush.msra.mxu0 %v682
  %774 = vmatpush.msra.mxu0 %v680
  %775 = vmatpush.msra.mxu0 %v678
  %776 = vmatpush.msra.mxu0 %v676
  %777 = vmatpush.msra.mxu0 %v674
  %778 = vmatpush.msra.mxu0 %v672
  %779 = vmatpush.msra.mxu0 %v670
  %780 = vmatpush.msra.mxu0 %v668
  %781 = vmatpush.msra.mxu0 %v666
  %782 = vmatpush.msra.mxu0 %v664
  %783 = vmatpush.msra.mxu0 %v662
  %784 = vmatpush.msra.mxu0 %v660
  %785 = vmatpush.msra.mxu0 %v658
  %786 = vmatpush.msra.mxu0 %v656
  %787 = vmatpush.msra.mxu0 %v654
  %788 = vmatpush.msra.mxu0 %v652
  %789 = vmatmul.f32.gmra.mxu0 %v579
  %v790 = vpop.f32.mrf.mxu0
  %v791 = vadd.f32 0.0, %v790
  %792 = vmatmul.f32.gmra.mxu0 %v582
  %v793 = vpop.f32.mrf.mxu0
  %v794 = vadd.f32 0.0, %v793
  %795 = vmatmul.f32.gmra.mxu0 %v585
  %v796 = vpop.f32.mrf.mxu0
  %v797 = vadd.f32 0.0, %v796
  %798 = vmatmul.f32.gmra.mxu0 %v588
  %v799 = vpop.f32.mrf.mxu0
  %v800 = vadd.f32 0.0, %v799
  %801 = vdwg.mxu0
  %802 = vmatpush.msra.mxu0 %v714
  %803 = vmatpush.msra.mxu0 %v712
  %804 = vmatpush.msra.mxu0 %v710
  %805 = vmatpush.msra.mxu0 %v708
  %806 = vmatpush.msra.mxu0 %v706
  %807 = vmatpush.msra.mxu0 %v704
  %808 = vmatpush.msra.mxu0 %v702
  %809 = vmatpush.msra.mxu0 %v700
  %810 = vmatpush.msra.mxu0 %v698
  %811 = vmatpush.msra.mxu0 %v696
  %812 = vmatpush.msra.mxu0 %v694
  %813 = vmatpush.msra.mxu0 %v692
  %814 = vmatpush.msra.mxu0 %v690
  %815 = vmatpush.msra.mxu0 %v688
  %816 = vmatpush.msra.mxu0 %v686
  %817 = vmatpush.msra.mxu0 %v684
  %818 = vmatmul.f32.gmra.mxu0 %v608
  %v819 = vpop.f32.mrf.mxu0
  %v820 = vadd.f32 %v791, %v819
  %821 = vmatmul.f32.gmra.mxu0 %v611
  %v822 = vpop.f32.mrf.mxu0
  %v823 = vadd.f32 %v794, %v822
  %824 = vmatmul.f32.gmra.mxu0 %v614
  %v825 = vpop.f32.mrf.mxu0
  %v826 = vadd.f32 %v797, %v825
  %827 = vmatmul.f32.gmra.mxu0 %v617
  %v828 = vpop.f32.mrf.mxu0
  %v829 = vadd.f32 %v800, %v828
  %830 = vdwg.mxu0
  %v831 = vld [vmem:[%s4] sm:$0xff]
  %v832 = vld [vmem:[%s4 + $0x8] sm:$0xff]
  %v833 = vld [vmem:[%s4 + $0x10] sm:$0xff]
  %v834 = vld [vmem:[%s4 + $0x18] sm:$0xff]
  %v835 = vld [vmem:[%s4 + $0x20] sm:$0xff]
  %v836 = vld [vmem:[%s4 + $0x28] sm:$0xff]
  %v837 = vld [vmem:[%s4 + $0x30] sm:$0xff]
  %v838 = vld [vmem:[%s4 + $0x38] sm:$0xff]
  %s839 = scalar_lea.vmem %s6, 256
  %v840 = vld [vmem:[%s839] sm:$0xff]
  %v841 = vld [vmem:[%s839 + $0x8] sm:$0xff]
  %v842 = vld [vmem:[%s839 + $0x10] sm:$0xff]
  %v843 = vld [vmem:[%s839 + $0x18] sm:$0xff]
  %v844 = vld [vmem:[%s839 + $0x20] sm:$0xff]
  %v845 = vld [vmem:[%s839 + $0x28] sm:$0xff]
  %v846 = vld [vmem:[%s839 + $0x30] sm:$0xff]
  %v847 = vld [vmem:[%s839 + $0x38] sm:$0xff]
  %v848 = vld [vmem:[%s839 + $0x40] sm:$0xff]
  %v849 = vld [vmem:[%s839 + $0x48] sm:$0xff]
  %v850 = vld [vmem:[%s839 + $0x50] sm:$0xff]
  %v851 = vld [vmem:[%s839 + $0x58] sm:$0xff]
  %v852 = vld [vmem:[%s839 + $0x60] sm:$0xff]
  %v853 = vld [vmem:[%s839 + $0x68] sm:$0xff]
  %v854 = vld [vmem:[%s839 + $0x70] sm:$0xff]
  %v855 = vld [vmem:[%s839 + $0x78] sm:$0xff]
  %v856 = vld [vmem:[%s839 + $0x80] sm:$0xff]
  %v857 = vld [vmem:[%s839 + $0x88] sm:$0xff]
  %v858 = vld [vmem:[%s839 + $0x90] sm:$0xff]
  %v859 = vld [vmem:[%s839 + $0x98] sm:$0xff]
  %v860 = vld [vmem:[%s839 + $0xa0] sm:$0xff]
  %v861 = vld [vmem:[%s839 + $0xa8] sm:$0xff]
  %v862 = vld [vmem:[%s839 + $0xb0] sm:$0xff]
  %v863 = vld [vmem:[%s839 + $0xb8] sm:$0xff]
  %v864 = vld [vmem:[%s839 + $0xc0] sm:$0xff]
  %v865 = vld [vmem:[%s839 + $0xc8] sm:$0xff]
  %v866 = vld [vmem:[%s839 + $0xd0] sm:$0xff]
  %v867 = vld [vmem:[%s839 + $0xd8] sm:$0xff]
  %v868 = vld [vmem:[%s839 + $0xe0] sm:$0xff]
  %v869 = vld [vmem:[%s839 + $0xe8] sm:$0xff]
  %v870 = vld [vmem:[%s839 + $0xf0] sm:$0xff]
  %v871 = vld [vmem:[%s839 + $0xf8] sm:$0xff]
  %v872 = vunpack.c.l.bf16 %v840
  %v873 = vunpack.c.h.bf16 %v840
  %v874 = vunpack.c.l.bf16 %v841
  %v875 = vunpack.c.h.bf16 %v841
  %v876 = vunpack.c.l.bf16 %v842
  %v877 = vunpack.c.h.bf16 %v842
  %v878 = vunpack.c.l.bf16 %v843
  %v879 = vunpack.c.h.bf16 %v843
  %v880 = vunpack.c.l.bf16 %v844
  %v881 = vunpack.c.h.bf16 %v844
  %v882 = vunpack.c.l.bf16 %v845
  %v883 = vunpack.c.h.bf16 %v845
  %v884 = vunpack.c.l.bf16 %v846
  %v885 = vunpack.c.h.bf16 %v846
  %v886 = vunpack.c.l.bf16 %v847
  %v887 = vunpack.c.h.bf16 %v847
  %v888 = vunpack.c.l.bf16 %v848
  %v889 = vunpack.c.h.bf16 %v848
  %v890 = vunpack.c.l.bf16 %v849
  %v891 = vunpack.c.h.bf16 %v849
  %v892 = vunpack.c.l.bf16 %v850
  %v893 = vunpack.c.h.bf16 %v850
  %v894 = vunpack.c.l.bf16 %v851
  %v895 = vunpack.c.h.bf16 %v851
  %v896 = vunpack.c.l.bf16 %v852
  %v897 = vunpack.c.h.bf16 %v852
  %v898 = vunpack.c.l.bf16 %v853
  %v899 = vunpack.c.h.bf16 %v853
  %v900 = vunpack.c.l.bf16 %v854
  %v901 = vunpack.c.h.bf16 %v854
  %v902 = vunpack.c.l.bf16 %v855
  %v903 = vunpack.c.h.bf16 %v855
  %v904 = vunpack.c.l.bf16 %v856
  %v905 = vunpack.c.h.bf16 %v856
  %v906 = vunpack.c.l.bf16 %v857
  %v907 = vunpack.c.h.bf16 %v857
  %v908 = vunpack.c.l.bf16 %v858
  %v909 = vunpack.c.h.bf16 %v858
  %v910 = vunpack.c.l.bf16 %v859
  %v911 = vunpack.c.h.bf16 %v859
  %v912 = vunpack.c.l.bf16 %v860
  %v913 = vunpack.c.h.bf16 %v860
  %v914 = vunpack.c.l.bf16 %v861
  %v915 = vunpack.c.h.bf16 %v861
  %v916 = vunpack.c.l.bf16 %v862
  %v917 = vunpack.c.h.bf16 %v862
  %v918 = vunpack.c.l.bf16 %v863
  %v919 = vunpack.c.h.bf16 %v863
  %v920 = vunpack.c.l.bf16 %v864
  %v921 = vunpack.c.h.bf16 %v864
  %v922 = vunpack.c.l.bf16 %v865
  %v923 = vunpack.c.h.bf16 %v865
  %v924 = vunpack.c.l.bf16 %v866
  %v925 = vunpack.c.h.bf16 %v866
  %v926 = vunpack.c.l.bf16 %v867
  %v927 = vunpack.c.h.bf16 %v867
  %v928 = vunpack.c.l.bf16 %v868
  %v929 = vunpack.c.h.bf16 %v868
  %v930 = vunpack.c.l.bf16 %v869
  %v931 = vunpack.c.h.bf16 %v869
  %v932 = vunpack.c.l.bf16 %v870
  %v933 = vunpack.c.h.bf16 %v870
  %v934 = vunpack.c.l.bf16 %v871
  %v935 = vunpack.c.h.bf16 %v871
  %936 = vmatpush.msra.mxu0 %v902
  %937 = vmatpush.msra.mxu0 %v900
  %938 = vmatpush.msra.mxu0 %v898
  %939 = vmatpush.msra.mxu0 %v896
  %940 = vmatpush.msra.mxu0 %v894
  %941 = vmatpush.msra.mxu0 %v892
  %942 = vmatpush.msra.mxu0 %v890
  %943 = vmatpush.msra.mxu0 %v888
  %944 = vmatpush.msra.mxu0 %v886
  %945 = vmatpush.msra.mxu0 %v884
  %946 = vmatpush.msra.mxu0 %v882
  %947 = vmatpush.msra.mxu0 %v880
  %948 = vmatpush.msra.mxu0 %v878
  %949 = vmatpush.msra.mxu0 %v876
  %950 = vmatpush.msra.mxu0 %v874
  %951 = vmatpush.msra.mxu0 %v872
  %952 = vmatmul.f32.gmra.mxu0 %v579
  %v953 = vpop.f32.mrf.mxu0
  %v954 = vadd.f32 0.0, %v953
  %955 = vmatmul.f32.gmra.mxu0 %v582
  %v956 = vpop.f32.mrf.mxu0
  %v957 = vadd.f32 0.0, %v956
  %958 = vmatmul.f32.gmra.mxu0 %v585
  %v959 = vpop.f32.mrf.mxu0
  %v960 = vadd.f32 0.0, %v959
  %961 = vmatmul.f32.gmra.mxu0 %v588
  %v962 = vpop.f32.mrf.mxu0
  %v963 = vadd.f32 0.0, %v962
  %964 = vdwg.mxu0
  %965 = vmatpush.msra.mxu0 %v934
  %966 = vmatpush.msra.mxu0 %v932
  %967 = vmatpush.msra.mxu0 %v930
  %968 = vmatpush.msra.mxu0 %v928
  %969 = vmatpush.msra.mxu0 %v926
  %970 = vmatpush.msra.mxu0 %v924
  %971 = vmatpush.msra.mxu0 %v922
  %972 = vmatpush.msra.mxu0 %v920
  %973 = vmatpush.msra.mxu0 %v918
  %974 = vmatpush.msra.mxu0 %v916
  %975 = vmatpush.msra.mxu0 %v914
  %976 = vmatpush.msra.mxu0 %v912
  %977 = vmatpush.msra.mxu0 %v910
  %978 = vmatpush.msra.mxu0 %v908
  %979 = vmatpush.msra.mxu0 %v906
  %980 = vmatpush.msra.mxu0 %v904
  %981 = vmatmul.f32.gmra.mxu0 %v608
  %v982 = vpop.f32.mrf.mxu0
  %v983 = vadd.f32 %v954, %v982
  %984 = vmatmul.f32.gmra.mxu0 %v611
  %v985 = vpop.f32.mrf.mxu0
  %v986 = vadd.f32 %v957, %v985
  %987 = vmatmul.f32.gmra.mxu0 %v614
  %v988 = vpop.f32.mrf.mxu0
  %v989 = vadd.f32 %v960, %v988
  %990 = vmatmul.f32.gmra.mxu0 %v617
  %v991 = vpop.f32.mrf.mxu0
  %v992 = vadd.f32 %v963, %v991
  %993 = vdwg.mxu0
  %994 = vmatpush.msra.mxu0 %v903
  %995 = vmatpush.msra.mxu0 %v901
  %996 = vmatpush.msra.mxu0 %v899
  %997 = vmatpush.msra.mxu0 %v897
  %998 = vmatpush.msra.mxu0 %v895
  %999 = vmatpush.msra.mxu0 %v893
  %1000 = vmatpush.msra.mxu0 %v891
  %1001 = vmatpush.msra.mxu0 %v889
  %1002 = vmatpush.msra.mxu0 %v887
  %1003 = vmatpush.msra.mxu0 %v885
  %1004 = vmatpush.msra.mxu0 %v883
  %1005 = vmatpush.msra.mxu0 %v881
  %1006 = vmatpush.msra.mxu0 %v879
  %1007 = vmatpush.msra.mxu0 %v877
  %1008 = vmatpush.msra.mxu0 %v875
  %1009 = vmatpush.msra.mxu0 %v873
  %1010 = vmatmul.f32.gmra.mxu0 %v579
  %v1011 = vpop.f32.mrf.mxu0
  %v1012 = vadd.f32 0.0, %v1011
  %1013 = vmatmul.f32.gmra.mxu0 %v582
  %v1014 = vpop.f32.mrf.mxu0
  %v1015 = vadd.f32 0.0, %v1014
  %1016 = vmatmul.f32.gmra.mxu0 %v585
  %v1017 = vpop.f32.mrf.mxu0
  %v1018 = vadd.f32 0.0, %v1017
  %1019 = vmatmul.f32.gmra.mxu0 %v588
  %v1020 = vpop.f32.mrf.mxu0
  %v1021 = vadd.f32 0.0, %v1020
  %1022 = vdwg.mxu0
  %1023 = vmatpush.msra.mxu0 %v935
  %1024 = vmatpush.msra.mxu0 %v933
  %1025 = vmatpush.msra.mxu0 %v931
  %1026 = vmatpush.msra.mxu0 %v929
  %1027 = vmatpush.msra.mxu0 %v927
  %1028 = vmatpush.msra.mxu0 %v925
  %1029 = vmatpush.msra.mxu0 %v923
  %1030 = vmatpush.msra.mxu0 %v921
  %1031 = vmatpush.msra.mxu0 %v919
  %1032 = vmatpush.msra.mxu0 %v917
  %1033 = vmatpush.msra.mxu0 %v915
  %1034 = vmatpush.msra.mxu0 %v913
  %1035 = vmatpush.msra.mxu0 %v911
  %1036 = vmatpush.msra.mxu0 %v909
  %1037 = vmatpush.msra.mxu0 %v907
  %1038 = vmatpush.msra.mxu0 %v905
  %1039 = vmatmul.f32.gmra.mxu0 %v608
  %v1040 = vpop.f32.mrf.mxu0
  %v1041 = vadd.f32 %v1012, %v1040
  %1042 = vmatmul.f32.gmra.mxu0 %v611
  %v1043 = vpop.f32.mrf.mxu0
  %v1044 = vadd.f32 %v1015, %v1043
  %1045 = vmatmul.f32.gmra.mxu0 %v614
  %v1046 = vpop.f32.mrf.mxu0
  %v1047 = vadd.f32 %v1018, %v1046
  %1048 = vmatmul.f32.gmra.mxu0 %v617
  %v1049 = vpop.f32.mrf.mxu0
  %v1050 = vadd.f32 %v1021, %v1049
  %1051 = vdwg.mxu0
  %s1052 = scalar_lea.vmem %s4, 64
  %v1053 = vld [vmem:[%s1052] sm:$0xff]
  %v1054 = vld [vmem:[%s1052 + $0x8] sm:$0xff]
  %v1055 = vld [vmem:[%s1052 + $0x10] sm:$0xff]
  %v1056 = vld [vmem:[%s1052 + $0x18] sm:$0xff]
  %v1057 = vld [vmem:[%s1052 + $0x20] sm:$0xff]
  %v1058 = vld [vmem:[%s1052 + $0x28] sm:$0xff]
  %v1059 = vld [vmem:[%s1052 + $0x30] sm:$0xff]
  %v1060 = vld [vmem:[%s1052 + $0x38] sm:$0xff]
  %vm1061 = vcmask 261120
  %v1063 = vsel %vm1061, %v1053, 0
  %v1066 = vsel %vm1061, %v1054, 0
  %v1069 = vsel %vm1061, %v1055, 0
  %v1072 = vsel %vm1061, %v1056, 0
  %v1075 = vsel %vm1061, %v1057, 0
  %v1078 = vsel %vm1061, %v1058, 0
  %v1081 = vsel %vm1061, %v1059, 0
  %v1084 = vsel %vm1061, %v1060, 0
  %1086 = vmatpush.msra.mxu0 0.0
  %1087 = vmatpush.msra.mxu0 0.0
  %1088 = vmatpush.msra.mxu0 0.0
  %1089 = vmatpush.msra.mxu0 0.0
  %1090 = vmatpush.msra.mxu0 0.0
  %1091 = vmatpush.msra.mxu0 0.0
  %1092 = vmatpush.msra.mxu0 0.0
  %1093 = vmatpush.msra.mxu0 0.0
  %1094 = vmatpush.msra.mxu0 0.0
  %1095 = vmatpush.msra.mxu0 0.0
  %1096 = vmatpush.msra.mxu0 0.0
  %1097 = vmatpush.msra.mxu0 0.0
  %1098 = vmatpush.msra.mxu0 %v992
  %1099 = vmatpush.msra.mxu0 %v989
  %1100 = vmatpush.msra.mxu0 %v986
  %1101 = vmatpush.msra.mxu0 %v983
  %1102 = vmatmul.f32.gmra.mxu0 %v1063
  %v1103 = vpop.f32.mrf.mxu0
  %v1104 = vadd.f32 0.0, %v1103
  %1105 = vmatmul.f32.gmra.mxu0 %v1066
  %v1106 = vpop.f32.mrf.mxu0
  %v1107 = vadd.f32 0.0, %v1106
  %1108 = vmatmul.f32.gmra.mxu0 %v1069
  %v1109 = vpop.f32.mrf.mxu0
  %v1110 = vadd.f32 0.0, %v1109
  %1111 = vmatmul.f32.gmra.mxu0 %v1072
  %v1112 = vpop.f32.mrf.mxu0
  %v1113 = vadd.f32 0.0, %v1112
  %1114 = vmatmul.f32.gmra.mxu0 %v1075
  %v1115 = vpop.f32.mrf.mxu0
  %v1116 = vadd.f32 0.0, %v1115
  %1117 = vmatmul.f32.gmra.mxu0 %v1078
  %v1118 = vpop.f32.mrf.mxu0
  %v1119 = vadd.f32 0.0, %v1118
  %1120 = vmatmul.f32.gmra.mxu0 %v1081
  %v1121 = vpop.f32.mrf.mxu0
  %v1122 = vadd.f32 0.0, %v1121
  %1123 = vmatmul.f32.gmra.mxu0 %v1084
  %v1124 = vpop.f32.mrf.mxu0
  %v1125 = vadd.f32 0.0, %v1124
  %1126 = vdwg.mxu0
  %1127 = vmatpush.msra.mxu0 0.0
  %1128 = vmatpush.msra.mxu0 0.0
  %1129 = vmatpush.msra.mxu0 0.0
  %1130 = vmatpush.msra.mxu0 0.0
  %1131 = vmatpush.msra.mxu0 0.0
  %1132 = vmatpush.msra.mxu0 0.0
  %1133 = vmatpush.msra.mxu0 0.0
  %1134 = vmatpush.msra.mxu0 0.0
  %1135 = vmatpush.msra.mxu0 0.0
  %1136 = vmatpush.msra.mxu0 0.0
  %1137 = vmatpush.msra.mxu0 0.0
  %1138 = vmatpush.msra.mxu0 0.0
  %1139 = vmatpush.msra.mxu0 %v1050
  %1140 = vmatpush.msra.mxu0 %v1047
  %1141 = vmatpush.msra.mxu0 %v1044
  %1142 = vmatpush.msra.mxu0 %v1041
  %1143 = vmatmul.f32.gmra.mxu0 %v1063
  %v1144 = vpop.f32.mrf.mxu0
  %v1145 = vadd.f32 0.0, %v1144
  %1146 = vmatmul.f32.gmra.mxu0 %v1066
  %v1147 = vpop.f32.mrf.mxu0
  %v1148 = vadd.f32 0.0, %v1147
  %1149 = vmatmul.f32.gmra.mxu0 %v1069
  %v1150 = vpop.f32.mrf.mxu0
  %v1151 = vadd.f32 0.0, %v1150
  %1152 = vmatmul.f32.gmra.mxu0 %v1072
  %v1153 = vpop.f32.mrf.mxu0
  %v1154 = vadd.f32 0.0, %v1153
  %1155 = vmatmul.f32.gmra.mxu0 %v1075
  %v1156 = vpop.f32.mrf.mxu0
  %v1157 = vadd.f32 0.0, %v1156
  %1158 = vmatmul.f32.gmra.mxu0 %v1078
  %v1159 = vpop.f32.mrf.mxu0
  %v1160 = vadd.f32 0.0, %v1159
  %1161 = vmatmul.f32.gmra.mxu0 %v1081
  %v1162 = vpop.f32.mrf.mxu0
  %v1163 = vadd.f32 0.0, %v1162
  %1164 = vmatmul.f32.gmra.mxu0 %v1084
  %v1165 = vpop.f32.mrf.mxu0
  %v1166 = vadd.f32 0.0, %v1165
  %1167 = vdwg.mxu0
  %v1169 = vsel %vm1061, %v831, 0
  %v1172 = vsel %vm1061, %v832, 0
  %v1175 = vsel %vm1061, %v833, 0
  %v1178 = vsel %vm1061, %v834, 0
  %v1181 = vsel %vm1061, %v835, 0
  %v1184 = vsel %vm1061, %v836, 0
  %v1187 = vsel %vm1061, %v837, 0
  %v1190 = vsel %vm1061, %v838, 0
  %1192 = vmatpush.msra.mxu0 0.0
  %1193 = vmatpush.msra.mxu0 0.0
  %1194 = vmatpush.msra.mxu0 0.0
  %1195 = vmatpush.msra.mxu0 0.0
  %1196 = vmatpush.msra.mxu0 0.0
  %1197 = vmatpush.msra.mxu0 0.0
  %1198 = vmatpush.msra.mxu0 0.0
  %1199 = vmatpush.msra.mxu0 0.0
  %1200 = vmatpush.msra.mxu0 0.0
  %1201 = vmatpush.msra.mxu0 0.0
  %1202 = vmatpush.msra.mxu0 0.0
  %1203 = vmatpush.msra.mxu0 0.0
  %1204 = vmatpush.msra.mxu0 %v771
  %1205 = vmatpush.msra.mxu0 %v768
  %1206 = vmatpush.msra.mxu0 %v765
  %1207 = vmatpush.msra.mxu0 %v762
  %1208 = vmatmul.f32.gmra.mxu0 %v1169
  %v1209 = vpop.f32.mrf.mxu0
  %v1210 = vadd.f32 %v1104, %v1209
  %1211 = vmatmul.f32.gmra.mxu0 %v1172
  %v1212 = vpop.f32.mrf.mxu0
  %v1213 = vadd.f32 %v1107, %v1212
  %1214 = vmatmul.f32.gmra.mxu0 %v1175
  %v1215 = vpop.f32.mrf.mxu0
  %v1216 = vadd.f32 %v1110, %v1215
  %1217 = vmatmul.f32.gmra.mxu0 %v1178
  %v1218 = vpop.f32.mrf.mxu0
  %v1219 = vadd.f32 %v1113, %v1218
  %1220 = vmatmul.f32.gmra.mxu0 %v1181
  %v1221 = vpop.f32.mrf.mxu0
  %v1222 = vadd.f32 %v1116, %v1221
  %1223 = vmatmul.f32.gmra.mxu0 %v1184
  %v1224 = vpop.f32.mrf.mxu0
  %v1225 = vadd.f32 %v1119, %v1224
  %1226 = vmatmul.f32.gmra.mxu0 %v1187
  %v1227 = vpop.f32.mrf.mxu0
  %v1228 = vadd.f32 %v1122, %v1227
  %1229 = vmatmul.f32.gmra.mxu0 %v1190
  %v1230 = vpop.f32.mrf.mxu0
  %v1231 = vadd.f32 %v1125, %v1230
  %1232 = vdwg.mxu0
  %1233 = vmatpush.msra.mxu0 0.0
  %1234 = vmatpush.msra.mxu0 0.0
  %1235 = vmatpush.msra.mxu0 0.0
  %1236 = vmatpush.msra.mxu0 0.0
  %1237 = vmatpush.msra.mxu0 0.0
  %1238 = vmatpush.msra.mxu0 0.0
  %1239 = vmatpush.msra.mxu0 0.0
  %1240 = vmatpush.msra.mxu0 0.0
  %1241 = vmatpush.msra.mxu0 0.0
  %1242 = vmatpush.msra.mxu0 0.0
  %1243 = vmatpush.msra.mxu0 0.0
  %1244 = vmatpush.msra.mxu0 0.0
  %1245 = vmatpush.msra.mxu0 %v829
  %1246 = vmatpush.msra.mxu0 %v826
  %1247 = vmatpush.msra.mxu0 %v823
  %1248 = vmatpush.msra.mxu0 %v820
  %1249 = vmatmul.f32.gmra.mxu0 %v1169
  %v1250 = vpop.f32.mrf.mxu0
  %v1251 = vadd.f32 %v1145, %v1250
  %1252 = vmatmul.f32.gmra.mxu0 %v1172
  %v1253 = vpop.f32.mrf.mxu0
  %v1254 = vadd.f32 %v1148, %v1253
  %1255 = vmatmul.f32.gmra.mxu0 %v1175
  %v1256 = vpop.f32.mrf.mxu0
  %v1257 = vadd.f32 %v1151, %v1256
  %1258 = vmatmul.f32.gmra.mxu0 %v1178
  %v1259 = vpop.f32.mrf.mxu0
  %v1260 = vadd.f32 %v1154, %v1259
  %1261 = vmatmul.f32.gmra.mxu0 %v1181
  %v1262 = vpop.f32.mrf.mxu0
  %v1263 = vadd.f32 %v1157, %v1262
  %1264 = vmatmul.f32.gmra.mxu0 %v1184
  %v1265 = vpop.f32.mrf.mxu0
  %v1266 = vadd.f32 %v1160, %v1265
  %1267 = vmatmul.f32.gmra.mxu0 %v1187
  %v1268 = vpop.f32.mrf.mxu0
  %v1269 = vadd.f32 %v1163, %v1268
  %1270 = vmatmul.f32.gmra.mxu0 %v1190
  %v1271 = vpop.f32.mrf.mxu0
  %v1272 = vadd.f32 %v1166, %v1271
  %1273 = vdwg.mxu0
  %s1274 = scalar_lea.vmem %s6, 512
  %v1275 = vld [vmem:[%s1274] sm:$0xff]
  %v1276 = vld [vmem:[%s1274 + $0x8] sm:$0xff]
  %v1277 = vld [vmem:[%s1274 + $0x10] sm:$0xff]
  %v1278 = vld [vmem:[%s1274 + $0x18] sm:$0xff]
  %v1279 = vld [vmem:[%s1274 + $0x20] sm:$0xff]
  %v1280 = vld [vmem:[%s1274 + $0x28] sm:$0xff]
  %v1281 = vld [vmem:[%s1274 + $0x30] sm:$0xff]
  %v1282 = vld [vmem:[%s1274 + $0x38] sm:$0xff]
  %v1283 = vld [vmem:[%s1274 + $0x40] sm:$0xff]
  %v1284 = vld [vmem:[%s1274 + $0x48] sm:$0xff]
  %v1285 = vld [vmem:[%s1274 + $0x50] sm:$0xff]
  %v1286 = vld [vmem:[%s1274 + $0x58] sm:$0xff]
  %v1287 = vld [vmem:[%s1274 + $0x60] sm:$0xff]
  %v1288 = vld [vmem:[%s1274 + $0x68] sm:$0xff]
  %v1289 = vld [vmem:[%s1274 + $0x70] sm:$0xff]
  %v1290 = vld [vmem:[%s1274 + $0x78] sm:$0xff]
  %v1291 = vld [vmem:[%s1274 + $0x80] sm:$0xff]
  %v1292 = vld [vmem:[%s1274 + $0x88] sm:$0xff]
  %v1293 = vld [vmem:[%s1274 + $0x90] sm:$0xff]
  %v1294 = vld [vmem:[%s1274 + $0x98] sm:$0xff]
  %v1295 = vld [vmem:[%s1274 + $0xa0] sm:$0xff]
  %v1296 = vld [vmem:[%s1274 + $0xa8] sm:$0xff]
  %v1297 = vld [vmem:[%s1274 + $0xb0] sm:$0xff]
  %v1298 = vld [vmem:[%s1274 + $0xb8] sm:$0xff]
  %v1299 = vld [vmem:[%s1274 + $0xc0] sm:$0xff]
  %v1300 = vld [vmem:[%s1274 + $0xc8] sm:$0xff]
  %v1301 = vld [vmem:[%s1274 + $0xd0] sm:$0xff]
  %v1302 = vld [vmem:[%s1274 + $0xd8] sm:$0xff]
  %v1303 = vld [vmem:[%s1274 + $0xe0] sm:$0xff]
  %v1304 = vld [vmem:[%s1274 + $0xe8] sm:$0xff]
  %v1305 = vld [vmem:[%s1274 + $0xf0] sm:$0xff]
  %v1306 = vld [vmem:[%s1274 + $0xf8] sm:$0xff]
  %v1307 = vunpack.c.l.bf16 %v1275
  %v1308 = vunpack.c.h.bf16 %v1275
  %v1309 = vunpack.c.l.bf16 %v1276
  %v1310 = vunpack.c.h.bf16 %v1276
  %v1311 = vunpack.c.l.bf16 %v1277
  %v1312 = vunpack.c.h.bf16 %v1277
  %v1313 = vunpack.c.l.bf16 %v1278
  %v1314 = vunpack.c.h.bf16 %v1278
  %v1315 = vunpack.c.l.bf16 %v1279
  %v1316 = vunpack.c.h.bf16 %v1279
  %v1317 = vunpack.c.l.bf16 %v1280
  %v1318 = vunpack.c.h.bf16 %v1280
  %v1319 = vunpack.c.l.bf16 %v1281
  %v1320 = vunpack.c.h.bf16 %v1281
  %v1321 = vunpack.c.l.bf16 %v1282
  %v1322 = vunpack.c.h.bf16 %v1282
  %v1323 = vunpack.c.l.bf16 %v1283
  %v1324 = vunpack.c.h.bf16 %v1283
  %v1325 = vunpack.c.l.bf16 %v1284
  %v1326 = vunpack.c.h.bf16 %v1284
  %v1327 = vunpack.c.l.bf16 %v1285
  %v1328 = vunpack.c.h.bf16 %v1285
  %v1329 = vunpack.c.l.bf16 %v1286
  %v1330 = vunpack.c.h.bf16 %v1286
  %v1331 = vunpack.c.l.bf16 %v1287
  %v1332 = vunpack.c.h.bf16 %v1287
  %v1333 = vunpack.c.l.bf16 %v1288
  %v1334 = vunpack.c.h.bf16 %v1288
  %v1335 = vunpack.c.l.bf16 %v1289
  %v1336 = vunpack.c.h.bf16 %v1289
  %v1337 = vunpack.c.l.bf16 %v1290
  %v1338 = vunpack.c.h.bf16 %v1290
  %v1339 = vunpack.c.l.bf16 %v1291
  %v1340 = vunpack.c.h.bf16 %v1291
  %v1341 = vunpack.c.l.bf16 %v1292
  %v1342 = vunpack.c.h.bf16 %v1292
  %v1343 = vunpack.c.l.bf16 %v1293
  %v1344 = vunpack.c.h.bf16 %v1293
  %v1345 = vunpack.c.l.bf16 %v1294
  %v1346 = vunpack.c.h.bf16 %v1294
  %v1347 = vunpack.c.l.bf16 %v1295
  %v1348 = vunpack.c.h.bf16 %v1295
  %v1349 = vunpack.c.l.bf16 %v1296
  %v1350 = vunpack.c.h.bf16 %v1296
  %v1351 = vunpack.c.l.bf16 %v1297
  %v1352 = vunpack.c.h.bf16 %v1297
  %v1353 = vunpack.c.l.bf16 %v1298
  %v1354 = vunpack.c.h.bf16 %v1298
  %v1355 = vunpack.c.l.bf16 %v1299
  %v1356 = vunpack.c.h.bf16 %v1299
  %v1357 = vunpack.c.l.bf16 %v1300
  %v1358 = vunpack.c.h.bf16 %v1300
  %v1359 = vunpack.c.l.bf16 %v1301
  %v1360 = vunpack.c.h.bf16 %v1301
  %v1361 = vunpack.c.l.bf16 %v1302
  %v1362 = vunpack.c.h.bf16 %v1302
  %v1363 = vunpack.c.l.bf16 %v1303
  %v1364 = vunpack.c.h.bf16 %v1303
  %v1365 = vunpack.c.l.bf16 %v1304
  %v1366 = vunpack.c.h.bf16 %v1304
  %v1367 = vunpack.c.l.bf16 %v1305
  %v1368 = vunpack.c.h.bf16 %v1305
  %v1369 = vunpack.c.l.bf16 %v1306
  %v1370 = vunpack.c.h.bf16 %v1306
  %1371 = vmatpush.msra.mxu0 %v1337
  %1372 = vmatpush.msra.mxu0 %v1335
  %1373 = vmatpush.msra.mxu0 %v1333
  %1374 = vmatpush.msra.mxu0 %v1331
  %1375 = vmatpush.msra.mxu0 %v1329
  %1376 = vmatpush.msra.mxu0 %v1327
  %1377 = vmatpush.msra.mxu0 %v1325
  %1378 = vmatpush.msra.mxu0 %v1323
  %1379 = vmatpush.msra.mxu0 %v1321
  %1380 = vmatpush.msra.mxu0 %v1319
  %1381 = vmatpush.msra.mxu0 %v1317
  %1382 = vmatpush.msra.mxu0 %v1315
  %1383 = vmatpush.msra.mxu0 %v1313
  %1384 = vmatpush.msra.mxu0 %v1311
  %1385 = vmatpush.msra.mxu0 %v1309
  %1386 = vmatpush.msra.mxu0 %v1307
  %1387 = vmatmul.f32.gmra.mxu0 %v579
  %v1388 = vpop.f32.mrf.mxu0
  %v1389 = vadd.f32 0.0, %v1388
  %1390 = vmatmul.f32.gmra.mxu0 %v582
  %v1391 = vpop.f32.mrf.mxu0
  %v1392 = vadd.f32 0.0, %v1391
  %1393 = vmatmul.f32.gmra.mxu0 %v585
  %v1394 = vpop.f32.mrf.mxu0
  %v1395 = vadd.f32 0.0, %v1394
  %1396 = vmatmul.f32.gmra.mxu0 %v588
  %v1397 = vpop.f32.mrf.mxu0
  %v1398 = vadd.f32 0.0, %v1397
  %1399 = vdwg.mxu0
  %1400 = vmatpush.msra.mxu0 %v1369
  %1401 = vmatpush.msra.mxu0 %v1367
  %1402 = vmatpush.msra.mxu0 %v1365
  %1403 = vmatpush.msra.mxu0 %v1363
  %1404 = vmatpush.msra.mxu0 %v1361
  %1405 = vmatpush.msra.mxu0 %v1359
  %1406 = vmatpush.msra.mxu0 %v1357
  %1407 = vmatpush.msra.mxu0 %v1355
  %1408 = vmatpush.msra.mxu0 %v1353
  %1409 = vmatpush.msra.mxu0 %v1351
  %1410 = vmatpush.msra.mxu0 %v1349
  %1411 = vmatpush.msra.mxu0 %v1347
  %1412 = vmatpush.msra.mxu0 %v1345
  %1413 = vmatpush.msra.mxu0 %v1343
  %1414 = vmatpush.msra.mxu0 %v1341
  %1415 = vmatpush.msra.mxu0 %v1339
  %1416 = vmatmul.f32.gmra.mxu0 %v608
  %v1417 = vpop.f32.mrf.mxu0
  %v1418 = vadd.f32 %v1389, %v1417
  %1419 = vmatmul.f32.gmra.mxu0 %v611
  %v1420 = vpop.f32.mrf.mxu0
  %v1421 = vadd.f32 %v1392, %v1420
  %1422 = vmatmul.f32.gmra.mxu0 %v614
  %v1423 = vpop.f32.mrf.mxu0
  %v1424 = vadd.f32 %v1395, %v1423
  %1425 = vmatmul.f32.gmra.mxu0 %v617
  %v1426 = vpop.f32.mrf.mxu0
  %v1427 = vadd.f32 %v1398, %v1426
  %1428 = vdwg.mxu0
  %1429 = vmatpush.msra.mxu0 %v1338
  %1430 = vmatpush.msra.mxu0 %v1336
  %1431 = vmatpush.msra.mxu0 %v1334
  %1432 = vmatpush.msra.mxu0 %v1332
  %1433 = vmatpush.msra.mxu0 %v1330
  %1434 = vmatpush.msra.mxu0 %v1328
  %1435 = vmatpush.msra.mxu0 %v1326
  %1436 = vmatpush.msra.mxu0 %v1324
  %1437 = vmatpush.msra.mxu0 %v1322
  %1438 = vmatpush.msra.mxu0 %v1320
  %1439 = vmatpush.msra.mxu0 %v1318
  %1440 = vmatpush.msra.mxu0 %v1316
  %1441 = vmatpush.msra.mxu0 %v1314
  %1442 = vmatpush.msra.mxu0 %v1312
  %1443 = vmatpush.msra.mxu0 %v1310
  %1444 = vmatpush.msra.mxu0 %v1308
  %1445 = vmatmul.f32.gmra.mxu0 %v579
  %v1446 = vpop.f32.mrf.mxu0
  %v1447 = vadd.f32 0.0, %v1446
  %1448 = vmatmul.f32.gmra.mxu0 %v582
  %v1449 = vpop.f32.mrf.mxu0
  %v1450 = vadd.f32 0.0, %v1449
  %1451 = vmatmul.f32.gmra.mxu0 %v585
  %v1452 = vpop.f32.mrf.mxu0
  %v1453 = vadd.f32 0.0, %v1452
  %1454 = vmatmul.f32.gmra.mxu0 %v588
  %v1455 = vpop.f32.mrf.mxu0
  %v1456 = vadd.f32 0.0, %v1455
  %1457 = vdwg.mxu0
  %1458 = vmatpush.msra.mxu0 %v1370
  %1459 = vmatpush.msra.mxu0 %v1368
  %1460 = vmatpush.msra.mxu0 %v1366
  %1461 = vmatpush.msra.mxu0 %v1364
  %1462 = vmatpush.msra.mxu0 %v1362
  %1463 = vmatpush.msra.mxu0 %v1360
  %1464 = vmatpush.msra.mxu0 %v1358
  %1465 = vmatpush.msra.mxu0 %v1356
  %1466 = vmatpush.msra.mxu0 %v1354
  %1467 = vmatpush.msra.mxu0 %v1352
  %1468 = vmatpush.msra.mxu0 %v1350
  %1469 = vmatpush.msra.mxu0 %v1348
  %1470 = vmatpush.msra.mxu0 %v1346
  %1471 = vmatpush.msra.mxu0 %v1344
  %1472 = vmatpush.msra.mxu0 %v1342
  %1473 = vmatpush.msra.mxu0 %v1340
  %1474 = vmatmul.f32.gmra.mxu0 %v608
  %v1475 = vpop.f32.mrf.mxu0
  %v1476 = vadd.f32 %v1447, %v1475
  %1477 = vmatmul.f32.gmra.mxu0 %v611
  %v1478 = vpop.f32.mrf.mxu0
  %v1479 = vadd.f32 %v1450, %v1478
  %1480 = vmatmul.f32.gmra.mxu0 %v614
  %v1481 = vpop.f32.mrf.mxu0
  %v1482 = vadd.f32 %v1453, %v1481
  %1483 = vmatmul.f32.gmra.mxu0 %v617
  %v1484 = vpop.f32.mrf.mxu0
  %v1485 = vadd.f32 %v1456, %v1484
  %1486 = vdwg.mxu0
  %s1487 = scalar_lea.vmem %s4, 128
  %v1488 = vld [vmem:[%s1487] sm:$0xff]
  %v1489 = vld [vmem:[%s1487 + $0x8] sm:$0xff]
  %v1490 = vld [vmem:[%s1487 + $0x10] sm:$0xff]
  %v1491 = vld [vmem:[%s1487 + $0x18] sm:$0xff]
  %v1492 = vld [vmem:[%s1487 + $0x20] sm:$0xff]
  %v1493 = vld [vmem:[%s1487 + $0x28] sm:$0xff]
  %v1494 = vld [vmem:[%s1487 + $0x30] sm:$0xff]
  %v1495 = vld [vmem:[%s1487 + $0x38] sm:$0xff]
  %v1497 = vsel %vm1061, %v1488, 0
  %v1500 = vsel %vm1061, %v1489, 0
  %v1503 = vsel %vm1061, %v1490, 0
  %v1506 = vsel %vm1061, %v1491, 0
  %v1509 = vsel %vm1061, %v1492, 0
  %v1512 = vsel %vm1061, %v1493, 0
  %v1515 = vsel %vm1061, %v1494, 0
  %v1518 = vsel %vm1061, %v1495, 0
  %1520 = vmatpush.msra.mxu0 0.0
  %1521 = vmatpush.msra.mxu0 0.0
  %1522 = vmatpush.msra.mxu0 0.0
  %1523 = vmatpush.msra.mxu0 0.0
  %1524 = vmatpush.msra.mxu0 0.0
  %1525 = vmatpush.msra.mxu0 0.0
  %1526 = vmatpush.msra.mxu0 0.0
  %1527 = vmatpush.msra.mxu0 0.0
  %1528 = vmatpush.msra.mxu0 0.0
  %1529 = vmatpush.msra.mxu0 0.0
  %1530 = vmatpush.msra.mxu0 0.0
  %1531 = vmatpush.msra.mxu0 0.0
  %1532 = vmatpush.msra.mxu0 %v1427
  %1533 = vmatpush.msra.mxu0 %v1424
  %1534 = vmatpush.msra.mxu0 %v1421
  %1535 = vmatpush.msra.mxu0 %v1418
  %1536 = vmatmul.f32.gmra.mxu0 %v1497
  %v1537 = vpop.f32.mrf.mxu0
  %v1538 = vadd.f32 0.0, %v1537
  %1539 = vmatmul.f32.gmra.mxu0 %v1500
  %v1540 = vpop.f32.mrf.mxu0
  %v1541 = vadd.f32 0.0, %v1540
  %1542 = vmatmul.f32.gmra.mxu0 %v1503
  %v1543 = vpop.f32.mrf.mxu0
  %v1544 = vadd.f32 0.0, %v1543
  %1545 = vmatmul.f32.gmra.mxu0 %v1506
  %v1546 = vpop.f32.mrf.mxu0
  %v1547 = vadd.f32 0.0, %v1546
  %1548 = vmatmul.f32.gmra.mxu0 %v1509
  %v1549 = vpop.f32.mrf.mxu0
  %v1550 = vadd.f32 0.0, %v1549
  %1551 = vmatmul.f32.gmra.mxu0 %v1512
  %v1552 = vpop.f32.mrf.mxu0
  %v1553 = vadd.f32 0.0, %v1552
  %1554 = vmatmul.f32.gmra.mxu0 %v1515
  %v1555 = vpop.f32.mrf.mxu0
  %v1556 = vadd.f32 0.0, %v1555
  %1557 = vmatmul.f32.gmra.mxu0 %v1518
  %v1558 = vpop.f32.mrf.mxu0
  %v1559 = vadd.f32 0.0, %v1558
  %1560 = vdwg.mxu0
  %1561 = vmatpush.msra.mxu0 0.0
  %1562 = vmatpush.msra.mxu0 0.0
  %1563 = vmatpush.msra.mxu0 0.0
  %1564 = vmatpush.msra.mxu0 0.0
  %1565 = vmatpush.msra.mxu0 0.0
  %1566 = vmatpush.msra.mxu0 0.0
  %1567 = vmatpush.msra.mxu0 0.0
  %1568 = vmatpush.msra.mxu0 0.0
  %1569 = vmatpush.msra.mxu0 0.0
  %1570 = vmatpush.msra.mxu0 0.0
  %1571 = vmatpush.msra.mxu0 0.0
  %1572 = vmatpush.msra.mxu0 0.0
  %1573 = vmatpush.msra.mxu0 %v1485
  %1574 = vmatpush.msra.mxu0 %v1482
  %1575 = vmatpush.msra.mxu0 %v1479
  %1576 = vmatpush.msra.mxu0 %v1476
  %1577 = vmatmul.f32.gmra.mxu0 %v1497
  %v1578 = vpop.f32.mrf.mxu0
  %v1579 = vadd.f32 0.0, %v1578
  %1580 = vmatmul.f32.gmra.mxu0 %v1500
  %v1581 = vpop.f32.mrf.mxu0
  %v1582 = vadd.f32 0.0, %v1581
  %1583 = vmatmul.f32.gmra.mxu0 %v1503
  %v1584 = vpop.f32.mrf.mxu0
  %v1585 = vadd.f32 0.0, %v1584
  %1586 = vmatmul.f32.gmra.mxu0 %v1506
  %v1587 = vpop.f32.mrf.mxu0
  %v1588 = vadd.f32 0.0, %v1587
  %1589 = vmatmul.f32.gmra.mxu0 %v1509
  %v1590 = vpop.f32.mrf.mxu0
  %v1591 = vadd.f32 0.0, %v1590
  %1592 = vmatmul.f32.gmra.mxu0 %v1512
  %v1593 = vpop.f32.mrf.mxu0
  %v1594 = vadd.f32 0.0, %v1593
  %1595 = vmatmul.f32.gmra.mxu0 %v1515
  %v1596 = vpop.f32.mrf.mxu0
  %v1597 = vadd.f32 0.0, %v1596
  %1598 = vmatmul.f32.gmra.mxu0 %v1518
  %v1599 = vpop.f32.mrf.mxu0
  %v1600 = vadd.f32 0.0, %v1599
  %1601 = vdwg.mxu0
  %v1602 = vadd.f32 %v1210, %v1538
  %v1603 = vadd.f32 %v1251, %v1579
  %v1604 = vadd.f32 %v1213, %v1541
  %v1605 = vadd.f32 %v1254, %v1582
  %v1606 = vadd.f32 %v1216, %v1544
  %v1607 = vadd.f32 %v1257, %v1585
  %v1608 = vadd.f32 %v1219, %v1547
  %v1609 = vadd.f32 %v1260, %v1588
  %v1610 = vadd.f32 %v1222, %v1550
  %v1611 = vadd.f32 %v1263, %v1591
  %v1612 = vadd.f32 %v1225, %v1553
  %v1613 = vadd.f32 %v1266, %v1594
  %v1614 = vadd.f32 %v1228, %v1556
  %v1615 = vadd.f32 %v1269, %v1597
  %v1616 = vadd.f32 %v1231, %v1559
  %v1617 = vadd.f32 %v1272, %v1600
  %s1618 = scalar_lea.vmem %s6, 768
  %v1619 = vld [vmem:[%s1618] sm:$0xff]
  %v1620 = vld [vmem:[%s1618 + $0x8] sm:$0xff]
  %v1621 = vld [vmem:[%s1618 + $0x10] sm:$0xff]
  %v1622 = vld [vmem:[%s1618 + $0x18] sm:$0xff]
  %v1623 = vld [vmem:[%s1618 + $0x20] sm:$0xff]
  %v1624 = vld [vmem:[%s1618 + $0x28] sm:$0xff]
  %v1625 = vld [vmem:[%s1618 + $0x30] sm:$0xff]
  %v1626 = vld [vmem:[%s1618 + $0x38] sm:$0xff]
  %v1627 = vld [vmem:[%s1618 + $0x40] sm:$0xff]
  %v1628 = vld [vmem:[%s1618 + $0x48] sm:$0xff]
  %v1629 = vld [vmem:[%s1618 + $0x50] sm:$0xff]
  %v1630 = vld [vmem:[%s1618 + $0x58] sm:$0xff]
  %v1631 = vld [vmem:[%s1618 + $0x60] sm:$0xff]
  %v1632 = vld [vmem:[%s1618 + $0x68] sm:$0xff]
  %v1633 = vld [vmem:[%s1618 + $0x70] sm:$0xff]
  %v1634 = vld [vmem:[%s1618 + $0x78] sm:$0xff]
  %v1635 = vld [vmem:[%s1618 + $0x80] sm:$0xff]
  %v1636 = vld [vmem:[%s1618 + $0x88] sm:$0xff]
  %v1637 = vld [vmem:[%s1618 + $0x90] sm:$0xff]
  %v1638 = vld [vmem:[%s1618 + $0x98] sm:$0xff]
  %v1639 = vld [vmem:[%s1618 + $0xa0] sm:$0xff]
  %v1640 = vld [vmem:[%s1618 + $0xa8] sm:$0xff]
  %v1641 = vld [vmem:[%s1618 + $0xb0] sm:$0xff]
  %v1642 = vld [vmem:[%s1618 + $0xb8] sm:$0xff]
  %v1643 = vld [vmem:[%s1618 + $0xc0] sm:$0xff]
  %v1644 = vld [vmem:[%s1618 + $0xc8] sm:$0xff]
  %v1645 = vld [vmem:[%s1618 + $0xd0] sm:$0xff]
  %v1646 = vld [vmem:[%s1618 + $0xd8] sm:$0xff]
  %v1647 = vld [vmem:[%s1618 + $0xe0] sm:$0xff]
  %v1648 = vld [vmem:[%s1618 + $0xe8] sm:$0xff]
  %v1649 = vld [vmem:[%s1618 + $0xf0] sm:$0xff]
  %v1650 = vld [vmem:[%s1618 + $0xf8] sm:$0xff]
  %v1651 = vunpack.c.l.bf16 %v1619
  %v1652 = vunpack.c.h.bf16 %v1619
  %v1653 = vunpack.c.l.bf16 %v1620
  %v1654 = vunpack.c.h.bf16 %v1620
  %v1655 = vunpack.c.l.bf16 %v1621
  %v1656 = vunpack.c.h.bf16 %v1621
  %v1657 = vunpack.c.l.bf16 %v1622
  %v1658 = vunpack.c.h.bf16 %v1622
  %v1659 = vunpack.c.l.bf16 %v1623
  %v1660 = vunpack.c.h.bf16 %v1623
  %v1661 = vunpack.c.l.bf16 %v1624
  %v1662 = vunpack.c.h.bf16 %v1624
  %v1663 = vunpack.c.l.bf16 %v1625
  %v1664 = vunpack.c.h.bf16 %v1625
  %v1665 = vunpack.c.l.bf16 %v1626
  %v1666 = vunpack.c.h.bf16 %v1626
  %v1667 = vunpack.c.l.bf16 %v1627
  %v1668 = vunpack.c.h.bf16 %v1627
  %v1669 = vunpack.c.l.bf16 %v1628
  %v1670 = vunpack.c.h.bf16 %v1628
  %v1671 = vunpack.c.l.bf16 %v1629
  %v1672 = vunpack.c.h.bf16 %v1629
  %v1673 = vunpack.c.l.bf16 %v1630
  %v1674 = vunpack.c.h.bf16 %v1630
  %v1675 = vunpack.c.l.bf16 %v1631
  %v1676 = vunpack.c.h.bf16 %v1631
  %v1677 = vunpack.c.l.bf16 %v1632
  %v1678 = vunpack.c.h.bf16 %v1632
  %v1679 = vunpack.c.l.bf16 %v1633
  %v1680 = vunpack.c.h.bf16 %v1633
  %v1681 = vunpack.c.l.bf16 %v1634
  %v1682 = vunpack.c.h.bf16 %v1634
  %v1683 = vunpack.c.l.bf16 %v1635
  %v1684 = vunpack.c.h.bf16 %v1635
  %v1685 = vunpack.c.l.bf16 %v1636
  %v1686 = vunpack.c.h.bf16 %v1636
  %v1687 = vunpack.c.l.bf16 %v1637
  %v1688 = vunpack.c.h.bf16 %v1637
  %v1689 = vunpack.c.l.bf16 %v1638
  %v1690 = vunpack.c.h.bf16 %v1638
  %v1691 = vunpack.c.l.bf16 %v1639
  %v1692 = vunpack.c.h.bf16 %v1639
  %v1693 = vunpack.c.l.bf16 %v1640
  %v1694 = vunpack.c.h.bf16 %v1640
  %v1695 = vunpack.c.l.bf16 %v1641
  %v1696 = vunpack.c.h.bf16 %v1641
  %v1697 = vunpack.c.l.bf16 %v1642
  %v1698 = vunpack.c.h.bf16 %v1642
  %v1699 = vunpack.c.l.bf16 %v1643
  %v1700 = vunpack.c.h.bf16 %v1643
  %v1701 = vunpack.c.l.bf16 %v1644
  %v1702 = vunpack.c.h.bf16 %v1644
  %v1703 = vunpack.c.l.bf16 %v1645
  %v1704 = vunpack.c.h.bf16 %v1645
  %v1705 = vunpack.c.l.bf16 %v1646
  %v1706 = vunpack.c.h.bf16 %v1646
  %v1707 = vunpack.c.l.bf16 %v1647
  %v1708 = vunpack.c.h.bf16 %v1647
  %v1709 = vunpack.c.l.bf16 %v1648
  %v1710 = vunpack.c.h.bf16 %v1648
  %v1711 = vunpack.c.l.bf16 %v1649
  %v1712 = vunpack.c.h.bf16 %v1649
  %v1713 = vunpack.c.l.bf16 %v1650
  %v1714 = vunpack.c.h.bf16 %v1650
  %1715 = vmatpush.msra.mxu0 %v1681
  %1716 = vmatpush.msra.mxu0 %v1679
  %1717 = vmatpush.msra.mxu0 %v1677
  %1718 = vmatpush.msra.mxu0 %v1675
  %1719 = vmatpush.msra.mxu0 %v1673
  %1720 = vmatpush.msra.mxu0 %v1671
  %1721 = vmatpush.msra.mxu0 %v1669
  %1722 = vmatpush.msra.mxu0 %v1667
  %1723 = vmatpush.msra.mxu0 %v1665
  %1724 = vmatpush.msra.mxu0 %v1663
  %1725 = vmatpush.msra.mxu0 %v1661
  %1726 = vmatpush.msra.mxu0 %v1659
  %1727 = vmatpush.msra.mxu0 %v1657
  %1728 = vmatpush.msra.mxu0 %v1655
  %1729 = vmatpush.msra.mxu0 %v1653
  %1730 = vmatpush.msra.mxu0 %v1651
  %1731 = vmatmul.f32.gmra.mxu0 %v579
  %v1732 = vpop.f32.mrf.mxu0
  %v1733 = vadd.f32 0.0, %v1732
  %1734 = vmatmul.f32.gmra.mxu0 %v582
  %v1735 = vpop.f32.mrf.mxu0
  %v1736 = vadd.f32 0.0, %v1735
  %1737 = vmatmul.f32.gmra.mxu0 %v585
  %v1738 = vpop.f32.mrf.mxu0
  %v1739 = vadd.f32 0.0, %v1738
  %1740 = vmatmul.f32.gmra.mxu0 %v588
  %v1741 = vpop.f32.mrf.mxu0
  %v1742 = vadd.f32 0.0, %v1741
  %1743 = vdwg.mxu0
  %1744 = vmatpush.msra.mxu0 %v1713
  %1745 = vmatpush.msra.mxu0 %v1711
  %1746 = vmatpush.msra.mxu0 %v1709
  %1747 = vmatpush.msra.mxu0 %v1707
  %1748 = vmatpush.msra.mxu0 %v1705
  %1749 = vmatpush.msra.mxu0 %v1703
  %1750 = vmatpush.msra.mxu0 %v1701
  %1751 = vmatpush.msra.mxu0 %v1699
  %1752 = vmatpush.msra.mxu0 %v1697
  %1753 = vmatpush.msra.mxu0 %v1695
  %1754 = vmatpush.msra.mxu0 %v1693
  %1755 = vmatpush.msra.mxu0 %v1691
  %1756 = vmatpush.msra.mxu0 %v1689
  %1757 = vmatpush.msra.mxu0 %v1687
  %1758 = vmatpush.msra.mxu0 %v1685
  %1759 = vmatpush.msra.mxu0 %v1683
  %1760 = vmatmul.f32.gmra.mxu0 %v608
  %v1761 = vpop.f32.mrf.mxu0
  %v1762 = vadd.f32 %v1733, %v1761
  %1763 = vmatmul.f32.gmra.mxu0 %v611
  %v1764 = vpop.f32.mrf.mxu0
  %v1765 = vadd.f32 %v1736, %v1764
  %1766 = vmatmul.f32.gmra.mxu0 %v614
  %v1767 = vpop.f32.mrf.mxu0
  %v1768 = vadd.f32 %v1739, %v1767
  %1769 = vmatmul.f32.gmra.mxu0 %v617
  %v1770 = vpop.f32.mrf.mxu0
  %v1771 = vadd.f32 %v1742, %v1770
  %1772 = vdwg.mxu0
  %1773 = vmatpush.msra.mxu0 %v1682
  %1774 = vmatpush.msra.mxu0 %v1680
  %1775 = vmatpush.msra.mxu0 %v1678
  %1776 = vmatpush.msra.mxu0 %v1676
  %1777 = vmatpush.msra.mxu0 %v1674
  %1778 = vmatpush.msra.mxu0 %v1672
  %1779 = vmatpush.msra.mxu0 %v1670
  %1780 = vmatpush.msra.mxu0 %v1668
  %1781 = vmatpush.msra.mxu0 %v1666
  %1782 = vmatpush.msra.mxu0 %v1664
  %1783 = vmatpush.msra.mxu0 %v1662
  %1784 = vmatpush.msra.mxu0 %v1660
  %1785 = vmatpush.msra.mxu0 %v1658
  %1786 = vmatpush.msra.mxu0 %v1656
  %1787 = vmatpush.msra.mxu0 %v1654
  %1788 = vmatpush.msra.mxu0 %v1652
  %1789 = vmatmul.f32.gmra.mxu0 %v579
  %v1790 = vpop.f32.mrf.mxu0
  %v1791 = vadd.f32 0.0, %v1790
  %1792 = vmatmul.f32.gmra.mxu0 %v582
  %v1793 = vpop.f32.mrf.mxu0
  %v1794 = vadd.f32 0.0, %v1793
  %1795 = vmatmul.f32.gmra.mxu0 %v585
  %v1796 = vpop.f32.mrf.mxu0
  %v1797 = vadd.f32 0.0, %v1796
  %1798 = vmatmul.f32.gmra.mxu0 %v588
  %v1799 = vpop.f32.mrf.mxu0
  %v1800 = vadd.f32 0.0, %v1799
  %1801 = vdwg.mxu0
  %1802 = vmatpush.msra.mxu0 %v1714
  %1803 = vmatpush.msra.mxu0 %v1712
  %1804 = vmatpush.msra.mxu0 %v1710
  %1805 = vmatpush.msra.mxu0 %v1708
  %1806 = vmatpush.msra.mxu0 %v1706
  %1807 = vmatpush.msra.mxu0 %v1704
  %1808 = vmatpush.msra.mxu0 %v1702
  %1809 = vmatpush.msra.mxu0 %v1700
  %1810 = vmatpush.msra.mxu0 %v1698
  %1811 = vmatpush.msra.mxu0 %v1696
  %1812 = vmatpush.msra.mxu0 %v1694
  %1813 = vmatpush.msra.mxu0 %v1692
  %1814 = vmatpush.msra.mxu0 %v1690
  %1815 = vmatpush.msra.mxu0 %v1688
  %1816 = vmatpush.msra.mxu0 %v1686
  %1817 = vmatpush.msra.mxu0 %v1684
  %1818 = vmatmul.f32.gmra.mxu0 %v608
  %v1819 = vpop.f32.mrf.mxu0
  %v1820 = vadd.f32 %v1791, %v1819
  %1821 = vmatmul.f32.gmra.mxu0 %v611
  %v1822 = vpop.f32.mrf.mxu0
  %v1823 = vadd.f32 %v1794, %v1822
  %1824 = vmatmul.f32.gmra.mxu0 %v614
  %v1825 = vpop.f32.mrf.mxu0
  %v1826 = vadd.f32 %v1797, %v1825
  %1827 = vmatmul.f32.gmra.mxu0 %v617
  %v1828 = vpop.f32.mrf.mxu0
  %v1829 = vadd.f32 %v1800, %v1828
  %1830 = vdwg.mxu0
  %s1831 = scalar_lea.vmem %s4, 192
  %v1832 = vld [vmem:[%s1831] sm:$0xff]
  %v1833 = vld [vmem:[%s1831 + $0x8] sm:$0xff]
  %v1834 = vld [vmem:[%s1831 + $0x10] sm:$0xff]
  %v1835 = vld [vmem:[%s1831 + $0x18] sm:$0xff]
  %v1836 = vld [vmem:[%s1831 + $0x20] sm:$0xff]
  %v1837 = vld [vmem:[%s1831 + $0x28] sm:$0xff]
  %v1838 = vld [vmem:[%s1831 + $0x30] sm:$0xff]
  %v1839 = vld [vmem:[%s1831 + $0x38] sm:$0xff]
  %v1841 = vsel %vm1061, %v1832, 0
  %v1844 = vsel %vm1061, %v1833, 0
  %v1847 = vsel %vm1061, %v1834, 0
  %v1850 = vsel %vm1061, %v1835, 0
  %v1853 = vsel %vm1061, %v1836, 0
  %v1856 = vsel %vm1061, %v1837, 0
  %v1859 = vsel %vm1061, %v1838, 0
  %v1862 = vsel %vm1061, %v1839, 0
  %1864 = vmatpush.msra.mxu0 0.0
  %1865 = vmatpush.msra.mxu0 0.0
  %1866 = vmatpush.msra.mxu0 0.0
  %1867 = vmatpush.msra.mxu0 0.0
  %1868 = vmatpush.msra.mxu0 0.0
  %1869 = vmatpush.msra.mxu0 0.0
  %1870 = vmatpush.msra.mxu0 0.0
  %1871 = vmatpush.msra.mxu0 0.0
  %1872 = vmatpush.msra.mxu0 0.0
  %1873 = vmatpush.msra.mxu0 0.0
  %1874 = vmatpush.msra.mxu0 0.0
  %1875 = vmatpush.msra.mxu0 0.0
  %1876 = vmatpush.msra.mxu0 %v1771
  %1877 = vmatpush.msra.mxu0 %v1768
  %1878 = vmatpush.msra.mxu0 %v1765
  %1879 = vmatpush.msra.mxu0 %v1762
  %1880 = vmatmul.f32.gmra.mxu0 %v1841
  %v1881 = vpop.f32.mrf.mxu0
  %v1882 = vadd.f32 0.0, %v1881
  %1883 = vmatmul.f32.gmra.mxu0 %v1844
  %v1884 = vpop.f32.mrf.mxu0
  %v1885 = vadd.f32 0.0, %v1884
  %1886 = vmatmul.f32.gmra.mxu0 %v1847
  %v1887 = vpop.f32.mrf.mxu0
  %v1888 = vadd.f32 0.0, %v1887
  %1889 = vmatmul.f32.gmra.mxu0 %v1850
  %v1890 = vpop.f32.mrf.mxu0
  %v1891 = vadd.f32 0.0, %v1890
  %1892 = vmatmul.f32.gmra.mxu0 %v1853
  %v1893 = vpop.f32.mrf.mxu0
  %v1894 = vadd.f32 0.0, %v1893
  %1895 = vmatmul.f32.gmra.mxu0 %v1856
  %v1896 = vpop.f32.mrf.mxu0
  %v1897 = vadd.f32 0.0, %v1896
  %1898 = vmatmul.f32.gmra.mxu0 %v1859
  %v1899 = vpop.f32.mrf.mxu0
  %v1900 = vadd.f32 0.0, %v1899
  %1901 = vmatmul.f32.gmra.mxu0 %v1862
  %v1902 = vpop.f32.mrf.mxu0
  %v1903 = vadd.f32 0.0, %v1902
  %1904 = vdwg.mxu0
  %1905 = vmatpush.msra.mxu0 0.0
  %1906 = vmatpush.msra.mxu0 0.0
  %1907 = vmatpush.msra.mxu0 0.0
  %1908 = vmatpush.msra.mxu0 0.0
  %1909 = vmatpush.msra.mxu0 0.0
  %1910 = vmatpush.msra.mxu0 0.0
  %1911 = vmatpush.msra.mxu0 0.0
  %1912 = vmatpush.msra.mxu0 0.0
  %1913 = vmatpush.msra.mxu0 0.0
  %1914 = vmatpush.msra.mxu0 0.0
  %1915 = vmatpush.msra.mxu0 0.0
  %1916 = vmatpush.msra.mxu0 0.0
  %1917 = vmatpush.msra.mxu0 %v1829
  %1918 = vmatpush.msra.mxu0 %v1826
  %1919 = vmatpush.msra.mxu0 %v1823
  %1920 = vmatpush.msra.mxu0 %v1820
  %1921 = vmatmul.f32.gmra.mxu0 %v1841
  %v1922 = vpop.f32.mrf.mxu0
  %v1923 = vadd.f32 0.0, %v1922
  %1924 = vmatmul.f32.gmra.mxu0 %v1844
  %v1925 = vpop.f32.mrf.mxu0
  %v1926 = vadd.f32 0.0, %v1925
  %1927 = vmatmul.f32.gmra.mxu0 %v1847
  %v1928 = vpop.f32.mrf.mxu0
  %v1929 = vadd.f32 0.0, %v1928
  %1930 = vmatmul.f32.gmra.mxu0 %v1850
  %v1931 = vpop.f32.mrf.mxu0
  %v1932 = vadd.f32 0.0, %v1931
  %1933 = vmatmul.f32.gmra.mxu0 %v1853
  %v1934 = vpop.f32.mrf.mxu0
  %v1935 = vadd.f32 0.0, %v1934
  %1936 = vmatmul.f32.gmra.mxu0 %v1856
  %v1937 = vpop.f32.mrf.mxu0
  %v1938 = vadd.f32 0.0, %v1937
  %1939 = vmatmul.f32.gmra.mxu0 %v1859
  %v1940 = vpop.f32.mrf.mxu0
  %v1941 = vadd.f32 0.0, %v1940
  %1942 = vmatmul.f32.gmra.mxu0 %v1862
  %v1943 = vpop.f32.mrf.mxu0
  %v1944 = vadd.f32 0.0, %v1943
  %1945 = vdwg.mxu0
  %v1946 = vadd.f32 %v1602, %v1882
  %v1947 = vadd.f32 %v1603, %v1923
  %v1948 = vadd.f32 %v1604, %v1885
  %v1949 = vadd.f32 %v1605, %v1926
  %v1950 = vadd.f32 %v1606, %v1888
  %v1951 = vadd.f32 %v1607, %v1929
  %v1952 = vadd.f32 %v1608, %v1891
  %v1953 = vadd.f32 %v1609, %v1932
  %v1954 = vadd.f32 %v1610, %v1894
  %v1955 = vadd.f32 %v1611, %v1935
  %v1956 = vadd.f32 %v1612, %v1897
  %v1957 = vadd.f32 %v1613, %v1938
  %v1958 = vadd.f32 %v1614, %v1900
  %v1959 = vadd.f32 %v1615, %v1941
  %v1960 = vadd.f32 %v1616, %v1903
  %v1961 = vadd.f32 %v1617, %v1944
  %s1962 = scalar_lea.vmem %s6, 1024
  %v1963 = vld [vmem:[%s1962] sm:$0xff]
  %v1964 = vld [vmem:[%s1962 + $0x8] sm:$0xff]
  %v1965 = vld [vmem:[%s1962 + $0x10] sm:$0xff]
  %v1966 = vld [vmem:[%s1962 + $0x18] sm:$0xff]
  %v1967 = vld [vmem:[%s1962 + $0x20] sm:$0xff]
  %v1968 = vld [vmem:[%s1962 + $0x28] sm:$0xff]
  %v1969 = vld [vmem:[%s1962 + $0x30] sm:$0xff]
  %v1970 = vld [vmem:[%s1962 + $0x38] sm:$0xff]
  %v1971 = vld [vmem:[%s1962 + $0x40] sm:$0xff]
  %v1972 = vld [vmem:[%s1962 + $0x48] sm:$0xff]
  %v1973 = vld [vmem:[%s1962 + $0x50] sm:$0xff]
  %v1974 = vld [vmem:[%s1962 + $0x58] sm:$0xff]
  %v1975 = vld [vmem:[%s1962 + $0x60] sm:$0xff]
  %v1976 = vld [vmem:[%s1962 + $0x68] sm:$0xff]
  %v1977 = vld [vmem:[%s1962 + $0x70] sm:$0xff]
  %v1978 = vld [vmem:[%s1962 + $0x78] sm:$0xff]
  %v1979 = vld [vmem:[%s1962 + $0x80] sm:$0xff]
  %v1980 = vld [vmem:[%s1962 + $0x88] sm:$0xff]
  %v1981 = vld [vmem:[%s1962 + $0x90] sm:$0xff]
  %v1982 = vld [vmem:[%s1962 + $0x98] sm:$0xff]
  %v1983 = vld [vmem:[%s1962 + $0xa0] sm:$0xff]
  %v1984 = vld [vmem:[%s1962 + $0xa8] sm:$0xff]
  %v1985 = vld [vmem:[%s1962 + $0xb0] sm:$0xff]
  %v1986 = vld [vmem:[%s1962 + $0xb8] sm:$0xff]
  %v1987 = vld [vmem:[%s1962 + $0xc0] sm:$0xff]
  %v1988 = vld [vmem:[%s1962 + $0xc8] sm:$0xff]
  %v1989 = vld [vmem:[%s1962 + $0xd0] sm:$0xff]
  %v1990 = vld [vmem:[%s1962 + $0xd8] sm:$0xff]
  %v1991 = vld [vmem:[%s1962 + $0xe0] sm:$0xff]
  %v1992 = vld [vmem:[%s1962 + $0xe8] sm:$0xff]
  %v1993 = vld [vmem:[%s1962 + $0xf0] sm:$0xff]
  %v1994 = vld [vmem:[%s1962 + $0xf8] sm:$0xff]
  %v1995 = vunpack.c.l.bf16 %v1963
  %v1996 = vunpack.c.h.bf16 %v1963
  %v1997 = vunpack.c.l.bf16 %v1964
  %v1998 = vunpack.c.h.bf16 %v1964
  %v1999 = vunpack.c.l.bf16 %v1965
  %v2000 = vunpack.c.h.bf16 %v1965
  %v2001 = vunpack.c.l.bf16 %v1966
  %v2002 = vunpack.c.h.bf16 %v1966
  %v2003 = vunpack.c.l.bf16 %v1967
  %v2004 = vunpack.c.h.bf16 %v1967
  %v2005 = vunpack.c.l.bf16 %v1968
  %v2006 = vunpack.c.h.bf16 %v1968
  %v2007 = vunpack.c.l.bf16 %v1969
  %v2008 = vunpack.c.h.bf16 %v1969
  %v2009 = vunpack.c.l.bf16 %v1970
  %v2010 = vunpack.c.h.bf16 %v1970
  %v2011 = vunpack.c.l.bf16 %v1971
  %v2012 = vunpack.c.h.bf16 %v1971
  %v2013 = vunpack.c.l.bf16 %v1972
  %v2014 = vunpack.c.h.bf16 %v1972
  %v2015 = vunpack.c.l.bf16 %v1973
  %v2016 = vunpack.c.h.bf16 %v1973
  %v2017 = vunpack.c.l.bf16 %v1974
  %v2018 = vunpack.c.h.bf16 %v1974
  %v2019 = vunpack.c.l.bf16 %v1975
  %v2020 = vunpack.c.h.bf16 %v1975
  %v2021 = vunpack.c.l.bf16 %v1976
  %v2022 = vunpack.c.h.bf16 %v1976
  %v2023 = vunpack.c.l.bf16 %v1977
  %v2024 = vunpack.c.h.bf16 %v1977
  %v2025 = vunpack.c.l.bf16 %v1978
  %v2026 = vunpack.c.h.bf16 %v1978
  %v2027 = vunpack.c.l.bf16 %v1979
  %v2028 = vunpack.c.h.bf16 %v1979
  %v2029 = vunpack.c.l.bf16 %v1980
  %v2030 = vunpack.c.h.bf16 %v1980
  %v2031 = vunpack.c.l.bf16 %v1981
  %v2032 = vunpack.c.h.bf16 %v1981
  %v2033 = vunpack.c.l.bf16 %v1982
  %v2034 = vunpack.c.h.bf16 %v1982
  %v2035 = vunpack.c.l.bf16 %v1983
  %v2036 = vunpack.c.h.bf16 %v1983
  %v2037 = vunpack.c.l.bf16 %v1984
  %v2038 = vunpack.c.h.bf16 %v1984
  %v2039 = vunpack.c.l.bf16 %v1985
  %v2040 = vunpack.c.h.bf16 %v1985
  %v2041 = vunpack.c.l.bf16 %v1986
  %v2042 = vunpack.c.h.bf16 %v1986
  %v2043 = vunpack.c.l.bf16 %v1987
  %v2044 = vunpack.c.h.bf16 %v1987
  %v2045 = vunpack.c.l.bf16 %v1988
  %v2046 = vunpack.c.h.bf16 %v1988
  %v2047 = vunpack.c.l.bf16 %v1989
  %v2048 = vunpack.c.h.bf16 %v1989
  %v2049 = vunpack.c.l.bf16 %v1990
  %v2050 = vunpack.c.h.bf16 %v1990
  %v2051 = vunpack.c.l.bf16 %v1991
  %v2052 = vunpack.c.h.bf16 %v1991
  %v2053 = vunpack.c.l.bf16 %v1992
  %v2054 = vunpack.c.h.bf16 %v1992
  %v2055 = vunpack.c.l.bf16 %v1993
  %v2056 = vunpack.c.h.bf16 %v1993
  %v2057 = vunpack.c.l.bf16 %v1994
  %v2058 = vunpack.c.h.bf16 %v1994
  %2059 = vmatpush.msra.mxu0 %v2025
  %2060 = vmatpush.msra.mxu0 %v2023
  %2061 = vmatpush.msra.mxu0 %v2021
  %2062 = vmatpush.msra.mxu0 %v2019
  %2063 = vmatpush.msra.mxu0 %v2017
  %2064 = vmatpush.msra.mxu0 %v2015
  %2065 = vmatpush.msra.mxu0 %v2013
  %2066 = vmatpush.msra.mxu0 %v2011
  %2067 = vmatpush.msra.mxu0 %v2009
  %2068 = vmatpush.msra.mxu0 %v2007
  %2069 = vmatpush.msra.mxu0 %v2005
  %2070 = vmatpush.msra.mxu0 %v2003
  %2071 = vmatpush.msra.mxu0 %v2001
  %2072 = vmatpush.msra.mxu0 %v1999
  %2073 = vmatpush.msra.mxu0 %v1997
  %2074 = vmatpush.msra.mxu0 %v1995
  %2075 = vmatmul.f32.gmra.mxu0 %v579
  %v2076 = vpop.f32.mrf.mxu0
  %v2077 = vadd.f32 0.0, %v2076
  %2078 = vmatmul.f32.gmra.mxu0 %v582
  %v2079 = vpop.f32.mrf.mxu0
  %v2080 = vadd.f32 0.0, %v2079
  %2081 = vmatmul.f32.gmra.mxu0 %v585
  %v2082 = vpop.f32.mrf.mxu0
  %v2083 = vadd.f32 0.0, %v2082
  %2084 = vmatmul.f32.gmra.mxu0 %v588
  %v2085 = vpop.f32.mrf.mxu0
  %v2086 = vadd.f32 0.0, %v2085
  %2087 = vdwg.mxu0
  %2088 = vmatpush.msra.mxu0 %v2057
  %2089 = vmatpush.msra.mxu0 %v2055
  %2090 = vmatpush.msra.mxu0 %v2053
  %2091 = vmatpush.msra.mxu0 %v2051
  %2092 = vmatpush.msra.mxu0 %v2049
  %2093 = vmatpush.msra.mxu0 %v2047
  %2094 = vmatpush.msra.mxu0 %v2045
  %2095 = vmatpush.msra.mxu0 %v2043
  %2096 = vmatpush.msra.mxu0 %v2041
  %2097 = vmatpush.msra.mxu0 %v2039
  %2098 = vmatpush.msra.mxu0 %v2037
  %2099 = vmatpush.msra.mxu0 %v2035
  %2100 = vmatpush.msra.mxu0 %v2033
  %2101 = vmatpush.msra.mxu0 %v2031
  %2102 = vmatpush.msra.mxu0 %v2029
  %2103 = vmatpush.msra.mxu0 %v2027
  %2104 = vmatmul.f32.gmra.mxu0 %v608
  %v2105 = vpop.f32.mrf.mxu0
  %v2106 = vadd.f32 %v2077, %v2105
  %2107 = vmatmul.f32.gmra.mxu0 %v611
  %v2108 = vpop.f32.mrf.mxu0
  %v2109 = vadd.f32 %v2080, %v2108
  %2110 = vmatmul.f32.gmra.mxu0 %v614
  %v2111 = vpop.f32.mrf.mxu0
  %v2112 = vadd.f32 %v2083, %v2111
  %2113 = vmatmul.f32.gmra.mxu0 %v617
  %v2114 = vpop.f32.mrf.mxu0
  %v2115 = vadd.f32 %v2086, %v2114
  %2116 = vdwg.mxu0
  %2117 = vmatpush.msra.mxu0 %v2026
  %2118 = vmatpush.msra.mxu0 %v2024
  %2119 = vmatpush.msra.mxu0 %v2022
  %2120 = vmatpush.msra.mxu0 %v2020
  %2121 = vmatpush.msra.mxu0 %v2018
  %2122 = vmatpush.msra.mxu0 %v2016
  %2123 = vmatpush.msra.mxu0 %v2014
  %2124 = vmatpush.msra.mxu0 %v2012
  %2125 = vmatpush.msra.mxu0 %v2010
  %2126 = vmatpush.msra.mxu0 %v2008
  %2127 = vmatpush.msra.mxu0 %v2006
  %2128 = vmatpush.msra.mxu0 %v2004
  %2129 = vmatpush.msra.mxu0 %v2002
  %2130 = vmatpush.msra.mxu0 %v2000
  %2131 = vmatpush.msra.mxu0 %v1998
  %2132 = vmatpush.msra.mxu0 %v1996
  %2133 = vmatmul.f32.gmra.mxu0 %v579
  %v2134 = vpop.f32.mrf.mxu0
  %v2135 = vadd.f32 0.0, %v2134
  %2136 = vmatmul.f32.gmra.mxu0 %v582
  %v2137 = vpop.f32.mrf.mxu0
  %v2138 = vadd.f32 0.0, %v2137
  %2139 = vmatmul.f32.gmra.mxu0 %v585
  %v2140 = vpop.f32.mrf.mxu0
  %v2141 = vadd.f32 0.0, %v2140
  %2142 = vmatmul.f32.gmra.mxu0 %v588
  %v2143 = vpop.f32.mrf.mxu0
  %v2144 = vadd.f32 0.0, %v2143
  %2145 = vdwg.mxu0
  %2146 = vmatpush.msra.mxu0 %v2058
  %2147 = vmatpush.msra.mxu0 %v2056
  %2148 = vmatpush.msra.mxu0 %v2054
  %2149 = vmatpush.msra.mxu0 %v2052
  %2150 = vmatpush.msra.mxu0 %v2050
  %2151 = vmatpush.msra.mxu0 %v2048
  %2152 = vmatpush.msra.mxu0 %v2046
  %2153 = vmatpush.msra.mxu0 %v2044
  %2154 = vmatpush.msra.mxu0 %v2042
  %2155 = vmatpush.msra.mxu0 %v2040
  %2156 = vmatpush.msra.mxu0 %v2038
  %2157 = vmatpush.msra.mxu0 %v2036
  %2158 = vmatpush.msra.mxu0 %v2034
  %2159 = vmatpush.msra.mxu0 %v2032
  %2160 = vmatpush.msra.mxu0 %v2030
  %2161 = vmatpush.msra.mxu0 %v2028
  %2162 = vmatmul.f32.gmra.mxu0 %v608
  %v2163 = vpop.f32.mrf.mxu0
  %v2164 = vadd.f32 %v2135, %v2163
  %2165 = vmatmul.f32.gmra.mxu0 %v611
  %v2166 = vpop.f32.mrf.mxu0
  %v2167 = vadd.f32 %v2138, %v2166
  %2168 = vmatmul.f32.gmra.mxu0 %v614
  %v2169 = vpop.f32.mrf.mxu0
  %v2170 = vadd.f32 %v2141, %v2169
  %2171 = vmatmul.f32.gmra.mxu0 %v617
  %v2172 = vpop.f32.mrf.mxu0
  %v2173 = vadd.f32 %v2144, %v2172
  %2174 = vdwg.mxu0
  %s2175 = scalar_lea.vmem %s4, 256
  %v2176 = vld [vmem:[%s2175] sm:$0xff]
  %v2177 = vld [vmem:[%s2175 + $0x8] sm:$0xff]
  %v2178 = vld [vmem:[%s2175 + $0x10] sm:$0xff]
  %v2179 = vld [vmem:[%s2175 + $0x18] sm:$0xff]
  %v2180 = vld [vmem:[%s2175 + $0x20] sm:$0xff]
  %v2181 = vld [vmem:[%s2175 + $0x28] sm:$0xff]
  %v2182 = vld [vmem:[%s2175 + $0x30] sm:$0xff]
  %v2183 = vld [vmem:[%s2175 + $0x38] sm:$0xff]
  %v2185 = vsel %vm1061, %v2176, 0
  %v2188 = vsel %vm1061, %v2177, 0
  %v2191 = vsel %vm1061, %v2178, 0
  %v2194 = vsel %vm1061, %v2179, 0
  %v2197 = vsel %vm1061, %v2180, 0
  %v2200 = vsel %vm1061, %v2181, 0
  %v2203 = vsel %vm1061, %v2182, 0
  %v2206 = vsel %vm1061, %v2183, 0
  %2208 = vmatpush.msra.mxu0 0.0
  %2209 = vmatpush.msra.mxu0 0.0
  %2210 = vmatpush.msra.mxu0 0.0
  %2211 = vmatpush.msra.mxu0 0.0
  %2212 = vmatpush.msra.mxu0 0.0
  %2213 = vmatpush.msra.mxu0 0.0
  %2214 = vmatpush.msra.mxu0 0.0
  %2215 = vmatpush.msra.mxu0 0.0
  %2216 = vmatpush.msra.mxu0 0.0
  %2217 = vmatpush.msra.mxu0 0.0
  %2218 = vmatpush.msra.mxu0 0.0
  %2219 = vmatpush.msra.mxu0 0.0
  %2220 = vmatpush.msra.mxu0 %v2115
  %2221 = vmatpush.msra.mxu0 %v2112
  %2222 = vmatpush.msra.mxu0 %v2109
  %2223 = vmatpush.msra.mxu0 %v2106
  %2224 = vmatmul.f32.gmra.mxu0 %v2185
  %v2225 = vpop.f32.mrf.mxu0
  %v2226 = vadd.f32 0.0, %v2225
  %2227 = vmatmul.f32.gmra.mxu0 %v2188
  %v2228 = vpop.f32.mrf.mxu0
  %v2229 = vadd.f32 0.0, %v2228
  %2230 = vmatmul.f32.gmra.mxu0 %v2191
  %v2231 = vpop.f32.mrf.mxu0
  %v2232 = vadd.f32 0.0, %v2231
  %2233 = vmatmul.f32.gmra.mxu0 %v2194
  %v2234 = vpop.f32.mrf.mxu0
  %v2235 = vadd.f32 0.0, %v2234
  %2236 = vmatmul.f32.gmra.mxu0 %v2197
  %v2237 = vpop.f32.mrf.mxu0
  %v2238 = vadd.f32 0.0, %v2237
  %2239 = vmatmul.f32.gmra.mxu0 %v2200
  %v2240 = vpop.f32.mrf.mxu0
  %v2241 = vadd.f32 0.0, %v2240
  %2242 = vmatmul.f32.gmra.mxu0 %v2203
  %v2243 = vpop.f32.mrf.mxu0
  %v2244 = vadd.f32 0.0, %v2243
  %2245 = vmatmul.f32.gmra.mxu0 %v2206
  %v2246 = vpop.f32.mrf.mxu0
  %v2247 = vadd.f32 0.0, %v2246
  %2248 = vdwg.mxu0
  %2249 = vmatpush.msra.mxu0 0.0
  %2250 = vmatpush.msra.mxu0 0.0
  %2251 = vmatpush.msra.mxu0 0.0
  %2252 = vmatpush.msra.mxu0 0.0
  %2253 = vmatpush.msra.mxu0 0.0
  %2254 = vmatpush.msra.mxu0 0.0
  %2255 = vmatpush.msra.mxu0 0.0
  %2256 = vmatpush.msra.mxu0 0.0
  %2257 = vmatpush.msra.mxu0 0.0
  %2258 = vmatpush.msra.mxu0 0.0
  %2259 = vmatpush.msra.mxu0 0.0
  %2260 = vmatpush.msra.mxu0 0.0
  %2261 = vmatpush.msra.mxu0 %v2173
  %2262 = vmatpush.msra.mxu0 %v2170
  %2263 = vmatpush.msra.mxu0 %v2167
  %2264 = vmatpush.msra.mxu0 %v2164
  %2265 = vmatmul.f32.gmra.mxu0 %v2185
  %v2266 = vpop.f32.mrf.mxu0
  %v2267 = vadd.f32 0.0, %v2266
  %2268 = vmatmul.f32.gmra.mxu0 %v2188
  %v2269 = vpop.f32.mrf.mxu0
  %v2270 = vadd.f32 0.0, %v2269
  %2271 = vmatmul.f32.gmra.mxu0 %v2191
  %v2272 = vpop.f32.mrf.mxu0
  %v2273 = vadd.f32 0.0, %v2272
  %2274 = vmatmul.f32.gmra.mxu0 %v2194
  %v2275 = vpop.f32.mrf.mxu0
  %v2276 = vadd.f32 0.0, %v2275
  %2277 = vmatmul.f32.gmra.mxu0 %v2197
  %v2278 = vpop.f32.mrf.mxu0
  %v2279 = vadd.f32 0.0, %v2278
  %2280 = vmatmul.f32.gmra.mxu0 %v2200
  %v2281 = vpop.f32.mrf.mxu0
  %v2282 = vadd.f32 0.0, %v2281
  %2283 = vmatmul.f32.gmra.mxu0 %v2203
  %v2284 = vpop.f32.mrf.mxu0
  %v2285 = vadd.f32 0.0, %v2284
  %2286 = vmatmul.f32.gmra.mxu0 %v2206
  %v2287 = vpop.f32.mrf.mxu0
  %v2288 = vadd.f32 0.0, %v2287
  %2289 = vdwg.mxu0
  %v2290 = vadd.f32 %v1946, %v2226
  %v2291 = vadd.f32 %v1947, %v2267
  %v2292 = vadd.f32 %v1948, %v2229
  %v2293 = vadd.f32 %v1949, %v2270
  %v2294 = vadd.f32 %v1950, %v2232
  %v2295 = vadd.f32 %v1951, %v2273
  %v2296 = vadd.f32 %v1952, %v2235
  %v2297 = vadd.f32 %v1953, %v2276
  %v2298 = vadd.f32 %v1954, %v2238
  %v2299 = vadd.f32 %v1955, %v2279
  %v2300 = vadd.f32 %v1956, %v2241
  %v2301 = vadd.f32 %v1957, %v2282
  %v2302 = vadd.f32 %v1958, %v2244
  %v2303 = vadd.f32 %v1959, %v2285
  %v2304 = vadd.f32 %v1960, %v2247
  %v2305 = vadd.f32 %v1961, %v2288
  %s2306 = scalar_lea.vmem %s6, 1280
  %v2307 = vld [vmem:[%s2306] sm:$0xff]
  %v2308 = vld [vmem:[%s2306 + $0x8] sm:$0xff]
  %v2309 = vld [vmem:[%s2306 + $0x10] sm:$0xff]
  %v2310 = vld [vmem:[%s2306 + $0x18] sm:$0xff]
  %v2311 = vld [vmem:[%s2306 + $0x20] sm:$0xff]
  %v2312 = vld [vmem:[%s2306 + $0x28] sm:$0xff]
  %v2313 = vld [vmem:[%s2306 + $0x30] sm:$0xff]
  %v2314 = vld [vmem:[%s2306 + $0x38] sm:$0xff]
  %v2315 = vld [vmem:[%s2306 + $0x40] sm:$0xff]
  %v2316 = vld [vmem:[%s2306 + $0x48] sm:$0xff]
  %v2317 = vld [vmem:[%s2306 + $0x50] sm:$0xff]
  %v2318 = vld [vmem:[%s2306 + $0x58] sm:$0xff]
  %v2319 = vld [vmem:[%s2306 + $0x60] sm:$0xff]
  %v2320 = vld [vmem:[%s2306 + $0x68] sm:$0xff]
  %v2321 = vld [vmem:[%s2306 + $0x70] sm:$0xff]
  %v2322 = vld [vmem:[%s2306 + $0x78] sm:$0xff]
  %v2323 = vld [vmem:[%s2306 + $0x80] sm:$0xff]
  %v2324 = vld [vmem:[%s2306 + $0x88] sm:$0xff]
  %v2325 = vld [vmem:[%s2306 + $0x90] sm:$0xff]
  %v2326 = vld [vmem:[%s2306 + $0x98] sm:$0xff]
  %v2327 = vld [vmem:[%s2306 + $0xa0] sm:$0xff]
  %v2328 = vld [vmem:[%s2306 + $0xa8] sm:$0xff]
  %v2329 = vld [vmem:[%s2306 + $0xb0] sm:$0xff]
  %v2330 = vld [vmem:[%s2306 + $0xb8] sm:$0xff]
  %v2331 = vld [vmem:[%s2306 + $0xc0] sm:$0xff]
  %v2332 = vld [vmem:[%s2306 + $0xc8] sm:$0xff]
  %v2333 = vld [vmem:[%s2306 + $0xd0] sm:$0xff]
  %v2334 = vld [vmem:[%s2306 + $0xd8] sm:$0xff]
  %v2335 = vld [vmem:[%s2306 + $0xe0] sm:$0xff]
  %v2336 = vld [vmem:[%s2306 + $0xe8] sm:$0xff]
  %v2337 = vld [vmem:[%s2306 + $0xf0] sm:$0xff]
  %v2338 = vld [vmem:[%s2306 + $0xf8] sm:$0xff]
  %v2339 = vunpack.c.l.bf16 %v2307
  %v2340 = vunpack.c.h.bf16 %v2307
  %v2341 = vunpack.c.l.bf16 %v2308
  %v2342 = vunpack.c.h.bf16 %v2308
  %v2343 = vunpack.c.l.bf16 %v2309
  %v2344 = vunpack.c.h.bf16 %v2309
  %v2345 = vunpack.c.l.bf16 %v2310
  %v2346 = vunpack.c.h.bf16 %v2310
  %v2347 = vunpack.c.l.bf16 %v2311
  %v2348 = vunpack.c.h.bf16 %v2311
  %v2349 = vunpack.c.l.bf16 %v2312
  %v2350 = vunpack.c.h.bf16 %v2312
  %v2351 = vunpack.c.l.bf16 %v2313
  %v2352 = vunpack.c.h.bf16 %v2313
  %v2353 = vunpack.c.l.bf16 %v2314
  %v2354 = vunpack.c.h.bf16 %v2314
  %v2355 = vunpack.c.l.bf16 %v2315
  %v2356 = vunpack.c.h.bf16 %v2315
  %v2357 = vunpack.c.l.bf16 %v2316
  %v2358 = vunpack.c.h.bf16 %v2316
  %v2359 = vunpack.c.l.bf16 %v2317
  %v2360 = vunpack.c.h.bf16 %v2317
  %v2361 = vunpack.c.l.bf16 %v2318
  %v2362 = vunpack.c.h.bf16 %v2318
  %v2363 = vunpack.c.l.bf16 %v2319
  %v2364 = vunpack.c.h.bf16 %v2319
  %v2365 = vunpack.c.l.bf16 %v2320
  %v2366 = vunpack.c.h.bf16 %v2320
  %v2367 = vunpack.c.l.bf16 %v2321
  %v2368 = vunpack.c.h.bf16 %v2321
  %v2369 = vunpack.c.l.bf16 %v2322
  %v2370 = vunpack.c.h.bf16 %v2322
  %v2371 = vunpack.c.l.bf16 %v2323
  %v2372 = vunpack.c.h.bf16 %v2323
  %v2373 = vunpack.c.l.bf16 %v2324
  %v2374 = vunpack.c.h.bf16 %v2324
  %v2375 = vunpack.c.l.bf16 %v2325
  %v2376 = vunpack.c.h.bf16 %v2325
  %v2377 = vunpack.c.l.bf16 %v2326
  %v2378 = vunpack.c.h.bf16 %v2326
  %v2379 = vunpack.c.l.bf16 %v2327
  %v2380 = vunpack.c.h.bf16 %v2327
  %v2381 = vunpack.c.l.bf16 %v2328
  %v2382 = vunpack.c.h.bf16 %v2328
  %v2383 = vunpack.c.l.bf16 %v2329
  %v2384 = vunpack.c.h.bf16 %v2329
  %v2385 = vunpack.c.l.bf16 %v2330
  %v2386 = vunpack.c.h.bf16 %v2330
  %v2387 = vunpack.c.l.bf16 %v2331
  %v2388 = vunpack.c.h.bf16 %v2331
  %v2389 = vunpack.c.l.bf16 %v2332
  %v2390 = vunpack.c.h.bf16 %v2332
  %v2391 = vunpack.c.l.bf16 %v2333
  %v2392 = vunpack.c.h.bf16 %v2333
  %v2393 = vunpack.c.l.bf16 %v2334
  %v2394 = vunpack.c.h.bf16 %v2334
  %v2395 = vunpack.c.l.bf16 %v2335
  %v2396 = vunpack.c.h.bf16 %v2335
  %v2397 = vunpack.c.l.bf16 %v2336
  %v2398 = vunpack.c.h.bf16 %v2336
  %v2399 = vunpack.c.l.bf16 %v2337
  %v2400 = vunpack.c.h.bf16 %v2337
  %v2401 = vunpack.c.l.bf16 %v2338
  %v2402 = vunpack.c.h.bf16 %v2338
  %2403 = vmatpush.msra.mxu0 %v2369
  %2404 = vmatpush.msra.mxu0 %v2367
  %2405 = vmatpush.msra.mxu0 %v2365
  %2406 = vmatpush.msra.mxu0 %v2363
  %2407 = vmatpush.msra.mxu0 %v2361
  %2408 = vmatpush.msra.mxu0 %v2359
  %2409 = vmatpush.msra.mxu0 %v2357
  %2410 = vmatpush.msra.mxu0 %v2355
  %2411 = vmatpush.msra.mxu0 %v2353
  %2412 = vmatpush.msra.mxu0 %v2351
  %2413 = vmatpush.msra.mxu0 %v2349
  %2414 = vmatpush.msra.mxu0 %v2347
  %2415 = vmatpush.msra.mxu0 %v2345
  %2416 = vmatpush.msra.mxu0 %v2343
  %2417 = vmatpush.msra.mxu0 %v2341
  %2418 = vmatpush.msra.mxu0 %v2339
  %2419 = vmatmul.f32.gmra.mxu0 %v579
  %v2420 = vpop.f32.mrf.mxu0
  %v2421 = vadd.f32 0.0, %v2420
  %2422 = vmatmul.f32.gmra.mxu0 %v582
  %v2423 = vpop.f32.mrf.mxu0
  %v2424 = vadd.f32 0.0, %v2423
  %2425 = vmatmul.f32.gmra.mxu0 %v585
  %v2426 = vpop.f32.mrf.mxu0
  %v2427 = vadd.f32 0.0, %v2426
  %2428 = vmatmul.f32.gmra.mxu0 %v588
  %v2429 = vpop.f32.mrf.mxu0
  %v2430 = vadd.f32 0.0, %v2429
  %2431 = vdwg.mxu0
  %2432 = vmatpush.msra.mxu0 %v2401
  %2433 = vmatpush.msra.mxu0 %v2399
  %2434 = vmatpush.msra.mxu0 %v2397
  %2435 = vmatpush.msra.mxu0 %v2395
  %2436 = vmatpush.msra.mxu0 %v2393
  %2437 = vmatpush.msra.mxu0 %v2391
  %2438 = vmatpush.msra.mxu0 %v2389
  %2439 = vmatpush.msra.mxu0 %v2387
  %2440 = vmatpush.msra.mxu0 %v2385
  %2441 = vmatpush.msra.mxu0 %v2383
  %2442 = vmatpush.msra.mxu0 %v2381
  %2443 = vmatpush.msra.mxu0 %v2379
  %2444 = vmatpush.msra.mxu0 %v2377
  %2445 = vmatpush.msra.mxu0 %v2375
  %2446 = vmatpush.msra.mxu0 %v2373
  %2447 = vmatpush.msra.mxu0 %v2371
  %2448 = vmatmul.f32.gmra.mxu0 %v608
  %v2449 = vpop.f32.mrf.mxu0
  %v2450 = vadd.f32 %v2421, %v2449
  %2451 = vmatmul.f32.gmra.mxu0 %v611
  %v2452 = vpop.f32.mrf.mxu0
  %v2453 = vadd.f32 %v2424, %v2452
  %2454 = vmatmul.f32.gmra.mxu0 %v614
  %v2455 = vpop.f32.mrf.mxu0
  %v2456 = vadd.f32 %v2427, %v2455
  %2457 = vmatmul.f32.gmra.mxu0 %v617
  %v2458 = vpop.f32.mrf.mxu0
  %v2459 = vadd.f32 %v2430, %v2458
  %2460 = vdwg.mxu0
  %2461 = vmatpush.msra.mxu0 %v2370
  %2462 = vmatpush.msra.mxu0 %v2368
  %2463 = vmatpush.msra.mxu0 %v2366
  %2464 = vmatpush.msra.mxu0 %v2364
  %2465 = vmatpush.msra.mxu0 %v2362
  %2466 = vmatpush.msra.mxu0 %v2360
  %2467 = vmatpush.msra.mxu0 %v2358
  %2468 = vmatpush.msra.mxu0 %v2356
  %2469 = vmatpush.msra.mxu0 %v2354
  %2470 = vmatpush.msra.mxu0 %v2352
  %2471 = vmatpush.msra.mxu0 %v2350
  %2472 = vmatpush.msra.mxu0 %v2348
  %2473 = vmatpush.msra.mxu0 %v2346
  %2474 = vmatpush.msra.mxu0 %v2344
  %2475 = vmatpush.msra.mxu0 %v2342
  %2476 = vmatpush.msra.mxu0 %v2340
  %2477 = vmatmul.f32.gmra.mxu0 %v579
  %v2478 = vpop.f32.mrf.mxu0
  %v2479 = vadd.f32 0.0, %v2478
  %2480 = vmatmul.f32.gmra.mxu0 %v582
  %v2481 = vpop.f32.mrf.mxu0
  %v2482 = vadd.f32 0.0, %v2481
  %2483 = vmatmul.f32.gmra.mxu0 %v585
  %v2484 = vpop.f32.mrf.mxu0
  %v2485 = vadd.f32 0.0, %v2484
  %2486 = vmatmul.f32.gmra.mxu0 %v588
  %v2487 = vpop.f32.mrf.mxu0
  %v2488 = vadd.f32 0.0, %v2487
  %2489 = vdwg.mxu0
  %2490 = vmatpush.msra.mxu0 %v2402
  %2491 = vmatpush.msra.mxu0 %v2400
  %2492 = vmatpush.msra.mxu0 %v2398
  %2493 = vmatpush.msra.mxu0 %v2396
  %2494 = vmatpush.msra.mxu0 %v2394
  %2495 = vmatpush.msra.mxu0 %v2392
  %2496 = vmatpush.msra.mxu0 %v2390
  %2497 = vmatpush.msra.mxu0 %v2388
  %2498 = vmatpush.msra.mxu0 %v2386
  %2499 = vmatpush.msra.mxu0 %v2384
  %2500 = vmatpush.msra.mxu0 %v2382
  %2501 = vmatpush.msra.mxu0 %v2380
  %2502 = vmatpush.msra.mxu0 %v2378
  %2503 = vmatpush.msra.mxu0 %v2376
  %2504 = vmatpush.msra.mxu0 %v2374
  %2505 = vmatpush.msra.mxu0 %v2372
  %2506 = vmatmul.f32.gmra.mxu0 %v608
  %v2507 = vpop.f32.mrf.mxu0
  %v2508 = vadd.f32 %v2479, %v2507
  %2509 = vmatmul.f32.gmra.mxu0 %v611
  %v2510 = vpop.f32.mrf.mxu0
  %v2511 = vadd.f32 %v2482, %v2510
  %2512 = vmatmul.f32.gmra.mxu0 %v614
  %v2513 = vpop.f32.mrf.mxu0
  %v2514 = vadd.f32 %v2485, %v2513
  %2515 = vmatmul.f32.gmra.mxu0 %v617
  %v2516 = vpop.f32.mrf.mxu0
  %v2517 = vadd.f32 %v2488, %v2516
  %2518 = vdwg.mxu0
  %s2519 = scalar_lea.vmem %s4, 320
  %v2520 = vld [vmem:[%s2519] sm:$0xff]
  %v2521 = vld [vmem:[%s2519 + $0x8] sm:$0xff]
  %v2522 = vld [vmem:[%s2519 + $0x10] sm:$0xff]
  %v2523 = vld [vmem:[%s2519 + $0x18] sm:$0xff]
  %v2524 = vld [vmem:[%s2519 + $0x20] sm:$0xff]
  %v2525 = vld [vmem:[%s2519 + $0x28] sm:$0xff]
  %v2526 = vld [vmem:[%s2519 + $0x30] sm:$0xff]
  %v2527 = vld [vmem:[%s2519 + $0x38] sm:$0xff]
  %v2529 = vsel %vm1061, %v2520, 0
  %v2532 = vsel %vm1061, %v2521, 0
  %v2535 = vsel %vm1061, %v2522, 0
  %v2538 = vsel %vm1061, %v2523, 0
  %v2541 = vsel %vm1061, %v2524, 0
  %v2544 = vsel %vm1061, %v2525, 0
  %v2547 = vsel %vm1061, %v2526, 0
  %v2550 = vsel %vm1061, %v2527, 0
  %2552 = vmatpush.msra.mxu0 0.0
  %2553 = vmatpush.msra.mxu0 0.0
  %2554 = vmatpush.msra.mxu0 0.0
  %2555 = vmatpush.msra.mxu0 0.0
  %2556 = vmatpush.msra.mxu0 0.0
  %2557 = vmatpush.msra.mxu0 0.0
  %2558 = vmatpush.msra.mxu0 0.0
  %2559 = vmatpush.msra.mxu0 0.0
  %2560 = vmatpush.msra.mxu0 0.0
  %2561 = vmatpush.msra.mxu0 0.0
  %2562 = vmatpush.msra.mxu0 0.0
  %2563 = vmatpush.msra.mxu0 0.0
  %2564 = vmatpush.msra.mxu0 %v2459
  %2565 = vmatpush.msra.mxu0 %v2456
  %2566 = vmatpush.msra.mxu0 %v2453
  %2567 = vmatpush.msra.mxu0 %v2450
  %2568 = vmatmul.f32.gmra.mxu0 %v2529
  %v2569 = vpop.f32.mrf.mxu0
  %v2570 = vadd.f32 0.0, %v2569
  %2571 = vmatmul.f32.gmra.mxu0 %v2532
  %v2572 = vpop.f32.mrf.mxu0
  %v2573 = vadd.f32 0.0, %v2572
  %2574 = vmatmul.f32.gmra.mxu0 %v2535
  %v2575 = vpop.f32.mrf.mxu0
  %v2576 = vadd.f32 0.0, %v2575
  %2577 = vmatmul.f32.gmra.mxu0 %v2538
  %v2578 = vpop.f32.mrf.mxu0
  %v2579 = vadd.f32 0.0, %v2578
  %2580 = vmatmul.f32.gmra.mxu0 %v2541
  %v2581 = vpop.f32.mrf.mxu0
  %v2582 = vadd.f32 0.0, %v2581
  %2583 = vmatmul.f32.gmra.mxu0 %v2544
  %v2584 = vpop.f32.mrf.mxu0
  %v2585 = vadd.f32 0.0, %v2584
  %2586 = vmatmul.f32.gmra.mxu0 %v2547
  %v2587 = vpop.f32.mrf.mxu0
  %v2588 = vadd.f32 0.0, %v2587
  %2589 = vmatmul.f32.gmra.mxu0 %v2550
  %v2590 = vpop.f32.mrf.mxu0
  %v2591 = vadd.f32 0.0, %v2590
  %2592 = vdwg.mxu0
  %2593 = vmatpush.msra.mxu0 0.0
  %2594 = vmatpush.msra.mxu0 0.0
  %2595 = vmatpush.msra.mxu0 0.0
  %2596 = vmatpush.msra.mxu0 0.0
  %2597 = vmatpush.msra.mxu0 0.0
  %2598 = vmatpush.msra.mxu0 0.0
  %2599 = vmatpush.msra.mxu0 0.0
  %2600 = vmatpush.msra.mxu0 0.0
  %2601 = vmatpush.msra.mxu0 0.0
  %2602 = vmatpush.msra.mxu0 0.0
  %2603 = vmatpush.msra.mxu0 0.0
  %2604 = vmatpush.msra.mxu0 0.0
  %2605 = vmatpush.msra.mxu0 %v2517
  %2606 = vmatpush.msra.mxu0 %v2514
  %2607 = vmatpush.msra.mxu0 %v2511
  %2608 = vmatpush.msra.mxu0 %v2508
  %2609 = vmatmul.f32.gmra.mxu0 %v2529
  %v2610 = vpop.f32.mrf.mxu0
  %v2611 = vadd.f32 0.0, %v2610
  %2612 = vmatmul.f32.gmra.mxu0 %v2532
  %v2613 = vpop.f32.mrf.mxu0
  %v2614 = vadd.f32 0.0, %v2613
  %2615 = vmatmul.f32.gmra.mxu0 %v2535
  %v2616 = vpop.f32.mrf.mxu0
  %v2617 = vadd.f32 0.0, %v2616
  %2618 = vmatmul.f32.gmra.mxu0 %v2538
  %v2619 = vpop.f32.mrf.mxu0
  %v2620 = vadd.f32 0.0, %v2619
  %2621 = vmatmul.f32.gmra.mxu0 %v2541
  %v2622 = vpop.f32.mrf.mxu0
  %v2623 = vadd.f32 0.0, %v2622
  %2624 = vmatmul.f32.gmra.mxu0 %v2544
  %v2625 = vpop.f32.mrf.mxu0
  %v2626 = vadd.f32 0.0, %v2625
  %2627 = vmatmul.f32.gmra.mxu0 %v2547
  %v2628 = vpop.f32.mrf.mxu0
  %v2629 = vadd.f32 0.0, %v2628
  %2630 = vmatmul.f32.gmra.mxu0 %v2550
  %v2631 = vpop.f32.mrf.mxu0
  %v2632 = vadd.f32 0.0, %v2631
  %2633 = vdwg.mxu0
  %v2634 = vadd.f32 %v2290, %v2570
  %v2635 = vadd.f32 %v2291, %v2611
  %v2636 = vadd.f32 %v2292, %v2573
  %v2637 = vadd.f32 %v2293, %v2614
  %v2638 = vadd.f32 %v2294, %v2576
  %v2639 = vadd.f32 %v2295, %v2617
  %v2640 = vadd.f32 %v2296, %v2579
  %v2641 = vadd.f32 %v2297, %v2620
  %v2642 = vadd.f32 %v2298, %v2582
  %v2643 = vadd.f32 %v2299, %v2623
  %v2644 = vadd.f32 %v2300, %v2585
  %v2645 = vadd.f32 %v2301, %v2626
  %v2646 = vadd.f32 %v2302, %v2588
  %v2647 = vadd.f32 %v2303, %v2629
  %v2648 = vadd.f32 %v2304, %v2591
  %v2649 = vadd.f32 %v2305, %v2632
  %s2650 = scalar_lea.vmem %s6, 1536
  %v2651 = vld [vmem:[%s2650] sm:$0xff]
  %v2652 = vld [vmem:[%s2650 + $0x8] sm:$0xff]
  %v2653 = vld [vmem:[%s2650 + $0x10] sm:$0xff]
  %v2654 = vld [vmem:[%s2650 + $0x18] sm:$0xff]
  %v2655 = vld [vmem:[%s2650 + $0x20] sm:$0xff]
  %v2656 = vld [vmem:[%s2650 + $0x28] sm:$0xff]
  %v2657 = vld [vmem:[%s2650 + $0x30] sm:$0xff]
  %v2658 = vld [vmem:[%s2650 + $0x38] sm:$0xff]
  %v2659 = vld [vmem:[%s2650 + $0x40] sm:$0xff]
  %v2660 = vld [vmem:[%s2650 + $0x48] sm:$0xff]
  %v2661 = vld [vmem:[%s2650 + $0x50] sm:$0xff]
  %v2662 = vld [vmem:[%s2650 + $0x58] sm:$0xff]
  %v2663 = vld [vmem:[%s2650 + $0x60] sm:$0xff]
  %v2664 = vld [vmem:[%s2650 + $0x68] sm:$0xff]
  %v2665 = vld [vmem:[%s2650 + $0x70] sm:$0xff]
  %v2666 = vld [vmem:[%s2650 + $0x78] sm:$0xff]
  %v2667 = vld [vmem:[%s2650 + $0x80] sm:$0xff]
  %v2668 = vld [vmem:[%s2650 + $0x88] sm:$0xff]
  %v2669 = vld [vmem:[%s2650 + $0x90] sm:$0xff]
  %v2670 = vld [vmem:[%s2650 + $0x98] sm:$0xff]
  %v2671 = vld [vmem:[%s2650 + $0xa0] sm:$0xff]
  %v2672 = vld [vmem:[%s2650 + $0xa8] sm:$0xff]
  %v2673 = vld [vmem:[%s2650 + $0xb0] sm:$0xff]
  %v2674 = vld [vmem:[%s2650 + $0xb8] sm:$0xff]
  %v2675 = vld [vmem:[%s2650 + $0xc0] sm:$0xff]
  %v2676 = vld [vmem:[%s2650 + $0xc8] sm:$0xff]
  %v2677 = vld [vmem:[%s2650 + $0xd0] sm:$0xff]
  %v2678 = vld [vmem:[%s2650 + $0xd8] sm:$0xff]
  %v2679 = vld [vmem:[%s2650 + $0xe0] sm:$0xff]
  %v2680 = vld [vmem:[%s2650 + $0xe8] sm:$0xff]
  %v2681 = vld [vmem:[%s2650 + $0xf0] sm:$0xff]
  %v2682 = vld [vmem:[%s2650 + $0xf8] sm:$0xff]
  %v2683 = vunpack.c.l.bf16 %v2651
  %v2684 = vunpack.c.h.bf16 %v2651
  %v2685 = vunpack.c.l.bf16 %v2652
  %v2686 = vunpack.c.h.bf16 %v2652
  %v2687 = vunpack.c.l.bf16 %v2653
  %v2688 = vunpack.c.h.bf16 %v2653
  %v2689 = vunpack.c.l.bf16 %v2654
  %v2690 = vunpack.c.h.bf16 %v2654
  %v2691 = vunpack.c.l.bf16 %v2655
  %v2692 = vunpack.c.h.bf16 %v2655
  %v2693 = vunpack.c.l.bf16 %v2656
  %v2694 = vunpack.c.h.bf16 %v2656
  %v2695 = vunpack.c.l.bf16 %v2657
  %v2696 = vunpack.c.h.bf16 %v2657
  %v2697 = vunpack.c.l.bf16 %v2658
  %v2698 = vunpack.c.h.bf16 %v2658
  %v2699 = vunpack.c.l.bf16 %v2659
  %v2700 = vunpack.c.h.bf16 %v2659
  %v2701 = vunpack.c.l.bf16 %v2660
  %v2702 = vunpack.c.h.bf16 %v2660
  %v2703 = vunpack.c.l.bf16 %v2661
  %v2704 = vunpack.c.h.bf16 %v2661
  %v2705 = vunpack.c.l.bf16 %v2662
  %v2706 = vunpack.c.h.bf16 %v2662
  %v2707 = vunpack.c.l.bf16 %v2663
  %v2708 = vunpack.c.h.bf16 %v2663
  %v2709 = vunpack.c.l.bf16 %v2664
  %v2710 = vunpack.c.h.bf16 %v2664
  %v2711 = vunpack.c.l.bf16 %v2665
  %v2712 = vunpack.c.h.bf16 %v2665
  %v2713 = vunpack.c.l.bf16 %v2666
  %v2714 = vunpack.c.h.bf16 %v2666
  %v2715 = vunpack.c.l.bf16 %v2667
  %v2716 = vunpack.c.h.bf16 %v2667
  %v2717 = vunpack.c.l.bf16 %v2668
  %v2718 = vunpack.c.h.bf16 %v2668
  %v2719 = vunpack.c.l.bf16 %v2669
  %v2720 = vunpack.c.h.bf16 %v2669
  %v2721 = vunpack.c.l.bf16 %v2670
  %v2722 = vunpack.c.h.bf16 %v2670
  %v2723 = vunpack.c.l.bf16 %v2671
  %v2724 = vunpack.c.h.bf16 %v2671
  %v2725 = vunpack.c.l.bf16 %v2672
  %v2726 = vunpack.c.h.bf16 %v2672
  %v2727 = vunpack.c.l.bf16 %v2673
  %v2728 = vunpack.c.h.bf16 %v2673
  %v2729 = vunpack.c.l.bf16 %v2674
  %v2730 = vunpack.c.h.bf16 %v2674
  %v2731 = vunpack.c.l.bf16 %v2675
  %v2732 = vunpack.c.h.bf16 %v2675
  %v2733 = vunpack.c.l.bf16 %v2676
  %v2734 = vunpack.c.h.bf16 %v2676
  %v2735 = vunpack.c.l.bf16 %v2677
  %v2736 = vunpack.c.h.bf16 %v2677
  %v2737 = vunpack.c.l.bf16 %v2678
  %v2738 = vunpack.c.h.bf16 %v2678
  %v2739 = vunpack.c.l.bf16 %v2679
  %v2740 = vunpack.c.h.bf16 %v2679
  %v2741 = vunpack.c.l.bf16 %v2680
  %v2742 = vunpack.c.h.bf16 %v2680
  %v2743 = vunpack.c.l.bf16 %v2681
  %v2744 = vunpack.c.h.bf16 %v2681
  %v2745 = vunpack.c.l.bf16 %v2682
  %v2746 = vunpack.c.h.bf16 %v2682
  %2747 = vmatpush.msra.mxu0 %v2713
  %2748 = vmatpush.msra.mxu0 %v2711
  %2749 = vmatpush.msra.mxu0 %v2709
  %2750 = vmatpush.msra.mxu0 %v2707
  %2751 = vmatpush.msra.mxu0 %v2705
  %2752 = vmatpush.msra.mxu0 %v2703
  %2753 = vmatpush.msra.mxu0 %v2701
  %2754 = vmatpush.msra.mxu0 %v2699
  %2755 = vmatpush.msra.mxu0 %v2697
  %2756 = vmatpush.msra.mxu0 %v2695
  %2757 = vmatpush.msra.mxu0 %v2693
  %2758 = vmatpush.msra.mxu0 %v2691
  %2759 = vmatpush.msra.mxu0 %v2689
  %2760 = vmatpush.msra.mxu0 %v2687
  %2761 = vmatpush.msra.mxu0 %v2685
  %2762 = vmatpush.msra.mxu0 %v2683
  %2763 = vmatmul.f32.gmra.mxu0 %v579
  %v2764 = vpop.f32.mrf.mxu0
  %v2765 = vadd.f32 0.0, %v2764
  %2766 = vmatmul.f32.gmra.mxu0 %v582
  %v2767 = vpop.f32.mrf.mxu0
  %v2768 = vadd.f32 0.0, %v2767
  %2769 = vmatmul.f32.gmra.mxu0 %v585
  %v2770 = vpop.f32.mrf.mxu0
  %v2771 = vadd.f32 0.0, %v2770
  %2772 = vmatmul.f32.gmra.mxu0 %v588
  %v2773 = vpop.f32.mrf.mxu0
  %v2774 = vadd.f32 0.0, %v2773
  %2775 = vdwg.mxu0
  %2776 = vmatpush.msra.mxu0 %v2745
  %2777 = vmatpush.msra.mxu0 %v2743
  %2778 = vmatpush.msra.mxu0 %v2741
  %2779 = vmatpush.msra.mxu0 %v2739
  %2780 = vmatpush.msra.mxu0 %v2737
  %2781 = vmatpush.msra.mxu0 %v2735
  %2782 = vmatpush.msra.mxu0 %v2733
  %2783 = vmatpush.msra.mxu0 %v2731
  %2784 = vmatpush.msra.mxu0 %v2729
  %2785 = vmatpush.msra.mxu0 %v2727
  %2786 = vmatpush.msra.mxu0 %v2725
  %2787 = vmatpush.msra.mxu0 %v2723
  %2788 = vmatpush.msra.mxu0 %v2721
  %2789 = vmatpush.msra.mxu0 %v2719
  %2790 = vmatpush.msra.mxu0 %v2717
  %2791 = vmatpush.msra.mxu0 %v2715
  %2792 = vmatmul.f32.gmra.mxu0 %v608
  %v2793 = vpop.f32.mrf.mxu0
  %v2794 = vadd.f32 %v2765, %v2793
  %2795 = vmatmul.f32.gmra.mxu0 %v611
  %v2796 = vpop.f32.mrf.mxu0
  %v2797 = vadd.f32 %v2768, %v2796
  %2798 = vmatmul.f32.gmra.mxu0 %v614
  %v2799 = vpop.f32.mrf.mxu0
  %v2800 = vadd.f32 %v2771, %v2799
  %2801 = vmatmul.f32.gmra.mxu0 %v617
  %v2802 = vpop.f32.mrf.mxu0
  %v2803 = vadd.f32 %v2774, %v2802
  %2804 = vdwg.mxu0
  %2805 = vmatpush.msra.mxu0 %v2714
  %2806 = vmatpush.msra.mxu0 %v2712
  %2807 = vmatpush.msra.mxu0 %v2710
  %2808 = vmatpush.msra.mxu0 %v2708
  %2809 = vmatpush.msra.mxu0 %v2706
  %2810 = vmatpush.msra.mxu0 %v2704
  %2811 = vmatpush.msra.mxu0 %v2702
  %2812 = vmatpush.msra.mxu0 %v2700
  %2813 = vmatpush.msra.mxu0 %v2698
  %2814 = vmatpush.msra.mxu0 %v2696
  %2815 = vmatpush.msra.mxu0 %v2694
  %2816 = vmatpush.msra.mxu0 %v2692
  %2817 = vmatpush.msra.mxu0 %v2690
  %2818 = vmatpush.msra.mxu0 %v2688
  %2819 = vmatpush.msra.mxu0 %v2686
  %2820 = vmatpush.msra.mxu0 %v2684
  %2821 = vmatmul.f32.gmra.mxu0 %v579
  %v2822 = vpop.f32.mrf.mxu0
  %v2823 = vadd.f32 0.0, %v2822
  %2824 = vmatmul.f32.gmra.mxu0 %v582
  %v2825 = vpop.f32.mrf.mxu0
  %v2826 = vadd.f32 0.0, %v2825
  %2827 = vmatmul.f32.gmra.mxu0 %v585
  %v2828 = vpop.f32.mrf.mxu0
  %v2829 = vadd.f32 0.0, %v2828
  %2830 = vmatmul.f32.gmra.mxu0 %v588
  %v2831 = vpop.f32.mrf.mxu0
  %v2832 = vadd.f32 0.0, %v2831
  %2833 = vdwg.mxu0
  %2834 = vmatpush.msra.mxu0 %v2746
  %2835 = vmatpush.msra.mxu0 %v2744
  %2836 = vmatpush.msra.mxu0 %v2742
  %2837 = vmatpush.msra.mxu0 %v2740
  %2838 = vmatpush.msra.mxu0 %v2738
  %2839 = vmatpush.msra.mxu0 %v2736
  %2840 = vmatpush.msra.mxu0 %v2734
  %2841 = vmatpush.msra.mxu0 %v2732
  %2842 = vmatpush.msra.mxu0 %v2730
  %2843 = vmatpush.msra.mxu0 %v2728
  %2844 = vmatpush.msra.mxu0 %v2726
  %2845 = vmatpush.msra.mxu0 %v2724
  %2846 = vmatpush.msra.mxu0 %v2722
  %2847 = vmatpush.msra.mxu0 %v2720
  %2848 = vmatpush.msra.mxu0 %v2718
  %2849 = vmatpush.msra.mxu0 %v2716
  %2850 = vmatmul.f32.gmra.mxu0 %v608
  %v2851 = vpop.f32.mrf.mxu0
  %v2852 = vadd.f32 %v2823, %v2851
  %2853 = vmatmul.f32.gmra.mxu0 %v611
  %v2854 = vpop.f32.mrf.mxu0
  %v2855 = vadd.f32 %v2826, %v2854
  %2856 = vmatmul.f32.gmra.mxu0 %v614
  %v2857 = vpop.f32.mrf.mxu0
  %v2858 = vadd.f32 %v2829, %v2857
  %2859 = vmatmul.f32.gmra.mxu0 %v617
  %v2860 = vpop.f32.mrf.mxu0
  %v2861 = vadd.f32 %v2832, %v2860
  %2862 = vdwg.mxu0
  %s2863 = scalar_lea.vmem %s4, 384
  %v2864 = vld [vmem:[%s2863] sm:$0xff]
  %v2865 = vld [vmem:[%s2863 + $0x8] sm:$0xff]
  %v2866 = vld [vmem:[%s2863 + $0x10] sm:$0xff]
  %v2867 = vld [vmem:[%s2863 + $0x18] sm:$0xff]
  %v2868 = vld [vmem:[%s2863 + $0x20] sm:$0xff]
  %v2869 = vld [vmem:[%s2863 + $0x28] sm:$0xff]
  %v2870 = vld [vmem:[%s2863 + $0x30] sm:$0xff]
  %v2871 = vld [vmem:[%s2863 + $0x38] sm:$0xff]
  %v2873 = vsel %vm1061, %v2864, 0
  %v2876 = vsel %vm1061, %v2865, 0
  %v2879 = vsel %vm1061, %v2866, 0
  %v2882 = vsel %vm1061, %v2867, 0
  %v2885 = vsel %vm1061, %v2868, 0
  %v2888 = vsel %vm1061, %v2869, 0
  %v2891 = vsel %vm1061, %v2870, 0
  %v2894 = vsel %vm1061, %v2871, 0
  %2896 = vmatpush.msra.mxu0 0.0
  %2897 = vmatpush.msra.mxu0 0.0
  %2898 = vmatpush.msra.mxu0 0.0
  %2899 = vmatpush.msra.mxu0 0.0
  %2900 = vmatpush.msra.mxu0 0.0
  %2901 = vmatpush.msra.mxu0 0.0
  %2902 = vmatpush.msra.mxu0 0.0
  %2903 = vmatpush.msra.mxu0 0.0
  %2904 = vmatpush.msra.mxu0 0.0
  %2905 = vmatpush.msra.mxu0 0.0
  %2906 = vmatpush.msra.mxu0 0.0
  %2907 = vmatpush.msra.mxu0 0.0
  %2908 = vmatpush.msra.mxu0 %v2803
  %2909 = vmatpush.msra.mxu0 %v2800
  %2910 = vmatpush.msra.mxu0 %v2797
  %2911 = vmatpush.msra.mxu0 %v2794
  %2912 = vmatmul.f32.gmra.mxu0 %v2873
  %v2913 = vpop.f32.mrf.mxu0
  %v2914 = vadd.f32 0.0, %v2913
  %2915 = vmatmul.f32.gmra.mxu0 %v2876
  %v2916 = vpop.f32.mrf.mxu0
  %v2917 = vadd.f32 0.0, %v2916
  %2918 = vmatmul.f32.gmra.mxu0 %v2879
  %v2919 = vpop.f32.mrf.mxu0
  %v2920 = vadd.f32 0.0, %v2919
  %2921 = vmatmul.f32.gmra.mxu0 %v2882
  %v2922 = vpop.f32.mrf.mxu0
  %v2923 = vadd.f32 0.0, %v2922
  %2924 = vmatmul.f32.gmra.mxu0 %v2885
  %v2925 = vpop.f32.mrf.mxu0
  %v2926 = vadd.f32 0.0, %v2925
  %2927 = vmatmul.f32.gmra.mxu0 %v2888
  %v2928 = vpop.f32.mrf.mxu0
  %v2929 = vadd.f32 0.0, %v2928
  %2930 = vmatmul.f32.gmra.mxu0 %v2891
  %v2931 = vpop.f32.mrf.mxu0
  %v2932 = vadd.f32 0.0, %v2931
  %2933 = vmatmul.f32.gmra.mxu0 %v2894
  %v2934 = vpop.f32.mrf.mxu0
  %v2935 = vadd.f32 0.0, %v2934
  %2936 = vdwg.mxu0
  %2937 = vmatpush.msra.mxu0 0.0
  %2938 = vmatpush.msra.mxu0 0.0
  %2939 = vmatpush.msra.mxu0 0.0
  %2940 = vmatpush.msra.mxu0 0.0
  %2941 = vmatpush.msra.mxu0 0.0
  %2942 = vmatpush.msra.mxu0 0.0
  %2943 = vmatpush.msra.mxu0 0.0
  %2944 = vmatpush.msra.mxu0 0.0
  %2945 = vmatpush.msra.mxu0 0.0
  %2946 = vmatpush.msra.mxu0 0.0
  %2947 = vmatpush.msra.mxu0 0.0
  %2948 = vmatpush.msra.mxu0 0.0
  %2949 = vmatpush.msra.mxu0 %v2861
  %2950 = vmatpush.msra.mxu0 %v2858
  %2951 = vmatpush.msra.mxu0 %v2855
  %2952 = vmatpush.msra.mxu0 %v2852
  %2953 = vmatmul.f32.gmra.mxu0 %v2873
  %v2954 = vpop.f32.mrf.mxu0
  %v2955 = vadd.f32 0.0, %v2954
  %2956 = vmatmul.f32.gmra.mxu0 %v2876
  %v2957 = vpop.f32.mrf.mxu0
  %v2958 = vadd.f32 0.0, %v2957
  %2959 = vmatmul.f32.gmra.mxu0 %v2879
  %v2960 = vpop.f32.mrf.mxu0
  %v2961 = vadd.f32 0.0, %v2960
  %2962 = vmatmul.f32.gmra.mxu0 %v2882
  %v2963 = vpop.f32.mrf.mxu0
  %v2964 = vadd.f32 0.0, %v2963
  %2965 = vmatmul.f32.gmra.mxu0 %v2885
  %v2966 = vpop.f32.mrf.mxu0
  %v2967 = vadd.f32 0.0, %v2966
  %2968 = vmatmul.f32.gmra.mxu0 %v2888
  %v2969 = vpop.f32.mrf.mxu0
  %v2970 = vadd.f32 0.0, %v2969
  %2971 = vmatmul.f32.gmra.mxu0 %v2891
  %v2972 = vpop.f32.mrf.mxu0
  %v2973 = vadd.f32 0.0, %v2972
  %2974 = vmatmul.f32.gmra.mxu0 %v2894
  %v2975 = vpop.f32.mrf.mxu0
  %v2976 = vadd.f32 0.0, %v2975
  %2977 = vdwg.mxu0
  %v2978 = vadd.f32 %v2634, %v2914
  %v2979 = vadd.f32 %v2635, %v2955
  %v2980 = vadd.f32 %v2636, %v2917
  %v2981 = vadd.f32 %v2637, %v2958
  %v2982 = vadd.f32 %v2638, %v2920
  %v2983 = vadd.f32 %v2639, %v2961
  %v2984 = vadd.f32 %v2640, %v2923
  %v2985 = vadd.f32 %v2641, %v2964
  %v2986 = vadd.f32 %v2642, %v2926
  %v2987 = vadd.f32 %v2643, %v2967
  %v2988 = vadd.f32 %v2644, %v2929
  %v2989 = vadd.f32 %v2645, %v2970
  %v2990 = vadd.f32 %v2646, %v2932
  %v2991 = vadd.f32 %v2647, %v2973
  %v2992 = vadd.f32 %v2648, %v2935
  %v2993 = vadd.f32 %v2649, %v2976
  %s2994 = scalar_lea.vmem %s6, 1792
  %v2995 = vld [vmem:[%s2994] sm:$0xff]
  %v2996 = vld [vmem:[%s2994 + $0x8] sm:$0xff]
  %v2997 = vld [vmem:[%s2994 + $0x10] sm:$0xff]
  %v2998 = vld [vmem:[%s2994 + $0x18] sm:$0xff]
  %v2999 = vld [vmem:[%s2994 + $0x20] sm:$0xff]
  %v3000 = vld [vmem:[%s2994 + $0x28] sm:$0xff]
  %v3001 = vld [vmem:[%s2994 + $0x30] sm:$0xff]
  %v3002 = vld [vmem:[%s2994 + $0x38] sm:$0xff]
  %v3003 = vld [vmem:[%s2994 + $0x40] sm:$0xff]
  %v3004 = vld [vmem:[%s2994 + $0x48] sm:$0xff]
  %v3005 = vld [vmem:[%s2994 + $0x50] sm:$0xff]
  %v3006 = vld [vmem:[%s2994 + $0x58] sm:$0xff]
  %v3007 = vld [vmem:[%s2994 + $0x60] sm:$0xff]
  %v3008 = vld [vmem:[%s2994 + $0x68] sm:$0xff]
  %v3009 = vld [vmem:[%s2994 + $0x70] sm:$0xff]
  %v3010 = vld [vmem:[%s2994 + $0x78] sm:$0xff]
  %v3011 = vld [vmem:[%s2994 + $0x80] sm:$0xff]
  %v3012 = vld [vmem:[%s2994 + $0x88] sm:$0xff]
  %v3013 = vld [vmem:[%s2994 + $0x90] sm:$0xff]
  %v3014 = vld [vmem:[%s2994 + $0x98] sm:$0xff]
  %v3015 = vld [vmem:[%s2994 + $0xa0] sm:$0xff]
  %v3016 = vld [vmem:[%s2994 + $0xa8] sm:$0xff]
  %v3017 = vld [vmem:[%s2994 + $0xb0] sm:$0xff]
  %v3018 = vld [vmem:[%s2994 + $0xb8] sm:$0xff]
  %v3019 = vld [vmem:[%s2994 + $0xc0] sm:$0xff]
  %v3020 = vld [vmem:[%s2994 + $0xc8] sm:$0xff]
  %v3021 = vld [vmem:[%s2994 + $0xd0] sm:$0xff]
  %v3022 = vld [vmem:[%s2994 + $0xd8] sm:$0xff]
  %v3023 = vld [vmem:[%s2994 + $0xe0] sm:$0xff]
  %v3024 = vld [vmem:[%s2994 + $0xe8] sm:$0xff]
  %v3025 = vld [vmem:[%s2994 + $0xf0] sm:$0xff]
  %v3026 = vld [vmem:[%s2994 + $0xf8] sm:$0xff]
  %v3027 = vunpack.c.l.bf16 %v2995
  %v3028 = vunpack.c.h.bf16 %v2995
  %v3029 = vunpack.c.l.bf16 %v2996
  %v3030 = vunpack.c.h.bf16 %v2996
  %v3031 = vunpack.c.l.bf16 %v2997
  %v3032 = vunpack.c.h.bf16 %v2997
  %v3033 = vunpack.c.l.bf16 %v2998
  %v3034 = vunpack.c.h.bf16 %v2998
  %v3035 = vunpack.c.l.bf16 %v2999
  %v3036 = vunpack.c.h.bf16 %v2999
  %v3037 = vunpack.c.l.bf16 %v3000
  %v3038 = vunpack.c.h.bf16 %v3000
  %v3039 = vunpack.c.l.bf16 %v3001
  %v3040 = vunpack.c.h.bf16 %v3001
  %v3041 = vunpack.c.l.bf16 %v3002
  %v3042 = vunpack.c.h.bf16 %v3002
  %v3043 = vunpack.c.l.bf16 %v3003
  %v3044 = vunpack.c.h.bf16 %v3003
  %v3045 = vunpack.c.l.bf16 %v3004
  %v3046 = vunpack.c.h.bf16 %v3004
  %v3047 = vunpack.c.l.bf16 %v3005
  %v3048 = vunpack.c.h.bf16 %v3005
  %v3049 = vunpack.c.l.bf16 %v3006
  %v3050 = vunpack.c.h.bf16 %v3006
  %v3051 = vunpack.c.l.bf16 %v3007
  %v3052 = vunpack.c.h.bf16 %v3007
  %v3053 = vunpack.c.l.bf16 %v3008
  %v3054 = vunpack.c.h.bf16 %v3008
  %v3055 = vunpack.c.l.bf16 %v3009
  %v3056 = vunpack.c.h.bf16 %v3009
  %v3057 = vunpack.c.l.bf16 %v3010
  %v3058 = vunpack.c.h.bf16 %v3010
  %v3059 = vunpack.c.l.bf16 %v3011
  %v3060 = vunpack.c.h.bf16 %v3011
  %v3061 = vunpack.c.l.bf16 %v3012
  %v3062 = vunpack.c.h.bf16 %v3012
  %v3063 = vunpack.c.l.bf16 %v3013
  %v3064 = vunpack.c.h.bf16 %v3013
  %v3065 = vunpack.c.l.bf16 %v3014
  %v3066 = vunpack.c.h.bf16 %v3014
  %v3067 = vunpack.c.l.bf16 %v3015
  %v3068 = vunpack.c.h.bf16 %v3015
  %v3069 = vunpack.c.l.bf16 %v3016
  %v3070 = vunpack.c.h.bf16 %v3016
  %v3071 = vunpack.c.l.bf16 %v3017
  %v3072 = vunpack.c.h.bf16 %v3017
  %v3073 = vunpack.c.l.bf16 %v3018
  %v3074 = vunpack.c.h.bf16 %v3018
  %v3075 = vunpack.c.l.bf16 %v3019
  %v3076 = vunpack.c.h.bf16 %v3019
  %v3077 = vunpack.c.l.bf16 %v3020
  %v3078 = vunpack.c.h.bf16 %v3020
  %v3079 = vunpack.c.l.bf16 %v3021
  %v3080 = vunpack.c.h.bf16 %v3021
  %v3081 = vunpack.c.l.bf16 %v3022
  %v3082 = vunpack.c.h.bf16 %v3022
  %v3083 = vunpack.c.l.bf16 %v3023
  %v3084 = vunpack.c.h.bf16 %v3023
  %v3085 = vunpack.c.l.bf16 %v3024
  %v3086 = vunpack.c.h.bf16 %v3024
  %v3087 = vunpack.c.l.bf16 %v3025
  %v3088 = vunpack.c.h.bf16 %v3025
  %v3089 = vunpack.c.l.bf16 %v3026
  %v3090 = vunpack.c.h.bf16 %v3026
  %3091 = vmatpush.msra.mxu0 %v3057
  %3092 = vmatpush.msra.mxu0 %v3055
  %3093 = vmatpush.msra.mxu0 %v3053
  %3094 = vmatpush.msra.mxu0 %v3051
  %3095 = vmatpush.msra.mxu0 %v3049
  %3096 = vmatpush.msra.mxu0 %v3047
  %3097 = vmatpush.msra.mxu0 %v3045
  %3098 = vmatpush.msra.mxu0 %v3043
  %3099 = vmatpush.msra.mxu0 %v3041
  %3100 = vmatpush.msra.mxu0 %v3039
  %3101 = vmatpush.msra.mxu0 %v3037
  %3102 = vmatpush.msra.mxu0 %v3035
  %3103 = vmatpush.msra.mxu0 %v3033
  %3104 = vmatpush.msra.mxu0 %v3031
  %3105 = vmatpush.msra.mxu0 %v3029
  %3106 = vmatpush.msra.mxu0 %v3027
  %3107 = vmatmul.f32.gmra.mxu0 %v579
  %v3108 = vpop.f32.mrf.mxu0
  %v3109 = vadd.f32 0.0, %v3108
  %3110 = vmatmul.f32.gmra.mxu0 %v582
  %v3111 = vpop.f32.mrf.mxu0
  %v3112 = vadd.f32 0.0, %v3111
  %3113 = vmatmul.f32.gmra.mxu0 %v585
  %v3114 = vpop.f32.mrf.mxu0
  %v3115 = vadd.f32 0.0, %v3114
  %3116 = vmatmul.f32.gmra.mxu0 %v588
  %v3117 = vpop.f32.mrf.mxu0
  %v3118 = vadd.f32 0.0, %v3117
  %3119 = vdwg.mxu0
  %3120 = vmatpush.msra.mxu0 %v3089
  %3121 = vmatpush.msra.mxu0 %v3087
  %3122 = vmatpush.msra.mxu0 %v3085
  %3123 = vmatpush.msra.mxu0 %v3083
  %3124 = vmatpush.msra.mxu0 %v3081
  %3125 = vmatpush.msra.mxu0 %v3079
  %3126 = vmatpush.msra.mxu0 %v3077
  %3127 = vmatpush.msra.mxu0 %v3075
  %3128 = vmatpush.msra.mxu0 %v3073
  %3129 = vmatpush.msra.mxu0 %v3071
  %3130 = vmatpush.msra.mxu0 %v3069
  %3131 = vmatpush.msra.mxu0 %v3067
  %3132 = vmatpush.msra.mxu0 %v3065
  %3133 = vmatpush.msra.mxu0 %v3063
  %3134 = vmatpush.msra.mxu0 %v3061
  %3135 = vmatpush.msra.mxu0 %v3059
  %3136 = vmatmul.f32.gmra.mxu0 %v608
  %v3137 = vpop.f32.mrf.mxu0
  %v3138 = vadd.f32 %v3109, %v3137
  %3139 = vmatmul.f32.gmra.mxu0 %v611
  %v3140 = vpop.f32.mrf.mxu0
  %v3141 = vadd.f32 %v3112, %v3140
  %3142 = vmatmul.f32.gmra.mxu0 %v614
  %v3143 = vpop.f32.mrf.mxu0
  %v3144 = vadd.f32 %v3115, %v3143
  %3145 = vmatmul.f32.gmra.mxu0 %v617
  %v3146 = vpop.f32.mrf.mxu0
  %v3147 = vadd.f32 %v3118, %v3146
  %3148 = vdwg.mxu0
  %3149 = vmatpush.msra.mxu0 %v3058
  %3150 = vmatpush.msra.mxu0 %v3056
  %3151 = vmatpush.msra.mxu0 %v3054
  %3152 = vmatpush.msra.mxu0 %v3052
  %3153 = vmatpush.msra.mxu0 %v3050
  %3154 = vmatpush.msra.mxu0 %v3048
  %3155 = vmatpush.msra.mxu0 %v3046
  %3156 = vmatpush.msra.mxu0 %v3044
  %3157 = vmatpush.msra.mxu0 %v3042
  %3158 = vmatpush.msra.mxu0 %v3040
  %3159 = vmatpush.msra.mxu0 %v3038
  %3160 = vmatpush.msra.mxu0 %v3036
  %3161 = vmatpush.msra.mxu0 %v3034
  %3162 = vmatpush.msra.mxu0 %v3032
  %3163 = vmatpush.msra.mxu0 %v3030
  %3164 = vmatpush.msra.mxu0 %v3028
  %3165 = vmatmul.f32.gmra.mxu0 %v579
  %v3166 = vpop.f32.mrf.mxu0
  %v3167 = vadd.f32 0.0, %v3166
  %3168 = vmatmul.f32.gmra.mxu0 %v582
  %v3169 = vpop.f32.mrf.mxu0
  %v3170 = vadd.f32 0.0, %v3169
  %3171 = vmatmul.f32.gmra.mxu0 %v585
  %v3172 = vpop.f32.mrf.mxu0
  %v3173 = vadd.f32 0.0, %v3172
  %3174 = vmatmul.f32.gmra.mxu0 %v588
  %v3175 = vpop.f32.mrf.mxu0
  %v3176 = vadd.f32 0.0, %v3175
  %3177 = vdwg.mxu0
  %3178 = vmatpush.msra.mxu0 %v3090
  %3179 = vmatpush.msra.mxu0 %v3088
  %3180 = vmatpush.msra.mxu0 %v3086
  %3181 = vmatpush.msra.mxu0 %v3084
  %3182 = vmatpush.msra.mxu0 %v3082
  %3183 = vmatpush.msra.mxu0 %v3080
  %3184 = vmatpush.msra.mxu0 %v3078
  %3185 = vmatpush.msra.mxu0 %v3076
  %3186 = vmatpush.msra.mxu0 %v3074
  %3187 = vmatpush.msra.mxu0 %v3072
  %3188 = vmatpush.msra.mxu0 %v3070
  %3189 = vmatpush.msra.mxu0 %v3068
  %3190 = vmatpush.msra.mxu0 %v3066
  %3191 = vmatpush.msra.mxu0 %v3064
  %3192 = vmatpush.msra.mxu0 %v3062
  %3193 = vmatpush.msra.mxu0 %v3060
  %3194 = vmatmul.f32.gmra.mxu0 %v608
  %v3195 = vpop.f32.mrf.mxu0
  %v3196 = vadd.f32 %v3167, %v3195
  %3197 = vmatmul.f32.gmra.mxu0 %v611
  %v3198 = vpop.f32.mrf.mxu0
  %v3199 = vadd.f32 %v3170, %v3198
  %3200 = vmatmul.f32.gmra.mxu0 %v614
  %v3201 = vpop.f32.mrf.mxu0
  %v3202 = vadd.f32 %v3173, %v3201
  %3203 = vmatmul.f32.gmra.mxu0 %v617
  %v3204 = vpop.f32.mrf.mxu0
  %v3205 = vadd.f32 %v3176, %v3204
  %3206 = vdwg.mxu0
  %s3207 = scalar_lea.vmem %s4, 448
  %v3208 = vld [vmem:[%s3207] sm:$0xff]
  %v3209 = vld [vmem:[%s3207 + $0x8] sm:$0xff]
  %v3210 = vld [vmem:[%s3207 + $0x10] sm:$0xff]
  %v3211 = vld [vmem:[%s3207 + $0x18] sm:$0xff]
  %v3212 = vld [vmem:[%s3207 + $0x20] sm:$0xff]
  %v3213 = vld [vmem:[%s3207 + $0x28] sm:$0xff]
  %v3214 = vld [vmem:[%s3207 + $0x30] sm:$0xff]
  %v3215 = vld [vmem:[%s3207 + $0x38] sm:$0xff]
  %v3217 = vsel %vm1061, %v3208, 0
  %v3220 = vsel %vm1061, %v3209, 0
  %v3223 = vsel %vm1061, %v3210, 0
  %v3226 = vsel %vm1061, %v3211, 0
  %v3229 = vsel %vm1061, %v3212, 0
  %v3232 = vsel %vm1061, %v3213, 0
  %v3235 = vsel %vm1061, %v3214, 0
  %v3238 = vsel %vm1061, %v3215, 0
  %3240 = vmatpush.msra.mxu0 0.0
  %3241 = vmatpush.msra.mxu0 0.0
  %3242 = vmatpush.msra.mxu0 0.0
  %3243 = vmatpush.msra.mxu0 0.0
  %3244 = vmatpush.msra.mxu0 0.0
  %3245 = vmatpush.msra.mxu0 0.0
  %3246 = vmatpush.msra.mxu0 0.0
  %3247 = vmatpush.msra.mxu0 0.0
  %3248 = vmatpush.msra.mxu0 0.0
  %3249 = vmatpush.msra.mxu0 0.0
  %3250 = vmatpush.msra.mxu0 0.0
  %3251 = vmatpush.msra.mxu0 0.0
  %3252 = vmatpush.msra.mxu0 %v3147
  %3253 = vmatpush.msra.mxu0 %v3144
  %3254 = vmatpush.msra.mxu0 %v3141
  %3255 = vmatpush.msra.mxu0 %v3138
  %3256 = vmatmul.f32.gmra.mxu0 %v3217
  %v3257 = vpop.f32.mrf.mxu0
  %v3258 = vadd.f32 0.0, %v3257
  %3259 = vmatmul.f32.gmra.mxu0 %v3220
  %v3260 = vpop.f32.mrf.mxu0
  %v3261 = vadd.f32 0.0, %v3260
  %3262 = vmatmul.f32.gmra.mxu0 %v3223
  %v3263 = vpop.f32.mrf.mxu0
  %v3264 = vadd.f32 0.0, %v3263
  %3265 = vmatmul.f32.gmra.mxu0 %v3226
  %v3266 = vpop.f32.mrf.mxu0
  %v3267 = vadd.f32 0.0, %v3266
  %3268 = vmatmul.f32.gmra.mxu0 %v3229
  %v3269 = vpop.f32.mrf.mxu0
  %v3270 = vadd.f32 0.0, %v3269
  %3271 = vmatmul.f32.gmra.mxu0 %v3232
  %v3272 = vpop.f32.mrf.mxu0
  %v3273 = vadd.f32 0.0, %v3272
  %3274 = vmatmul.f32.gmra.mxu0 %v3235
  %v3275 = vpop.f32.mrf.mxu0
  %v3276 = vadd.f32 0.0, %v3275
  %3277 = vmatmul.f32.gmra.mxu0 %v3238
  %v3278 = vpop.f32.mrf.mxu0
  %v3279 = vadd.f32 0.0, %v3278
  %3280 = vdwg.mxu0
  %3281 = vmatpush.msra.mxu0 0.0
  %3282 = vmatpush.msra.mxu0 0.0
  %3283 = vmatpush.msra.mxu0 0.0
  %3284 = vmatpush.msra.mxu0 0.0
  %3285 = vmatpush.msra.mxu0 0.0
  %3286 = vmatpush.msra.mxu0 0.0
  %3287 = vmatpush.msra.mxu0 0.0
  %3288 = vmatpush.msra.mxu0 0.0
  %3289 = vmatpush.msra.mxu0 0.0
  %3290 = vmatpush.msra.mxu0 0.0
  %3291 = vmatpush.msra.mxu0 0.0
  %3292 = vmatpush.msra.mxu0 0.0
  %3293 = vmatpush.msra.mxu0 %v3205
  %3294 = vmatpush.msra.mxu0 %v3202
  %3295 = vmatpush.msra.mxu0 %v3199
  %3296 = vmatpush.msra.mxu0 %v3196
  %3297 = vmatmul.f32.gmra.mxu0 %v3217
  %v3298 = vpop.f32.mrf.mxu0
  %v3299 = vadd.f32 0.0, %v3298
  %3300 = vmatmul.f32.gmra.mxu0 %v3220
  %v3301 = vpop.f32.mrf.mxu0
  %v3302 = vadd.f32 0.0, %v3301
  %3303 = vmatmul.f32.gmra.mxu0 %v3223
  %v3304 = vpop.f32.mrf.mxu0
  %v3305 = vadd.f32 0.0, %v3304
  %3306 = vmatmul.f32.gmra.mxu0 %v3226
  %v3307 = vpop.f32.mrf.mxu0
  %v3308 = vadd.f32 0.0, %v3307
  %3309 = vmatmul.f32.gmra.mxu0 %v3229
  %v3310 = vpop.f32.mrf.mxu0
  %v3311 = vadd.f32 0.0, %v3310
  %3312 = vmatmul.f32.gmra.mxu0 %v3232
  %v3313 = vpop.f32.mrf.mxu0
  %v3314 = vadd.f32 0.0, %v3313
  %3315 = vmatmul.f32.gmra.mxu0 %v3235
  %v3316 = vpop.f32.mrf.mxu0
  %v3317 = vadd.f32 0.0, %v3316
  %3318 = vmatmul.f32.gmra.mxu0 %v3238
  %v3319 = vpop.f32.mrf.mxu0
  %v3320 = vadd.f32 0.0, %v3319
  %3321 = vdwg.mxu0
  %v3322 = vadd.f32 %v2978, %v3258
  %v3323 = vadd.f32 %v2979, %v3299
  %v3324 = vadd.f32 %v2980, %v3261
  %v3325 = vadd.f32 %v2981, %v3302
  %v3326 = vadd.f32 %v2982, %v3264
  %v3327 = vadd.f32 %v2983, %v3305
  %v3328 = vadd.f32 %v2984, %v3267
  %v3329 = vadd.f32 %v2985, %v3308
  %v3330 = vadd.f32 %v2986, %v3270
  %v3331 = vadd.f32 %v2987, %v3311
  %v3332 = vadd.f32 %v2988, %v3273
  %v3333 = vadd.f32 %v2989, %v3314
  %v3334 = vadd.f32 %v2990, %v3276
  %v3335 = vadd.f32 %v2991, %v3317
  %v3336 = vadd.f32 %v2992, %v3279
  %v3337 = vadd.f32 %v2993, %v3320
  %s3338 = scalar_lea.vmem %s6, 2048
  %v3339 = vld [vmem:[%s3338] sm:$0xff]
  %v3340 = vld [vmem:[%s3338 + $0x8] sm:$0xff]
  %v3341 = vld [vmem:[%s3338 + $0x10] sm:$0xff]
  %v3342 = vld [vmem:[%s3338 + $0x18] sm:$0xff]
  %v3343 = vld [vmem:[%s3338 + $0x20] sm:$0xff]
  %v3344 = vld [vmem:[%s3338 + $0x28] sm:$0xff]
  %v3345 = vld [vmem:[%s3338 + $0x30] sm:$0xff]
  %v3346 = vld [vmem:[%s3338 + $0x38] sm:$0xff]
  %v3347 = vld [vmem:[%s3338 + $0x40] sm:$0xff]
  %v3348 = vld [vmem:[%s3338 + $0x48] sm:$0xff]
  %v3349 = vld [vmem:[%s3338 + $0x50] sm:$0xff]
  %v3350 = vld [vmem:[%s3338 + $0x58] sm:$0xff]
  %v3351 = vld [vmem:[%s3338 + $0x60] sm:$0xff]
  %v3352 = vld [vmem:[%s3338 + $0x68] sm:$0xff]
  %v3353 = vld [vmem:[%s3338 + $0x70] sm:$0xff]
  %v3354 = vld [vmem:[%s3338 + $0x78] sm:$0xff]
  %v3355 = vld [vmem:[%s3338 + $0x80] sm:$0xff]
  %v3356 = vld [vmem:[%s3338 + $0x88] sm:$0xff]
  %v3357 = vld [vmem:[%s3338 + $0x90] sm:$0xff]
  %v3358 = vld [vmem:[%s3338 + $0x98] sm:$0xff]
  %v3359 = vld [vmem:[%s3338 + $0xa0] sm:$0xff]
  %v3360 = vld [vmem:[%s3338 + $0xa8] sm:$0xff]
  %v3361 = vld [vmem:[%s3338 + $0xb0] sm:$0xff]
  %v3362 = vld [vmem:[%s3338 + $0xb8] sm:$0xff]
  %v3363 = vld [vmem:[%s3338 + $0xc0] sm:$0xff]
  %v3364 = vld [vmem:[%s3338 + $0xc8] sm:$0xff]
  %v3365 = vld [vmem:[%s3338 + $0xd0] sm:$0xff]
  %v3366 = vld [vmem:[%s3338 + $0xd8] sm:$0xff]
  %v3367 = vld [vmem:[%s3338 + $0xe0] sm:$0xff]
  %v3368 = vld [vmem:[%s3338 + $0xe8] sm:$0xff]
  %v3369 = vld [vmem:[%s3338 + $0xf0] sm:$0xff]
  %v3370 = vld [vmem:[%s3338 + $0xf8] sm:$0xff]
  %v3371 = vunpack.c.l.bf16 %v3339
  %v3372 = vunpack.c.h.bf16 %v3339
  %v3373 = vunpack.c.l.bf16 %v3340
  %v3374 = vunpack.c.h.bf16 %v3340
  %v3375 = vunpack.c.l.bf16 %v3341
  %v3376 = vunpack.c.h.bf16 %v3341
  %v3377 = vunpack.c.l.bf16 %v3342
  %v3378 = vunpack.c.h.bf16 %v3342
  %v3379 = vunpack.c.l.bf16 %v3343
  %v3380 = vunpack.c.h.bf16 %v3343
  %v3381 = vunpack.c.l.bf16 %v3344
  %v3382 = vunpack.c.h.bf16 %v3344
  %v3383 = vunpack.c.l.bf16 %v3345
  %v3384 = vunpack.c.h.bf16 %v3345
  %v3385 = vunpack.c.l.bf16 %v3346
  %v3386 = vunpack.c.h.bf16 %v3346
  %v3387 = vunpack.c.l.bf16 %v3347
  %v3388 = vunpack.c.h.bf16 %v3347
  %v3389 = vunpack.c.l.bf16 %v3348
  %v3390 = vunpack.c.h.bf16 %v3348
  %v3391 = vunpack.c.l.bf16 %v3349
  %v3392 = vunpack.c.h.bf16 %v3349
  %v3393 = vunpack.c.l.bf16 %v3350
  %v3394 = vunpack.c.h.bf16 %v3350
  %v3395 = vunpack.c.l.bf16 %v3351
  %v3396 = vunpack.c.h.bf16 %v3351
  %v3397 = vunpack.c.l.bf16 %v3352
  %v3398 = vunpack.c.h.bf16 %v3352
  %v3399 = vunpack.c.l.bf16 %v3353
  %v3400 = vunpack.c.h.bf16 %v3353
  %v3401 = vunpack.c.l.bf16 %v3354
  %v3402 = vunpack.c.h.bf16 %v3354
  %v3403 = vunpack.c.l.bf16 %v3355
  %v3404 = vunpack.c.h.bf16 %v3355
  %v3405 = vunpack.c.l.bf16 %v3356
  %v3406 = vunpack.c.h.bf16 %v3356
  %v3407 = vunpack.c.l.bf16 %v3357
  %v3408 = vunpack.c.h.bf16 %v3357
  %v3409 = vunpack.c.l.bf16 %v3358
  %v3410 = vunpack.c.h.bf16 %v3358
  %v3411 = vunpack.c.l.bf16 %v3359
  %v3412 = vunpack.c.h.bf16 %v3359
  %v3413 = vunpack.c.l.bf16 %v3360
  %v3414 = vunpack.c.h.bf16 %v3360
  %v3415 = vunpack.c.l.bf16 %v3361
  %v3416 = vunpack.c.h.bf16 %v3361
  %v3417 = vunpack.c.l.bf16 %v3362
  %v3418 = vunpack.c.h.bf16 %v3362
  %v3419 = vunpack.c.l.bf16 %v3363
  %v3420 = vunpack.c.h.bf16 %v3363
  %v3421 = vunpack.c.l.bf16 %v3364
  %v3422 = vunpack.c.h.bf16 %v3364
  %v3423 = vunpack.c.l.bf16 %v3365
  %v3424 = vunpack.c.h.bf16 %v3365
  %v3425 = vunpack.c.l.bf16 %v3366
  %v3426 = vunpack.c.h.bf16 %v3366
  %v3427 = vunpack.c.l.bf16 %v3367
  %v3428 = vunpack.c.h.bf16 %v3367
  %v3429 = vunpack.c.l.bf16 %v3368
  %v3430 = vunpack.c.h.bf16 %v3368
  %v3431 = vunpack.c.l.bf16 %v3369
  %v3432 = vunpack.c.h.bf16 %v3369
  %v3433 = vunpack.c.l.bf16 %v3370
  %v3434 = vunpack.c.h.bf16 %v3370
  %3435 = vmatpush.msra.mxu0 %v3401
  %3436 = vmatpush.msra.mxu0 %v3399
  %3437 = vmatpush.msra.mxu0 %v3397
  %3438 = vmatpush.msra.mxu0 %v3395
  %3439 = vmatpush.msra.mxu0 %v3393
  %3440 = vmatpush.msra.mxu0 %v3391
  %3441 = vmatpush.msra.mxu0 %v3389
  %3442 = vmatpush.msra.mxu0 %v3387
  %3443 = vmatpush.msra.mxu0 %v3385
  %3444 = vmatpush.msra.mxu0 %v3383
  %3445 = vmatpush.msra.mxu0 %v3381
  %3446 = vmatpush.msra.mxu0 %v3379
  %3447 = vmatpush.msra.mxu0 %v3377
  %3448 = vmatpush.msra.mxu0 %v3375
  %3449 = vmatpush.msra.mxu0 %v3373
  %3450 = vmatpush.msra.mxu0 %v3371
  %3451 = vmatmul.f32.gmra.mxu0 %v579
  %v3452 = vpop.f32.mrf.mxu0
  %v3453 = vadd.f32 0.0, %v3452
  %3454 = vmatmul.f32.gmra.mxu0 %v582
  %v3455 = vpop.f32.mrf.mxu0
  %v3456 = vadd.f32 0.0, %v3455
  %3457 = vmatmul.f32.gmra.mxu0 %v585
  %v3458 = vpop.f32.mrf.mxu0
  %v3459 = vadd.f32 0.0, %v3458
  %3460 = vmatmul.f32.gmra.mxu0 %v588
  %v3461 = vpop.f32.mrf.mxu0
  %v3462 = vadd.f32 0.0, %v3461
  %3463 = vdwg.mxu0
  %3464 = vmatpush.msra.mxu0 %v3433
  %3465 = vmatpush.msra.mxu0 %v3431
  %3466 = vmatpush.msra.mxu0 %v3429
  %3467 = vmatpush.msra.mxu0 %v3427
  %3468 = vmatpush.msra.mxu0 %v3425
  %3469 = vmatpush.msra.mxu0 %v3423
  %3470 = vmatpush.msra.mxu0 %v3421
  %3471 = vmatpush.msra.mxu0 %v3419
  %3472 = vmatpush.msra.mxu0 %v3417
  %3473 = vmatpush.msra.mxu0 %v3415
  %3474 = vmatpush.msra.mxu0 %v3413
  %3475 = vmatpush.msra.mxu0 %v3411
  %3476 = vmatpush.msra.mxu0 %v3409
  %3477 = vmatpush.msra.mxu0 %v3407
  %3478 = vmatpush.msra.mxu0 %v3405
  %3479 = vmatpush.msra.mxu0 %v3403
  %3480 = vmatmul.f32.gmra.mxu0 %v608
  %v3481 = vpop.f32.mrf.mxu0
  %v3482 = vadd.f32 %v3453, %v3481
  %3483 = vmatmul.f32.gmra.mxu0 %v611
  %v3484 = vpop.f32.mrf.mxu0
  %v3485 = vadd.f32 %v3456, %v3484
  %3486 = vmatmul.f32.gmra.mxu0 %v614
  %v3487 = vpop.f32.mrf.mxu0
  %v3488 = vadd.f32 %v3459, %v3487
  %3489 = vmatmul.f32.gmra.mxu0 %v617
  %v3490 = vpop.f32.mrf.mxu0
  %v3491 = vadd.f32 %v3462, %v3490
  %3492 = vdwg.mxu0
  %3493 = vmatpush.msra.mxu0 %v3402
  %3494 = vmatpush.msra.mxu0 %v3400
  %3495 = vmatpush.msra.mxu0 %v3398
  %3496 = vmatpush.msra.mxu0 %v3396
  %3497 = vmatpush.msra.mxu0 %v3394
  %3498 = vmatpush.msra.mxu0 %v3392
  %3499 = vmatpush.msra.mxu0 %v3390
  %3500 = vmatpush.msra.mxu0 %v3388
  %3501 = vmatpush.msra.mxu0 %v3386
  %3502 = vmatpush.msra.mxu0 %v3384
  %3503 = vmatpush.msra.mxu0 %v3382
  %3504 = vmatpush.msra.mxu0 %v3380
  %3505 = vmatpush.msra.mxu0 %v3378
  %3506 = vmatpush.msra.mxu0 %v3376
  %3507 = vmatpush.msra.mxu0 %v3374
  %3508 = vmatpush.msra.mxu0 %v3372
  %3509 = vmatmul.f32.gmra.mxu0 %v579
  %v3510 = vpop.f32.mrf.mxu0
  %v3511 = vadd.f32 0.0, %v3510
  %3512 = vmatmul.f32.gmra.mxu0 %v582
  %v3513 = vpop.f32.mrf.mxu0
  %v3514 = vadd.f32 0.0, %v3513
  %3515 = vmatmul.f32.gmra.mxu0 %v585
  %v3516 = vpop.f32.mrf.mxu0
  %v3517 = vadd.f32 0.0, %v3516
  %3518 = vmatmul.f32.gmra.mxu0 %v588
  %v3519 = vpop.f32.mrf.mxu0
  %v3520 = vadd.f32 0.0, %v3519
  %3521 = vdwg.mxu0
  %3522 = vmatpush.msra.mxu0 %v3434
  %3523 = vmatpush.msra.mxu0 %v3432
  %3524 = vmatpush.msra.mxu0 %v3430
  %3525 = vmatpush.msra.mxu0 %v3428
  %3526 = vmatpush.msra.mxu0 %v3426
  %3527 = vmatpush.msra.mxu0 %v3424
  %3528 = vmatpush.msra.mxu0 %v3422
  %3529 = vmatpush.msra.mxu0 %v3420
  %3530 = vmatpush.msra.mxu0 %v3418
  %3531 = vmatpush.msra.mxu0 %v3416
  %3532 = vmatpush.msra.mxu0 %v3414
  %3533 = vmatpush.msra.mxu0 %v3412
  %3534 = vmatpush.msra.mxu0 %v3410
  %3535 = vmatpush.msra.mxu0 %v3408
  %3536 = vmatpush.msra.mxu0 %v3406
  %3537 = vmatpush.msra.mxu0 %v3404
  %3538 = vmatmul.f32.gmra.mxu0 %v608
  %v3539 = vpop.f32.mrf.mxu0
  %v3540 = vadd.f32 %v3511, %v3539
  %3541 = vmatmul.f32.gmra.mxu0 %v611
  %v3542 = vpop.f32.mrf.mxu0
  %v3543 = vadd.f32 %v3514, %v3542
  %3544 = vmatmul.f32.gmra.mxu0 %v614
  %v3545 = vpop.f32.mrf.mxu0
  %v3546 = vadd.f32 %v3517, %v3545
  %3547 = vmatmul.f32.gmra.mxu0 %v617
  %v3548 = vpop.f32.mrf.mxu0
  %v3549 = vadd.f32 %v3520, %v3548
  %3550 = vdwg.mxu0
  %s3551 = scalar_lea.vmem %s4, 512
  %v3552 = vld [vmem:[%s3551] sm:$0xff]
  %v3553 = vld [vmem:[%s3551 + $0x8] sm:$0xff]
  %v3554 = vld [vmem:[%s3551 + $0x10] sm:$0xff]
  %v3555 = vld [vmem:[%s3551 + $0x18] sm:$0xff]
  %v3556 = vld [vmem:[%s3551 + $0x20] sm:$0xff]
  %v3557 = vld [vmem:[%s3551 + $0x28] sm:$0xff]
  %v3558 = vld [vmem:[%s3551 + $0x30] sm:$0xff]
  %v3559 = vld [vmem:[%s3551 + $0x38] sm:$0xff]
  %v3561 = vsel %vm1061, %v3552, 0
  %v3564 = vsel %vm1061, %v3553, 0
  %v3567 = vsel %vm1061, %v3554, 0
  %v3570 = vsel %vm1061, %v3555, 0
  %v3573 = vsel %vm1061, %v3556, 0
  %v3576 = vsel %vm1061, %v3557, 0
  %v3579 = vsel %vm1061, %v3558, 0
  %v3582 = vsel %vm1061, %v3559, 0
  %3584 = vmatpush.msra.mxu0 0.0
  %3585 = vmatpush.msra.mxu0 0.0
  %3586 = vmatpush.msra.mxu0 0.0
  %3587 = vmatpush.msra.mxu0 0.0
  %3588 = vmatpush.msra.mxu0 0.0
  %3589 = vmatpush.msra.mxu0 0.0
  %3590 = vmatpush.msra.mxu0 0.0
  %3591 = vmatpush.msra.mxu0 0.0
  %3592 = vmatpush.msra.mxu0 0.0
  %3593 = vmatpush.msra.mxu0 0.0
  %3594 = vmatpush.msra.mxu0 0.0
  %3595 = vmatpush.msra.mxu0 0.0
  %3596 = vmatpush.msra.mxu0 %v3491
  %3597 = vmatpush.msra.mxu0 %v3488
  %3598 = vmatpush.msra.mxu0 %v3485
  %3599 = vmatpush.msra.mxu0 %v3482
  %3600 = vmatmul.f32.gmra.mxu0 %v3561
  %v3601 = vpop.f32.mrf.mxu0
  %v3602 = vadd.f32 0.0, %v3601
  %3603 = vmatmul.f32.gmra.mxu0 %v3564
  %v3604 = vpop.f32.mrf.mxu0
  %v3605 = vadd.f32 0.0, %v3604
  %3606 = vmatmul.f32.gmra.mxu0 %v3567
  %v3607 = vpop.f32.mrf.mxu0
  %v3608 = vadd.f32 0.0, %v3607
  %3609 = vmatmul.f32.gmra.mxu0 %v3570
  %v3610 = vpop.f32.mrf.mxu0
  %v3611 = vadd.f32 0.0, %v3610
  %3612 = vmatmul.f32.gmra.mxu0 %v3573
  %v3613 = vpop.f32.mrf.mxu0
  %v3614 = vadd.f32 0.0, %v3613
  %3615 = vmatmul.f32.gmra.mxu0 %v3576
  %v3616 = vpop.f32.mrf.mxu0
  %v3617 = vadd.f32 0.0, %v3616
  %3618 = vmatmul.f32.gmra.mxu0 %v3579
  %v3619 = vpop.f32.mrf.mxu0
  %v3620 = vadd.f32 0.0, %v3619
  %3621 = vmatmul.f32.gmra.mxu0 %v3582
  %v3622 = vpop.f32.mrf.mxu0
  %v3623 = vadd.f32 0.0, %v3622
  %3624 = vdwg.mxu0
  %3625 = vmatpush.msra.mxu0 0.0
  %3626 = vmatpush.msra.mxu0 0.0
  %3627 = vmatpush.msra.mxu0 0.0
  %3628 = vmatpush.msra.mxu0 0.0
  %3629 = vmatpush.msra.mxu0 0.0
  %3630 = vmatpush.msra.mxu0 0.0
  %3631 = vmatpush.msra.mxu0 0.0
  %3632 = vmatpush.msra.mxu0 0.0
  %3633 = vmatpush.msra.mxu0 0.0
  %3634 = vmatpush.msra.mxu0 0.0
  %3635 = vmatpush.msra.mxu0 0.0
  %3636 = vmatpush.msra.mxu0 0.0
  %3637 = vmatpush.msra.mxu0 %v3549
  %3638 = vmatpush.msra.mxu0 %v3546
  %3639 = vmatpush.msra.mxu0 %v3543
  %3640 = vmatpush.msra.mxu0 %v3540
  %3641 = vmatmul.f32.gmra.mxu0 %v3561
  %v3642 = vpop.f32.mrf.mxu0
  %v3643 = vadd.f32 0.0, %v3642
  %3644 = vmatmul.f32.gmra.mxu0 %v3564
  %v3645 = vpop.f32.mrf.mxu0
  %v3646 = vadd.f32 0.0, %v3645
  %3647 = vmatmul.f32.gmra.mxu0 %v3567
  %v3648 = vpop.f32.mrf.mxu0
  %v3649 = vadd.f32 0.0, %v3648
  %3650 = vmatmul.f32.gmra.mxu0 %v3570
  %v3651 = vpop.f32.mrf.mxu0
  %v3652 = vadd.f32 0.0, %v3651
  %3653 = vmatmul.f32.gmra.mxu0 %v3573
  %v3654 = vpop.f32.mrf.mxu0
  %v3655 = vadd.f32 0.0, %v3654
  %3656 = vmatmul.f32.gmra.mxu0 %v3576
  %v3657 = vpop.f32.mrf.mxu0
  %v3658 = vadd.f32 0.0, %v3657
  %3659 = vmatmul.f32.gmra.mxu0 %v3579
  %v3660 = vpop.f32.mrf.mxu0
  %v3661 = vadd.f32 0.0, %v3660
  %3662 = vmatmul.f32.gmra.mxu0 %v3582
  %v3663 = vpop.f32.mrf.mxu0
  %v3664 = vadd.f32 0.0, %v3663
  %3665 = vdwg.mxu0
  %v3666 = vadd.f32 %v3322, %v3602
  %v3667 = vadd.f32 %v3323, %v3643
  %v3668 = vadd.f32 %v3324, %v3605
  %v3669 = vadd.f32 %v3325, %v3646
  %v3670 = vadd.f32 %v3326, %v3608
  %v3671 = vadd.f32 %v3327, %v3649
  %v3672 = vadd.f32 %v3328, %v3611
  %v3673 = vadd.f32 %v3329, %v3652
  %v3674 = vadd.f32 %v3330, %v3614
  %v3675 = vadd.f32 %v3331, %v3655
  %v3676 = vadd.f32 %v3332, %v3617
  %v3677 = vadd.f32 %v3333, %v3658
  %v3678 = vadd.f32 %v3334, %v3620
  %v3679 = vadd.f32 %v3335, %v3661
  %v3680 = vadd.f32 %v3336, %v3623
  %v3681 = vadd.f32 %v3337, %v3664
  %v3682 = vld [vmem:[%s5] sm:$0xff]
  %v3683 = vld [vmem:[%s5 + $0x8] sm:$0xff]
  %v3684 = vld [vmem:[%s5 + $0x10] sm:$0xff]
  %v3685 = vld [vmem:[%s5 + $0x18] sm:$0xff]
  %v3686 = vld [vmem:[%s5 + $0x20] sm:$0xff]
  %v3687 = vld [vmem:[%s5 + $0x28] sm:$0xff]
  %v3688 = vld [vmem:[%s5 + $0x30] sm:$0xff]
  %v3689 = vld [vmem:[%s5 + $0x38] sm:$0xff]
  %3691 = vset.pattern.permute.xlu0 0
  %3692 = vperm.xlu0 %3691, %v3682
  %v3693 = vpop.permute.xlu0 %3692
  %3696 = vset.pattern.permute.xlu0 0
  %3697 = vperm.xlu0 %3696, %v3683
  %v3698 = vpop.permute.xlu0 %3697
  %3701 = vset.pattern.permute.xlu0 0
  %3702 = vperm.xlu0 %3701, %v3684
  %v3703 = vpop.permute.xlu0 %3702
  %3706 = vset.pattern.permute.xlu0 0
  %3707 = vperm.xlu0 %3706, %v3685
  %v3708 = vpop.permute.xlu0 %3707
  %3711 = vset.pattern.permute.xlu0 0
  %3712 = vperm.xlu0 %3711, %v3686
  %v3713 = vpop.permute.xlu0 %3712
  %3716 = vset.pattern.permute.xlu0 0
  %3717 = vperm.xlu0 %3716, %v3687
  %v3718 = vpop.permute.xlu0 %3717
  %3721 = vset.pattern.permute.xlu0 0
  %3722 = vperm.xlu0 %3721, %v3688
  %v3723 = vpop.permute.xlu0 %3722
  %3726 = vset.pattern.permute.xlu0 0
  %3727 = vperm.xlu0 %3726, %v3689
  %v3728 = vpop.permute.xlu0 %3727
  %v3730 = vadd.f32 %v3666, %v3693
  %v3731 = vadd.f32 %v3667, %v3693
  %v3732 = vadd.f32 %v3668, %v3698
  %v3733 = vadd.f32 %v3669, %v3698
  %v3734 = vadd.f32 %v3670, %v3703
  %v3735 = vadd.f32 %v3671, %v3703
  %v3736 = vadd.f32 %v3672, %v3708
  %v3737 = vadd.f32 %v3673, %v3708
  %v3738 = vadd.f32 %v3674, %v3713
  %v3739 = vadd.f32 %v3675, %v3713
  %v3740 = vadd.f32 %v3676, %v3718
  %v3741 = vadd.f32 %v3677, %v3718
  %v3742 = vadd.f32 %v3678, %v3723
  %v3743 = vadd.f32 %v3679, %v3723
  %v3744 = vadd.f32 %v3680, %v3728
  %v3745 = vadd.f32 %v3681, %v3728
  %v3746 = vmax.f32 %v3730, 0.0
  %v3747 = vmax.f32 %v3731, 0.0
  %v3748 = vmax.f32 %v3732, 0.0
  %v3749 = vmax.f32 %v3733, 0.0
  %v3750 = vmax.f32 %v3734, 0.0
  %v3751 = vmax.f32 %v3735, 0.0
  %v3752 = vmax.f32 %v3736, 0.0
  %v3753 = vmax.f32 %v3737, 0.0
  %v3754 = vmax.f32 %v3738, 0.0
  %v3755 = vmax.f32 %v3739, 0.0
  %v3756 = vmax.f32 %v3740, 0.0
  %v3757 = vmax.f32 %v3741, 0.0
  %v3758 = vmax.f32 %v3742, 0.0
  %v3759 = vmax.f32 %v3743, 0.0
  %v3760 = vmax.f32 %v3744, 0.0
  %v3761 = vmax.f32 %v3745, 0.0
  %v3762 = vld [vmem:[%s9] sm:$0xf]
  %v3763 = vld [vmem:[%s9 + $0x4] sm:$0xf]
  %v3764 = vld [vmem:[%s9 + $0x8] sm:$0xf]
  %v3765 = vld [vmem:[%s9 + $0xc] sm:$0xf]
  %v3766 = vld [vmem:[%s9 + $0x10] sm:$0xf]
  %v3767 = vld [vmem:[%s9 + $0x14] sm:$0xf]
  %v3768 = vld [vmem:[%s9 + $0x18] sm:$0xf]
  %v3769 = vld [vmem:[%s9 + $0x1c] sm:$0xf]
  %v3770 = vld [vmem:[%s9 + $0x20] sm:$0xf]
  %v3771 = vld [vmem:[%s9 + $0x24] sm:$0xf]
  %v3772 = vld [vmem:[%s9 + $0x28] sm:$0xf]
  %v3773 = vld [vmem:[%s9 + $0x2c] sm:$0xf]
  %v3774 = vld [vmem:[%s9 + $0x30] sm:$0xf]
  %v3775 = vld [vmem:[%s9 + $0x34] sm:$0xf]
  %v3776 = vld [vmem:[%s9 + $0x38] sm:$0xf]
  %v3777 = vld [vmem:[%s9 + $0x3c] sm:$0xf]
  %v3778 = vld [vmem:[%s9 + $0x40] sm:$0xf]
  %v3779 = vld [vmem:[%s9 + $0x44] sm:$0xf]
  %v3780 = vld [vmem:[%s9 + $0x48] sm:$0xf]
  %v3781 = vld [vmem:[%s9 + $0x4c] sm:$0xf]
  %v3782 = vld [vmem:[%s9 + $0x50] sm:$0xf]
  %v3783 = vld [vmem:[%s9 + $0x54] sm:$0xf]
  %v3784 = vld [vmem:[%s9 + $0x58] sm:$0xf]
  %v3785 = vld [vmem:[%s9 + $0x5c] sm:$0xf]
  %v3786 = vld [vmem:[%s9 + $0x60] sm:$0xf]
  %v3787 = vld [vmem:[%s9 + $0x64] sm:$0xf]
  %v3788 = vld [vmem:[%s9 + $0x68] sm:$0xf]
  %v3789 = vld [vmem:[%s9 + $0x6c] sm:$0xf]
  %v3790 = vld [vmem:[%s9 + $0x70] sm:$0xf]
  %v3791 = vld [vmem:[%s9 + $0x74] sm:$0xf]
  %v3792 = vld [vmem:[%s9 + $0x78] sm:$0xf]
  %v3793 = vld [vmem:[%s9 + $0x7c] sm:$0xf]
  %v3794 = vunpack.c.l.bf16 %v3762
  %v3795 = vunpack.c.l.bf16 %v3763
  %v3796 = vunpack.c.l.bf16 %v3764
  %v3797 = vunpack.c.l.bf16 %v3765
  %v3798 = vunpack.c.l.bf16 %v3766
  %v3799 = vunpack.c.l.bf16 %v3767
  %v3800 = vunpack.c.l.bf16 %v3768
  %v3801 = vunpack.c.l.bf16 %v3769
  %v3802 = vunpack.c.l.bf16 %v3770
  %v3803 = vunpack.c.l.bf16 %v3771
  %v3804 = vunpack.c.l.bf16 %v3772
  %v3805 = vunpack.c.l.bf16 %v3773
  %v3806 = vunpack.c.l.bf16 %v3774
  %v3807 = vunpack.c.l.bf16 %v3775
  %v3808 = vunpack.c.l.bf16 %v3776
  %v3809 = vunpack.c.l.bf16 %v3777
  %v3810 = vunpack.c.l.bf16 %v3778
  %v3811 = vunpack.c.l.bf16 %v3779
  %v3812 = vunpack.c.l.bf16 %v3780
  %v3813 = vunpack.c.l.bf16 %v3781
  %v3814 = vunpack.c.l.bf16 %v3782
  %v3815 = vunpack.c.l.bf16 %v3783
  %v3816 = vunpack.c.l.bf16 %v3784
  %v3817 = vunpack.c.l.bf16 %v3785
  %v3818 = vunpack.c.l.bf16 %v3786
  %v3819 = vunpack.c.l.bf16 %v3787
  %v3820 = vunpack.c.l.bf16 %v3788
  %v3821 = vunpack.c.l.bf16 %v3789
  %v3822 = vunpack.c.l.bf16 %v3790
  %v3823 = vunpack.c.l.bf16 %v3791
  %v3824 = vunpack.c.l.bf16 %v3792
  %v3825 = vunpack.c.l.bf16 %v3793
  %3826 = vmatpush.msra.mxu0 %v3809
  %3827 = vmatpush.msra.mxu0 %v3808
  %3828 = vmatpush.msra.mxu0 %v3807
  %3829 = vmatpush.msra.mxu0 %v3806
  %3830 = vmatpush.msra.mxu0 %v3805
  %3831 = vmatpush.msra.mxu0 %v3804
  %3832 = vmatpush.msra.mxu0 %v3803
  %3833 = vmatpush.msra.mxu0 %v3802
  %3834 = vmatpush.msra.mxu0 %v3801
  %3835 = vmatpush.msra.mxu0 %v3800
  %3836 = vmatpush.msra.mxu0 %v3799
  %3837 = vmatpush.msra.mxu0 %v3798
  %3838 = vmatpush.msra.mxu0 %v3797
  %3839 = vmatpush.msra.mxu0 %v3796
  %3840 = vmatpush.msra.mxu0 %v3795
  %3841 = vmatpush.msra.mxu0 %v3794
  %3842 = vmatmul.f32.gmra.mxu0 %v3746
  %v3843 = vpop.f32.mrf.mxu0
  %v3844 = vadd.f32 0.0, %v3843
  %3845 = vmatmul.f32.gmra.mxu0 %v3748
  %v3846 = vpop.f32.mrf.mxu0
  %v3847 = vadd.f32 0.0, %v3846
  %3848 = vmatmul.f32.gmra.mxu0 %v3750
  %v3849 = vpop.f32.mrf.mxu0
  %v3850 = vadd.f32 0.0, %v3849
  %3851 = vmatmul.f32.gmra.mxu0 %v3752
  %v3852 = vpop.f32.mrf.mxu0
  %v3853 = vadd.f32 0.0, %v3852
  %3854 = vmatmul.f32.gmra.mxu0 %v3754
  %v3855 = vpop.f32.mrf.mxu0
  %v3856 = vadd.f32 0.0, %v3855
  %3857 = vmatmul.f32.gmra.mxu0 %v3756
  %v3858 = vpop.f32.mrf.mxu0
  %v3859 = vadd.f32 0.0, %v3858
  %3860 = vmatmul.f32.gmra.mxu0 %v3758
  %v3861 = vpop.f32.mrf.mxu0
  %v3862 = vadd.f32 0.0, %v3861
  %3863 = vmatmul.f32.gmra.mxu0 %v3760
  %v3864 = vpop.f32.mrf.mxu0
  %v3865 = vadd.f32 0.0, %v3864
  %3866 = vdwg.mxu0
  %3867 = vmatpush.msra.mxu0 %v3825
  %3868 = vmatpush.msra.mxu0 %v3824
  %3869 = vmatpush.msra.mxu0 %v3823
  %3870 = vmatpush.msra.mxu0 %v3822
  %3871 = vmatpush.msra.mxu0 %v3821
  %3872 = vmatpush.msra.mxu0 %v3820
  %3873 = vmatpush.msra.mxu0 %v3819
  %3874 = vmatpush.msra.mxu0 %v3818
  %3875 = vmatpush.msra.mxu0 %v3817
  %3876 = vmatpush.msra.mxu0 %v3816
  %3877 = vmatpush.msra.mxu0 %v3815
  %3878 = vmatpush.msra.mxu0 %v3814
  %3879 = vmatpush.msra.mxu0 %v3813
  %3880 = vmatpush.msra.mxu0 %v3812
  %3881 = vmatpush.msra.mxu0 %v3811
  %3882 = vmatpush.msra.mxu0 %v3810
  %3883 = vmatmul.f32.gmra.mxu0 %v3747
  %v3884 = vpop.f32.mrf.mxu0
  %v3885 = vadd.f32 %v3844, %v3884
  %3886 = vmatmul.f32.gmra.mxu0 %v3749
  %v3887 = vpop.f32.mrf.mxu0
  %v3888 = vadd.f32 %v3847, %v3887
  %3889 = vmatmul.f32.gmra.mxu0 %v3751
  %v3890 = vpop.f32.mrf.mxu0
  %v3891 = vadd.f32 %v3850, %v3890
  %3892 = vmatmul.f32.gmra.mxu0 %v3753
  %v3893 = vpop.f32.mrf.mxu0
  %v3894 = vadd.f32 %v3853, %v3893
  %3895 = vmatmul.f32.gmra.mxu0 %v3755
  %v3896 = vpop.f32.mrf.mxu0
  %v3897 = vadd.f32 %v3856, %v3896
  %3898 = vmatmul.f32.gmra.mxu0 %v3757
  %v3899 = vpop.f32.mrf.mxu0
  %v3900 = vadd.f32 %v3859, %v3899
  %3901 = vmatmul.f32.gmra.mxu0 %v3759
  %v3902 = vpop.f32.mrf.mxu0
  %v3903 = vadd.f32 %v3862, %v3902
  %3904 = vmatmul.f32.gmra.mxu0 %v3761
  %v3905 = vpop.f32.mrf.mxu0
  %v3906 = vadd.f32 %v3865, %v3905
  %3907 = vdwg.mxu0
  %v3908 = vld [vmem:[%s7] sm:$0xff]
  %v3909 = vld [vmem:[%s7 + $0x8] sm:$0xff]
  %v3910 = vld [vmem:[%s7 + $0x10] sm:$0xff]
  %v3911 = vld [vmem:[%s7 + $0x18] sm:$0xff]
  %v3912 = vld [vmem:[%s7 + $0x20] sm:$0xff]
  %v3913 = vld [vmem:[%s7 + $0x28] sm:$0xff]
  %v3914 = vld [vmem:[%s7 + $0x30] sm:$0xff]
  %v3915 = vld [vmem:[%s7 + $0x38] sm:$0xff]
  %v3916 = vld [vmem:[%s7 + $0x40] sm:$0xff]
  %v3917 = vld [vmem:[%s7 + $0x48] sm:$0xff]
  %v3918 = vld [vmem:[%s7 + $0x50] sm:$0xff]
  %v3919 = vld [vmem:[%s7 + $0x58] sm:$0xff]
  %v3920 = vld [vmem:[%s7 + $0x60] sm:$0xff]
  %v3921 = vld [vmem:[%s7 + $0x68] sm:$0xff]
  %v3922 = vld [vmem:[%s7 + $0x70] sm:$0xff]
  %v3923 = vld [vmem:[%s7 + $0x78] sm:$0xff]
  %s3924 = scalar_lea.vmem %s9, 128
  %v3925 = vld [vmem:[%s3924] sm:$0xf]
  %v3926 = vld [vmem:[%s3924 + $0x4] sm:$0xf]
  %v3927 = vld [vmem:[%s3924 + $0x8] sm:$0xf]
  %v3928 = vld [vmem:[%s3924 + $0xc] sm:$0xf]
  %v3929 = vld [vmem:[%s3924 + $0x10] sm:$0xf]
  %v3930 = vld [vmem:[%s3924 + $0x14] sm:$0xf]
  %v3931 = vld [vmem:[%s3924 + $0x18] sm:$0xf]
  %v3932 = vld [vmem:[%s3924 + $0x1c] sm:$0xf]
  %v3933 = vld [vmem:[%s3924 + $0x20] sm:$0xf]
  %v3934 = vld [vmem:[%s3924 + $0x24] sm:$0xf]
  %v3935 = vld [vmem:[%s3924 + $0x28] sm:$0xf]
  %v3936 = vld [vmem:[%s3924 + $0x2c] sm:$0xf]
  %v3937 = vld [vmem:[%s3924 + $0x30] sm:$0xf]
  %v3938 = vld [vmem:[%s3924 + $0x34] sm:$0xf]
  %v3939 = vld [vmem:[%s3924 + $0x38] sm:$0xf]
  %v3940 = vld [vmem:[%s3924 + $0x3c] sm:$0xf]
  %v3941 = vld [vmem:[%s3924 + $0x40] sm:$0xf]
  %v3942 = vld [vmem:[%s3924 + $0x44] sm:$0xf]
  %v3943 = vld [vmem:[%s3924 + $0x48] sm:$0xf]
  %v3944 = vld [vmem:[%s3924 + $0x4c] sm:$0xf]
  %v3945 = vld [vmem:[%s3924 + $0x50] sm:$0xf]
  %v3946 = vld [vmem:[%s3924 + $0x54] sm:$0xf]
  %v3947 = vld [vmem:[%s3924 + $0x58] sm:$0xf]
  %v3948 = vld [vmem:[%s3924 + $0x5c] sm:$0xf]
  %v3949 = vld [vmem:[%s3924 + $0x60] sm:$0xf]
  %v3950 = vld [vmem:[%s3924 + $0x64] sm:$0xf]
  %v3951 = vld [vmem:[%s3924 + $0x68] sm:$0xf]
  %v3952 = vld [vmem:[%s3924 + $0x6c] sm:$0xf]
  %v3953 = vld [vmem:[%s3924 + $0x70] sm:$0xf]
  %v3954 = vld [vmem:[%s3924 + $0x74] sm:$0xf]
  %v3955 = vld [vmem:[%s3924 + $0x78] sm:$0xf]
  %v3956 = vld [vmem:[%s3924 + $0x7c] sm:$0xf]
  %v3957 = vunpack.c.l.bf16 %v3925
  %v3958 = vunpack.c.l.bf16 %v3926
  %v3959 = vunpack.c.l.bf16 %v3927
  %v3960 = vunpack.c.l.bf16 %v3928
  %v3961 = vunpack.c.l.bf16 %v3929
  %v3962 = vunpack.c.l.bf16 %v3930
  %v3963 = vunpack.c.l.bf16 %v3931
  %v3964 = vunpack.c.l.bf16 %v3932
  %v3965 = vunpack.c.l.bf16 %v3933
  %v3966 = vunpack.c.l.bf16 %v3934
  %v3967 = vunpack.c.l.bf16 %v3935
  %v3968 = vunpack.c.l.bf16 %v3936
  %v3969 = vunpack.c.l.bf16 %v3937
  %v3970 = vunpack.c.l.bf16 %v3938
  %v3971 = vunpack.c.l.bf16 %v3939
  %v3972 = vunpack.c.l.bf16 %v3940
  %v3973 = vunpack.c.l.bf16 %v3941
  %v3974 = vunpack.c.l.bf16 %v3942
  %v3975 = vunpack.c.l.bf16 %v3943
  %v3976 = vunpack.c.l.bf16 %v3944
  %v3977 = vunpack.c.l.bf16 %v3945
  %v3978 = vunpack.c.l.bf16 %v3946
  %v3979 = vunpack.c.l.bf16 %v3947
  %v3980 = vunpack.c.l.bf16 %v3948
  %v3981 = vunpack.c.l.bf16 %v3949
  %v3982 = vunpack.c.l.bf16 %v3950
  %v3983 = vunpack.c.l.bf16 %v3951
  %v3984 = vunpack.c.l.bf16 %v3952
  %v3985 = vunpack.c.l.bf16 %v3953
  %v3986 = vunpack.c.l.bf16 %v3954
  %v3987 = vunpack.c.l.bf16 %v3955
  %v3988 = vunpack.c.l.bf16 %v3956
  %3989 = vmatpush.msra.mxu0 %v3972
  %3990 = vmatpush.msra.mxu0 %v3971
  %3991 = vmatpush.msra.mxu0 %v3970
  %3992 = vmatpush.msra.mxu0 %v3969
  %3993 = vmatpush.msra.mxu0 %v3968
  %3994 = vmatpush.msra.mxu0 %v3967
  %3995 = vmatpush.msra.mxu0 %v3966
  %3996 = vmatpush.msra.mxu0 %v3965
  %3997 = vmatpush.msra.mxu0 %v3964
  %3998 = vmatpush.msra.mxu0 %v3963
  %3999 = vmatpush.msra.mxu0 %v3962
  %4000 = vmatpush.msra.mxu0 %v3961
  %4001 = vmatpush.msra.mxu0 %v3960
  %4002 = vmatpush.msra.mxu0 %v3959
  %4003 = vmatpush.msra.mxu0 %v3958
  %4004 = vmatpush.msra.mxu0 %v3957
  %4005 = vmatmul.f32.gmra.mxu0 %v3746
  %v4006 = vpop.f32.mrf.mxu0
  %v4007 = vadd.f32 0.0, %v4006
  %4008 = vmatmul.f32.gmra.mxu0 %v3748
  %v4009 = vpop.f32.mrf.mxu0
  %v4010 = vadd.f32 0.0, %v4009
  %4011 = vmatmul.f32.gmra.mxu0 %v3750
  %v4012 = vpop.f32.mrf.mxu0
  %v4013 = vadd.f32 0.0, %v4012
  %4014 = vmatmul.f32.gmra.mxu0 %v3752
  %v4015 = vpop.f32.mrf.mxu0
  %v4016 = vadd.f32 0.0, %v4015
  %4017 = vmatmul.f32.gmra.mxu0 %v3754
  %v4018 = vpop.f32.mrf.mxu0
  %v4019 = vadd.f32 0.0, %v4018
  %4020 = vmatmul.f32.gmra.mxu0 %v3756
  %v4021 = vpop.f32.mrf.mxu0
  %v4022 = vadd.f32 0.0, %v4021
  %4023 = vmatmul.f32.gmra.mxu0 %v3758
  %v4024 = vpop.f32.mrf.mxu0
  %v4025 = vadd.f32 0.0, %v4024
  %4026 = vmatmul.f32.gmra.mxu0 %v3760
  %v4027 = vpop.f32.mrf.mxu0
  %v4028 = vadd.f32 0.0, %v4027
  %4029 = vdwg.mxu0
  %4030 = vmatpush.msra.mxu0 %v3988
  %4031 = vmatpush.msra.mxu0 %v3987
  %4032 = vmatpush.msra.mxu0 %v3986
  %4033 = vmatpush.msra.mxu0 %v3985
  %4034 = vmatpush.msra.mxu0 %v3984
  %4035 = vmatpush.msra.mxu0 %v3983
  %4036 = vmatpush.msra.mxu0 %v3982
  %4037 = vmatpush.msra.mxu0 %v3981
  %4038 = vmatpush.msra.mxu0 %v3980
  %4039 = vmatpush.msra.mxu0 %v3979
  %4040 = vmatpush.msra.mxu0 %v3978
  %4041 = vmatpush.msra.mxu0 %v3977
  %4042 = vmatpush.msra.mxu0 %v3976
  %4043 = vmatpush.msra.mxu0 %v3975
  %4044 = vmatpush.msra.mxu0 %v3974
  %4045 = vmatpush.msra.mxu0 %v3973
  %4046 = vmatmul.f32.gmra.mxu0 %v3747
  %v4047 = vpop.f32.mrf.mxu0
  %v4048 = vadd.f32 %v4007, %v4047
  %4049 = vmatmul.f32.gmra.mxu0 %v3749
  %v4050 = vpop.f32.mrf.mxu0
  %v4051 = vadd.f32 %v4010, %v4050
  %4052 = vmatmul.f32.gmra.mxu0 %v3751
  %v4053 = vpop.f32.mrf.mxu0
  %v4054 = vadd.f32 %v4013, %v4053
  %4055 = vmatmul.f32.gmra.mxu0 %v3753
  %v4056 = vpop.f32.mrf.mxu0
  %v4057 = vadd.f32 %v4016, %v4056
  %4058 = vmatmul.f32.gmra.mxu0 %v3755
  %v4059 = vpop.f32.mrf.mxu0
  %v4060 = vadd.f32 %v4019, %v4059
  %4061 = vmatmul.f32.gmra.mxu0 %v3757
  %v4062 = vpop.f32.mrf.mxu0
  %v4063 = vadd.f32 %v4022, %v4062
  %4064 = vmatmul.f32.gmra.mxu0 %v3759
  %v4065 = vpop.f32.mrf.mxu0
  %v4066 = vadd.f32 %v4025, %v4065
  %4067 = vmatmul.f32.gmra.mxu0 %v3761
  %v4068 = vpop.f32.mrf.mxu0
  %v4069 = vadd.f32 %v4028, %v4068
  %4070 = vdwg.mxu0
  %s4071 = scalar_lea.vmem %s7, 128
  %v4072 = vld [vmem:[%s4071] sm:$0xff]
  %v4073 = vld [vmem:[%s4071 + $0x8] sm:$0xff]
  %v4074 = vld [vmem:[%s4071 + $0x10] sm:$0xff]
  %v4075 = vld [vmem:[%s4071 + $0x18] sm:$0xff]
  %v4076 = vld [vmem:[%s4071 + $0x20] sm:$0xff]
  %v4077 = vld [vmem:[%s4071 + $0x28] sm:$0xff]
  %v4078 = vld [vmem:[%s4071 + $0x30] sm:$0xff]
  %v4079 = vld [vmem:[%s4071 + $0x38] sm:$0xff]
  %v4080 = vld [vmem:[%s4071 + $0x40] sm:$0xff]
  %v4081 = vld [vmem:[%s4071 + $0x48] sm:$0xff]
  %v4082 = vld [vmem:[%s4071 + $0x50] sm:$0xff]
  %v4083 = vld [vmem:[%s4071 + $0x58] sm:$0xff]
  %v4084 = vld [vmem:[%s4071 + $0x60] sm:$0xff]
  %v4085 = vld [vmem:[%s4071 + $0x68] sm:$0xff]
  %v4086 = vld [vmem:[%s4071 + $0x70] sm:$0xff]
  %v4087 = vld [vmem:[%s4071 + $0x78] sm:$0xff]
  %vm4088 = vcmask 523264
  %v4090 = vsel %vm4088, %v4072, 0
  %v4093 = vsel %vm4088, %v4073, 0
  %v4096 = vsel %vm4088, %v4074, 0
  %v4099 = vsel %vm4088, %v4075, 0
  %v4102 = vsel %vm4088, %v4076, 0
  %v4105 = vsel %vm4088, %v4077, 0
  %v4108 = vsel %vm4088, %v4078, 0
  %v4111 = vsel %vm4088, %v4079, 0
  %v4114 = vsel %vm4088, %v4080, 0
  %v4117 = vsel %vm4088, %v4081, 0
  %v4120 = vsel %vm4088, %v4082, 0
  %v4123 = vsel %vm4088, %v4083, 0
  %v4126 = vsel %vm4088, %v4084, 0
  %v4129 = vsel %vm4088, %v4085, 0
  %v4132 = vsel %vm4088, %v4086, 0
  %v4135 = vsel %vm4088, %v4087, 0
  %4137 = vmatpush.msra.mxu0 0.0
  %4138 = vmatpush.msra.mxu0 0.0
  %4139 = vmatpush.msra.mxu0 0.0
  %4140 = vmatpush.msra.mxu0 0.0
  %4141 = vmatpush.msra.mxu0 0.0
  %4142 = vmatpush.msra.mxu0 0.0
  %4143 = vmatpush.msra.mxu0 0.0
  %4144 = vmatpush.msra.mxu0 0.0
  %4145 = vmatpush.msra.mxu0 %v4069
  %4146 = vmatpush.msra.mxu0 %v4066
  %4147 = vmatpush.msra.mxu0 %v4063
  %4148 = vmatpush.msra.mxu0 %v4060
  %4149 = vmatpush.msra.mxu0 %v4057
  %4150 = vmatpush.msra.mxu0 %v4054
  %4151 = vmatpush.msra.mxu0 %v4051
  %4152 = vmatpush.msra.mxu0 %v4048
  %4153 = vmatmul.f32.gmra.mxu0 %v4090
  %v4154 = vpop.f32.mrf.mxu0
  %v4155 = vadd.f32 0.0, %v4154
  %4156 = vmatmul.f32.gmra.mxu0 %v4093
  %v4157 = vpop.f32.mrf.mxu0
  %v4158 = vadd.f32 0.0, %v4157
  %4159 = vmatmul.f32.gmra.mxu0 %v4096
  %v4160 = vpop.f32.mrf.mxu0
  %v4161 = vadd.f32 0.0, %v4160
  %4162 = vmatmul.f32.gmra.mxu0 %v4099
  %v4163 = vpop.f32.mrf.mxu0
  %v4164 = vadd.f32 0.0, %v4163
  %4165 = vmatmul.f32.gmra.mxu0 %v4102
  %v4166 = vpop.f32.mrf.mxu0
  %v4167 = vadd.f32 0.0, %v4166
  %4168 = vmatmul.f32.gmra.mxu0 %v4105
  %v4169 = vpop.f32.mrf.mxu0
  %v4170 = vadd.f32 0.0, %v4169
  %4171 = vmatmul.f32.gmra.mxu0 %v4108
  %v4172 = vpop.f32.mrf.mxu0
  %v4173 = vadd.f32 0.0, %v4172
  %4174 = vmatmul.f32.gmra.mxu0 %v4111
  %v4175 = vpop.f32.mrf.mxu0
  %v4176 = vadd.f32 0.0, %v4175
  %4177 = vmatmul.f32.gmra.mxu0 %v4114
  %v4178 = vpop.f32.mrf.mxu0
  %v4179 = vadd.f32 0.0, %v4178
  %4180 = vmatmul.f32.gmra.mxu0 %v4117
  %v4181 = vpop.f32.mrf.mxu0
  %v4182 = vadd.f32 0.0, %v4181
  %4183 = vmatmul.f32.gmra.mxu0 %v4120
  %v4184 = vpop.f32.mrf.mxu0
  %v4185 = vadd.f32 0.0, %v4184
  %4186 = vmatmul.f32.gmra.mxu0 %v4123
  %v4187 = vpop.f32.mrf.mxu0
  %v4188 = vadd.f32 0.0, %v4187
  %4189 = vmatmul.f32.gmra.mxu0 %v4126
  %v4190 = vpop.f32.mrf.mxu0
  %v4191 = vadd.f32 0.0, %v4190
  %4192 = vmatmul.f32.gmra.mxu0 %v4129
  %v4193 = vpop.f32.mrf.mxu0
  %v4194 = vadd.f32 0.0, %v4193
  %4195 = vmatmul.f32.gmra.mxu0 %v4132
  %v4196 = vpop.f32.mrf.mxu0
  %v4197 = vadd.f32 0.0, %v4196
  %4198 = vmatmul.f32.gmra.mxu0 %v4135
  %v4199 = vpop.f32.mrf.mxu0
  %v4200 = vadd.f32 0.0, %v4199
  %4201 = vdwg.mxu0
  %v4203 = vsel %vm4088, %v3908, 0
  %v4206 = vsel %vm4088, %v3909, 0
  %v4209 = vsel %vm4088, %v3910, 0
  %v4212 = vsel %vm4088, %v3911, 0
  %v4215 = vsel %vm4088, %v3912, 0
  %v4218 = vsel %vm4088, %v3913, 0
  %v4221 = vsel %vm4088, %v3914, 0
  %v4224 = vsel %vm4088, %v3915, 0
  %v4227 = vsel %vm4088, %v3916, 0
  %v4230 = vsel %vm4088, %v3917, 0
  %v4233 = vsel %vm4088, %v3918, 0
  %v4236 = vsel %vm4088, %v3919, 0
  %v4239 = vsel %vm4088, %v3920, 0
  %v4242 = vsel %vm4088, %v3921, 0
  %v4245 = vsel %vm4088, %v3922, 0
  %v4248 = vsel %vm4088, %v3923, 0
  %4250 = vmatpush.msra.mxu0 0.0
  %4251 = vmatpush.msra.mxu0 0.0
  %4252 = vmatpush.msra.mxu0 0.0
  %4253 = vmatpush.msra.mxu0 0.0
  %4254 = vmatpush.msra.mxu0 0.0
  %4255 = vmatpush.msra.mxu0 0.0
  %4256 = vmatpush.msra.mxu0 0.0
  %4257 = vmatpush.msra.mxu0 0.0
  %4258 = vmatpush.msra.mxu0 %v3906
  %4259 = vmatpush.msra.mxu0 %v3903
  %4260 = vmatpush.msra.mxu0 %v3900
  %4261 = vmatpush.msra.mxu0 %v3897
  %4262 = vmatpush.msra.mxu0 %v3894
  %4263 = vmatpush.msra.mxu0 %v3891
  %4264 = vmatpush.msra.mxu0 %v3888
  %4265 = vmatpush.msra.mxu0 %v3885
  %4266 = vmatmul.f32.gmra.mxu0 %v4203
  %v4267 = vpop.f32.mrf.mxu0
  %v4268 = vadd.f32 %v4155, %v4267
  %4269 = vmatmul.f32.gmra.mxu0 %v4206
  %v4270 = vpop.f32.mrf.mxu0
  %v4271 = vadd.f32 %v4158, %v4270
  %4272 = vmatmul.f32.gmra.mxu0 %v4209
  %v4273 = vpop.f32.mrf.mxu0
  %v4274 = vadd.f32 %v4161, %v4273
  %4275 = vmatmul.f32.gmra.mxu0 %v4212
  %v4276 = vpop.f32.mrf.mxu0
  %v4277 = vadd.f32 %v4164, %v4276
  %4278 = vmatmul.f32.gmra.mxu0 %v4215
  %v4279 = vpop.f32.mrf.mxu0
  %v4280 = vadd.f32 %v4167, %v4279
  %4281 = vmatmul.f32.gmra.mxu0 %v4218
  %v4282 = vpop.f32.mrf.mxu0
  %v4283 = vadd.f32 %v4170, %v4282
  %4284 = vmatmul.f32.gmra.mxu0 %v4221
  %v4285 = vpop.f32.mrf.mxu0
  %v4286 = vadd.f32 %v4173, %v4285
  %4287 = vmatmul.f32.gmra.mxu0 %v4224
  %v4288 = vpop.f32.mrf.mxu0
  %v4289 = vadd.f32 %v4176, %v4288
  %4290 = vmatmul.f32.gmra.mxu0 %v4227
  %v4291 = vpop.f32.mrf.mxu0
  %v4292 = vadd.f32 %v4179, %v4291
  %4293 = vmatmul.f32.gmra.mxu0 %v4230
  %v4294 = vpop.f32.mrf.mxu0
  %v4295 = vadd.f32 %v4182, %v4294
  %4296 = vmatmul.f32.gmra.mxu0 %v4233
  %v4297 = vpop.f32.mrf.mxu0
  %v4298 = vadd.f32 %v4185, %v4297
  %4299 = vmatmul.f32.gmra.mxu0 %v4236
  %v4300 = vpop.f32.mrf.mxu0
  %v4301 = vadd.f32 %v4188, %v4300
  %4302 = vmatmul.f32.gmra.mxu0 %v4239
  %v4303 = vpop.f32.mrf.mxu0
  %v4304 = vadd.f32 %v4191, %v4303
  %4305 = vmatmul.f32.gmra.mxu0 %v4242
  %v4306 = vpop.f32.mrf.mxu0
  %v4307 = vadd.f32 %v4194, %v4306
  %4308 = vmatmul.f32.gmra.mxu0 %v4245
  %v4309 = vpop.f32.mrf.mxu0
  %v4310 = vadd.f32 %v4197, %v4309
  %4311 = vmatmul.f32.gmra.mxu0 %v4248
  %v4312 = vpop.f32.mrf.mxu0
  %v4313 = vadd.f32 %v4200, %v4312
  %4314 = vdwg.mxu0
  %s4315 = scalar_lea.vmem %s9, 256
  %v4316 = vld [vmem:[%s4315] sm:$0xf]
  %v4317 = vld [vmem:[%s4315 + $0x4] sm:$0xf]
  %v4318 = vld [vmem:[%s4315 + $0x8] sm:$0xf]
  %v4319 = vld [vmem:[%s4315 + $0xc] sm:$0xf]
  %v4320 = vld [vmem:[%s4315 + $0x10] sm:$0xf]
  %v4321 = vld [vmem:[%s4315 + $0x14] sm:$0xf]
  %v4322 = vld [vmem:[%s4315 + $0x18] sm:$0xf]
  %v4323 = vld [vmem:[%s4315 + $0x1c] sm:$0xf]
  %v4324 = vld [vmem:[%s4315 + $0x20] sm:$0xf]
  %v4325 = vld [vmem:[%s4315 + $0x24] sm:$0xf]
  %v4326 = vld [vmem:[%s4315 + $0x28] sm:$0xf]
  %v4327 = vld [vmem:[%s4315 + $0x2c] sm:$0xf]
  %v4328 = vld [vmem:[%s4315 + $0x30] sm:$0xf]
  %v4329 = vld [vmem:[%s4315 + $0x34] sm:$0xf]
  %v4330 = vld [vmem:[%s4315 + $0x38] sm:$0xf]
  %v4331 = vld [vmem:[%s4315 + $0x3c] sm:$0xf]
  %v4332 = vld [vmem:[%s4315 + $0x40] sm:$0xf]
  %v4333 = vld [vmem:[%s4315 + $0x44] sm:$0xf]
  %v4334 = vld [vmem:[%s4315 + $0x48] sm:$0xf]
  %v4335 = vld [vmem:[%s4315 + $0x4c] sm:$0xf]
  %v4336 = vld [vmem:[%s4315 + $0x50] sm:$0xf]
  %v4337 = vld [vmem:[%s4315 + $0x54] sm:$0xf]
  %v4338 = vld [vmem:[%s4315 + $0x58] sm:$0xf]
  %v4339 = vld [vmem:[%s4315 + $0x5c] sm:$0xf]
  %v4340 = vld [vmem:[%s4315 + $0x60] sm:$0xf]
  %v4341 = vld [vmem:[%s4315 + $0x64] sm:$0xf]
  %v4342 = vld [vmem:[%s4315 + $0x68] sm:$0xf]
  %v4343 = vld [vmem:[%s4315 + $0x6c] sm:$0xf]
  %v4344 = vld [vmem:[%s4315 + $0x70] sm:$0xf]
  %v4345 = vld [vmem:[%s4315 + $0x74] sm:$0xf]
  %v4346 = vld [vmem:[%s4315 + $0x78] sm:$0xf]
  %v4347 = vld [vmem:[%s4315 + $0x7c] sm:$0xf]
  %v4348 = vunpack.c.l.bf16 %v4316
  %v4349 = vunpack.c.l.bf16 %v4317
  %v4350 = vunpack.c.l.bf16 %v4318
  %v4351 = vunpack.c.l.bf16 %v4319
  %v4352 = vunpack.c.l.bf16 %v4320
  %v4353 = vunpack.c.l.bf16 %v4321
  %v4354 = vunpack.c.l.bf16 %v4322
  %v4355 = vunpack.c.l.bf16 %v4323
  %v4356 = vunpack.c.l.bf16 %v4324
  %v4357 = vunpack.c.l.bf16 %v4325
  %v4358 = vunpack.c.l.bf16 %v4326
  %v4359 = vunpack.c.l.bf16 %v4327
  %v4360 = vunpack.c.l.bf16 %v4328
  %v4361 = vunpack.c.l.bf16 %v4329
  %v4362 = vunpack.c.l.bf16 %v4330
  %v4363 = vunpack.c.l.bf16 %v4331
  %v4364 = vunpack.c.l.bf16 %v4332
  %v4365 = vunpack.c.l.bf16 %v4333
  %v4366 = vunpack.c.l.bf16 %v4334
  %v4367 = vunpack.c.l.bf16 %v4335
  %v4368 = vunpack.c.l.bf16 %v4336
  %v4369 = vunpack.c.l.bf16 %v4337
  %v4370 = vunpack.c.l.bf16 %v4338
  %v4371 = vunpack.c.l.bf16 %v4339
  %v4372 = vunpack.c.l.bf16 %v4340
  %v4373 = vunpack.c.l.bf16 %v4341
  %v4374 = vunpack.c.l.bf16 %v4342
  %v4375 = vunpack.c.l.bf16 %v4343
  %v4376 = vunpack.c.l.bf16 %v4344
  %v4377 = vunpack.c.l.bf16 %v4345
  %v4378 = vunpack.c.l.bf16 %v4346
  %v4379 = vunpack.c.l.bf16 %v4347
  %4380 = vmatpush.msra.mxu0 %v4363
  %4381 = vmatpush.msra.mxu0 %v4362
  %4382 = vmatpush.msra.mxu0 %v4361
  %4383 = vmatpush.msra.mxu0 %v4360
  %4384 = vmatpush.msra.mxu0 %v4359
  %4385 = vmatpush.msra.mxu0 %v4358
  %4386 = vmatpush.msra.mxu0 %v4357
  %4387 = vmatpush.msra.mxu0 %v4356
  %4388 = vmatpush.msra.mxu0 %v4355
  %4389 = vmatpush.msra.mxu0 %v4354
  %4390 = vmatpush.msra.mxu0 %v4353
  %4391 = vmatpush.msra.mxu0 %v4352
  %4392 = vmatpush.msra.mxu0 %v4351
  %4393 = vmatpush.msra.mxu0 %v4350
  %4394 = vmatpush.msra.mxu0 %v4349
  %4395 = vmatpush.msra.mxu0 %v4348
  %4396 = vmatmul.f32.gmra.mxu0 %v3746
  %v4397 = vpop.f32.mrf.mxu0
  %v4398 = vadd.f32 0.0, %v4397
  %4399 = vmatmul.f32.gmra.mxu0 %v3748
  %v4400 = vpop.f32.mrf.mxu0
  %v4401 = vadd.f32 0.0, %v4400
  %4402 = vmatmul.f32.gmra.mxu0 %v3750
  %v4403 = vpop.f32.mrf.mxu0
  %v4404 = vadd.f32 0.0, %v4403
  %4405 = vmatmul.f32.gmra.mxu0 %v3752
  %v4406 = vpop.f32.mrf.mxu0
  %v4407 = vadd.f32 0.0, %v4406
  %4408 = vmatmul.f32.gmra.mxu0 %v3754
  %v4409 = vpop.f32.mrf.mxu0
  %v4410 = vadd.f32 0.0, %v4409
  %4411 = vmatmul.f32.gmra.mxu0 %v3756
  %v4412 = vpop.f32.mrf.mxu0
  %v4413 = vadd.f32 0.0, %v4412
  %4414 = vmatmul.f32.gmra.mxu0 %v3758
  %v4415 = vpop.f32.mrf.mxu0
  %v4416 = vadd.f32 0.0, %v4415
  %4417 = vmatmul.f32.gmra.mxu0 %v3760
  %v4418 = vpop.f32.mrf.mxu0
  %v4419 = vadd.f32 0.0, %v4418
  %4420 = vdwg.mxu0
  %4421 = vmatpush.msra.mxu0 %v4379
  %4422 = vmatpush.msra.mxu0 %v4378
  %4423 = vmatpush.msra.mxu0 %v4377
  %4424 = vmatpush.msra.mxu0 %v4376
  %4425 = vmatpush.msra.mxu0 %v4375
  %4426 = vmatpush.msra.mxu0 %v4374
  %4427 = vmatpush.msra.mxu0 %v4373
  %4428 = vmatpush.msra.mxu0 %v4372
  %4429 = vmatpush.msra.mxu0 %v4371
  %4430 = vmatpush.msra.mxu0 %v4370
  %4431 = vmatpush.msra.mxu0 %v4369
  %4432 = vmatpush.msra.mxu0 %v4368
  %4433 = vmatpush.msra.mxu0 %v4367
  %4434 = vmatpush.msra.mxu0 %v4366
  %4435 = vmatpush.msra.mxu0 %v4365
  %4436 = vmatpush.msra.mxu0 %v4364
  %4437 = vmatmul.f32.gmra.mxu0 %v3747
  %v4438 = vpop.f32.mrf.mxu0
  %v4439 = vadd.f32 %v4398, %v4438
  %4440 = vmatmul.f32.gmra.mxu0 %v3749
  %v4441 = vpop.f32.mrf.mxu0
  %v4442 = vadd.f32 %v4401, %v4441
  %4443 = vmatmul.f32.gmra.mxu0 %v3751
  %v4444 = vpop.f32.mrf.mxu0
  %v4445 = vadd.f32 %v4404, %v4444
  %4446 = vmatmul.f32.gmra.mxu0 %v3753
  %v4447 = vpop.f32.mrf.mxu0
  %v4448 = vadd.f32 %v4407, %v4447
  %4449 = vmatmul.f32.gmra.mxu0 %v3755
  %v4450 = vpop.f32.mrf.mxu0
  %v4451 = vadd.f32 %v4410, %v4450
  %4452 = vmatmul.f32.gmra.mxu0 %v3757
  %v4453 = vpop.f32.mrf.mxu0
  %v4454 = vadd.f32 %v4413, %v4453
  %4455 = vmatmul.f32.gmra.mxu0 %v3759
  %v4456 = vpop.f32.mrf.mxu0
  %v4457 = vadd.f32 %v4416, %v4456
  %4458 = vmatmul.f32.gmra.mxu0 %v3761
  %v4459 = vpop.f32.mrf.mxu0
  %v4460 = vadd.f32 %v4419, %v4459
  %4461 = vdwg.mxu0
  %s4462 = scalar_lea.vmem %s7, 256
  %v4463 = vld [vmem:[%s4462] sm:$0xff]
  %v4464 = vld [vmem:[%s4462 + $0x8] sm:$0xff]
  %v4465 = vld [vmem:[%s4462 + $0x10] sm:$0xff]
  %v4466 = vld [vmem:[%s4462 + $0x18] sm:$0xff]
  %v4467 = vld [vmem:[%s4462 + $0x20] sm:$0xff]
  %v4468 = vld [vmem:[%s4462 + $0x28] sm:$0xff]
  %v4469 = vld [vmem:[%s4462 + $0x30] sm:$0xff]
  %v4470 = vld [vmem:[%s4462 + $0x38] sm:$0xff]
  %v4471 = vld [vmem:[%s4462 + $0x40] sm:$0xff]
  %v4472 = vld [vmem:[%s4462 + $0x48] sm:$0xff]
  %v4473 = vld [vmem:[%s4462 + $0x50] sm:$0xff]
  %v4474 = vld [vmem:[%s4462 + $0x58] sm:$0xff]
  %v4475 = vld [vmem:[%s4462 + $0x60] sm:$0xff]
  %v4476 = vld [vmem:[%s4462 + $0x68] sm:$0xff]
  %v4477 = vld [vmem:[%s4462 + $0x70] sm:$0xff]
  %v4478 = vld [vmem:[%s4462 + $0x78] sm:$0xff]
  %v4480 = vsel %vm4088, %v4463, 0
  %v4483 = vsel %vm4088, %v4464, 0
  %v4486 = vsel %vm4088, %v4465, 0
  %v4489 = vsel %vm4088, %v4466, 0
  %v4492 = vsel %vm4088, %v4467, 0
  %v4495 = vsel %vm4088, %v4468, 0
  %v4498 = vsel %vm4088, %v4469, 0
  %v4501 = vsel %vm4088, %v4470, 0
  %v4504 = vsel %vm4088, %v4471, 0
  %v4507 = vsel %vm4088, %v4472, 0
  %v4510 = vsel %vm4088, %v4473, 0
  %v4513 = vsel %vm4088, %v4474, 0
  %v4516 = vsel %vm4088, %v4475, 0
  %v4519 = vsel %vm4088, %v4476, 0
  %v4522 = vsel %vm4088, %v4477, 0
  %v4525 = vsel %vm4088, %v4478, 0
  %4527 = vmatpush.msra.mxu0 0.0
  %4528 = vmatpush.msra.mxu0 0.0
  %4529 = vmatpush.msra.mxu0 0.0
  %4530 = vmatpush.msra.mxu0 0.0
  %4531 = vmatpush.msra.mxu0 0.0
  %4532 = vmatpush.msra.mxu0 0.0
  %4533 = vmatpush.msra.mxu0 0.0
  %4534 = vmatpush.msra.mxu0 0.0
  %4535 = vmatpush.msra.mxu0 %v4460
  %4536 = vmatpush.msra.mxu0 %v4457
  %4537 = vmatpush.msra.mxu0 %v4454
  %4538 = vmatpush.msra.mxu0 %v4451
  %4539 = vmatpush.msra.mxu0 %v4448
  %4540 = vmatpush.msra.mxu0 %v4445
  %4541 = vmatpush.msra.mxu0 %v4442
  %4542 = vmatpush.msra.mxu0 %v4439
  %4543 = vmatmul.f32.gmra.mxu0 %v4480
  %v4544 = vpop.f32.mrf.mxu0
  %v4545 = vadd.f32 0.0, %v4544
  %4546 = vmatmul.f32.gmra.mxu0 %v4483
  %v4547 = vpop.f32.mrf.mxu0
  %v4548 = vadd.f32 0.0, %v4547
  %4549 = vmatmul.f32.gmra.mxu0 %v4486
  %v4550 = vpop.f32.mrf.mxu0
  %v4551 = vadd.f32 0.0, %v4550
  %4552 = vmatmul.f32.gmra.mxu0 %v4489
  %v4553 = vpop.f32.mrf.mxu0
  %v4554 = vadd.f32 0.0, %v4553
  %4555 = vmatmul.f32.gmra.mxu0 %v4492
  %v4556 = vpop.f32.mrf.mxu0
  %v4557 = vadd.f32 0.0, %v4556
  %4558 = vmatmul.f32.gmra.mxu0 %v4495
  %v4559 = vpop.f32.mrf.mxu0
  %v4560 = vadd.f32 0.0, %v4559
  %4561 = vmatmul.f32.gmra.mxu0 %v4498
  %v4562 = vpop.f32.mrf.mxu0
  %v4563 = vadd.f32 0.0, %v4562
  %4564 = vmatmul.f32.gmra.mxu0 %v4501
  %v4565 = vpop.f32.mrf.mxu0
  %v4566 = vadd.f32 0.0, %v4565
  %4567 = vmatmul.f32.gmra.mxu0 %v4504
  %v4568 = vpop.f32.mrf.mxu0
  %v4569 = vadd.f32 0.0, %v4568
  %4570 = vmatmul.f32.gmra.mxu0 %v4507
  %v4571 = vpop.f32.mrf.mxu0
  %v4572 = vadd.f32 0.0, %v4571
  %4573 = vmatmul.f32.gmra.mxu0 %v4510
  %v4574 = vpop.f32.mrf.mxu0
  %v4575 = vadd.f32 0.0, %v4574
  %4576 = vmatmul.f32.gmra.mxu0 %v4513
  %v4577 = vpop.f32.mrf.mxu0
  %v4578 = vadd.f32 0.0, %v4577
  %4579 = vmatmul.f32.gmra.mxu0 %v4516
  %v4580 = vpop.f32.mrf.mxu0
  %v4581 = vadd.f32 0.0, %v4580
  %4582 = vmatmul.f32.gmra.mxu0 %v4519
  %v4583 = vpop.f32.mrf.mxu0
  %v4584 = vadd.f32 0.0, %v4583
  %4585 = vmatmul.f32.gmra.mxu0 %v4522
  %v4586 = vpop.f32.mrf.mxu0
  %v4587 = vadd.f32 0.0, %v4586
  %4588 = vmatmul.f32.gmra.mxu0 %v4525
  %v4589 = vpop.f32.mrf.mxu0
  %v4590 = vadd.f32 0.0, %v4589
  %4591 = vdwg.mxu0
  %v4592 = vadd.f32 %v4268, %v4545
  %v4593 = vadd.f32 %v4271, %v4548
  %v4594 = vadd.f32 %v4274, %v4551
  %v4595 = vadd.f32 %v4277, %v4554
  %v4596 = vadd.f32 %v4280, %v4557
  %v4597 = vadd.f32 %v4283, %v4560
  %v4598 = vadd.f32 %v4286, %v4563
  %v4599 = vadd.f32 %v4289, %v4566
  %v4600 = vadd.f32 %v4292, %v4569
  %v4601 = vadd.f32 %v4295, %v4572
  %v4602 = vadd.f32 %v4298, %v4575
  %v4603 = vadd.f32 %v4301, %v4578
  %v4604 = vadd.f32 %v4304, %v4581
  %v4605 = vadd.f32 %v4307, %v4584
  %v4606 = vadd.f32 %v4310, %v4587
  %v4607 = vadd.f32 %v4313, %v4590
  %s4608 = scalar_lea.vmem %s9, 384
  %v4609 = vld [vmem:[%s4608] sm:$0xf]
  %v4610 = vld [vmem:[%s4608 + $0x4] sm:$0xf]
  %v4611 = vld [vmem:[%s4608 + $0x8] sm:$0xf]
  %v4612 = vld [vmem:[%s4608 + $0xc] sm:$0xf]
  %v4613 = vld [vmem:[%s4608 + $0x10] sm:$0xf]
  %v4614 = vld [vmem:[%s4608 + $0x14] sm:$0xf]
  %v4615 = vld [vmem:[%s4608 + $0x18] sm:$0xf]
  %v4616 = vld [vmem:[%s4608 + $0x1c] sm:$0xf]
  %v4617 = vld [vmem:[%s4608 + $0x20] sm:$0xf]
  %v4618 = vld [vmem:[%s4608 + $0x24] sm:$0xf]
  %v4619 = vld [vmem:[%s4608 + $0x28] sm:$0xf]
  %v4620 = vld [vmem:[%s4608 + $0x2c] sm:$0xf]
  %v4621 = vld [vmem:[%s4608 + $0x30] sm:$0xf]
  %v4622 = vld [vmem:[%s4608 + $0x34] sm:$0xf]
  %v4623 = vld [vmem:[%s4608 + $0x38] sm:$0xf]
  %v4624 = vld [vmem:[%s4608 + $0x3c] sm:$0xf]
  %v4625 = vld [vmem:[%s4608 + $0x40] sm:$0xf]
  %v4626 = vld [vmem:[%s4608 + $0x44] sm:$0xf]
  %v4627 = vld [vmem:[%s4608 + $0x48] sm:$0xf]
  %v4628 = vld [vmem:[%s4608 + $0x4c] sm:$0xf]
  %v4629 = vld [vmem:[%s4608 + $0x50] sm:$0xf]
  %v4630 = vld [vmem:[%s4608 + $0x54] sm:$0xf]
  %v4631 = vld [vmem:[%s4608 + $0x58] sm:$0xf]
  %v4632 = vld [vmem:[%s4608 + $0x5c] sm:$0xf]
  %v4633 = vld [vmem:[%s4608 + $0x60] sm:$0xf]
  %v4634 = vld [vmem:[%s4608 + $0x64] sm:$0xf]
  %v4635 = vld [vmem:[%s4608 + $0x68] sm:$0xf]
  %v4636 = vld [vmem:[%s4608 + $0x6c] sm:$0xf]
  %v4637 = vld [vmem:[%s4608 + $0x70] sm:$0xf]
  %v4638 = vld [vmem:[%s4608 + $0x74] sm:$0xf]
  %v4639 = vld [vmem:[%s4608 + $0x78] sm:$0xf]
  %v4640 = vld [vmem:[%s4608 + $0x7c] sm:$0xf]
  %v4641 = vunpack.c.l.bf16 %v4609
  %v4642 = vunpack.c.l.bf16 %v4610
  %v4643 = vunpack.c.l.bf16 %v4611
  %v4644 = vunpack.c.l.bf16 %v4612
  %v4645 = vunpack.c.l.bf16 %v4613
  %v4646 = vunpack.c.l.bf16 %v4614
  %v4647 = vunpack.c.l.bf16 %v4615
  %v4648 = vunpack.c.l.bf16 %v4616
  %v4649 = vunpack.c.l.bf16 %v4617
  %v4650 = vunpack.c.l.bf16 %v4618
  %v4651 = vunpack.c.l.bf16 %v4619
  %v4652 = vunpack.c.l.bf16 %v4620
  %v4653 = vunpack.c.l.bf16 %v4621
  %v4654 = vunpack.c.l.bf16 %v4622
  %v4655 = vunpack.c.l.bf16 %v4623
  %v4656 = vunpack.c.l.bf16 %v4624
  %v4657 = vunpack.c.l.bf16 %v4625
  %v4658 = vunpack.c.l.bf16 %v4626
  %v4659 = vunpack.c.l.bf16 %v4627
  %v4660 = vunpack.c.l.bf16 %v4628
  %v4661 = vunpack.c.l.bf16 %v4629
  %v4662 = vunpack.c.l.bf16 %v4630
  %v4663 = vunpack.c.l.bf16 %v4631
  %v4664 = vunpack.c.l.bf16 %v4632
  %v4665 = vunpack.c.l.bf16 %v4633
  %v4666 = vunpack.c.l.bf16 %v4634
  %v4667 = vunpack.c.l.bf16 %v4635
  %v4668 = vunpack.c.l.bf16 %v4636
  %v4669 = vunpack.c.l.bf16 %v4637
  %v4670 = vunpack.c.l.bf16 %v4638
  %v4671 = vunpack.c.l.bf16 %v4639
  %v4672 = vunpack.c.l.bf16 %v4640
  %4673 = vmatpush.msra.mxu0 %v4656
  %4674 = vmatpush.msra.mxu0 %v4655
  %4675 = vmatpush.msra.mxu0 %v4654
  %4676 = vmatpush.msra.mxu0 %v4653
  %4677 = vmatpush.msra.mxu0 %v4652
  %4678 = vmatpush.msra.mxu0 %v4651
  %4679 = vmatpush.msra.mxu0 %v4650
  %4680 = vmatpush.msra.mxu0 %v4649
  %4681 = vmatpush.msra.mxu0 %v4648
  %4682 = vmatpush.msra.mxu0 %v4647
  %4683 = vmatpush.msra.mxu0 %v4646
  %4684 = vmatpush.msra.mxu0 %v4645
  %4685 = vmatpush.msra.mxu0 %v4644
  %4686 = vmatpush.msra.mxu0 %v4643
  %4687 = vmatpush.msra.mxu0 %v4642
  %4688 = vmatpush.msra.mxu0 %v4641
  %4689 = vmatmul.f32.gmra.mxu0 %v3746
  %v4690 = vpop.f32.mrf.mxu0
  %v4691 = vadd.f32 0.0, %v4690
  %4692 = vmatmul.f32.gmra.mxu0 %v3748
  %v4693 = vpop.f32.mrf.mxu0
  %v4694 = vadd.f32 0.0, %v4693
  %4695 = vmatmul.f32.gmra.mxu0 %v3750
  %v4696 = vpop.f32.mrf.mxu0
  %v4697 = vadd.f32 0.0, %v4696
  %4698 = vmatmul.f32.gmra.mxu0 %v3752
  %v4699 = vpop.f32.mrf.mxu0
  %v4700 = vadd.f32 0.0, %v4699
  %4701 = vmatmul.f32.gmra.mxu0 %v3754
  %v4702 = vpop.f32.mrf.mxu0
  %v4703 = vadd.f32 0.0, %v4702
  %4704 = vmatmul.f32.gmra.mxu0 %v3756
  %v4705 = vpop.f32.mrf.mxu0
  %v4706 = vadd.f32 0.0, %v4705
  %4707 = vmatmul.f32.gmra.mxu0 %v3758
  %v4708 = vpop.f32.mrf.mxu0
  %v4709 = vadd.f32 0.0, %v4708
  %4710 = vmatmul.f32.gmra.mxu0 %v3760
  %v4711 = vpop.f32.mrf.mxu0
  %v4712 = vadd.f32 0.0, %v4711
  %4713 = vdwg.mxu0
  %4714 = vmatpush.msra.mxu0 %v4672
  %4715 = vmatpush.msra.mxu0 %v4671
  %4716 = vmatpush.msra.mxu0 %v4670
  %4717 = vmatpush.msra.mxu0 %v4669
  %4718 = vmatpush.msra.mxu0 %v4668
  %4719 = vmatpush.msra.mxu0 %v4667
  %4720 = vmatpush.msra.mxu0 %v4666
  %4721 = vmatpush.msra.mxu0 %v4665
  %4722 = vmatpush.msra.mxu0 %v4664
  %4723 = vmatpush.msra.mxu0 %v4663
  %4724 = vmatpush.msra.mxu0 %v4662
  %4725 = vmatpush.msra.mxu0 %v4661
  %4726 = vmatpush.msra.mxu0 %v4660
  %4727 = vmatpush.msra.mxu0 %v4659
  %4728 = vmatpush.msra.mxu0 %v4658
  %4729 = vmatpush.msra.mxu0 %v4657
  %4730 = vmatmul.f32.gmra.mxu0 %v3747
  %v4731 = vpop.f32.mrf.mxu0
  %v4732 = vadd.f32 %v4691, %v4731
  %4733 = vmatmul.f32.gmra.mxu0 %v3749
  %v4734 = vpop.f32.mrf.mxu0
  %v4735 = vadd.f32 %v4694, %v4734
  %4736 = vmatmul.f32.gmra.mxu0 %v3751
  %v4737 = vpop.f32.mrf.mxu0
  %v4738 = vadd.f32 %v4697, %v4737
  %4739 = vmatmul.f32.gmra.mxu0 %v3753
  %v4740 = vpop.f32.mrf.mxu0
  %v4741 = vadd.f32 %v4700, %v4740
  %4742 = vmatmul.f32.gmra.mxu0 %v3755
  %v4743 = vpop.f32.mrf.mxu0
  %v4744 = vadd.f32 %v4703, %v4743
  %4745 = vmatmul.f32.gmra.mxu0 %v3757
  %v4746 = vpop.f32.mrf.mxu0
  %v4747 = vadd.f32 %v4706, %v4746
  %4748 = vmatmul.f32.gmra.mxu0 %v3759
  %v4749 = vpop.f32.mrf.mxu0
  %v4750 = vadd.f32 %v4709, %v4749
  %4751 = vmatmul.f32.gmra.mxu0 %v3761
  %v4752 = vpop.f32.mrf.mxu0
  %v4753 = vadd.f32 %v4712, %v4752
  %4754 = vdwg.mxu0
  %s4755 = scalar_lea.vmem %s7, 384
  %v4756 = vld [vmem:[%s4755] sm:$0xff]
  %v4757 = vld [vmem:[%s4755 + $0x8] sm:$0xff]
  %v4758 = vld [vmem:[%s4755 + $0x10] sm:$0xff]
  %v4759 = vld [vmem:[%s4755 + $0x18] sm:$0xff]
  %v4760 = vld [vmem:[%s4755 + $0x20] sm:$0xff]
  %v4761 = vld [vmem:[%s4755 + $0x28] sm:$0xff]
  %v4762 = vld [vmem:[%s4755 + $0x30] sm:$0xff]
  %v4763 = vld [vmem:[%s4755 + $0x38] sm:$0xff]
  %v4764 = vld [vmem:[%s4755 + $0x40] sm:$0xff]
  %v4765 = vld [vmem:[%s4755 + $0x48] sm:$0xff]
  %v4766 = vld [vmem:[%s4755 + $0x50] sm:$0xff]
  %v4767 = vld [vmem:[%s4755 + $0x58] sm:$0xff]
  %v4768 = vld [vmem:[%s4755 + $0x60] sm:$0xff]
  %v4769 = vld [vmem:[%s4755 + $0x68] sm:$0xff]
  %v4770 = vld [vmem:[%s4755 + $0x70] sm:$0xff]
  %v4771 = vld [vmem:[%s4755 + $0x78] sm:$0xff]
  %v4773 = vsel %vm4088, %v4756, 0
  %v4776 = vsel %vm4088, %v4757, 0
  %v4779 = vsel %vm4088, %v4758, 0
  %v4782 = vsel %vm4088, %v4759, 0
  %v4785 = vsel %vm4088, %v4760, 0
  %v4788 = vsel %vm4088, %v4761, 0
  %v4791 = vsel %vm4088, %v4762, 0
  %v4794 = vsel %vm4088, %v4763, 0
  %v4797 = vsel %vm4088, %v4764, 0
  %v4800 = vsel %vm4088, %v4765, 0
  %v4803 = vsel %vm4088, %v4766, 0
  %v4806 = vsel %vm4088, %v4767, 0
  %v4809 = vsel %vm4088, %v4768, 0
  %v4812 = vsel %vm4088, %v4769, 0
  %v4815 = vsel %vm4088, %v4770, 0
  %v4818 = vsel %vm4088, %v4771, 0
  %4820 = vmatpush.msra.mxu0 0.0
  %4821 = vmatpush.msra.mxu0 0.0
  %4822 = vmatpush.msra.mxu0 0.0
  %4823 = vmatpush.msra.mxu0 0.0
  %4824 = vmatpush.msra.mxu0 0.0
  %4825 = vmatpush.msra.mxu0 0.0
  %4826 = vmatpush.msra.mxu0 0.0
  %4827 = vmatpush.msra.mxu0 0.0
  %4828 = vmatpush.msra.mxu0 %v4753
  %4829 = vmatpush.msra.mxu0 %v4750
  %4830 = vmatpush.msra.mxu0 %v4747
  %4831 = vmatpush.msra.mxu0 %v4744
  %4832 = vmatpush.msra.mxu0 %v4741
  %4833 = vmatpush.msra.mxu0 %v4738
  %4834 = vmatpush.msra.mxu0 %v4735
  %4835 = vmatpush.msra.mxu0 %v4732
  %4836 = vmatmul.f32.gmra.mxu0 %v4773
  %v4837 = vpop.f32.mrf.mxu0
  %v4838 = vadd.f32 0.0, %v4837
  %4839 = vmatmul.f32.gmra.mxu0 %v4776
  %v4840 = vpop.f32.mrf.mxu0
  %v4841 = vadd.f32 0.0, %v4840
  %4842 = vmatmul.f32.gmra.mxu0 %v4779
  %v4843 = vpop.f32.mrf.mxu0
  %v4844 = vadd.f32 0.0, %v4843
  %4845 = vmatmul.f32.gmra.mxu0 %v4782
  %v4846 = vpop.f32.mrf.mxu0
  %v4847 = vadd.f32 0.0, %v4846
  %4848 = vmatmul.f32.gmra.mxu0 %v4785
  %v4849 = vpop.f32.mrf.mxu0
  %v4850 = vadd.f32 0.0, %v4849
  %4851 = vmatmul.f32.gmra.mxu0 %v4788
  %v4852 = vpop.f32.mrf.mxu0
  %v4853 = vadd.f32 0.0, %v4852
  %4854 = vmatmul.f32.gmra.mxu0 %v4791
  %v4855 = vpop.f32.mrf.mxu0
  %v4856 = vadd.f32 0.0, %v4855
  %4857 = vmatmul.f32.gmra.mxu0 %v4794
  %v4858 = vpop.f32.mrf.mxu0
  %v4859 = vadd.f32 0.0, %v4858
  %4860 = vmatmul.f32.gmra.mxu0 %v4797
  %v4861 = vpop.f32.mrf.mxu0
  %v4862 = vadd.f32 0.0, %v4861
  %4863 = vmatmul.f32.gmra.mxu0 %v4800
  %v4864 = vpop.f32.mrf.mxu0
  %v4865 = vadd.f32 0.0, %v4864
  %4866 = vmatmul.f32.gmra.mxu0 %v4803
  %v4867 = vpop.f32.mrf.mxu0
  %v4868 = vadd.f32 0.0, %v4867
  %4869 = vmatmul.f32.gmra.mxu0 %v4806
  %v4870 = vpop.f32.mrf.mxu0
  %v4871 = vadd.f32 0.0, %v4870
  %4872 = vmatmul.f32.gmra.mxu0 %v4809
  %v4873 = vpop.f32.mrf.mxu0
  %v4874 = vadd.f32 0.0, %v4873
  %4875 = vmatmul.f32.gmra.mxu0 %v4812
  %v4876 = vpop.f32.mrf.mxu0
  %v4877 = vadd.f32 0.0, %v4876
  %4878 = vmatmul.f32.gmra.mxu0 %v4815
  %v4879 = vpop.f32.mrf.mxu0
  %v4880 = vadd.f32 0.0, %v4879
  %4881 = vmatmul.f32.gmra.mxu0 %v4818
  %v4882 = vpop.f32.mrf.mxu0
  %v4883 = vadd.f32 0.0, %v4882
  %4884 = vdwg.mxu0
  %v4885 = vadd.f32 %v4592, %v4838
  %v4886 = vadd.f32 %v4593, %v4841
  %v4887 = vadd.f32 %v4594, %v4844
  %v4888 = vadd.f32 %v4595, %v4847
  %v4889 = vadd.f32 %v4596, %v4850
  %v4890 = vadd.f32 %v4597, %v4853
  %v4891 = vadd.f32 %v4598, %v4856
  %v4892 = vadd.f32 %v4599, %v4859
  %v4893 = vadd.f32 %v4600, %v4862
  %v4894 = vadd.f32 %v4601, %v4865
  %v4895 = vadd.f32 %v4602, %v4868
  %v4896 = vadd.f32 %v4603, %v4871
  %v4897 = vadd.f32 %v4604, %v4874
  %v4898 = vadd.f32 %v4605, %v4877
  %v4899 = vadd.f32 %v4606, %v4880
  %v4900 = vadd.f32 %v4607, %v4883
  %s4901 = scalar_lea.vmem %s9, 512
  %v4902 = vld [vmem:[%s4901] sm:$0xf]
  %v4903 = vld [vmem:[%s4901 + $0x4] sm:$0xf]
  %v4904 = vld [vmem:[%s4901 + $0x8] sm:$0xf]
  %v4905 = vld [vmem:[%s4901 + $0xc] sm:$0xf]
  %v4906 = vld [vmem:[%s4901 + $0x10] sm:$0xf]
  %v4907 = vld [vmem:[%s4901 + $0x14] sm:$0xf]
  %v4908 = vld [vmem:[%s4901 + $0x18] sm:$0xf]
  %v4909 = vld [vmem:[%s4901 + $0x1c] sm:$0xf]
  %v4910 = vld [vmem:[%s4901 + $0x20] sm:$0xf]
  %v4911 = vld [vmem:[%s4901 + $0x24] sm:$0xf]
  %v4912 = vld [vmem:[%s4901 + $0x28] sm:$0xf]
  %v4913 = vld [vmem:[%s4901 + $0x2c] sm:$0xf]
  %v4914 = vld [vmem:[%s4901 + $0x30] sm:$0xf]
  %v4915 = vld [vmem:[%s4901 + $0x34] sm:$0xf]
  %v4916 = vld [vmem:[%s4901 + $0x38] sm:$0xf]
  %v4917 = vld [vmem:[%s4901 + $0x3c] sm:$0xf]
  %v4918 = vld [vmem:[%s4901 + $0x40] sm:$0xf]
  %v4919 = vld [vmem:[%s4901 + $0x44] sm:$0xf]
  %v4920 = vld [vmem:[%s4901 + $0x48] sm:$0xf]
  %v4921 = vld [vmem:[%s4901 + $0x4c] sm:$0xf]
  %v4922 = vld [vmem:[%s4901 + $0x50] sm:$0xf]
  %v4923 = vld [vmem:[%s4901 + $0x54] sm:$0xf]
  %v4924 = vld [vmem:[%s4901 + $0x58] sm:$0xf]
  %v4925 = vld [vmem:[%s4901 + $0x5c] sm:$0xf]
  %v4926 = vld [vmem:[%s4901 + $0x60] sm:$0xf]
  %v4927 = vld [vmem:[%s4901 + $0x64] sm:$0xf]
  %v4928 = vld [vmem:[%s4901 + $0x68] sm:$0xf]
  %v4929 = vld [vmem:[%s4901 + $0x6c] sm:$0xf]
  %v4930 = vld [vmem:[%s4901 + $0x70] sm:$0xf]
  %v4931 = vld [vmem:[%s4901 + $0x74] sm:$0xf]
  %v4932 = vld [vmem:[%s4901 + $0x78] sm:$0xf]
  %v4933 = vld [vmem:[%s4901 + $0x7c] sm:$0xf]
  %v4934 = vunpack.c.l.bf16 %v4902
  %v4935 = vunpack.c.l.bf16 %v4903
  %v4936 = vunpack.c.l.bf16 %v4904
  %v4937 = vunpack.c.l.bf16 %v4905
  %v4938 = vunpack.c.l.bf16 %v4906
  %v4939 = vunpack.c.l.bf16 %v4907
  %v4940 = vunpack.c.l.bf16 %v4908
  %v4941 = vunpack.c.l.bf16 %v4909
  %v4942 = vunpack.c.l.bf16 %v4910
  %v4943 = vunpack.c.l.bf16 %v4911
  %v4944 = vunpack.c.l.bf16 %v4912
  %v4945 = vunpack.c.l.bf16 %v4913
  %v4946 = vunpack.c.l.bf16 %v4914
  %v4947 = vunpack.c.l.bf16 %v4915
  %v4948 = vunpack.c.l.bf16 %v4916
  %v4949 = vunpack.c.l.bf16 %v4917
  %v4950 = vunpack.c.l.bf16 %v4918
  %v4951 = vunpack.c.l.bf16 %v4919
  %v4952 = vunpack.c.l.bf16 %v4920
  %v4953 = vunpack.c.l.bf16 %v4921
  %v4954 = vunpack.c.l.bf16 %v4922
  %v4955 = vunpack.c.l.bf16 %v4923
  %v4956 = vunpack.c.l.bf16 %v4924
  %v4957 = vunpack.c.l.bf16 %v4925
  %v4958 = vunpack.c.l.bf16 %v4926
  %v4959 = vunpack.c.l.bf16 %v4927
  %v4960 = vunpack.c.l.bf16 %v4928
  %v4961 = vunpack.c.l.bf16 %v4929
  %v4962 = vunpack.c.l.bf16 %v4930
  %v4963 = vunpack.c.l.bf16 %v4931
  %v4964 = vunpack.c.l.bf16 %v4932
  %v4965 = vunpack.c.l.bf16 %v4933
  %4966 = vmatpush.msra.mxu0 %v4949
  %4967 = vmatpush.msra.mxu0 %v4948
  %4968 = vmatpush.msra.mxu0 %v4947
  %4969 = vmatpush.msra.mxu0 %v4946
  %4970 = vmatpush.msra.mxu0 %v4945
  %4971 = vmatpush.msra.mxu0 %v4944
  %4972 = vmatpush.msra.mxu0 %v4943
  %4973 = vmatpush.msra.mxu0 %v4942
  %4974 = vmatpush.msra.mxu0 %v4941
  %4975 = vmatpush.msra.mxu0 %v4940
  %4976 = vmatpush.msra.mxu0 %v4939
  %4977 = vmatpush.msra.mxu0 %v4938
  %4978 = vmatpush.msra.mxu0 %v4937
  %4979 = vmatpush.msra.mxu0 %v4936
  %4980 = vmatpush.msra.mxu0 %v4935
  %4981 = vmatpush.msra.mxu0 %v4934
  %4982 = vmatmul.f32.gmra.mxu0 %v3746
  %v4983 = vpop.f32.mrf.mxu0
  %v4984 = vadd.f32 0.0, %v4983
  %4985 = vmatmul.f32.gmra.mxu0 %v3748
  %v4986 = vpop.f32.mrf.mxu0
  %v4987 = vadd.f32 0.0, %v4986
  %4988 = vmatmul.f32.gmra.mxu0 %v3750
  %v4989 = vpop.f32.mrf.mxu0
  %v4990 = vadd.f32 0.0, %v4989
  %4991 = vmatmul.f32.gmra.mxu0 %v3752
  %v4992 = vpop.f32.mrf.mxu0
  %v4993 = vadd.f32 0.0, %v4992
  %4994 = vmatmul.f32.gmra.mxu0 %v3754
  %v4995 = vpop.f32.mrf.mxu0
  %v4996 = vadd.f32 0.0, %v4995
  %4997 = vmatmul.f32.gmra.mxu0 %v3756
  %v4998 = vpop.f32.mrf.mxu0
  %v4999 = vadd.f32 0.0, %v4998
  %5000 = vmatmul.f32.gmra.mxu0 %v3758
  %v5001 = vpop.f32.mrf.mxu0
  %v5002 = vadd.f32 0.0, %v5001
  %5003 = vmatmul.f32.gmra.mxu0 %v3760
  %v5004 = vpop.f32.mrf.mxu0
  %v5005 = vadd.f32 0.0, %v5004
  %5006 = vdwg.mxu0
  %5007 = vmatpush.msra.mxu0 %v4965
  %5008 = vmatpush.msra.mxu0 %v4964
  %5009 = vmatpush.msra.mxu0 %v4963
  %5010 = vmatpush.msra.mxu0 %v4962
  %5011 = vmatpush.msra.mxu0 %v4961
  %5012 = vmatpush.msra.mxu0 %v4960
  %5013 = vmatpush.msra.mxu0 %v4959
  %5014 = vmatpush.msra.mxu0 %v4958
  %5015 = vmatpush.msra.mxu0 %v4957
  %5016 = vmatpush.msra.mxu0 %v4956
  %5017 = vmatpush.msra.mxu0 %v4955
  %5018 = vmatpush.msra.mxu0 %v4954
  %5019 = vmatpush.msra.mxu0 %v4953
  %5020 = vmatpush.msra.mxu0 %v4952
  %5021 = vmatpush.msra.mxu0 %v4951
  %5022 = vmatpush.msra.mxu0 %v4950
  %5023 = vmatmul.f32.gmra.mxu0 %v3747
  %v5024 = vpop.f32.mrf.mxu0
  %v5025 = vadd.f32 %v4984, %v5024
  %5026 = vmatmul.f32.gmra.mxu0 %v3749
  %v5027 = vpop.f32.mrf.mxu0
  %v5028 = vadd.f32 %v4987, %v5027
  %5029 = vmatmul.f32.gmra.mxu0 %v3751
  %v5030 = vpop.f32.mrf.mxu0
  %v5031 = vadd.f32 %v4990, %v5030
  %5032 = vmatmul.f32.gmra.mxu0 %v3753
  %v5033 = vpop.f32.mrf.mxu0
  %v5034 = vadd.f32 %v4993, %v5033
  %5035 = vmatmul.f32.gmra.mxu0 %v3755
  %v5036 = vpop.f32.mrf.mxu0
  %v5037 = vadd.f32 %v4996, %v5036
  %5038 = vmatmul.f32.gmra.mxu0 %v3757
  %v5039 = vpop.f32.mrf.mxu0
  %v5040 = vadd.f32 %v4999, %v5039
  %5041 = vmatmul.f32.gmra.mxu0 %v3759
  %v5042 = vpop.f32.mrf.mxu0
  %v5043 = vadd.f32 %v5002, %v5042
  %5044 = vmatmul.f32.gmra.mxu0 %v3761
  %v5045 = vpop.f32.mrf.mxu0
  %v5046 = vadd.f32 %v5005, %v5045
  %5047 = vdwg.mxu0
  %s5048 = scalar_lea.vmem %s7, 512
  %v5049 = vld [vmem:[%s5048] sm:$0xff]
  %v5050 = vld [vmem:[%s5048 + $0x8] sm:$0xff]
  %v5051 = vld [vmem:[%s5048 + $0x10] sm:$0xff]
  %v5052 = vld [vmem:[%s5048 + $0x18] sm:$0xff]
  %v5053 = vld [vmem:[%s5048 + $0x20] sm:$0xff]
  %v5054 = vld [vmem:[%s5048 + $0x28] sm:$0xff]
  %v5055 = vld [vmem:[%s5048 + $0x30] sm:$0xff]
  %v5056 = vld [vmem:[%s5048 + $0x38] sm:$0xff]
  %v5057 = vld [vmem:[%s5048 + $0x40] sm:$0xff]
  %v5058 = vld [vmem:[%s5048 + $0x48] sm:$0xff]
  %v5059 = vld [vmem:[%s5048 + $0x50] sm:$0xff]
  %v5060 = vld [vmem:[%s5048 + $0x58] sm:$0xff]
  %v5061 = vld [vmem:[%s5048 + $0x60] sm:$0xff]
  %v5062 = vld [vmem:[%s5048 + $0x68] sm:$0xff]
  %v5063 = vld [vmem:[%s5048 + $0x70] sm:$0xff]
  %v5064 = vld [vmem:[%s5048 + $0x78] sm:$0xff]
  %v5066 = vsel %vm4088, %v5049, 0
  %v5069 = vsel %vm4088, %v5050, 0
  %v5072 = vsel %vm4088, %v5051, 0
  %v5075 = vsel %vm4088, %v5052, 0
  %v5078 = vsel %vm4088, %v5053, 0
  %v5081 = vsel %vm4088, %v5054, 0
  %v5084 = vsel %vm4088, %v5055, 0
  %v5087 = vsel %vm4088, %v5056, 0
  %v5090 = vsel %vm4088, %v5057, 0
  %v5093 = vsel %vm4088, %v5058, 0
  %v5096 = vsel %vm4088, %v5059, 0
  %v5099 = vsel %vm4088, %v5060, 0
  %v5102 = vsel %vm4088, %v5061, 0
  %v5105 = vsel %vm4088, %v5062, 0
  %v5108 = vsel %vm4088, %v5063, 0
  %v5111 = vsel %vm4088, %v5064, 0
  %5113 = vmatpush.msra.mxu0 0.0
  %5114 = vmatpush.msra.mxu0 0.0
  %5115 = vmatpush.msra.mxu0 0.0
  %5116 = vmatpush.msra.mxu0 0.0
  %5117 = vmatpush.msra.mxu0 0.0
  %5118 = vmatpush.msra.mxu0 0.0
  %5119 = vmatpush.msra.mxu0 0.0
  %5120 = vmatpush.msra.mxu0 0.0
  %5121 = vmatpush.msra.mxu0 %v5046
  %5122 = vmatpush.msra.mxu0 %v5043
  %5123 = vmatpush.msra.mxu0 %v5040
  %5124 = vmatpush.msra.mxu0 %v5037
  %5125 = vmatpush.msra.mxu0 %v5034
  %5126 = vmatpush.msra.mxu0 %v5031
  %5127 = vmatpush.msra.mxu0 %v5028
  %5128 = vmatpush.msra.mxu0 %v5025
  %5129 = vmatmul.f32.gmra.mxu0 %v5066
  %v5130 = vpop.f32.mrf.mxu0
  %v5131 = vadd.f32 0.0, %v5130
  %5132 = vmatmul.f32.gmra.mxu0 %v5069
  %v5133 = vpop.f32.mrf.mxu0
  %v5134 = vadd.f32 0.0, %v5133
  %5135 = vmatmul.f32.gmra.mxu0 %v5072
  %v5136 = vpop.f32.mrf.mxu0
  %v5137 = vadd.f32 0.0, %v5136
  %5138 = vmatmul.f32.gmra.mxu0 %v5075
  %v5139 = vpop.f32.mrf.mxu0
  %v5140 = vadd.f32 0.0, %v5139
  %5141 = vmatmul.f32.gmra.mxu0 %v5078
  %v5142 = vpop.f32.mrf.mxu0
  %v5143 = vadd.f32 0.0, %v5142
  %5144 = vmatmul.f32.gmra.mxu0 %v5081
  %v5145 = vpop.f32.mrf.mxu0
  %v5146 = vadd.f32 0.0, %v5145
  %5147 = vmatmul.f32.gmra.mxu0 %v5084
  %v5148 = vpop.f32.mrf.mxu0
  %v5149 = vadd.f32 0.0, %v5148
  %5150 = vmatmul.f32.gmra.mxu0 %v5087
  %v5151 = vpop.f32.mrf.mxu0
  %v5152 = vadd.f32 0.0, %v5151
  %5153 = vmatmul.f32.gmra.mxu0 %v5090
  %v5154 = vpop.f32.mrf.mxu0
  %v5155 = vadd.f32 0.0, %v5154
  %5156 = vmatmul.f32.gmra.mxu0 %v5093
  %v5157 = vpop.f32.mrf.mxu0
  %v5158 = vadd.f32 0.0, %v5157
  %5159 = vmatmul.f32.gmra.mxu0 %v5096
  %v5160 = vpop.f32.mrf.mxu0
  %v5161 = vadd.f32 0.0, %v5160
  %5162 = vmatmul.f32.gmra.mxu0 %v5099
  %v5163 = vpop.f32.mrf.mxu0
  %v5164 = vadd.f32 0.0, %v5163
  %5165 = vmatmul.f32.gmra.mxu0 %v5102
  %v5166 = vpop.f32.mrf.mxu0
  %v5167 = vadd.f32 0.0, %v5166
  %5168 = vmatmul.f32.gmra.mxu0 %v5105
  %v5169 = vpop.f32.mrf.mxu0
  %v5170 = vadd.f32 0.0, %v5169
  %5171 = vmatmul.f32.gmra.mxu0 %v5108
  %v5172 = vpop.f32.mrf.mxu0
  %v5173 = vadd.f32 0.0, %v5172
  %5174 = vmatmul.f32.gmra.mxu0 %v5111
  %v5175 = vpop.f32.mrf.mxu0
  %v5176 = vadd.f32 0.0, %v5175
  %5177 = vdwg.mxu0
  %v5178 = vadd.f32 %v4885, %v5131
  %v5179 = vadd.f32 %v4886, %v5134
  %v5180 = vadd.f32 %v4887, %v5137
  %v5181 = vadd.f32 %v4888, %v5140
  %v5182 = vadd.f32 %v4889, %v5143
  %v5183 = vadd.f32 %v4890, %v5146
  %v5184 = vadd.f32 %v4891, %v5149
  %v5185 = vadd.f32 %v4892, %v5152
  %v5186 = vadd.f32 %v4893, %v5155
  %v5187 = vadd.f32 %v4894, %v5158
  %v5188 = vadd.f32 %v4895, %v5161
  %v5189 = vadd.f32 %v4896, %v5164
  %v5190 = vadd.f32 %v4897, %v5167
  %v5191 = vadd.f32 %v4898, %v5170
  %v5192 = vadd.f32 %v4899, %v5173
  %v5193 = vadd.f32 %v4900, %v5176
  %s5194 = scalar_lea.vmem %s9, 640
  %v5195 = vld [vmem:[%s5194] sm:$0xf]
  %v5196 = vld [vmem:[%s5194 + $0x4] sm:$0xf]
  %v5197 = vld [vmem:[%s5194 + $0x8] sm:$0xf]
  %v5198 = vld [vmem:[%s5194 + $0xc] sm:$0xf]
  %v5199 = vld [vmem:[%s5194 + $0x10] sm:$0xf]
  %v5200 = vld [vmem:[%s5194 + $0x14] sm:$0xf]
  %v5201 = vld [vmem:[%s5194 + $0x18] sm:$0xf]
  %v5202 = vld [vmem:[%s5194 + $0x1c] sm:$0xf]
  %v5203 = vld [vmem:[%s5194 + $0x20] sm:$0xf]
  %v5204 = vld [vmem:[%s5194 + $0x24] sm:$0xf]
  %v5205 = vld [vmem:[%s5194 + $0x28] sm:$0xf]
  %v5206 = vld [vmem:[%s5194 + $0x2c] sm:$0xf]
  %v5207 = vld [vmem:[%s5194 + $0x30] sm:$0xf]
  %v5208 = vld [vmem:[%s5194 + $0x34] sm:$0xf]
  %v5209 = vld [vmem:[%s5194 + $0x38] sm:$0xf]
  %v5210 = vld [vmem:[%s5194 + $0x3c] sm:$0xf]
  %v5211 = vld [vmem:[%s5194 + $0x40] sm:$0xf]
  %v5212 = vld [vmem:[%s5194 + $0x44] sm:$0xf]
  %v5213 = vld [vmem:[%s5194 + $0x48] sm:$0xf]
  %v5214 = vld [vmem:[%s5194 + $0x4c] sm:$0xf]
  %v5215 = vld [vmem:[%s5194 + $0x50] sm:$0xf]
  %v5216 = vld [vmem:[%s5194 + $0x54] sm:$0xf]
  %v5217 = vld [vmem:[%s5194 + $0x58] sm:$0xf]
  %v5218 = vld [vmem:[%s5194 + $0x5c] sm:$0xf]
  %v5219 = vld [vmem:[%s5194 + $0x60] sm:$0xf]
  %v5220 = vld [vmem:[%s5194 + $0x64] sm:$0xf]
  %v5221 = vld [vmem:[%s5194 + $0x68] sm:$0xf]
  %v5222 = vld [vmem:[%s5194 + $0x6c] sm:$0xf]
  %v5223 = vld [vmem:[%s5194 + $0x70] sm:$0xf]
  %v5224 = vld [vmem:[%s5194 + $0x74] sm:$0xf]
  %v5225 = vld [vmem:[%s5194 + $0x78] sm:$0xf]
  %v5226 = vld [vmem:[%s5194 + $0x7c] sm:$0xf]
  %v5227 = vunpack.c.l.bf16 %v5195
  %v5228 = vunpack.c.l.bf16 %v5196
  %v5229 = vunpack.c.l.bf16 %v5197
  %v5230 = vunpack.c.l.bf16 %v5198
  %v5231 = vunpack.c.l.bf16 %v5199
  %v5232 = vunpack.c.l.bf16 %v5200
  %v5233 = vunpack.c.l.bf16 %v5201
  %v5234 = vunpack.c.l.bf16 %v5202
  %v5235 = vunpack.c.l.bf16 %v5203
  %v5236 = vunpack.c.l.bf16 %v5204
  %v5237 = vunpack.c.l.bf16 %v5205
  %v5238 = vunpack.c.l.bf16 %v5206
  %v5239 = vunpack.c.l.bf16 %v5207
  %v5240 = vunpack.c.l.bf16 %v5208
  %v5241 = vunpack.c.l.bf16 %v5209
  %v5242 = vunpack.c.l.bf16 %v5210
  %v5243 = vunpack.c.l.bf16 %v5211
  %v5244 = vunpack.c.l.bf16 %v5212
  %v5245 = vunpack.c.l.bf16 %v5213
  %v5246 = vunpack.c.l.bf16 %v5214
  %v5247 = vunpack.c.l.bf16 %v5215
  %v5248 = vunpack.c.l.bf16 %v5216
  %v5249 = vunpack.c.l.bf16 %v5217
  %v5250 = vunpack.c.l.bf16 %v5218
  %v5251 = vunpack.c.l.bf16 %v5219
  %v5252 = vunpack.c.l.bf16 %v5220
  %v5253 = vunpack.c.l.bf16 %v5221
  %v5254 = vunpack.c.l.bf16 %v5222
  %v5255 = vunpack.c.l.bf16 %v5223
  %v5256 = vunpack.c.l.bf16 %v5224
  %v5257 = vunpack.c.l.bf16 %v5225
  %v5258 = vunpack.c.l.bf16 %v5226
  %5259 = vmatpush.msra.mxu0 %v5242
  %5260 = vmatpush.msra.mxu0 %v5241
  %5261 = vmatpush.msra.mxu0 %v5240
  %5262 = vmatpush.msra.mxu0 %v5239
  %5263 = vmatpush.msra.mxu0 %v5238
  %5264 = vmatpush.msra.mxu0 %v5237
  %5265 = vmatpush.msra.mxu0 %v5236
  %5266 = vmatpush.msra.mxu0 %v5235
  %5267 = vmatpush.msra.mxu0 %v5234
  %5268 = vmatpush.msra.mxu0 %v5233
  %5269 = vmatpush.msra.mxu0 %v5232
  %5270 = vmatpush.msra.mxu0 %v5231
  %5271 = vmatpush.msra.mxu0 %v5230
  %5272 = vmatpush.msra.mxu0 %v5229
  %5273 = vmatpush.msra.mxu0 %v5228
  %5274 = vmatpush.msra.mxu0 %v5227
  %5275 = vmatmul.f32.gmra.mxu0 %v3746
  %v5276 = vpop.f32.mrf.mxu0
  %v5277 = vadd.f32 0.0, %v5276
  %5278 = vmatmul.f32.gmra.mxu0 %v3748
  %v5279 = vpop.f32.mrf.mxu0
  %v5280 = vadd.f32 0.0, %v5279
  %5281 = vmatmul.f32.gmra.mxu0 %v3750
  %v5282 = vpop.f32.mrf.mxu0
  %v5283 = vadd.f32 0.0, %v5282
  %5284 = vmatmul.f32.gmra.mxu0 %v3752
  %v5285 = vpop.f32.mrf.mxu0
  %v5286 = vadd.f32 0.0, %v5285
  %5287 = vmatmul.f32.gmra.mxu0 %v3754
  %v5288 = vpop.f32.mrf.mxu0
  %v5289 = vadd.f32 0.0, %v5288
  %5290 = vmatmul.f32.gmra.mxu0 %v3756
  %v5291 = vpop.f32.mrf.mxu0
  %v5292 = vadd.f32 0.0, %v5291
  %5293 = vmatmul.f32.gmra.mxu0 %v3758
  %v5294 = vpop.f32.mrf.mxu0
  %v5295 = vadd.f32 0.0, %v5294
  %5296 = vmatmul.f32.gmra.mxu0 %v3760
  %v5297 = vpop.f32.mrf.mxu0
  %v5298 = vadd.f32 0.0, %v5297
  %5299 = vdwg.mxu0
  %5300 = vmatpush.msra.mxu0 %v5258
  %5301 = vmatpush.msra.mxu0 %v5257
  %5302 = vmatpush.msra.mxu0 %v5256
  %5303 = vmatpush.msra.mxu0 %v5255
  %5304 = vmatpush.msra.mxu0 %v5254
  %5305 = vmatpush.msra.mxu0 %v5253
  %5306 = vmatpush.msra.mxu0 %v5252
  %5307 = vmatpush.msra.mxu0 %v5251
  %5308 = vmatpush.msra.mxu0 %v5250
  %5309 = vmatpush.msra.mxu0 %v5249
  %5310 = vmatpush.msra.mxu0 %v5248
  %5311 = vmatpush.msra.mxu0 %v5247
  %5312 = vmatpush.msra.mxu0 %v5246
  %5313 = vmatpush.msra.mxu0 %v5245
  %5314 = vmatpush.msra.mxu0 %v5244
  %5315 = vmatpush.msra.mxu0 %v5243
  %5316 = vmatmul.f32.gmra.mxu0 %v3747
  %v5317 = vpop.f32.mrf.mxu0
  %v5318 = vadd.f32 %v5277, %v5317
  %5319 = vmatmul.f32.gmra.mxu0 %v3749
  %v5320 = vpop.f32.mrf.mxu0
  %v5321 = vadd.f32 %v5280, %v5320
  %5322 = vmatmul.f32.gmra.mxu0 %v3751
  %v5323 = vpop.f32.mrf.mxu0
  %v5324 = vadd.f32 %v5283, %v5323
  %5325 = vmatmul.f32.gmra.mxu0 %v3753
  %v5326 = vpop.f32.mrf.mxu0
  %v5327 = vadd.f32 %v5286, %v5326
  %5328 = vmatmul.f32.gmra.mxu0 %v3755
  %v5329 = vpop.f32.mrf.mxu0
  %v5330 = vadd.f32 %v5289, %v5329
  %5331 = vmatmul.f32.gmra.mxu0 %v3757
  %v5332 = vpop.f32.mrf.mxu0
  %v5333 = vadd.f32 %v5292, %v5332
  %5334 = vmatmul.f32.gmra.mxu0 %v3759
  %v5335 = vpop.f32.mrf.mxu0
  %v5336 = vadd.f32 %v5295, %v5335
  %5337 = vmatmul.f32.gmra.mxu0 %v3761
  %v5338 = vpop.f32.mrf.mxu0
  %v5339 = vadd.f32 %v5298, %v5338
  %5340 = vdwg.mxu0
  %s5341 = scalar_lea.vmem %s7, 640
  %v5342 = vld [vmem:[%s5341] sm:$0xff]
  %v5343 = vld [vmem:[%s5341 + $0x8] sm:$0xff]
  %v5344 = vld [vmem:[%s5341 + $0x10] sm:$0xff]
  %v5345 = vld [vmem:[%s5341 + $0x18] sm:$0xff]
  %v5346 = vld [vmem:[%s5341 + $0x20] sm:$0xff]
  %v5347 = vld [vmem:[%s5341 + $0x28] sm:$0xff]
  %v5348 = vld [vmem:[%s5341 + $0x30] sm:$0xff]
  %v5349 = vld [vmem:[%s5341 + $0x38] sm:$0xff]
  %v5350 = vld [vmem:[%s5341 + $0x40] sm:$0xff]
  %v5351 = vld [vmem:[%s5341 + $0x48] sm:$0xff]
  %v5352 = vld [vmem:[%s5341 + $0x50] sm:$0xff]
  %v5353 = vld [vmem:[%s5341 + $0x58] sm:$0xff]
  %v5354 = vld [vmem:[%s5341 + $0x60] sm:$0xff]
  %v5355 = vld [vmem:[%s5341 + $0x68] sm:$0xff]
  %v5356 = vld [vmem:[%s5341 + $0x70] sm:$0xff]
  %v5357 = vld [vmem:[%s5341 + $0x78] sm:$0xff]
  %v5359 = vsel %vm4088, %v5342, 0
  %v5362 = vsel %vm4088, %v5343, 0
  %v5365 = vsel %vm4088, %v5344, 0
  %v5368 = vsel %vm4088, %v5345, 0
  %v5371 = vsel %vm4088, %v5346, 0
  %v5374 = vsel %vm4088, %v5347, 0
  %v5377 = vsel %vm4088, %v5348, 0
  %v5380 = vsel %vm4088, %v5349, 0
  %v5383 = vsel %vm4088, %v5350, 0
  %v5386 = vsel %vm4088, %v5351, 0
  %v5389 = vsel %vm4088, %v5352, 0
  %v5392 = vsel %vm4088, %v5353, 0
  %v5395 = vsel %vm4088, %v5354, 0
  %v5398 = vsel %vm4088, %v5355, 0
  %v5401 = vsel %vm4088, %v5356, 0
  %v5404 = vsel %vm4088, %v5357, 0
  %5406 = vmatpush.msra.mxu0 0.0
  %5407 = vmatpush.msra.mxu0 0.0
  %5408 = vmatpush.msra.mxu0 0.0
  %5409 = vmatpush.msra.mxu0 0.0
  %5410 = vmatpush.msra.mxu0 0.0
  %5411 = vmatpush.msra.mxu0 0.0
  %5412 = vmatpush.msra.mxu0 0.0
  %5413 = vmatpush.msra.mxu0 0.0
  %5414 = vmatpush.msra.mxu0 %v5339
  %5415 = vmatpush.msra.mxu0 %v5336
  %5416 = vmatpush.msra.mxu0 %v5333
  %5417 = vmatpush.msra.mxu0 %v5330
  %5418 = vmatpush.msra.mxu0 %v5327
  %5419 = vmatpush.msra.mxu0 %v5324
  %5420 = vmatpush.msra.mxu0 %v5321
  %5421 = vmatpush.msra.mxu0 %v5318
  %5422 = vmatmul.f32.gmra.mxu0 %v5359
  %v5423 = vpop.f32.mrf.mxu0
  %v5424 = vadd.f32 0.0, %v5423
  %5425 = vmatmul.f32.gmra.mxu0 %v5362
  %v5426 = vpop.f32.mrf.mxu0
  %v5427 = vadd.f32 0.0, %v5426
  %5428 = vmatmul.f32.gmra.mxu0 %v5365
  %v5429 = vpop.f32.mrf.mxu0
  %v5430 = vadd.f32 0.0, %v5429
  %5431 = vmatmul.f32.gmra.mxu0 %v5368
  %v5432 = vpop.f32.mrf.mxu0
  %v5433 = vadd.f32 0.0, %v5432
  %5434 = vmatmul.f32.gmra.mxu0 %v5371
  %v5435 = vpop.f32.mrf.mxu0
  %v5436 = vadd.f32 0.0, %v5435
  %5437 = vmatmul.f32.gmra.mxu0 %v5374
  %v5438 = vpop.f32.mrf.mxu0
  %v5439 = vadd.f32 0.0, %v5438
  %5440 = vmatmul.f32.gmra.mxu0 %v5377
  %v5441 = vpop.f32.mrf.mxu0
  %v5442 = vadd.f32 0.0, %v5441
  %5443 = vmatmul.f32.gmra.mxu0 %v5380
  %v5444 = vpop.f32.mrf.mxu0
  %v5445 = vadd.f32 0.0, %v5444
  %5446 = vmatmul.f32.gmra.mxu0 %v5383
  %v5447 = vpop.f32.mrf.mxu0
  %v5448 = vadd.f32 0.0, %v5447
  %5449 = vmatmul.f32.gmra.mxu0 %v5386
  %v5450 = vpop.f32.mrf.mxu0
  %v5451 = vadd.f32 0.0, %v5450
  %5452 = vmatmul.f32.gmra.mxu0 %v5389
  %v5453 = vpop.f32.mrf.mxu0
  %v5454 = vadd.f32 0.0, %v5453
  %5455 = vmatmul.f32.gmra.mxu0 %v5392
  %v5456 = vpop.f32.mrf.mxu0
  %v5457 = vadd.f32 0.0, %v5456
  %5458 = vmatmul.f32.gmra.mxu0 %v5395
  %v5459 = vpop.f32.mrf.mxu0
  %v5460 = vadd.f32 0.0, %v5459
  %5461 = vmatmul.f32.gmra.mxu0 %v5398
  %v5462 = vpop.f32.mrf.mxu0
  %v5463 = vadd.f32 0.0, %v5462
  %5464 = vmatmul.f32.gmra.mxu0 %v5401
  %v5465 = vpop.f32.mrf.mxu0
  %v5466 = vadd.f32 0.0, %v5465
  %5467 = vmatmul.f32.gmra.mxu0 %v5404
  %v5468 = vpop.f32.mrf.mxu0
  %v5469 = vadd.f32 0.0, %v5468
  %5470 = vdwg.mxu0
  %v5471 = vadd.f32 %v5178, %v5424
  %v5472 = vadd.f32 %v5179, %v5427
  %v5473 = vadd.f32 %v5180, %v5430
  %v5474 = vadd.f32 %v5181, %v5433
  %v5475 = vadd.f32 %v5182, %v5436
  %v5476 = vadd.f32 %v5183, %v5439
  %v5477 = vadd.f32 %v5184, %v5442
  %v5478 = vadd.f32 %v5185, %v5445
  %v5479 = vadd.f32 %v5186, %v5448
  %v5480 = vadd.f32 %v5187, %v5451
  %v5481 = vadd.f32 %v5188, %v5454
  %v5482 = vadd.f32 %v5189, %v5457
  %v5483 = vadd.f32 %v5190, %v5460
  %v5484 = vadd.f32 %v5191, %v5463
  %v5485 = vadd.f32 %v5192, %v5466
  %v5486 = vadd.f32 %v5193, %v5469
  %s5487 = scalar_lea.vmem %s9, 768
  %v5488 = vld [vmem:[%s5487] sm:$0xf]
  %v5489 = vld [vmem:[%s5487 + $0x4] sm:$0xf]
  %v5490 = vld [vmem:[%s5487 + $0x8] sm:$0xf]
  %v5491 = vld [vmem:[%s5487 + $0xc] sm:$0xf]
  %v5492 = vld [vmem:[%s5487 + $0x10] sm:$0xf]
  %v5493 = vld [vmem:[%s5487 + $0x14] sm:$0xf]
  %v5494 = vld [vmem:[%s5487 + $0x18] sm:$0xf]
  %v5495 = vld [vmem:[%s5487 + $0x1c] sm:$0xf]
  %v5496 = vld [vmem:[%s5487 + $0x20] sm:$0xf]
  %v5497 = vld [vmem:[%s5487 + $0x24] sm:$0xf]
  %v5498 = vld [vmem:[%s5487 + $0x28] sm:$0xf]
  %v5499 = vld [vmem:[%s5487 + $0x2c] sm:$0xf]
  %v5500 = vld [vmem:[%s5487 + $0x30] sm:$0xf]
  %v5501 = vld [vmem:[%s5487 + $0x34] sm:$0xf]
  %v5502 = vld [vmem:[%s5487 + $0x38] sm:$0xf]
  %v5503 = vld [vmem:[%s5487 + $0x3c] sm:$0xf]
  %v5504 = vld [vmem:[%s5487 + $0x40] sm:$0xf]
  %v5505 = vld [vmem:[%s5487 + $0x44] sm:$0xf]
  %v5506 = vld [vmem:[%s5487 + $0x48] sm:$0xf]
  %v5507 = vld [vmem:[%s5487 + $0x4c] sm:$0xf]
  %v5508 = vld [vmem:[%s5487 + $0x50] sm:$0xf]
  %v5509 = vld [vmem:[%s5487 + $0x54] sm:$0xf]
  %v5510 = vld [vmem:[%s5487 + $0x58] sm:$0xf]
  %v5511 = vld [vmem:[%s5487 + $0x5c] sm:$0xf]
  %v5512 = vld [vmem:[%s5487 + $0x60] sm:$0xf]
  %v5513 = vld [vmem:[%s5487 + $0x64] sm:$0xf]
  %v5514 = vld [vmem:[%s5487 + $0x68] sm:$0xf]
  %v5515 = vld [vmem:[%s5487 + $0x6c] sm:$0xf]
  %v5516 = vld [vmem:[%s5487 + $0x70] sm:$0xf]
  %v5517 = vld [vmem:[%s5487 + $0x74] sm:$0xf]
  %v5518 = vld [vmem:[%s5487 + $0x78] sm:$0xf]
  %v5519 = vld [vmem:[%s5487 + $0x7c] sm:$0xf]
  %v5520 = vunpack.c.l.bf16 %v5488
  %v5521 = vunpack.c.l.bf16 %v5489
  %v5522 = vunpack.c.l.bf16 %v5490
  %v5523 = vunpack.c.l.bf16 %v5491
  %v5524 = vunpack.c.l.bf16 %v5492
  %v5525 = vunpack.c.l.bf16 %v5493
  %v5526 = vunpack.c.l.bf16 %v5494
  %v5527 = vunpack.c.l.bf16 %v5495
  %v5528 = vunpack.c.l.bf16 %v5496
  %v5529 = vunpack.c.l.bf16 %v5497
  %v5530 = vunpack.c.l.bf16 %v5498
  %v5531 = vunpack.c.l.bf16 %v5499
  %v5532 = vunpack.c.l.bf16 %v5500
  %v5533 = vunpack.c.l.bf16 %v5501
  %v5534 = vunpack.c.l.bf16 %v5502
  %v5535 = vunpack.c.l.bf16 %v5503
  %v5536 = vunpack.c.l.bf16 %v5504
  %v5537 = vunpack.c.l.bf16 %v5505
  %v5538 = vunpack.c.l.bf16 %v5506
  %v5539 = vunpack.c.l.bf16 %v5507
  %v5540 = vunpack.c.l.bf16 %v5508
  %v5541 = vunpack.c.l.bf16 %v5509
  %v5542 = vunpack.c.l.bf16 %v5510
  %v5543 = vunpack.c.l.bf16 %v5511
  %v5544 = vunpack.c.l.bf16 %v5512
  %v5545 = vunpack.c.l.bf16 %v5513
  %v5546 = vunpack.c.l.bf16 %v5514
  %v5547 = vunpack.c.l.bf16 %v5515
  %v5548 = vunpack.c.l.bf16 %v5516
  %v5549 = vunpack.c.l.bf16 %v5517
  %v5550 = vunpack.c.l.bf16 %v5518
  %v5551 = vunpack.c.l.bf16 %v5519
  %5552 = vmatpush.msra.mxu0 %v5535
  %5553 = vmatpush.msra.mxu0 %v5534
  %5554 = vmatpush.msra.mxu0 %v5533
  %5555 = vmatpush.msra.mxu0 %v5532
  %5556 = vmatpush.msra.mxu0 %v5531
  %5557 = vmatpush.msra.mxu0 %v5530
  %5558 = vmatpush.msra.mxu0 %v5529
  %5559 = vmatpush.msra.mxu0 %v5528
  %5560 = vmatpush.msra.mxu0 %v5527
  %5561 = vmatpush.msra.mxu0 %v5526
  %5562 = vmatpush.msra.mxu0 %v5525
  %5563 = vmatpush.msra.mxu0 %v5524
  %5564 = vmatpush.msra.mxu0 %v5523
  %5565 = vmatpush.msra.mxu0 %v5522
  %5566 = vmatpush.msra.mxu0 %v5521
  %5567 = vmatpush.msra.mxu0 %v5520
  %5568 = vmatmul.f32.gmra.mxu0 %v3746
  %v5569 = vpop.f32.mrf.mxu0
  %v5570 = vadd.f32 0.0, %v5569
  %5571 = vmatmul.f32.gmra.mxu0 %v3748
  %v5572 = vpop.f32.mrf.mxu0
  %v5573 = vadd.f32 0.0, %v5572
  %5574 = vmatmul.f32.gmra.mxu0 %v3750
  %v5575 = vpop.f32.mrf.mxu0
  %v5576 = vadd.f32 0.0, %v5575
  %5577 = vmatmul.f32.gmra.mxu0 %v3752
  %v5578 = vpop.f32.mrf.mxu0
  %v5579 = vadd.f32 0.0, %v5578
  %5580 = vmatmul.f32.gmra.mxu0 %v3754
  %v5581 = vpop.f32.mrf.mxu0
  %v5582 = vadd.f32 0.0, %v5581
  %5583 = vmatmul.f32.gmra.mxu0 %v3756
  %v5584 = vpop.f32.mrf.mxu0
  %v5585 = vadd.f32 0.0, %v5584
  %5586 = vmatmul.f32.gmra.mxu0 %v3758
  %v5587 = vpop.f32.mrf.mxu0
  %v5588 = vadd.f32 0.0, %v5587
  %5589 = vmatmul.f32.gmra.mxu0 %v3760
  %v5590 = vpop.f32.mrf.mxu0
  %v5591 = vadd.f32 0.0, %v5590
  %5592 = vdwg.mxu0
  %5593 = vmatpush.msra.mxu0 %v5551
  %5594 = vmatpush.msra.mxu0 %v5550
  %5595 = vmatpush.msra.mxu0 %v5549
  %5596 = vmatpush.msra.mxu0 %v5548
  %5597 = vmatpush.msra.mxu0 %v5547
  %5598 = vmatpush.msra.mxu0 %v5546
  %5599 = vmatpush.msra.mxu0 %v5545
  %5600 = vmatpush.msra.mxu0 %v5544
  %5601 = vmatpush.msra.mxu0 %v5543
  %5602 = vmatpush.msra.mxu0 %v5542
  %5603 = vmatpush.msra.mxu0 %v5541
  %5604 = vmatpush.msra.mxu0 %v5540
  %5605 = vmatpush.msra.mxu0 %v5539
  %5606 = vmatpush.msra.mxu0 %v5538
  %5607 = vmatpush.msra.mxu0 %v5537
  %5608 = vmatpush.msra.mxu0 %v5536
  %5609 = vmatmul.f32.gmra.mxu0 %v3747
  %v5610 = vpop.f32.mrf.mxu0
  %v5611 = vadd.f32 %v5570, %v5610
  %5612 = vmatmul.f32.gmra.mxu0 %v3749
  %v5613 = vpop.f32.mrf.mxu0
  %v5614 = vadd.f32 %v5573, %v5613
  %5615 = vmatmul.f32.gmra.mxu0 %v3751
  %v5616 = vpop.f32.mrf.mxu0
  %v5617 = vadd.f32 %v5576, %v5616
  %5618 = vmatmul.f32.gmra.mxu0 %v3753
  %v5619 = vpop.f32.mrf.mxu0
  %v5620 = vadd.f32 %v5579, %v5619
  %5621 = vmatmul.f32.gmra.mxu0 %v3755
  %v5622 = vpop.f32.mrf.mxu0
  %v5623 = vadd.f32 %v5582, %v5622
  %5624 = vmatmul.f32.gmra.mxu0 %v3757
  %v5625 = vpop.f32.mrf.mxu0
  %v5626 = vadd.f32 %v5585, %v5625
  %5627 = vmatmul.f32.gmra.mxu0 %v3759
  %v5628 = vpop.f32.mrf.mxu0
  %v5629 = vadd.f32 %v5588, %v5628
  %5630 = vmatmul.f32.gmra.mxu0 %v3761
  %v5631 = vpop.f32.mrf.mxu0
  %v5632 = vadd.f32 %v5591, %v5631
  %5633 = vdwg.mxu0
  %s5634 = scalar_lea.vmem %s7, 768
  %v5635 = vld [vmem:[%s5634] sm:$0xff]
  %v5636 = vld [vmem:[%s5634 + $0x8] sm:$0xff]
  %v5637 = vld [vmem:[%s5634 + $0x10] sm:$0xff]
  %v5638 = vld [vmem:[%s5634 + $0x18] sm:$0xff]
  %v5639 = vld [vmem:[%s5634 + $0x20] sm:$0xff]
  %v5640 = vld [vmem:[%s5634 + $0x28] sm:$0xff]
  %v5641 = vld [vmem:[%s5634 + $0x30] sm:$0xff]
  %v5642 = vld [vmem:[%s5634 + $0x38] sm:$0xff]
  %v5643 = vld [vmem:[%s5634 + $0x40] sm:$0xff]
  %v5644 = vld [vmem:[%s5634 + $0x48] sm:$0xff]
  %v5645 = vld [vmem:[%s5634 + $0x50] sm:$0xff]
  %v5646 = vld [vmem:[%s5634 + $0x58] sm:$0xff]
  %v5647 = vld [vmem:[%s5634 + $0x60] sm:$0xff]
  %v5648 = vld [vmem:[%s5634 + $0x68] sm:$0xff]
  %v5649 = vld [vmem:[%s5634 + $0x70] sm:$0xff]
  %v5650 = vld [vmem:[%s5634 + $0x78] sm:$0xff]
  %v5652 = vsel %vm4088, %v5635, 0
  %v5655 = vsel %vm4088, %v5636, 0
  %v5658 = vsel %vm4088, %v5637, 0
  %v5661 = vsel %vm4088, %v5638, 0
  %v5664 = vsel %vm4088, %v5639, 0
  %v5667 = vsel %vm4088, %v5640, 0
  %v5670 = vsel %vm4088, %v5641, 0
  %v5673 = vsel %vm4088, %v5642, 0
  %v5676 = vsel %vm4088, %v5643, 0
  %v5679 = vsel %vm4088, %v5644, 0
  %v5682 = vsel %vm4088, %v5645, 0
  %v5685 = vsel %vm4088, %v5646, 0
  %v5688 = vsel %vm4088, %v5647, 0
  %v5691 = vsel %vm4088, %v5648, 0
  %v5694 = vsel %vm4088, %v5649, 0
  %v5697 = vsel %vm4088, %v5650, 0
  %5699 = vmatpush.msra.mxu0 0.0
  %5700 = vmatpush.msra.mxu0 0.0
  %5701 = vmatpush.msra.mxu0 0.0
  %5702 = vmatpush.msra.mxu0 0.0
  %5703 = vmatpush.msra.mxu0 0.0
  %5704 = vmatpush.msra.mxu0 0.0
  %5705 = vmatpush.msra.mxu0 0.0
  %5706 = vmatpush.msra.mxu0 0.0
  %5707 = vmatpush.msra.mxu0 %v5632
  %5708 = vmatpush.msra.mxu0 %v5629
  %5709 = vmatpush.msra.mxu0 %v5626
  %5710 = vmatpush.msra.mxu0 %v5623
  %5711 = vmatpush.msra.mxu0 %v5620
  %5712 = vmatpush.msra.mxu0 %v5617
  %5713 = vmatpush.msra.mxu0 %v5614
  %5714 = vmatpush.msra.mxu0 %v5611
  %5715 = vmatmul.f32.gmra.mxu0 %v5652
  %v5716 = vpop.f32.mrf.mxu0
  %v5717 = vadd.f32 0.0, %v5716
  %5718 = vmatmul.f32.gmra.mxu0 %v5655
  %v5719 = vpop.f32.mrf.mxu0
  %v5720 = vadd.f32 0.0, %v5719
  %5721 = vmatmul.f32.gmra.mxu0 %v5658
  %v5722 = vpop.f32.mrf.mxu0
  %v5723 = vadd.f32 0.0, %v5722
  %5724 = vmatmul.f32.gmra.mxu0 %v5661
  %v5725 = vpop.f32.mrf.mxu0
  %v5726 = vadd.f32 0.0, %v5725
  %5727 = vmatmul.f32.gmra.mxu0 %v5664
  %v5728 = vpop.f32.mrf.mxu0
  %v5729 = vadd.f32 0.0, %v5728
  %5730 = vmatmul.f32.gmra.mxu0 %v5667
  %v5731 = vpop.f32.mrf.mxu0
  %v5732 = vadd.f32 0.0, %v5731
  %5733 = vmatmul.f32.gmra.mxu0 %v5670
  %v5734 = vpop.f32.mrf.mxu0
  %v5735 = vadd.f32 0.0, %v5734
  %5736 = vmatmul.f32.gmra.mxu0 %v5673
  %v5737 = vpop.f32.mrf.mxu0
  %v5738 = vadd.f32 0.0, %v5737
  %5739 = vmatmul.f32.gmra.mxu0 %v5676
  %v5740 = vpop.f32.mrf.mxu0
  %v5741 = vadd.f32 0.0, %v5740
  %5742 = vmatmul.f32.gmra.mxu0 %v5679
  %v5743 = vpop.f32.mrf.mxu0
  %v5744 = vadd.f32 0.0, %v5743
  %5745 = vmatmul.f32.gmra.mxu0 %v5682
  %v5746 = vpop.f32.mrf.mxu0
  %v5747 = vadd.f32 0.0, %v5746
  %5748 = vmatmul.f32.gmra.mxu0 %v5685
  %v5749 = vpop.f32.mrf.mxu0
  %v5750 = vadd.f32 0.0, %v5749
  %5751 = vmatmul.f32.gmra.mxu0 %v5688
  %v5752 = vpop.f32.mrf.mxu0
  %v5753 = vadd.f32 0.0, %v5752
  %5754 = vmatmul.f32.gmra.mxu0 %v5691
  %v5755 = vpop.f32.mrf.mxu0
  %v5756 = vadd.f32 0.0, %v5755
  %5757 = vmatmul.f32.gmra.mxu0 %v5694
  %v5758 = vpop.f32.mrf.mxu0
  %v5759 = vadd.f32 0.0, %v5758
  %5760 = vmatmul.f32.gmra.mxu0 %v5697
  %v5761 = vpop.f32.mrf.mxu0
  %v5762 = vadd.f32 0.0, %v5761
  %5763 = vdwg.mxu0
  %v5764 = vadd.f32 %v5471, %v5717
  %v5765 = vadd.f32 %v5472, %v5720
  %v5766 = vadd.f32 %v5473, %v5723
  %v5767 = vadd.f32 %v5474, %v5726
  %v5768 = vadd.f32 %v5475, %v5729
  %v5769 = vadd.f32 %v5476, %v5732
  %v5770 = vadd.f32 %v5477, %v5735
  %v5771 = vadd.f32 %v5478, %v5738
  %v5772 = vadd.f32 %v5479, %v5741
  %v5773 = vadd.f32 %v5480, %v5744
  %v5774 = vadd.f32 %v5481, %v5747
  %v5775 = vadd.f32 %v5482, %v5750
  %v5776 = vadd.f32 %v5483, %v5753
  %v5777 = vadd.f32 %v5484, %v5756
  %v5778 = vadd.f32 %v5485, %v5759
  %v5779 = vadd.f32 %v5486, %v5762
  %s5780 = scalar_lea.vmem %s9, 896
  %v5781 = vld [vmem:[%s5780] sm:$0xf]
  %v5782 = vld [vmem:[%s5780 + $0x4] sm:$0xf]
  %v5783 = vld [vmem:[%s5780 + $0x8] sm:$0xf]
  %v5784 = vld [vmem:[%s5780 + $0xc] sm:$0xf]
  %v5785 = vld [vmem:[%s5780 + $0x10] sm:$0xf]
  %v5786 = vld [vmem:[%s5780 + $0x14] sm:$0xf]
  %v5787 = vld [vmem:[%s5780 + $0x18] sm:$0xf]
  %v5788 = vld [vmem:[%s5780 + $0x1c] sm:$0xf]
  %v5789 = vld [vmem:[%s5780 + $0x20] sm:$0xf]
  %v5790 = vld [vmem:[%s5780 + $0x24] sm:$0xf]
  %v5791 = vld [vmem:[%s5780 + $0x28] sm:$0xf]
  %v5792 = vld [vmem:[%s5780 + $0x2c] sm:$0xf]
  %v5793 = vld [vmem:[%s5780 + $0x30] sm:$0xf]
  %v5794 = vld [vmem:[%s5780 + $0x34] sm:$0xf]
  %v5795 = vld [vmem:[%s5780 + $0x38] sm:$0xf]
  %v5796 = vld [vmem:[%s5780 + $0x3c] sm:$0xf]
  %v5797 = vld [vmem:[%s5780 + $0x40] sm:$0xf]
  %v5798 = vld [vmem:[%s5780 + $0x44] sm:$0xf]
  %v5799 = vld [vmem:[%s5780 + $0x48] sm:$0xf]
  %v5800 = vld [vmem:[%s5780 + $0x4c] sm:$0xf]
  %v5801 = vld [vmem:[%s5780 + $0x50] sm:$0xf]
  %v5802 = vld [vmem:[%s5780 + $0x54] sm:$0xf]
  %v5803 = vld [vmem:[%s5780 + $0x58] sm:$0xf]
  %v5804 = vld [vmem:[%s5780 + $0x5c] sm:$0xf]
  %v5805 = vld [vmem:[%s5780 + $0x60] sm:$0xf]
  %v5806 = vld [vmem:[%s5780 + $0x64] sm:$0xf]
  %v5807 = vld [vmem:[%s5780 + $0x68] sm:$0xf]
  %v5808 = vld [vmem:[%s5780 + $0x6c] sm:$0xf]
  %v5809 = vld [vmem:[%s5780 + $0x70] sm:$0xf]
  %v5810 = vld [vmem:[%s5780 + $0x74] sm:$0xf]
  %v5811 = vld [vmem:[%s5780 + $0x78] sm:$0xf]
  %v5812 = vld [vmem:[%s5780 + $0x7c] sm:$0xf]
  %v5813 = vunpack.c.l.bf16 %v5781
  %v5814 = vunpack.c.l.bf16 %v5782
  %v5815 = vunpack.c.l.bf16 %v5783
  %v5816 = vunpack.c.l.bf16 %v5784
  %v5817 = vunpack.c.l.bf16 %v5785
  %v5818 = vunpack.c.l.bf16 %v5786
  %v5819 = vunpack.c.l.bf16 %v5787
  %v5820 = vunpack.c.l.bf16 %v5788
  %v5821 = vunpack.c.l.bf16 %v5789
  %v5822 = vunpack.c.l.bf16 %v5790
  %v5823 = vunpack.c.l.bf16 %v5791
  %v5824 = vunpack.c.l.bf16 %v5792
  %v5825 = vunpack.c.l.bf16 %v5793
  %v5826 = vunpack.c.l.bf16 %v5794
  %v5827 = vunpack.c.l.bf16 %v5795
  %v5828 = vunpack.c.l.bf16 %v5796
  %v5829 = vunpack.c.l.bf16 %v5797
  %v5830 = vunpack.c.l.bf16 %v5798
  %v5831 = vunpack.c.l.bf16 %v5799
  %v5832 = vunpack.c.l.bf16 %v5800
  %v5833 = vunpack.c.l.bf16 %v5801
  %v5834 = vunpack.c.l.bf16 %v5802
  %v5835 = vunpack.c.l.bf16 %v5803
  %v5836 = vunpack.c.l.bf16 %v5804
  %v5837 = vunpack.c.l.bf16 %v5805
  %v5838 = vunpack.c.l.bf16 %v5806
  %v5839 = vunpack.c.l.bf16 %v5807
  %v5840 = vunpack.c.l.bf16 %v5808
  %v5841 = vunpack.c.l.bf16 %v5809
  %v5842 = vunpack.c.l.bf16 %v5810
  %v5843 = vunpack.c.l.bf16 %v5811
  %v5844 = vunpack.c.l.bf16 %v5812
  %5845 = vmatpush.msra.mxu0 %v5828
  %5846 = vmatpush.msra.mxu0 %v5827
  %5847 = vmatpush.msra.mxu0 %v5826
  %5848 = vmatpush.msra.mxu0 %v5825
  %5849 = vmatpush.msra.mxu0 %v5824
  %5850 = vmatpush.msra.mxu0 %v5823
  %5851 = vmatpush.msra.mxu0 %v5822
  %5852 = vmatpush.msra.mxu0 %v5821
  %5853 = vmatpush.msra.mxu0 %v5820
  %5854 = vmatpush.msra.mxu0 %v5819
  %5855 = vmatpush.msra.mxu0 %v5818
  %5856 = vmatpush.msra.mxu0 %v5817
  %5857 = vmatpush.msra.mxu0 %v5816
  %5858 = vmatpush.msra.mxu0 %v5815
  %5859 = vmatpush.msra.mxu0 %v5814
  %5860 = vmatpush.msra.mxu0 %v5813
  %5861 = vmatmul.f32.gmra.mxu0 %v3746
  %v5862 = vpop.f32.mrf.mxu0
  %v5863 = vadd.f32 0.0, %v5862
  %5864 = vmatmul.f32.gmra.mxu0 %v3748
  %v5865 = vpop.f32.mrf.mxu0
  %v5866 = vadd.f32 0.0, %v5865
  %5867 = vmatmul.f32.gmra.mxu0 %v3750
  %v5868 = vpop.f32.mrf.mxu0
  %v5869 = vadd.f32 0.0, %v5868
  %5870 = vmatmul.f32.gmra.mxu0 %v3752
  %v5871 = vpop.f32.mrf.mxu0
  %v5872 = vadd.f32 0.0, %v5871
  %5873 = vmatmul.f32.gmra.mxu0 %v3754
  %v5874 = vpop.f32.mrf.mxu0
  %v5875 = vadd.f32 0.0, %v5874
  %5876 = vmatmul.f32.gmra.mxu0 %v3756
  %v5877 = vpop.f32.mrf.mxu0
  %v5878 = vadd.f32 0.0, %v5877
  %5879 = vmatmul.f32.gmra.mxu0 %v3758
  %v5880 = vpop.f32.mrf.mxu0
  %v5881 = vadd.f32 0.0, %v5880
  %5882 = vmatmul.f32.gmra.mxu0 %v3760
  %v5883 = vpop.f32.mrf.mxu0
  %v5884 = vadd.f32 0.0, %v5883
  %5885 = vdwg.mxu0
  %5886 = vmatpush.msra.mxu0 %v5844
  %5887 = vmatpush.msra.mxu0 %v5843
  %5888 = vmatpush.msra.mxu0 %v5842
  %5889 = vmatpush.msra.mxu0 %v5841
  %5890 = vmatpush.msra.mxu0 %v5840
  %5891 = vmatpush.msra.mxu0 %v5839
  %5892 = vmatpush.msra.mxu0 %v5838
  %5893 = vmatpush.msra.mxu0 %v5837
  %5894 = vmatpush.msra.mxu0 %v5836
  %5895 = vmatpush.msra.mxu0 %v5835
  %5896 = vmatpush.msra.mxu0 %v5834
  %5897 = vmatpush.msra.mxu0 %v5833
  %5898 = vmatpush.msra.mxu0 %v5832
  %5899 = vmatpush.msra.mxu0 %v5831
  %5900 = vmatpush.msra.mxu0 %v5830
  %5901 = vmatpush.msra.mxu0 %v5829
  %5902 = vmatmul.f32.gmra.mxu0 %v3747
  %v5903 = vpop.f32.mrf.mxu0
  %v5904 = vadd.f32 %v5863, %v5903
  %5905 = vmatmul.f32.gmra.mxu0 %v3749
  %v5906 = vpop.f32.mrf.mxu0
  %v5907 = vadd.f32 %v5866, %v5906
  %5908 = vmatmul.f32.gmra.mxu0 %v3751
  %v5909 = vpop.f32.mrf.mxu0
  %v5910 = vadd.f32 %v5869, %v5909
  %5911 = vmatmul.f32.gmra.mxu0 %v3753
  %v5912 = vpop.f32.mrf.mxu0
  %v5913 = vadd.f32 %v5872, %v5912
  %5914 = vmatmul.f32.gmra.mxu0 %v3755
  %v5915 = vpop.f32.mrf.mxu0
  %v5916 = vadd.f32 %v5875, %v5915
  %5917 = vmatmul.f32.gmra.mxu0 %v3757
  %v5918 = vpop.f32.mrf.mxu0
  %v5919 = vadd.f32 %v5878, %v5918
  %5920 = vmatmul.f32.gmra.mxu0 %v3759
  %v5921 = vpop.f32.mrf.mxu0
  %v5922 = vadd.f32 %v5881, %v5921
  %5923 = vmatmul.f32.gmra.mxu0 %v3761
  %v5924 = vpop.f32.mrf.mxu0
  %v5925 = vadd.f32 %v5884, %v5924
  %5926 = vdwg.mxu0
  %s5927 = scalar_lea.vmem %s7, 896
  %v5928 = vld [vmem:[%s5927] sm:$0xff]
  %v5929 = vld [vmem:[%s5927 + $0x8] sm:$0xff]
  %v5930 = vld [vmem:[%s5927 + $0x10] sm:$0xff]
  %v5931 = vld [vmem:[%s5927 + $0x18] sm:$0xff]
  %v5932 = vld [vmem:[%s5927 + $0x20] sm:$0xff]
  %v5933 = vld [vmem:[%s5927 + $0x28] sm:$0xff]
  %v5934 = vld [vmem:[%s5927 + $0x30] sm:$0xff]
  %v5935 = vld [vmem:[%s5927 + $0x38] sm:$0xff]
  %v5936 = vld [vmem:[%s5927 + $0x40] sm:$0xff]
  %v5937 = vld [vmem:[%s5927 + $0x48] sm:$0xff]
  %v5938 = vld [vmem:[%s5927 + $0x50] sm:$0xff]
  %v5939 = vld [vmem:[%s5927 + $0x58] sm:$0xff]
  %v5940 = vld [vmem:[%s5927 + $0x60] sm:$0xff]
  %v5941 = vld [vmem:[%s5927 + $0x68] sm:$0xff]
  %v5942 = vld [vmem:[%s5927 + $0x70] sm:$0xff]
  %v5943 = vld [vmem:[%s5927 + $0x78] sm:$0xff]
  %v5945 = vsel %vm4088, %v5928, 0
  %v5948 = vsel %vm4088, %v5929, 0
  %v5951 = vsel %vm4088, %v5930, 0
  %v5954 = vsel %vm4088, %v5931, 0
  %v5957 = vsel %vm4088, %v5932, 0
  %v5960 = vsel %vm4088, %v5933, 0
  %v5963 = vsel %vm4088, %v5934, 0
  %v5966 = vsel %vm4088, %v5935, 0
  %v5969 = vsel %vm4088, %v5936, 0
  %v5972 = vsel %vm4088, %v5937, 0
  %v5975 = vsel %vm4088, %v5938, 0
  %v5978 = vsel %vm4088, %v5939, 0
  %v5981 = vsel %vm4088, %v5940, 0
  %v5984 = vsel %vm4088, %v5941, 0
  %v5987 = vsel %vm4088, %v5942, 0
  %v5990 = vsel %vm4088, %v5943, 0
  %5992 = vmatpush.msra.mxu0 0.0
  %5993 = vmatpush.msra.mxu0 0.0
  %5994 = vmatpush.msra.mxu0 0.0
  %5995 = vmatpush.msra.mxu0 0.0
  %5996 = vmatpush.msra.mxu0 0.0
  %5997 = vmatpush.msra.mxu0 0.0
  %5998 = vmatpush.msra.mxu0 0.0
  %5999 = vmatpush.msra.mxu0 0.0
  %6000 = vmatpush.msra.mxu0 %v5925
  %6001 = vmatpush.msra.mxu0 %v5922
  %6002 = vmatpush.msra.mxu0 %v5919
  %6003 = vmatpush.msra.mxu0 %v5916
  %6004 = vmatpush.msra.mxu0 %v5913
  %6005 = vmatpush.msra.mxu0 %v5910
  %6006 = vmatpush.msra.mxu0 %v5907
  %6007 = vmatpush.msra.mxu0 %v5904
  %6008 = vmatmul.f32.gmra.mxu0 %v5945
  %v6009 = vpop.f32.mrf.mxu0
  %v6010 = vadd.f32 0.0, %v6009
  %6011 = vmatmul.f32.gmra.mxu0 %v5948
  %v6012 = vpop.f32.mrf.mxu0
  %v6013 = vadd.f32 0.0, %v6012
  %6014 = vmatmul.f32.gmra.mxu0 %v5951
  %v6015 = vpop.f32.mrf.mxu0
  %v6016 = vadd.f32 0.0, %v6015
  %6017 = vmatmul.f32.gmra.mxu0 %v5954
  %v6018 = vpop.f32.mrf.mxu0
  %v6019 = vadd.f32 0.0, %v6018
  %6020 = vmatmul.f32.gmra.mxu0 %v5957
  %v6021 = vpop.f32.mrf.mxu0
  %v6022 = vadd.f32 0.0, %v6021
  %6023 = vmatmul.f32.gmra.mxu0 %v5960
  %v6024 = vpop.f32.mrf.mxu0
  %v6025 = vadd.f32 0.0, %v6024
  %6026 = vmatmul.f32.gmra.mxu0 %v5963
  %v6027 = vpop.f32.mrf.mxu0
  %v6028 = vadd.f32 0.0, %v6027
  %6029 = vmatmul.f32.gmra.mxu0 %v5966
  %v6030 = vpop.f32.mrf.mxu0
  %v6031 = vadd.f32 0.0, %v6030
  %6032 = vmatmul.f32.gmra.mxu0 %v5969
  %v6033 = vpop.f32.mrf.mxu0
  %v6034 = vadd.f32 0.0, %v6033
  %6035 = vmatmul.f32.gmra.mxu0 %v5972
  %v6036 = vpop.f32.mrf.mxu0
  %v6037 = vadd.f32 0.0, %v6036
  %6038 = vmatmul.f32.gmra.mxu0 %v5975
  %v6039 = vpop.f32.mrf.mxu0
  %v6040 = vadd.f32 0.0, %v6039
  %6041 = vmatmul.f32.gmra.mxu0 %v5978
  %v6042 = vpop.f32.mrf.mxu0
  %v6043 = vadd.f32 0.0, %v6042
  %6044 = vmatmul.f32.gmra.mxu0 %v5981
  %v6045 = vpop.f32.mrf.mxu0
  %v6046 = vadd.f32 0.0, %v6045
  %6047 = vmatmul.f32.gmra.mxu0 %v5984
  %v6048 = vpop.f32.mrf.mxu0
  %v6049 = vadd.f32 0.0, %v6048
  %6050 = vmatmul.f32.gmra.mxu0 %v5987
  %v6051 = vpop.f32.mrf.mxu0
  %v6052 = vadd.f32 0.0, %v6051
  %6053 = vmatmul.f32.gmra.mxu0 %v5990
  %v6054 = vpop.f32.mrf.mxu0
  %v6055 = vadd.f32 0.0, %v6054
  %6056 = vdwg.mxu0
  %v6057 = vadd.f32 %v5764, %v6010
  %v6058 = vadd.f32 %v5765, %v6013
  %v6059 = vadd.f32 %v5766, %v6016
  %v6060 = vadd.f32 %v5767, %v6019
  %v6061 = vadd.f32 %v5768, %v6022
  %v6062 = vadd.f32 %v5769, %v6025
  %v6063 = vadd.f32 %v5770, %v6028
  %v6064 = vadd.f32 %v5771, %v6031
  %v6065 = vadd.f32 %v5772, %v6034
  %v6066 = vadd.f32 %v5773, %v6037
  %v6067 = vadd.f32 %v5774, %v6040
  %v6068 = vadd.f32 %v5775, %v6043
  %v6069 = vadd.f32 %v5776, %v6046
  %v6070 = vadd.f32 %v5777, %v6049
  %v6071 = vadd.f32 %v5778, %v6052
  %v6072 = vadd.f32 %v5779, %v6055
  %s6073 = scalar_lea.vmem %s9, 1024
  %v6074 = vld [vmem:[%s6073] sm:$0xf]
  %v6075 = vld [vmem:[%s6073 + $0x4] sm:$0xf]
  %v6076 = vld [vmem:[%s6073 + $0x8] sm:$0xf]
  %v6077 = vld [vmem:[%s6073 + $0xc] sm:$0xf]
  %v6078 = vld [vmem:[%s6073 + $0x10] sm:$0xf]
  %v6079 = vld [vmem:[%s6073 + $0x14] sm:$0xf]
  %v6080 = vld [vmem:[%s6073 + $0x18] sm:$0xf]
  %v6081 = vld [vmem:[%s6073 + $0x1c] sm:$0xf]
  %v6082 = vld [vmem:[%s6073 + $0x20] sm:$0xf]
  %v6083 = vld [vmem:[%s6073 + $0x24] sm:$0xf]
  %v6084 = vld [vmem:[%s6073 + $0x28] sm:$0xf]
  %v6085 = vld [vmem:[%s6073 + $0x2c] sm:$0xf]
  %v6086 = vld [vmem:[%s6073 + $0x30] sm:$0xf]
  %v6087 = vld [vmem:[%s6073 + $0x34] sm:$0xf]
  %v6088 = vld [vmem:[%s6073 + $0x38] sm:$0xf]
  %v6089 = vld [vmem:[%s6073 + $0x3c] sm:$0xf]
  %v6090 = vld [vmem:[%s6073 + $0x40] sm:$0xf]
  %v6091 = vld [vmem:[%s6073 + $0x44] sm:$0xf]
  %v6092 = vld [vmem:[%s6073 + $0x48] sm:$0xf]
  %v6093 = vld [vmem:[%s6073 + $0x4c] sm:$0xf]
  %v6094 = vld [vmem:[%s6073 + $0x50] sm:$0xf]
  %v6095 = vld [vmem:[%s6073 + $0x54] sm:$0xf]
  %v6096 = vld [vmem:[%s6073 + $0x58] sm:$0xf]
  %v6097 = vld [vmem:[%s6073 + $0x5c] sm:$0xf]
  %v6098 = vld [vmem:[%s6073 + $0x60] sm:$0xf]
  %v6099 = vld [vmem:[%s6073 + $0x64] sm:$0xf]
  %v6100 = vld [vmem:[%s6073 + $0x68] sm:$0xf]
  %v6101 = vld [vmem:[%s6073 + $0x6c] sm:$0xf]
  %v6102 = vld [vmem:[%s6073 + $0x70] sm:$0xf]
  %v6103 = vld [vmem:[%s6073 + $0x74] sm:$0xf]
  %v6104 = vld [vmem:[%s6073 + $0x78] sm:$0xf]
  %v6105 = vld [vmem:[%s6073 + $0x7c] sm:$0xf]
  %v6106 = vunpack.c.l.bf16 %v6074
  %v6107 = vunpack.c.l.bf16 %v6075
  %v6108 = vunpack.c.l.bf16 %v6076
  %v6109 = vunpack.c.l.bf16 %v6077
  %v6110 = vunpack.c.l.bf16 %v6078
  %v6111 = vunpack.c.l.bf16 %v6079
  %v6112 = vunpack.c.l.bf16 %v6080
  %v6113 = vunpack.c.l.bf16 %v6081
  %v6114 = vunpack.c.l.bf16 %v6082
  %v6115 = vunpack.c.l.bf16 %v6083
  %v6116 = vunpack.c.l.bf16 %v6084
  %v6117 = vunpack.c.l.bf16 %v6085
  %v6118 = vunpack.c.l.bf16 %v6086
  %v6119 = vunpack.c.l.bf16 %v6087
  %v6120 = vunpack.c.l.bf16 %v6088
  %v6121 = vunpack.c.l.bf16 %v6089
  %v6122 = vunpack.c.l.bf16 %v6090
  %v6123 = vunpack.c.l.bf16 %v6091
  %v6124 = vunpack.c.l.bf16 %v6092
  %v6125 = vunpack.c.l.bf16 %v6093
  %v6126 = vunpack.c.l.bf16 %v6094
  %v6127 = vunpack.c.l.bf16 %v6095
  %v6128 = vunpack.c.l.bf16 %v6096
  %v6129 = vunpack.c.l.bf16 %v6097
  %v6130 = vunpack.c.l.bf16 %v6098
  %v6131 = vunpack.c.l.bf16 %v6099
  %v6132 = vunpack.c.l.bf16 %v6100
  %v6133 = vunpack.c.l.bf16 %v6101
  %v6134 = vunpack.c.l.bf16 %v6102
  %v6135 = vunpack.c.l.bf16 %v6103
  %v6136 = vunpack.c.l.bf16 %v6104
  %v6137 = vunpack.c.l.bf16 %v6105
  %6138 = vmatpush.msra.mxu0 %v6121
  %6139 = vmatpush.msra.mxu0 %v6120
  %6140 = vmatpush.msra.mxu0 %v6119
  %6141 = vmatpush.msra.mxu0 %v6118
  %6142 = vmatpush.msra.mxu0 %v6117
  %6143 = vmatpush.msra.mxu0 %v6116
  %6144 = vmatpush.msra.mxu0 %v6115
  %6145 = vmatpush.msra.mxu0 %v6114
  %6146 = vmatpush.msra.mxu0 %v6113
  %6147 = vmatpush.msra.mxu0 %v6112
  %6148 = vmatpush.msra.mxu0 %v6111
  %6149 = vmatpush.msra.mxu0 %v6110
  %6150 = vmatpush.msra.mxu0 %v6109
  %6151 = vmatpush.msra.mxu0 %v6108
  %6152 = vmatpush.msra.mxu0 %v6107
  %6153 = vmatpush.msra.mxu0 %v6106
  %6154 = vmatmul.f32.gmra.mxu0 %v3746
  %v6155 = vpop.f32.mrf.mxu0
  %v6156 = vadd.f32 0.0, %v6155
  %6157 = vmatmul.f32.gmra.mxu0 %v3748
  %v6158 = vpop.f32.mrf.mxu0
  %v6159 = vadd.f32 0.0, %v6158
  %6160 = vmatmul.f32.gmra.mxu0 %v3750
  %v6161 = vpop.f32.mrf.mxu0
  %v6162 = vadd.f32 0.0, %v6161
  %6163 = vmatmul.f32.gmra.mxu0 %v3752
  %v6164 = vpop.f32.mrf.mxu0
  %v6165 = vadd.f32 0.0, %v6164
  %6166 = vmatmul.f32.gmra.mxu0 %v3754
  %v6167 = vpop.f32.mrf.mxu0
  %v6168 = vadd.f32 0.0, %v6167
  %6169 = vmatmul.f32.gmra.mxu0 %v3756
  %v6170 = vpop.f32.mrf.mxu0
  %v6171 = vadd.f32 0.0, %v6170
  %6172 = vmatmul.f32.gmra.mxu0 %v3758
  %v6173 = vpop.f32.mrf.mxu0
  %v6174 = vadd.f32 0.0, %v6173
  %6175 = vmatmul.f32.gmra.mxu0 %v3760
  %v6176 = vpop.f32.mrf.mxu0
  %v6177 = vadd.f32 0.0, %v6176
  %6178 = vdwg.mxu0
  %6179 = vmatpush.msra.mxu0 %v6137
  %6180 = vmatpush.msra.mxu0 %v6136
  %6181 = vmatpush.msra.mxu0 %v6135
  %6182 = vmatpush.msra.mxu0 %v6134
  %6183 = vmatpush.msra.mxu0 %v6133
  %6184 = vmatpush.msra.mxu0 %v6132
  %6185 = vmatpush.msra.mxu0 %v6131
  %6186 = vmatpush.msra.mxu0 %v6130
  %6187 = vmatpush.msra.mxu0 %v6129
  %6188 = vmatpush.msra.mxu0 %v6128
  %6189 = vmatpush.msra.mxu0 %v6127
  %6190 = vmatpush.msra.mxu0 %v6126
  %6191 = vmatpush.msra.mxu0 %v6125
  %6192 = vmatpush.msra.mxu0 %v6124
  %6193 = vmatpush.msra.mxu0 %v6123
  %6194 = vmatpush.msra.mxu0 %v6122
  %6195 = vmatmul.f32.gmra.mxu0 %v3747
  %v6196 = vpop.f32.mrf.mxu0
  %v6197 = vadd.f32 %v6156, %v6196
  %6198 = vmatmul.f32.gmra.mxu0 %v3749
  %v6199 = vpop.f32.mrf.mxu0
  %v6200 = vadd.f32 %v6159, %v6199
  %6201 = vmatmul.f32.gmra.mxu0 %v3751
  %v6202 = vpop.f32.mrf.mxu0
  %v6203 = vadd.f32 %v6162, %v6202
  %6204 = vmatmul.f32.gmra.mxu0 %v3753
  %v6205 = vpop.f32.mrf.mxu0
  %v6206 = vadd.f32 %v6165, %v6205
  %6207 = vmatmul.f32.gmra.mxu0 %v3755
  %v6208 = vpop.f32.mrf.mxu0
  %v6209 = vadd.f32 %v6168, %v6208
  %6210 = vmatmul.f32.gmra.mxu0 %v3757
  %v6211 = vpop.f32.mrf.mxu0
  %v6212 = vadd.f32 %v6171, %v6211
  %6213 = vmatmul.f32.gmra.mxu0 %v3759
  %v6214 = vpop.f32.mrf.mxu0
  %v6215 = vadd.f32 %v6174, %v6214
  %6216 = vmatmul.f32.gmra.mxu0 %v3761
  %v6217 = vpop.f32.mrf.mxu0
  %v6218 = vadd.f32 %v6177, %v6217
  %6219 = vdwg.mxu0
  %s6220 = scalar_lea.vmem %s7, 1024
  %v6221 = vld [vmem:[%s6220] sm:$0xff]
  %v6222 = vld [vmem:[%s6220 + $0x8] sm:$0xff]
  %v6223 = vld [vmem:[%s6220 + $0x10] sm:$0xff]
  %v6224 = vld [vmem:[%s6220 + $0x18] sm:$0xff]
  %v6225 = vld [vmem:[%s6220 + $0x20] sm:$0xff]
  %v6226 = vld [vmem:[%s6220 + $0x28] sm:$0xff]
  %v6227 = vld [vmem:[%s6220 + $0x30] sm:$0xff]
  %v6228 = vld [vmem:[%s6220 + $0x38] sm:$0xff]
  %v6229 = vld [vmem:[%s6220 + $0x40] sm:$0xff]
  %v6230 = vld [vmem:[%s6220 + $0x48] sm:$0xff]
  %v6231 = vld [vmem:[%s6220 + $0x50] sm:$0xff]
  %v6232 = vld [vmem:[%s6220 + $0x58] sm:$0xff]
  %v6233 = vld [vmem:[%s6220 + $0x60] sm:$0xff]
  %v6234 = vld [vmem:[%s6220 + $0x68] sm:$0xff]
  %v6235 = vld [vmem:[%s6220 + $0x70] sm:$0xff]
  %v6236 = vld [vmem:[%s6220 + $0x78] sm:$0xff]
  %v6238 = vsel %vm4088, %v6221, 0
  %v6241 = vsel %vm4088, %v6222, 0
  %v6244 = vsel %vm4088, %v6223, 0
  %v6247 = vsel %vm4088, %v6224, 0
  %v6250 = vsel %vm4088, %v6225, 0
  %v6253 = vsel %vm4088, %v6226, 0
  %v6256 = vsel %vm4088, %v6227, 0
  %v6259 = vsel %vm4088, %v6228, 0
  %v6262 = vsel %vm4088, %v6229, 0
  %v6265 = vsel %vm4088, %v6230, 0
  %v6268 = vsel %vm4088, %v6231, 0
  %v6271 = vsel %vm4088, %v6232, 0
  %v6274 = vsel %vm4088, %v6233, 0
  %v6277 = vsel %vm4088, %v6234, 0
  %v6280 = vsel %vm4088, %v6235, 0
  %v6283 = vsel %vm4088, %v6236, 0
  %6285 = vmatpush.msra.mxu0 0.0
  %6286 = vmatpush.msra.mxu0 0.0
  %6287 = vmatpush.msra.mxu0 0.0
  %6288 = vmatpush.msra.mxu0 0.0
  %6289 = vmatpush.msra.mxu0 0.0
  %6290 = vmatpush.msra.mxu0 0.0
  %6291 = vmatpush.msra.mxu0 0.0
  %6292 = vmatpush.msra.mxu0 0.0
  %6293 = vmatpush.msra.mxu0 %v6218
  %6294 = vmatpush.msra.mxu0 %v6215
  %6295 = vmatpush.msra.mxu0 %v6212
  %6296 = vmatpush.msra.mxu0 %v6209
  %6297 = vmatpush.msra.mxu0 %v6206
  %6298 = vmatpush.msra.mxu0 %v6203
  %6299 = vmatpush.msra.mxu0 %v6200
  %6300 = vmatpush.msra.mxu0 %v6197
  %6301 = vmatmul.f32.gmra.mxu0 %v6238
  %v6302 = vpop.f32.mrf.mxu0
  %v6303 = vadd.f32 0.0, %v6302
  %6304 = vmatmul.f32.gmra.mxu0 %v6241
  %v6305 = vpop.f32.mrf.mxu0
  %v6306 = vadd.f32 0.0, %v6305
  %6307 = vmatmul.f32.gmra.mxu0 %v6244
  %v6308 = vpop.f32.mrf.mxu0
  %v6309 = vadd.f32 0.0, %v6308
  %6310 = vmatmul.f32.gmra.mxu0 %v6247
  %v6311 = vpop.f32.mrf.mxu0
  %v6312 = vadd.f32 0.0, %v6311
  %6313 = vmatmul.f32.gmra.mxu0 %v6250
  %v6314 = vpop.f32.mrf.mxu0
  %v6315 = vadd.f32 0.0, %v6314
  %6316 = vmatmul.f32.gmra.mxu0 %v6253
  %v6317 = vpop.f32.mrf.mxu0
  %v6318 = vadd.f32 0.0, %v6317
  %6319 = vmatmul.f32.gmra.mxu0 %v6256
  %v6320 = vpop.f32.mrf.mxu0
  %v6321 = vadd.f32 0.0, %v6320
  %6322 = vmatmul.f32.gmra.mxu0 %v6259
  %v6323 = vpop.f32.mrf.mxu0
  %v6324 = vadd.f32 0.0, %v6323
  %6325 = vmatmul.f32.gmra.mxu0 %v6262
  %v6326 = vpop.f32.mrf.mxu0
  %v6327 = vadd.f32 0.0, %v6326
  %6328 = vmatmul.f32.gmra.mxu0 %v6265
  %v6329 = vpop.f32.mrf.mxu0
  %v6330 = vadd.f32 0.0, %v6329
  %6331 = vmatmul.f32.gmra.mxu0 %v6268
  %v6332 = vpop.f32.mrf.mxu0
  %v6333 = vadd.f32 0.0, %v6332
  %6334 = vmatmul.f32.gmra.mxu0 %v6271
  %v6335 = vpop.f32.mrf.mxu0
  %v6336 = vadd.f32 0.0, %v6335
  %6337 = vmatmul.f32.gmra.mxu0 %v6274
  %v6338 = vpop.f32.mrf.mxu0
  %v6339 = vadd.f32 0.0, %v6338
  %6340 = vmatmul.f32.gmra.mxu0 %v6277
  %v6341 = vpop.f32.mrf.mxu0
  %v6342 = vadd.f32 0.0, %v6341
  %6343 = vmatmul.f32.gmra.mxu0 %v6280
  %v6344 = vpop.f32.mrf.mxu0
  %v6345 = vadd.f32 0.0, %v6344
  %6346 = vmatmul.f32.gmra.mxu0 %v6283
  %v6347 = vpop.f32.mrf.mxu0
  %v6348 = vadd.f32 0.0, %v6347
  %6349 = vdwg.mxu0
  %v6350 = vadd.f32 %v6057, %v6303
  %v6351 = vadd.f32 %v6058, %v6306
  %v6352 = vadd.f32 %v6059, %v6309
  %v6353 = vadd.f32 %v6060, %v6312
  %v6354 = vadd.f32 %v6061, %v6315
  %v6355 = vadd.f32 %v6062, %v6318
  %v6356 = vadd.f32 %v6063, %v6321
  %v6357 = vadd.f32 %v6064, %v6324
  %v6358 = vadd.f32 %v6065, %v6327
  %v6359 = vadd.f32 %v6066, %v6330
  %v6360 = vadd.f32 %v6067, %v6333
  %v6361 = vadd.f32 %v6068, %v6336
  %v6362 = vadd.f32 %v6069, %v6339
  %v6363 = vadd.f32 %v6070, %v6342
  %v6364 = vadd.f32 %v6071, %v6345
  %v6365 = vadd.f32 %v6072, %v6348
  %v6366 = vld [vmem:[%s8] sm:$0xff]
  %v6367 = vld [vmem:[%s8 + $0x8] sm:$0xff]
  %v6368 = vld [vmem:[%s8 + $0x10] sm:$0xff]
  %v6369 = vld [vmem:[%s8 + $0x18] sm:$0xff]
  %v6370 = vld [vmem:[%s8 + $0x20] sm:$0xff]
  %v6371 = vld [vmem:[%s8 + $0x28] sm:$0xff]
  %v6372 = vld [vmem:[%s8 + $0x30] sm:$0xff]
  %v6373 = vld [vmem:[%s8 + $0x38] sm:$0xff]
  %v6374 = vld [vmem:[%s8 + $0x40] sm:$0xff]
  %v6375 = vld [vmem:[%s8 + $0x48] sm:$0xff]
  %v6376 = vld [vmem:[%s8 + $0x50] sm:$0xff]
  %v6377 = vld [vmem:[%s8 + $0x58] sm:$0xff]
  %v6378 = vld [vmem:[%s8 + $0x60] sm:$0xff]
  %v6379 = vld [vmem:[%s8 + $0x68] sm:$0xff]
  %v6380 = vld [vmem:[%s8 + $0x70] sm:$0xff]
  %v6381 = vld [vmem:[%s8 + $0x78] sm:$0xff]
  %6383 = vset.pattern.permute.xlu0 0
  %6384 = vperm.xlu0 %6383, %v6366
  %v6385 = vpop.permute.xlu0 %6384
  %6388 = vset.pattern.permute.xlu0 0
  %6389 = vperm.xlu0 %6388, %v6367
  %v6390 = vpop.permute.xlu0 %6389
  %6393 = vset.pattern.permute.xlu0 0
  %6394 = vperm.xlu0 %6393, %v6368
  %v6395 = vpop.permute.xlu0 %6394
  %6398 = vset.pattern.permute.xlu0 0
  %6399 = vperm.xlu0 %6398, %v6369
  %v6400 = vpop.permute.xlu0 %6399
  %6403 = vset.pattern.permute.xlu0 0
  %6404 = vperm.xlu0 %6403, %v6370
  %v6405 = vpop.permute.xlu0 %6404
  %6408 = vset.pattern.permute.xlu0 0
  %6409 = vperm.xlu0 %6408, %v6371
  %v6410 = vpop.permute.xlu0 %6409
  %6413 = vset.pattern.permute.xlu0 0
  %6414 = vperm.xlu0 %6413, %v6372
  %v6415 = vpop.permute.xlu0 %6414
  %6418 = vset.pattern.permute.xlu0 0
  %6419 = vperm.xlu0 %6418, %v6373
  %v6420 = vpop.permute.xlu0 %6419
  %6423 = vset.pattern.permute.xlu0 0
  %6424 = vperm.xlu0 %6423, %v6374
  %v6425 = vpop.permute.xlu0 %6424
  %6428 = vset.pattern.permute.xlu0 0
  %6429 = vperm.xlu0 %6428, %v6375
  %v6430 = vpop.permute.xlu0 %6429
  %6433 = vset.pattern.permute.xlu0 0
  %6434 = vperm.xlu0 %6433, %v6376
  %v6435 = vpop.permute.xlu0 %6434
  %6438 = vset.pattern.permute.xlu0 0
  %6439 = vperm.xlu0 %6438, %v6377
  %v6440 = vpop.permute.xlu0 %6439
  %6443 = vset.pattern.permute.xlu0 0
  %6444 = vperm.xlu0 %6443, %v6378
  %v6445 = vpop.permute.xlu0 %6444
  %6448 = vset.pattern.permute.xlu0 0
  %6449 = vperm.xlu0 %6448, %v6379
  %v6450 = vpop.permute.xlu0 %6449
  %6453 = vset.pattern.permute.xlu0 0
  %6454 = vperm.xlu0 %6453, %v6380
  %v6455 = vpop.permute.xlu0 %6454
  %6458 = vset.pattern.permute.xlu0 0
  %6459 = vperm.xlu0 %6458, %v6381
  %v6460 = vpop.permute.xlu0 %6459
  %v6462 = vadd.f32 %v6350, %v6385
  %v6463 = vadd.f32 %v6351, %v6390
  %v6464 = vadd.f32 %v6352, %v6395
  %v6465 = vadd.f32 %v6353, %v6400
  %v6466 = vadd.f32 %v6354, %v6405
  %v6467 = vadd.f32 %v6355, %v6410
  %v6468 = vadd.f32 %v6356, %v6415
  %v6469 = vadd.f32 %v6357, %v6420
  %v6470 = vadd.f32 %v6358, %v6425
  %v6471 = vadd.f32 %v6359, %v6430
  %v6472 = vadd.f32 %v6360, %v6435
  %v6473 = vadd.f32 %v6361, %v6440
  %v6474 = vadd.f32 %v6362, %v6445
  %v6475 = vadd.f32 %v6363, %v6450
  %v6476 = vadd.f32 %v6364, %v6455
  %v6477 = vadd.f32 %v6365, %v6460
  %v6478 = vmax.f32 %v6462, 0.0
  %v6479 = vmax.f32 %v6463, 0.0
  %v6480 = vmax.f32 %v6464, 0.0
  %v6481 = vmax.f32 %v6465, 0.0
  %v6482 = vmax.f32 %v6466, 0.0
  %v6483 = vmax.f32 %v6467, 0.0
  %v6484 = vmax.f32 %v6468, 0.0
  %v6485 = vmax.f32 %v6469, 0.0
  %v6486 = vmax.f32 %v6470, 0.0
  %v6487 = vmax.f32 %v6471, 0.0
  %v6488 = vmax.f32 %v6472, 0.0
  %v6489 = vmax.f32 %v6473, 0.0
  %v6490 = vmax.f32 %v6474, 0.0
  %v6491 = vmax.f32 %v6475, 0.0
  %v6492 = vmax.f32 %v6476, 0.0
  %v6493 = vmax.f32 %v6477, 0.0
  %v6494 = vld [vmem:[%s10] sm:$0xff]
  %v6495 = vld [vmem:[%s10 + $0x8] sm:$0xff]
  %v6496 = vld [vmem:[%s10 + $0x10] sm:$0xff]
  %v6497 = vld [vmem:[%s10 + $0x18] sm:$0xff]
  %v6498 = vld [vmem:[%s10 + $0x20] sm:$0xff]
  %v6499 = vld [vmem:[%s10 + $0x28] sm:$0xff]
  %v6500 = vld [vmem:[%s10 + $0x30] sm:$0xff]
  %v6501 = vld [vmem:[%s10 + $0x38] sm:$0xff]
  %v6502 = vld [vmem:[%s11] sm:$0xff]
  %v6503 = vld [vmem:[%s11 + $0x8] sm:$0xff]
  %v6504 = vld [vmem:[%s11 + $0x10] sm:$0xff]
  %v6505 = vld [vmem:[%s11 + $0x18] sm:$0xff]
  %v6506 = vld [vmem:[%s11 + $0x20] sm:$0xff]
  %v6507 = vld [vmem:[%s11 + $0x28] sm:$0xff]
  %v6508 = vld [vmem:[%s11 + $0x30] sm:$0xff]
  %v6509 = vld [vmem:[%s11 + $0x38] sm:$0xff]
  %6511 = vset.pattern.permute.xlu0 0
  %6512 = vperm.xlu0 %6511, %v6502
  %v6513 = vpop.permute.xlu0 %6512
  %6516 = vset.pattern.permute.xlu0 0
  %6517 = vperm.xlu0 %6516, %v6503
  %v6518 = vpop.permute.xlu0 %6517
  %6521 = vset.pattern.permute.xlu0 0
  %6522 = vperm.xlu0 %6521, %v6504
  %v6523 = vpop.permute.xlu0 %6522
  %6526 = vset.pattern.permute.xlu0 0
  %6527 = vperm.xlu0 %6526, %v6505
  %v6528 = vpop.permute.xlu0 %6527
  %6531 = vset.pattern.permute.xlu0 0
  %6532 = vperm.xlu0 %6531, %v6506
  %v6533 = vpop.permute.xlu0 %6532
  %6536 = vset.pattern.permute.xlu0 0
  %6537 = vperm.xlu0 %6536, %v6507
  %v6538 = vpop.permute.xlu0 %6537
  %6541 = vset.pattern.permute.xlu0 0
  %6542 = vperm.xlu0 %6541, %v6508
  %v6543 = vpop.permute.xlu0 %6542
  %6546 = vset.pattern.permute.xlu0 0
  %6547 = vperm.xlu0 %6546, %v6509
  %v6548 = vpop.permute.xlu0 %6547
  %v6551 = vsel %vm4088, %v6494, 0
  %v6554 = vsel %vm4088, %v6495, 0
  %v6557 = vsel %vm4088, %v6496, 0
  %v6560 = vsel %vm4088, %v6497, 0
  %v6563 = vsel %vm4088, %v6498, 0
  %v6566 = vsel %vm4088, %v6499, 0
  %v6569 = vsel %vm4088, %v6500, 0
  %v6572 = vsel %vm4088, %v6501, 0
  %6574 = vmatpush.msra.mxu0 0.0
  %6575 = vmatpush.msra.mxu0 0.0
  %6576 = vmatpush.msra.mxu0 0.0
  %6577 = vmatpush.msra.mxu0 0.0
  %6578 = vmatpush.msra.mxu0 0.0
  %6579 = vmatpush.msra.mxu0 0.0
  %6580 = vmatpush.msra.mxu0 0.0
  %6581 = vmatpush.msra.mxu0 0.0
  %6582 = vmatpush.msra.mxu0 %v3760
  %6583 = vmatpush.msra.mxu0 %v3758
  %6584 = vmatpush.msra.mxu0 %v3756
  %6585 = vmatpush.msra.mxu0 %v3754
  %6586 = vmatpush.msra.mxu0 %v3752
  %6587 = vmatpush.msra.mxu0 %v3750
  %6588 = vmatpush.msra.mxu0 %v3748
  %6589 = vmatpush.msra.mxu0 %v3746
  %6590 = vmatmul.f32.gmra.mxu0 %v6551
  %v6591 = vpop.f32.mrf.mxu0
  %v6592 = vadd.f32 %v6513, %v6591
  %6593 = vmatmul.f32.gmra.mxu0 %v6554
  %v6594 = vpop.f32.mrf.mxu0
  %v6595 = vadd.f32 %v6518, %v6594
  %6596 = vmatmul.f32.gmra.mxu0 %v6557
  %v6597 = vpop.f32.mrf.mxu0
  %v6598 = vadd.f32 %v6523, %v6597
  %6599 = vmatmul.f32.gmra.mxu0 %v6560
  %v6600 = vpop.f32.mrf.mxu0
  %v6601 = vadd.f32 %v6528, %v6600
  %6602 = vmatmul.f32.gmra.mxu0 %v6563
  %v6603 = vpop.f32.mrf.mxu0
  %v6604 = vadd.f32 %v6533, %v6603
  %6605 = vmatmul.f32.gmra.mxu0 %v6566
  %v6606 = vpop.f32.mrf.mxu0
  %v6607 = vadd.f32 %v6538, %v6606
  %6608 = vmatmul.f32.gmra.mxu0 %v6569
  %v6609 = vpop.f32.mrf.mxu0
  %v6610 = vadd.f32 %v6543, %v6609
  %6611 = vmatmul.f32.gmra.mxu0 %v6572
  %v6612 = vpop.f32.mrf.mxu0
  %v6613 = vadd.f32 %v6548, %v6612
  %6614 = vdwg.mxu0
  %6615 = vmatpush.msra.mxu0 0.0
  %6616 = vmatpush.msra.mxu0 0.0
  %6617 = vmatpush.msra.mxu0 0.0
  %6618 = vmatpush.msra.mxu0 0.0
  %6619 = vmatpush.msra.mxu0 0.0
  %6620 = vmatpush.msra.mxu0 0.0
  %6621 = vmatpush.msra.mxu0 0.0
  %6622 = vmatpush.msra.mxu0 0.0
  %6623 = vmatpush.msra.mxu0 %v3761
  %6624 = vmatpush.msra.mxu0 %v3759
  %6625 = vmatpush.msra.mxu0 %v3757
  %6626 = vmatpush.msra.mxu0 %v3755
  %6627 = vmatpush.msra.mxu0 %v3753
  %6628 = vmatpush.msra.mxu0 %v3751
  %6629 = vmatpush.msra.mxu0 %v3749
  %6630 = vmatpush.msra.mxu0 %v3747
  %6631 = vmatmul.f32.gmra.mxu0 %v6551
  %v6632 = vpop.f32.mrf.mxu0
  %v6633 = vadd.f32 %v6513, %v6632
  %6634 = vmatmul.f32.gmra.mxu0 %v6554
  %v6635 = vpop.f32.mrf.mxu0
  %v6636 = vadd.f32 %v6518, %v6635
  %6637 = vmatmul.f32.gmra.mxu0 %v6557
  %v6638 = vpop.f32.mrf.mxu0
  %v6639 = vadd.f32 %v6523, %v6638
  %6640 = vmatmul.f32.gmra.mxu0 %v6560
  %v6641 = vpop.f32.mrf.mxu0
  %v6642 = vadd.f32 %v6528, %v6641
  %6643 = vmatmul.f32.gmra.mxu0 %v6563
  %v6644 = vpop.f32.mrf.mxu0
  %v6645 = vadd.f32 %v6533, %v6644
  %6646 = vmatmul.f32.gmra.mxu0 %v6566
  %v6647 = vpop.f32.mrf.mxu0
  %v6648 = vadd.f32 %v6538, %v6647
  %6649 = vmatmul.f32.gmra.mxu0 %v6569
  %v6650 = vpop.f32.mrf.mxu0
  %v6651 = vadd.f32 %v6543, %v6650
  %6652 = vmatmul.f32.gmra.mxu0 %v6572
  %v6653 = vpop.f32.mrf.mxu0
  %v6654 = vadd.f32 %v6548, %v6653
  %6655 = vdwg.mxu0
  %v6656 = vmax.f32 %v6592, 0.0
  %v6657 = vmax.f32 %v6633, 0.0
  %v6658 = vmax.f32 %v6595, 0.0
  %v6659 = vmax.f32 %v6636, 0.0
  %v6660 = vmax.f32 %v6598, 0.0
  %v6661 = vmax.f32 %v6639, 0.0
  %v6662 = vmax.f32 %v6601, 0.0
  %v6663 = vmax.f32 %v6642, 0.0
  %v6664 = vmax.f32 %v6604, 0.0
  %v6665 = vmax.f32 %v6645, 0.0
  %v6666 = vmax.f32 %v6607, 0.0
  %v6667 = vmax.f32 %v6648, 0.0
  %v6668 = vmax.f32 %v6610, 0.0
  %v6669 = vmax.f32 %v6651, 0.0
  %v6670 = vmax.f32 %v6613, 0.0
  %v6671 = vmax.f32 %v6654, 0.0
  %v6672 = vld [vmem:[%s12] sm:$0xff]
  %v6673 = vld [vmem:[%s12 + $0x8] sm:$0xff]
  %v6674 = vld [vmem:[%s12 + $0x10] sm:$0xff]
  %v6675 = vld [vmem:[%s12 + $0x18] sm:$0xff]
  %v6676 = vld [vmem:[%s12 + $0x20] sm:$0xff]
  %v6677 = vld [vmem:[%s12 + $0x28] sm:$0xff]
  %v6678 = vld [vmem:[%s12 + $0x30] sm:$0xff]
  %v6679 = vld [vmem:[%s12 + $0x38] sm:$0xff]
  %v6680 = vld [vmem:[%s13] sm:$0xff]
  %v6681 = vld [vmem:[%s13 + $0x8] sm:$0xff]
  %v6682 = vld [vmem:[%s13 + $0x10] sm:$0xff]
  %v6683 = vld [vmem:[%s13 + $0x18] sm:$0xff]
  %v6684 = vld [vmem:[%s13 + $0x20] sm:$0xff]
  %v6685 = vld [vmem:[%s13 + $0x28] sm:$0xff]
  %v6686 = vld [vmem:[%s13 + $0x30] sm:$0xff]
  %v6687 = vld [vmem:[%s13 + $0x38] sm:$0xff]
  %6689 = vset.pattern.permute.xlu0 0
  %6690 = vperm.xlu0 %6689, %v6680
  %v6691 = vpop.permute.xlu0 %6690
  %6694 = vset.pattern.permute.xlu0 0
  %6695 = vperm.xlu0 %6694, %v6681
  %v6696 = vpop.permute.xlu0 %6695
  %6699 = vset.pattern.permute.xlu0 0
  %6700 = vperm.xlu0 %6699, %v6682
  %v6701 = vpop.permute.xlu0 %6700
  %6704 = vset.pattern.permute.xlu0 0
  %6705 = vperm.xlu0 %6704, %v6683
  %v6706 = vpop.permute.xlu0 %6705
  %6709 = vset.pattern.permute.xlu0 0
  %6710 = vperm.xlu0 %6709, %v6684
  %v6711 = vpop.permute.xlu0 %6710
  %6714 = vset.pattern.permute.xlu0 0
  %6715 = vperm.xlu0 %6714, %v6685
  %v6716 = vpop.permute.xlu0 %6715
  %6719 = vset.pattern.permute.xlu0 0
  %6720 = vperm.xlu0 %6719, %v6686
  %v6721 = vpop.permute.xlu0 %6720
  %6724 = vset.pattern.permute.xlu0 0
  %6725 = vperm.xlu0 %6724, %v6687
  %v6726 = vpop.permute.xlu0 %6725
  %6728 = vmatpush.msra.mxu0 %v6493
  %6729 = vmatpush.msra.mxu0 %v6492
  %6730 = vmatpush.msra.mxu0 %v6491
  %6731 = vmatpush.msra.mxu0 %v6490
  %6732 = vmatpush.msra.mxu0 %v6489
  %6733 = vmatpush.msra.mxu0 %v6488
  %6734 = vmatpush.msra.mxu0 %v6487
  %6735 = vmatpush.msra.mxu0 %v6486
  %6736 = vmatpush.msra.mxu0 %v6485
  %6737 = vmatpush.msra.mxu0 %v6484
  %6738 = vmatpush.msra.mxu0 %v6483
  %6739 = vmatpush.msra.mxu0 %v6482
  %6740 = vmatpush.msra.mxu0 %v6481
  %6741 = vmatpush.msra.mxu0 %v6480
  %6742 = vmatpush.msra.mxu0 %v6479
  %6743 = vmatpush.msra.mxu0 %v6478
  %6744 = vmatmul.f32.gmra.mxu0 %v6672
  %v6745 = vpop.f32.mrf.mxu0
  %v6746 = vadd.f32 %v6691, %v6745
  %6747 = vmatmul.f32.gmra.mxu0 %v6673
  %v6748 = vpop.f32.mrf.mxu0
  %v6749 = vadd.f32 %v6696, %v6748
  %6750 = vmatmul.f32.gmra.mxu0 %v6674
  %v6751 = vpop.f32.mrf.mxu0
  %v6752 = vadd.f32 %v6701, %v6751
  %6753 = vmatmul.f32.gmra.mxu0 %v6675
  %v6754 = vpop.f32.mrf.mxu0
  %v6755 = vadd.f32 %v6706, %v6754
  %6756 = vmatmul.f32.gmra.mxu0 %v6676
  %v6757 = vpop.f32.mrf.mxu0
  %v6758 = vadd.f32 %v6711, %v6757
  %6759 = vmatmul.f32.gmra.mxu0 %v6677
  %v6760 = vpop.f32.mrf.mxu0
  %v6761 = vadd.f32 %v6716, %v6760
  %6762 = vmatmul.f32.gmra.mxu0 %v6678
  %v6763 = vpop.f32.mrf.mxu0
  %v6764 = vadd.f32 %v6721, %v6763
  %6765 = vmatmul.f32.gmra.mxu0 %v6679
  %v6766 = vpop.f32.mrf.mxu0
  %v6767 = vadd.f32 %v6726, %v6766
  %6768 = vdwg.mxu0
  %v6769 = vmax.f32 %v6746, 0.0
  %v6770 = vmax.f32 %v6749, 0.0
  %v6771 = vmax.f32 %v6752, 0.0
  %v6772 = vmax.f32 %v6755, 0.0
  %v6773 = vmax.f32 %v6758, 0.0
  %v6774 = vmax.f32 %v6761, 0.0
  %v6775 = vmax.f32 %v6764, 0.0
  %v6776 = vmax.f32 %v6767, 0.0
  %v6777 = vld [vmem:[%s14] sm:$0xff]
  %v6778 = vld [vmem:[%s14 + $0x8] sm:$0xff]
  %v6779 = vld [vmem:[%s14 + $0x10] sm:$0xff]
  %v6780 = vld [vmem:[%s14 + $0x18] sm:$0xff]
  %v6781 = vld [vmem:[%s14 + $0x20] sm:$0xff]
  %v6782 = vld [vmem:[%s14 + $0x28] sm:$0xff]
  %v6783 = vld [vmem:[%s14 + $0x30] sm:$0xff]
  %v6784 = vld [vmem:[%s14 + $0x38] sm:$0xff]
  %v6785 = vunpack.c.l.bf16 %v6777
  %v6786 = vunpack.c.h.bf16 %v6777
  %v6787 = vunpack.c.l.bf16 %v6778
  %v6788 = vunpack.c.h.bf16 %v6778
  %v6789 = vunpack.c.l.bf16 %v6779
  %v6790 = vunpack.c.h.bf16 %v6779
  %v6791 = vunpack.c.l.bf16 %v6780
  %v6792 = vunpack.c.h.bf16 %v6780
  %v6793 = vunpack.c.l.bf16 %v6781
  %v6794 = vunpack.c.h.bf16 %v6781
  %v6795 = vunpack.c.l.bf16 %v6782
  %v6796 = vunpack.c.h.bf16 %v6782
  %v6797 = vunpack.c.l.bf16 %v6783
  %v6798 = vunpack.c.h.bf16 %v6783
  %v6799 = vunpack.c.l.bf16 %v6784
  %v6800 = vunpack.c.h.bf16 %v6784
  %v6802 = vsel %vm4088, %v6769, 0
  %v6805 = vsel %vm4088, %v6770, 0
  %v6808 = vsel %vm4088, %v6771, 0
  %v6811 = vsel %vm4088, %v6772, 0
  %v6814 = vsel %vm4088, %v6773, 0
  %v6817 = vsel %vm4088, %v6774, 0
  %v6820 = vsel %vm4088, %v6775, 0
  %v6823 = vsel %vm4088, %v6776, 0
  %6825 = vmatpush.msra.mxu0 0.0
  %6826 = vmatpush.msra.mxu0 0.0
  %6827 = vmatpush.msra.mxu0 0.0
  %6828 = vmatpush.msra.mxu0 0.0
  %6829 = vmatpush.msra.mxu0 0.0
  %6830 = vmatpush.msra.mxu0 0.0
  %6831 = vmatpush.msra.mxu0 0.0
  %6832 = vmatpush.msra.mxu0 0.0
  %6833 = vmatpush.msra.mxu0 %v6799
  %6834 = vmatpush.msra.mxu0 %v6797
  %6835 = vmatpush.msra.mxu0 %v6795
  %6836 = vmatpush.msra.mxu0 %v6793
  %6837 = vmatpush.msra.mxu0 %v6791
  %6838 = vmatpush.msra.mxu0 %v6789
  %6839 = vmatpush.msra.mxu0 %v6787
  %6840 = vmatpush.msra.mxu0 %v6785
  %6841 = vmatmul.f32.gmra.mxu0 %v6802
  %v6842 = vpop.f32.mrf.mxu0
  %v6843 = vadd.f32 0.0, %v6842
  %6844 = vmatmul.f32.gmra.mxu0 %v6805
  %v6845 = vpop.f32.mrf.mxu0
  %v6846 = vadd.f32 0.0, %v6845
  %6847 = vmatmul.f32.gmra.mxu0 %v6808
  %v6848 = vpop.f32.mrf.mxu0
  %v6849 = vadd.f32 0.0, %v6848
  %6850 = vmatmul.f32.gmra.mxu0 %v6811
  %v6851 = vpop.f32.mrf.mxu0
  %v6852 = vadd.f32 0.0, %v6851
  %6853 = vmatmul.f32.gmra.mxu0 %v6814
  %v6854 = vpop.f32.mrf.mxu0
  %v6855 = vadd.f32 0.0, %v6854
  %6856 = vmatmul.f32.gmra.mxu0 %v6817
  %v6857 = vpop.f32.mrf.mxu0
  %v6858 = vadd.f32 0.0, %v6857
  %6859 = vmatmul.f32.gmra.mxu0 %v6820
  %v6860 = vpop.f32.mrf.mxu0
  %v6861 = vadd.f32 0.0, %v6860
  %6862 = vmatmul.f32.gmra.mxu0 %v6823
  %v6863 = vpop.f32.mrf.mxu0
  %v6864 = vadd.f32 0.0, %v6863
  %6865 = vdwg.mxu0
  %6866 = vmatpush.msra.mxu0 0.0
  %6867 = vmatpush.msra.mxu0 0.0
  %6868 = vmatpush.msra.mxu0 0.0
  %6869 = vmatpush.msra.mxu0 0.0
  %6870 = vmatpush.msra.mxu0 0.0
  %6871 = vmatpush.msra.mxu0 0.0
  %6872 = vmatpush.msra.mxu0 0.0
  %6873 = vmatpush.msra.mxu0 0.0
  %6874 = vmatpush.msra.mxu0 %v6800
  %6875 = vmatpush.msra.mxu0 %v6798
  %6876 = vmatpush.msra.mxu0 %v6796
  %6877 = vmatpush.msra.mxu0 %v6794
  %6878 = vmatpush.msra.mxu0 %v6792
  %6879 = vmatpush.msra.mxu0 %v6790
  %6880 = vmatpush.msra.mxu0 %v6788
  %6881 = vmatpush.msra.mxu0 %v6786
  %6882 = vmatmul.f32.gmra.mxu0 %v6802
  %v6883 = vpop.f32.mrf.mxu0
  %v6884 = vadd.f32 0.0, %v6883
  %6885 = vmatmul.f32.gmra.mxu0 %v6805
  %v6886 = vpop.f32.mrf.mxu0
  %v6887 = vadd.f32 0.0, %v6886
  %6888 = vmatmul.f32.gmra.mxu0 %v6808
  %v6889 = vpop.f32.mrf.mxu0
  %v6890 = vadd.f32 0.0, %v6889
  %6891 = vmatmul.f32.gmra.mxu0 %v6811
  %v6892 = vpop.f32.mrf.mxu0
  %v6893 = vadd.f32 0.0, %v6892
  %6894 = vmatmul.f32.gmra.mxu0 %v6814
  %v6895 = vpop.f32.mrf.mxu0
  %v6896 = vadd.f32 0.0, %v6895
  %6897 = vmatmul.f32.gmra.mxu0 %v6817
  %v6898 = vpop.f32.mrf.mxu0
  %v6899 = vadd.f32 0.0, %v6898
  %6900 = vmatmul.f32.gmra.mxu0 %v6820
  %v6901 = vpop.f32.mrf.mxu0
  %v6902 = vadd.f32 0.0, %v6901
  %6903 = vmatmul.f32.gmra.mxu0 %v6823
  %v6904 = vpop.f32.mrf.mxu0
  %v6905 = vadd.f32 0.0, %v6904
  %6906 = vdwg.mxu0
  %v6907 = vld [vmem:[%s15] sm:$0xff]
  %v6908 = vld [vmem:[%s15 + $0x8] sm:$0xff]
  %v6909 = vld [vmem:[%s15 + $0x10] sm:$0xff]
  %v6910 = vld [vmem:[%s15 + $0x18] sm:$0xff]
  %v6911 = vld [vmem:[%s15 + $0x20] sm:$0xff]
  %v6912 = vld [vmem:[%s15 + $0x28] sm:$0xff]
  %v6913 = vld [vmem:[%s15 + $0x30] sm:$0xff]
  %v6914 = vld [vmem:[%s15 + $0x38] sm:$0xff]
  %v6915 = vld [vmem:[%s15 + $0x40] sm:$0xff]
  %v6916 = vld [vmem:[%s16] sm:$0xff]
  %v6917 = vld [vmem:[%s16 + $0x8] sm:$0xff]
  %v6918 = vld [vmem:[%s16 + $0x10] sm:$0xff]
  %v6919 = vld [vmem:[%s16 + $0x18] sm:$0xff]
  %v6920 = vld [vmem:[%s16 + $0x20] sm:$0xff]
  %v6921 = vld [vmem:[%s16 + $0x28] sm:$0xff]
  %v6922 = vld [vmem:[%s16 + $0x30] sm:$0xff]
  %v6923 = vld [vmem:[%s16 + $0x38] sm:$0xff]
  %v6924 = vld [vmem:[%s16 + $0x40] sm:$0xff]
  %v6926 = vsel %vm4088, %v6916, 0
  %v6929 = vsel %vm4088, %v6917, 0
  %v6932 = vsel %vm4088, %v6918, 0
  %v6935 = vsel %vm4088, %v6919, 0
  %v6938 = vsel %vm4088, %v6920, 0
  %v6941 = vsel %vm4088, %v6921, 0
  %v6944 = vsel %vm4088, %v6922, 0
  %v6947 = vsel %vm4088, %v6923, 0
  %v6950 = vsel %vm4088, %v6924, 0
  %6952 = vmatpush.msra.mxu0 0.0
  %6953 = vmatpush.msra.mxu0 0.0
  %6954 = vmatpush.msra.mxu0 0.0
  %6955 = vmatpush.msra.mxu0 0.0
  %6956 = vmatpush.msra.mxu0 0.0
  %6957 = vmatpush.msra.mxu0 0.0
  %6958 = vmatpush.msra.mxu0 0.0
  %6959 = vmatpush.msra.mxu0 0.0
  %6960 = vmatpush.msra.mxu0 %v6864
  %6961 = vmatpush.msra.mxu0 %v6861
  %6962 = vmatpush.msra.mxu0 %v6858
  %6963 = vmatpush.msra.mxu0 %v6855
  %6964 = vmatpush.msra.mxu0 %v6852
  %6965 = vmatpush.msra.mxu0 %v6849
  %6966 = vmatpush.msra.mxu0 %v6846
  %6967 = vmatpush.msra.mxu0 %v6843
  %6968 = vmatmul.f32.gmra.mxu0 %v6926
  %v6969 = vpop.f32.mrf.mxu0
  %v6970 = vadd.f32 0.0, %v6969
  %6971 = vmatmul.f32.gmra.mxu0 %v6929
  %v6972 = vpop.f32.mrf.mxu0
  %v6973 = vadd.f32 0.0, %v6972
  %6974 = vmatmul.f32.gmra.mxu0 %v6932
  %v6975 = vpop.f32.mrf.mxu0
  %v6976 = vadd.f32 0.0, %v6975
  %6977 = vmatmul.f32.gmra.mxu0 %v6935
  %v6978 = vpop.f32.mrf.mxu0
  %v6979 = vadd.f32 0.0, %v6978
  %6980 = vmatmul.f32.gmra.mxu0 %v6938
  %v6981 = vpop.f32.mrf.mxu0
  %v6982 = vadd.f32 0.0, %v6981
  %6983 = vmatmul.f32.gmra.mxu0 %v6941
  %v6984 = vpop.f32.mrf.mxu0
  %v6985 = vadd.f32 0.0, %v6984
  %6986 = vmatmul.f32.gmra.mxu0 %v6944
  %v6987 = vpop.f32.mrf.mxu0
  %v6988 = vadd.f32 0.0, %v6987
  %6989 = vmatmul.f32.gmra.mxu0 %v6947
  %v6990 = vpop.f32.mrf.mxu0
  %v6991 = vadd.f32 0.0, %v6990
  %6992 = vmatmul.f32.gmra.mxu0 %v6950
  %v6993 = vpop.f32.mrf.mxu0
  %v6994 = vadd.f32 0.0, %v6993
  %6995 = vdwg.mxu0
  %6996 = vmatpush.msra.mxu0 0.0
  %6997 = vmatpush.msra.mxu0 0.0
  %6998 = vmatpush.msra.mxu0 0.0
  %6999 = vmatpush.msra.mxu0 0.0
  %7000 = vmatpush.msra.mxu0 0.0
  %7001 = vmatpush.msra.mxu0 0.0
  %7002 = vmatpush.msra.mxu0 0.0
  %7003 = vmatpush.msra.mxu0 0.0
  %7004 = vmatpush.msra.mxu0 %v6905
  %7005 = vmatpush.msra.mxu0 %v6902
  %7006 = vmatpush.msra.mxu0 %v6899
  %7007 = vmatpush.msra.mxu0 %v6896
  %7008 = vmatpush.msra.mxu0 %v6893
  %7009 = vmatpush.msra.mxu0 %v6890
  %7010 = vmatpush.msra.mxu0 %v6887
  %7011 = vmatpush.msra.mxu0 %v6884
  %7012 = vmatmul.f32.gmra.mxu0 %v6926
  %v7013 = vpop.f32.mrf.mxu0
  %v7014 = vadd.f32 0.0, %v7013
  %7015 = vmatmul.f32.gmra.mxu0 %v6929
  %v7016 = vpop.f32.mrf.mxu0
  %v7017 = vadd.f32 0.0, %v7016
  %7018 = vmatmul.f32.gmra.mxu0 %v6932
  %v7019 = vpop.f32.mrf.mxu0
  %v7020 = vadd.f32 0.0, %v7019
  %7021 = vmatmul.f32.gmra.mxu0 %v6935
  %v7022 = vpop.f32.mrf.mxu0
  %v7023 = vadd.f32 0.0, %v7022
  %7024 = vmatmul.f32.gmra.mxu0 %v6938
  %v7025 = vpop.f32.mrf.mxu0
  %v7026 = vadd.f32 0.0, %v7025
  %7027 = vmatmul.f32.gmra.mxu0 %v6941
  %v7028 = vpop.f32.mrf.mxu0
  %v7029 = vadd.f32 0.0, %v7028
  %7030 = vmatmul.f32.gmra.mxu0 %v6944
  %v7031 = vpop.f32.mrf.mxu0
  %v7032 = vadd.f32 0.0, %v7031
  %7033 = vmatmul.f32.gmra.mxu0 %v6947
  %v7034 = vpop.f32.mrf.mxu0
  %v7035 = vadd.f32 0.0, %v7034
  %7036 = vmatmul.f32.gmra.mxu0 %v6950
  %v7037 = vpop.f32.mrf.mxu0
  %v7038 = vadd.f32 0.0, %v7037
  %7039 = vdwg.mxu0
  %v7041 = vsel %vm4088, %v6907, 0
  %v7044 = vsel %vm4088, %v6908, 0
  %v7047 = vsel %vm4088, %v6909, 0
  %v7050 = vsel %vm4088, %v6910, 0
  %v7053 = vsel %vm4088, %v6911, 0
  %v7056 = vsel %vm4088, %v6912, 0
  %v7059 = vsel %vm4088, %v6913, 0
  %v7062 = vsel %vm4088, %v6914, 0
  %v7065 = vsel %vm4088, %v6915, 0
  %7067 = vmatpush.msra.mxu0 0.0
  %7068 = vmatpush.msra.mxu0 0.0
  %7069 = vmatpush.msra.mxu0 0.0
  %7070 = vmatpush.msra.mxu0 0.0
  %7071 = vmatpush.msra.mxu0 0.0
  %7072 = vmatpush.msra.mxu0 0.0
  %7073 = vmatpush.msra.mxu0 0.0
  %7074 = vmatpush.msra.mxu0 0.0
  %7075 = vmatpush.msra.mxu0 %v6670
  %7076 = vmatpush.msra.mxu0 %v6668
  %7077 = vmatpush.msra.mxu0 %v6666
  %7078 = vmatpush.msra.mxu0 %v6664
  %7079 = vmatpush.msra.mxu0 %v6662
  %7080 = vmatpush.msra.mxu0 %v6660
  %7081 = vmatpush.msra.mxu0 %v6658
  %7082 = vmatpush.msra.mxu0 %v6656
  %7083 = vmatmul.f32.gmra.mxu0 %v7041
  %v7084 = vpop.f32.mrf.mxu0
  %v7085 = vadd.f32 %v6970, %v7084
  %7086 = vmatmul.f32.gmra.mxu0 %v7044
  %v7087 = vpop.f32.mrf.mxu0
  %v7088 = vadd.f32 %v6973, %v7087
  %7089 = vmatmul.f32.gmra.mxu0 %v7047
  %v7090 = vpop.f32.mrf.mxu0
  %v7091 = vadd.f32 %v6976, %v7090
  %7092 = vmatmul.f32.gmra.mxu0 %v7050
  %v7093 = vpop.f32.mrf.mxu0
  %v7094 = vadd.f32 %v6979, %v7093
  %7095 = vmatmul.f32.gmra.mxu0 %v7053
  %v7096 = vpop.f32.mrf.mxu0
  %v7097 = vadd.f32 %v6982, %v7096
  %7098 = vmatmul.f32.gmra.mxu0 %v7056
  %v7099 = vpop.f32.mrf.mxu0
  %v7100 = vadd.f32 %v6985, %v7099
  %7101 = vmatmul.f32.gmra.mxu0 %v7059
  %v7102 = vpop.f32.mrf.mxu0
  %v7103 = vadd.f32 %v6988, %v7102
  %7104 = vmatmul.f32.gmra.mxu0 %v7062
  %v7105 = vpop.f32.mrf.mxu0
  %v7106 = vadd.f32 %v6991, %v7105
  %7107 = vmatmul.f32.gmra.mxu0 %v7065
  %v7108 = vpop.f32.mrf.mxu0
  %v7109 = vadd.f32 %v6994, %v7108
  %7110 = vdwg.mxu0
  %7111 = vmatpush.msra.mxu0 0.0
  %7112 = vmatpush.msra.mxu0 0.0
  %7113 = vmatpush.msra.mxu0 0.0
  %7114 = vmatpush.msra.mxu0 0.0
  %7115 = vmatpush.msra.mxu0 0.0
  %7116 = vmatpush.msra.mxu0 0.0
  %7117 = vmatpush.msra.mxu0 0.0
  %7118 = vmatpush.msra.mxu0 0.0
  %7119 = vmatpush.msra.mxu0 %v6671
  %7120 = vmatpush.msra.mxu0 %v6669
  %7121 = vmatpush.msra.mxu0 %v6667
  %7122 = vmatpush.msra.mxu0 %v6665
  %7123 = vmatpush.msra.mxu0 %v6663
  %7124 = vmatpush.msra.mxu0 %v6661
  %7125 = vmatpush.msra.mxu0 %v6659
  %7126 = vmatpush.msra.mxu0 %v6657
  %7127 = vmatmul.f32.gmra.mxu0 %v7041
  %v7128 = vpop.f32.mrf.mxu0
  %v7129 = vadd.f32 %v7014, %v7128
  %7130 = vmatmul.f32.gmra.mxu0 %v7044
  %v7131 = vpop.f32.mrf.mxu0
  %v7132 = vadd.f32 %v7017, %v7131
  %7133 = vmatmul.f32.gmra.mxu0 %v7047
  %v7134 = vpop.f32.mrf.mxu0
  %v7135 = vadd.f32 %v7020, %v7134
  %7136 = vmatmul.f32.gmra.mxu0 %v7050
  %v7137 = vpop.f32.mrf.mxu0
  %v7138 = vadd.f32 %v7023, %v7137
  %7139 = vmatmul.f32.gmra.mxu0 %v7053
  %v7140 = vpop.f32.mrf.mxu0
  %v7141 = vadd.f32 %v7026, %v7140
  %7142 = vmatmul.f32.gmra.mxu0 %v7056
  %v7143 = vpop.f32.mrf.mxu0
  %v7144 = vadd.f32 %v7029, %v7143
  %7145 = vmatmul.f32.gmra.mxu0 %v7059
  %v7146 = vpop.f32.mrf.mxu0
  %v7147 = vadd.f32 %v7032, %v7146
  %7148 = vmatmul.f32.gmra.mxu0 %v7062
  %v7149 = vpop.f32.mrf.mxu0
  %v7150 = vadd.f32 %v7035, %v7149
  %7151 = vmatmul.f32.gmra.mxu0 %v7065
  %v7152 = vpop.f32.mrf.mxu0
  %v7153 = vadd.f32 %v7038, %v7152
  %7154 = vdwg.mxu0
  %v7155 = vld [vmem:[%s17] sm:$0xff]
  %v7156 = vld [vmem:[%s17 + $0x8] sm:$0xff]
  %v7157 = vld [vmem:[%s17 + $0x10] sm:$0xff]
  %v7158 = vld [vmem:[%s17 + $0x18] sm:$0xff]
  %v7159 = vld [vmem:[%s17 + $0x20] sm:$0xff]
  %v7160 = vld [vmem:[%s17 + $0x28] sm:$0xff]
  %v7161 = vld [vmem:[%s17 + $0x30] sm:$0xff]
  %v7162 = vld [vmem:[%s17 + $0x38] sm:$0xff]
  %v7163 = vld [vmem:[%s17 + $0x40] sm:$0xff]
  %7165 = vset.pattern.permute.xlu0 0
  %7166 = vperm.xlu0 %7165, %v7155
  %v7167 = vpop.permute.xlu0 %7166
  %7170 = vset.pattern.permute.xlu0 0
  %7171 = vperm.xlu0 %7170, %v7156
  %v7172 = vpop.permute.xlu0 %7171
  %7175 = vset.pattern.permute.xlu0 0
  %7176 = vperm.xlu0 %7175, %v7157
  %v7177 = vpop.permute.xlu0 %7176
  %7180 = vset.pattern.permute.xlu0 0
  %7181 = vperm.xlu0 %7180, %v7158
  %v7182 = vpop.permute.xlu0 %7181
  %7185 = vset.pattern.permute.xlu0 0
  %7186 = vperm.xlu0 %7185, %v7159
  %v7187 = vpop.permute.xlu0 %7186
  %7190 = vset.pattern.permute.xlu0 0
  %7191 = vperm.xlu0 %7190, %v7160
  %v7192 = vpop.permute.xlu0 %7191
  %7195 = vset.pattern.permute.xlu0 0
  %7196 = vperm.xlu0 %7195, %v7161
  %v7197 = vpop.permute.xlu0 %7196
  %7200 = vset.pattern.permute.xlu0 0
  %7201 = vperm.xlu0 %7200, %v7162
  %v7202 = vpop.permute.xlu0 %7201
  %7205 = vset.pattern.permute.xlu0 0
  %7206 = vperm.xlu0 %7205, %v7163
  %v7207 = vpop.permute.xlu0 %7206
  %v7209 = vadd.f32 %v7085, %v7167
  %v7210 = vadd.f32 %v7129, %v7167
  %v7211 = vadd.f32 %v7088, %v7172
  %v7212 = vadd.f32 %v7132, %v7172
  %v7213 = vadd.f32 %v7091, %v7177
  %v7214 = vadd.f32 %v7135, %v7177
  %v7215 = vadd.f32 %v7094, %v7182
  %v7216 = vadd.f32 %v7138, %v7182
  %v7217 = vadd.f32 %v7097, %v7187
  %v7218 = vadd.f32 %v7141, %v7187
  %v7219 = vadd.f32 %v7100, %v7192
  %v7220 = vadd.f32 %v7144, %v7192
  %v7221 = vadd.f32 %v7103, %v7197
  %v7222 = vadd.f32 %v7147, %v7197
  %v7223 = vadd.f32 %v7106, %v7202
  %v7224 = vadd.f32 %v7150, %v7202
  %v7225 = vadd.f32 %v7109, %v7207
  %v7226 = vadd.f32 %v7153, %v7207
  %7227 = vst [vmem:[%s18] sm:$0xff] %v7209
  %7228 = vst [vmem:[%s18 + $0x8] sm:$0xff] %v7210
  %7229 = vst [vmem:[%s18 + $0x10] sm:$0xff] %v7211
  %7230 = vst [vmem:[%s18 + $0x18] sm:$0xff] %v7212
  %7231 = vst [vmem:[%s18 + $0x20] sm:$0xff] %v7213
  %7232 = vst [vmem:[%s18 + $0x28] sm:$0xff] %v7214
  %7233 = vst [vmem:[%s18 + $0x30] sm:$0xff] %v7215
  %7234 = vst [vmem:[%s18 + $0x38] sm:$0xff] %v7216
  %7235 = vst [vmem:[%s18 + $0x40] sm:$0xff] %v7217
  %7236 = vst [vmem:[%s18 + $0x48] sm:$0xff] %v7218
  %7237 = vst [vmem:[%s18 + $0x50] sm:$0xff] %v7219
  %7238 = vst [vmem:[%s18 + $0x58] sm:$0xff] %v7220
  %7239 = vst [vmem:[%s18 + $0x60] sm:$0xff] %v7221
  %7240 = vst [vmem:[%s18 + $0x68] sm:$0xff] %v7222
  %7241 = vst [vmem:[%s18 + $0x70] sm:$0xff] %v7223
  %7242 = vst [vmem:[%s18 + $0x78] sm:$0xff] %v7224
  %7243 = vst [vmem:[%s18 + $0x80] sm:$0xff] %v7225
  %7244 = vst [vmem:[%s18 + $0x88] sm:$0xff] %v7226
  // Predicated region
  $region74: #{combined_model_forward.1} parent=0 // pred_check
    _
  $region75: #{combined_model_forward.1} parent=0 // pred_check_branch
    %7246 = sbr.rel (0) target = $region77
  $region76: #{combined_model_forward.1} parent=0 // pred_region
    _
  $region77: #{combined_model_forward.1} parent=0 // pred_fallthru
    _
  // Predicated region
  $region78: #{combined_model_forward.1} parent=0 // pred_check
    _
  $region79: #{combined_model_forward.1} parent=0 // pred_check_branch
    %7248 = sbr.rel (0) target = $region81
  $region80: #{combined_model_forward.1} parent=0 // pred_region
    _
  $region81: #{combined_model_forward.1} parent=0 // pred_fallthru
    _

</llo_original>
